<compile_context>
chip_gen: v5e
topology: v5e:2x2
jax: 0.10.0
libtpu: 0.0.40
codegen_flags: <defaults>
</compile_context>

<pallas_src>
import functools

import jax
import jax.numpy as jnp
from jax.experimental import pallas as pl
from jax.experimental.pallas import tpu as pltpu


def _round_up(x, m):
    return ((x + m - 1) // m) * m


def _make_double_conv_kernel(H, W, Cin_p, Cout_p, S_pad):
    Wp = W + 2                 # padded width
    S_out = H * Wp             # rows of the "extended" (padded-width) output

    def kernel(x_ref, w1_ref, b1_ref, w2_ref, b2_ref, o_ref,
               xp1_ref, xp2_ref, im1_ref, im2_ref):
        # x_ref : (1, H*Wp, Cin_p)  bf16   input, W already padded by (1,1)
        # w1_ref: (9*Cin_p, Cout_p) bf16   b1_ref: (1, Cout_p) f32
        # w2_ref: (9*Cout_p, Cout_p) bf16  b2_ref: (1, Cout_p) f32
        # o_ref : (1, H*Wp, Cout_p) f32    extended output (garbage cols sliced later)
        # xp1/xp2: flattened zero-padded images, im1/im2: im2col slabs (VMEM)
        f32 = jnp.float32

        # ---- Stage 1: assemble flattened zero-padded input in VMEM ----
        xp1_ref[0:Wp, :] = jnp.zeros((Wp, Cin_p), xp1_ref.dtype)
        xp1_ref[Wp:Wp + S_out, :] = x_ref[0]
        xp1_ref[Wp + S_out:S_pad, :] = jnp.zeros(
            (S_pad - Wp - S_out, Cin_p), xp1_ref.dtype)

        # ---- Stage 1: im2col (9 contiguous shifted copies) + one MXU matmul ----
        for t in range(9):
            dy, dx = divmod(t, 3)
            o = dy * Wp + dx
            im1_ref[:, t * Cin_p:(t + 1) * Cin_p] = xp1_ref[o:o + S_out, :]
        acc1 = jnp.dot(im1_ref[...], w1_ref[...], preferred_element_type=f32)
        y1 = jnp.maximum(acc1 + b1_ref[...], 0.0)

        # Zero the wrap-around columns (xx >= W): they land exactly on the
        # zero-padding columns of the second conv's padded input.
        col = jax.lax.broadcasted_iota(jnp.int32, (S_out, 1), 0) % Wp
        y1 = jnp.where(col < W, y1, 0.0).astype(xp2_ref.dtype)

        # ---- Stage 2: place intermediate (+halo) into its padded VMEM buffer ----
        xp2_ref[0:Wp + 1, :] = jnp.zeros((Wp + 1, Cout_p), xp2_ref.dtype)
        xp2_ref[Wp + 1:Wp + 1 + S_out, :] = y1
        xp2_ref[Wp + 1 + S_out:S_pad, :] = jnp.zeros(
            (S_pad - Wp - 1 - S_out, Cout_p), xp2_ref.dtype)

        # ---- Stage 2: im2col + matmul + bias + ReLU ----
        for t in range(9):
            dy, dx = divmod(t, 3)
            o = dy * Wp + dx
            im2_ref[:, t * Cout_p:(t + 1) * Cout_p] = xp2_ref[o:o + S_out, :]
        acc2 = jnp.dot(im2_ref[...], w2_ref[...], preferred_element_type=f32)
        o_ref[0] = jnp.maximum(acc2 + b2_ref[...], 0.0).astype(o_ref.dtype)

    return kernel


@jax.jit
def double_conv_pallas(x_nchw, w1, b1, w2, b2):
    """x_nchw: (N,Cin,H,W) f32; w: (3,3,Cin,Cout)/(3,3,Cout,Cout); b: (Cout,)."""
    N, Cin, H, W = x_nchw.shape
    Cout = w1.shape[-1]
    Cin_p = _round_up(Cin, 128)
    Cout_p = _round_up(Cout, 128)
    Wp = W + 2
    S_out = H * Wp
    S_pad = _round_up((H + 2) * Wp + 2, 8)   # +2 rows so tap slices never go OOB

    # NCHW -> NHWC, pad width by 1 each side + channels to 128, cast bf16,
    # flatten (H, Wp) -> rows.  (Single fused XLA pass; the intermediate
    # activation never touches HBM at all.)
    x = jnp.transpose(x_nchw, (0, 2, 3, 1)).astype(jnp.float32)
    x = jnp.pad(x, ((0, 0), (0, 0), (1, 1), (0, Cin_p - Cin)))
    x = x.astype(jnp.bfloat16).reshape(N, S_out, Cin_p)

    # Weights -> (9*C, Cout_p) bf16 matching the im2col column order (dy,dx,c).
    w1p = jnp.pad(w1, ((0, 0), (0, 0), (0, Cin_p - Cin), (0, Cout_p - Cout)))
    w1_2d = w1p.astype(jnp.bfloat16).reshape(9 * Cin_p, Cout_p)
    b1p = jnp.pad(b1, (0, Cout_p - Cout)).reshape(1, Cout_p).astype(jnp.float32)
    w2p = jnp.pad(w2, ((0, 0), (0, 0), (0, Cout_p - Cout), (0, Cout_p - Cout)))
    w2_2d = w2p.astype(jnp.bfloat16).reshape(9 * Cout_p, Cout_p)
    b2p = jnp.pad(b2, (0, Cout_p - Cout)).reshape(1, Cout_p).astype(jnp.float32)

    kernel = _make_double_conv_kernel(H, W, Cin_p, Cout_p, S_pad)
    out = pl.pallas_call(
        kernel,
        out_shape=jax.ShapeDtypeStruct((N, S_out, Cout_p), jnp.float32),
        grid_spec=pltpu.PrefetchScalarGridSpec(
            num_scalar_prefetch=0,
            grid=(N,),
            in_specs=[
                pl.BlockSpec((1, S_out, Cin_p), lambda n: (n, 0, 0)),
                pl.BlockSpec((9 * Cin_p, Cout_p), lambda n: (0, 0)),
                pl.BlockSpec((1, Cout_p), lambda n: (0, 0)),
                pl.BlockSpec((9 * Cout_p, Cout_p), lambda n: (0, 0)),
                pl.BlockSpec((1, Cout_p), lambda n: (0, 0)),
            ],
            out_specs=pl.BlockSpec((1, S_out, Cout_p), lambda n: (n, 0, 0)),
            scratch_shapes=[
                pltpu.VMEM((S_pad, Cin_p), jnp.bfloat16),       # padded input
                pltpu.VMEM((S_pad, Cout_p), jnp.bfloat16),      # padded intermediate
                pltpu.VMEM((S_out, 9 * Cin_p), jnp.bfloat16),   # im2col stage 1
                pltpu.VMEM((S_out, 9 * Cout_p), jnp.bfloat16),  # im2col stage 2
            ],
        ),
        compiler_params=pltpu.CompilerParams(
            dimension_semantics=("parallel",)),
    )(x, w1_2d, b1p, w2_2d, b2p)

    # (N, H*Wp, Cout_p) -> (N, H, Wp, Cout_p) -> valid (N, H, W, Cout) -> NCHW
    y = out.reshape(N, H, Wp, Cout_p)[:, :, :W, :Cout]
    return jnp.transpose(y, (0, 3, 1, 2))


class DoubleConvPallas:
    """Equivalent of:
        nn.Sequential(Conv2d(in_ch, out_ch, 3, padding=1), ReLU,
                      Conv2d(out_ch, out_ch, 3, padding=1), ReLU)
    with deterministic synthetic parameters."""

    def __init__(self, in_ch, out_ch, key):
        k1, k2, k3, k4 = jax.random.split(key, 4)
        fan1 = in_ch * 9
        fan2 = out_ch * 9
        w1_oihw = jax.random.uniform(k1, (out_ch, in_ch, 3, 3), jnp.float32,
                                     -1.0, 1.0) / jnp.sqrt(fan1)
        b1 = jax.random.uniform(k2, (out_ch,), jnp.float32, -1.0, 1.0) / jnp.sqrt(fan1)
        w2_oihw = jax.random.uniform(k3, (out_ch, out_ch, 3, 3), jnp.float32,
                                     -1.0, 1.0) / jnp.sqrt(fan2)
        b2 = jax.random.uniform(k4, (out_ch,), jnp.float32, -1.0, 1.0) / jnp.sqrt(fan2)
        self.w1 = jnp.transpose(w1_oihw, (2, 3, 1, 0))  # (3,3,in_ch,out_ch)
        self.b1 = b1
        self.w2 = jnp.transpose(w2_oihw, (2, 3, 1, 0))  # (3,3,out_ch,out_ch)
        self.b2 = b2

    def __call__(self, x_nchw):
        return double_conv_pallas(x_nchw.astype(jnp.float32),
                                  self.w1, self.b1, self.w2, self.b2)


def _reference_double_conv(x_nchw, mod):
    """Pure-JAX reference (lax.conv), mimicking the kernel's bf16 operand casts."""
    q = lambda a: a.astype(jnp.bfloat16).astype(jnp.float32)
    w1 = jnp.transpose(mod.w1, (3, 2, 0, 1))  # OIHW
    w2 = jnp.transpose(mod.w2, (3, 2, 0, 1))
    dn = ("NCHW", "OIHW", "NCHW")
    y = jax.lax.conv_general_dilated(q(x_nchw), q(w1), (1, 1), ((1, 1), (1, 1)),
                                     dimension_numbers=dn,
                                     precision=jax.lax.Precision.HIGHEST)
    y = jnp.maximum(y + mod.b1[None, :, None, None], 0.0)
    y = jax.lax.conv_general_dilated(q(y), q(w2), (1, 1), ((1, 1), (1, 1)),
                                     dimension_numbers=dn,
                                     precision=jax.lax.Precision.HIGHEST)
    y = jnp.maximum(y + mod.b2[None, :, None, None], 0.0)
    return y


if __name__ == "__main__":
    key = jax.random.PRNGKey(0)
    kx, kp = jax.random.split(key)

    N, Cin, Cout, H, W = 2, 4, 8, 16, 16
    x = jax.random.normal(kx, (N, Cin, H, W), jnp.float32)

    mod = DoubleConvPallas(Cin, Cout, kp)
    out = jax.block_until_ready(mod(x))

    ref = jax.block_until_ready(_reference_double_conv(x, mod))
    assert out.shape == (N, Cout, H, W)
    assert jnp.allclose(out, ref, atol=2e-2, rtol=2e-2), \
        float(jnp.max(jnp.abs(out - ref)))

    print("KERNEL_OK")
</pallas_src>

<mosaic_0001>
module attributes {stable_mosaic.version = 11 : i64} {
  func.func @kernel(%arg0: i32, %arg1: memref<1x288x128xbf16, #tpu.memory_space<vmem>>, %arg2: memref<1152x128xbf16, #tpu.memory_space<vmem>>, %arg3: memref<1x128xf32, #tpu.memory_space<vmem>>, %arg4: memref<1152x128xbf16, #tpu.memory_space<vmem>>, %arg5: memref<1x128xf32, #tpu.memory_space<vmem>>, %arg6: memref<1x288x128xf32, #tpu.memory_space<vmem>>, %arg7: memref<328x128xbf16, #tpu.memory_space<vmem>>, %arg8: memref<328x128xbf16, #tpu.memory_space<vmem>>, %arg9: memref<288x1152xbf16, #tpu.memory_space<vmem>>, %arg10: memref<288x1152xbf16, #tpu.memory_space<vmem>>) attributes {dimension_semantics = [#tpu.dimension_semantics<parallel>], iteration_bounds = array<i64: 2>, scalar_prefetch = 0 : i64, scratch_operands = 4 : i64, tpu.core_type = #tpu.core_type<tc>, window_params = [{transform_indices = @transform_0, window_bounds = array<i64: 1, 288, 128>}, {pipeline_mode = #tpu.pipeline_mode<synchronous>, transform_indices = @transform_1, window_bounds = array<i64: 1152, 128>}, {pipeline_mode = #tpu.pipeline_mode<synchronous>, transform_indices = @transform_2, window_bounds = array<i64: 1, 128>}, {pipeline_mode = #tpu.pipeline_mode<synchronous>, transform_indices = @transform_3, window_bounds = array<i64: 1152, 128>}, {pipeline_mode = #tpu.pipeline_mode<synchronous>, transform_indices = @transform_4, window_bounds = array<i64: 1, 128>}, {transform_indices = @transform_5, window_bounds = array<i64: 1, 288, 128>}]} {
    %cst = arith.constant 0.000000e+00 : bf16
    %0 = vector.broadcast %cst : bf16 to vector<18x128xbf16>
    %c0 = arith.constant 0 : index
    %c0_0 = arith.constant 0 : index
    %1 = vector.load %arg7[%c0, %c0_0] : memref<328x128xbf16, #tpu.memory_space<vmem>>, vector<18x128xbf16>
    tpu.vector_store %arg7[%c0, %c0_0], %0 {strides = array<i32>} : memref<328x128xbf16, #tpu.memory_space<vmem>>, vector<18x128xbf16>,
    %c0_1 = arith.constant 0 : index
    %c0_2 = arith.constant 0 : index
    %c0_3 = arith.constant 0 : index
    %2 = vector.load %arg1[%c0_1, %c0_2, %c0_3] : memref<1x288x128xbf16, #tpu.memory_space<vmem>>, vector<1x288x128xbf16>
    %3 = vector.shape_cast %2 : vector<1x288x128xbf16> to vector<288x128xbf16>
    %c18 = arith.constant 18 : index
    %c0_4 = arith.constant 0 : index
    %4 = vector.load %arg7[%c18, %c0_4] : memref<328x128xbf16, #tpu.memory_space<vmem>>, vector<288x128xbf16>
    tpu.vector_store %arg7[%c18, %c0_4], %3 {strides = array<i32>} : memref<328x128xbf16, #tpu.memory_space<vmem>>, vector<288x128xbf16>,
    %cst_5 = arith.constant 0.000000e+00 : bf16
    %5 = vector.broadcast %cst_5 : bf16 to vector<22x128xbf16>
    %c306 = arith.constant 306 : index
    %c0_6 = arith.constant 0 : index
    %6 = vector.load %arg7[%c306, %c0_6] : memref<328x128xbf16, #tpu.memory_space<vmem>>, vector<22x128xbf16>
    tpu.vector_store %arg7[%c306, %c0_6], %5 {strides = array<i32>} : memref<328x128xbf16, #tpu.memory_space<vmem>>, vector<22x128xbf16>,
    %c0_7 = arith.constant 0 : index
    %c0_8 = arith.constant 0 : index
    %7 = vector.load %arg7[%c0_7, %c0_8] : memref<328x128xbf16, #tpu.memory_space<vmem>>, vector<288x128xbf16>
    %c0_9 = arith.constant 0 : index
    %c0_10 = arith.constant 0 : index
    %8 = vector.load %arg9[%c0_9, %c0_10] : memref<288x1152xbf16, #tpu.memory_space<vmem>>, vector<288x128xbf16>
    tpu.vector_store %arg9[%c0_9, %c0_10], %7 {strides = array<i32>} : memref<288x1152xbf16, #tpu.memory_space<vmem>>, vector<288x128xbf16>,
    %c1 = arith.constant 1 : index
    %c0_11 = arith.constant 0 : index
    %9 = vector.load %arg7[%c1, %c0_11] : memref<328x128xbf16, #tpu.memory_space<vmem>>, vector<288x128xbf16>
    %c0_12 = arith.constant 0 : index
    %c128 = arith.constant 128 : index
    %10 = vector.load %arg9[%c0_12, %c128] : memref<288x1152xbf16, #tpu.memory_space<vmem>>, vector<288x128xbf16>
    tpu.vector_store %arg9[%c0_12, %c128], %9 {strides = array<i32>} : memref<288x1152xbf16, #tpu.memory_space<vmem>>, vector<288x128xbf16>,
    %c2 = arith.constant 2 : index
    %c0_13 = arith.constant 0 : index
    %11 = vector.load %arg7[%c2, %c0_13] : memref<328x128xbf16, #tpu.memory_space<vmem>>, vector<288x128xbf16>
    %c0_14 = arith.constant 0 : index
    %c256 = arith.constant 256 : index
    %12 = vector.load %arg9[%c0_14, %c256] : memref<288x1152xbf16, #tpu.memory_space<vmem>>, vector<288x128xbf16>
    tpu.vector_store %arg9[%c0_14, %c256], %11 {strides = array<i32>} : memref<288x1152xbf16, #tpu.memory_space<vmem>>, vector<288x128xbf16>,
    %c18_15 = arith.constant 18 : index
    %c0_16 = arith.constant 0 : index
    %13 = vector.load %arg7[%c18_15, %c0_16] : memref<328x128xbf16, #tpu.memory_space<vmem>>, vector<288x128xbf16>
    %c0_17 = arith.constant 0 : index
    %c384 = arith.constant 384 : index
    %14 = vector.load %arg9[%c0_17, %c384] : memref<288x1152xbf16, #tpu.memory_space<vmem>>, vector<288x128xbf16>
    tpu.vector_store %arg9[%c0_17, %c384], %13 {strides = array<i32>} : memref<288x1152xbf16, #tpu.memory_space<vmem>>, vector<288x128xbf16>,
    %c19 = arith.constant 19 : index
    %c0_18 = arith.constant 0 : index
    %15 = vector.load %arg7[%c19, %c0_18] : memref<328x128xbf16, #tpu.memory_space<vmem>>, vector<288x128xbf16>
    %c0_19 = arith.constant 0 : index
    %c512 = arith.constant 512 : index
    %16 = vector.load %arg9[%c0_19, %c512] : memref<288x1152xbf16, #tpu.memory_space<vmem>>, vector<288x128xbf16>
    tpu.vector_store %arg9[%c0_19, %c512], %15 {strides = array<i32>} : memref<288x1152xbf16, #tpu.memory_space<vmem>>, vector<288x128xbf16>,
    %c20 = arith.constant 20 : index
    %c0_20 = arith.constant 0 : index
    %17 = vector.load %arg7[%c20, %c0_20] : memref<328x128xbf16, #tpu.memory_space<vmem>>, vector<288x128xbf16>
    %c0_21 = arith.constant 0 : index
    %c640 = arith.constant 640 : index
    %18 = vector.load %arg9[%c0_21, %c640] : memref<288x1152xbf16, #tpu.memory_space<vmem>>, vector<288x128xbf16>
    tpu.vector_store %arg9[%c0_21, %c640], %17 {strides = array<i32>} : memref<288x1152xbf16, #tpu.memory_space<vmem>>, vector<288x128xbf16>,
    %c36 = arith.constant 36 : index
    %c0_22 = arith.constant 0 : index
    %19 = vector.load %arg7[%c36, %c0_22] : memref<328x128xbf16, #tpu.memory_space<vmem>>, vector<288x128xbf16>
    %c0_23 = arith.constant 0 : index
    %c768 = arith.constant 768 : index
    %20 = vector.load %arg9[%c0_23, %c768] : memref<288x1152xbf16, #tpu.memory_space<vmem>>, vector<288x128xbf16>
    tpu.vector_store %arg9[%c0_23, %c768], %19 {strides = array<i32>} : memref<288x1152xbf16, #tpu.memory_space<vmem>>, vector<288x128xbf16>,
    %c37 = arith.constant 37 : index
    %c0_24 = arith.constant 0 : index
    %21 = vector.load %arg7[%c37, %c0_24] : memref<328x128xbf16, #tpu.memory_space<vmem>>, vector<288x128xbf16>
    %c0_25 = arith.constant 0 : index
    %c896 = arith.constant 896 : index
    %22 = vector.load %arg9[%c0_25, %c896] : memref<288x1152xbf16, #tpu.memory_space<vmem>>, vector<288x128xbf16>
    tpu.vector_store %arg9[%c0_25, %c896], %21 {strides = array<i32>} : memref<288x1152xbf16, #tpu.memory_space<vmem>>, vector<288x128xbf16>,
    %c38 = arith.constant 38 : index
    %c0_26 = arith.constant 0 : index
    %23 = vector.load %arg7[%c38, %c0_26] : memref<328x128xbf16, #tpu.memory_space<vmem>>, vector<288x128xbf16>
    %c0_27 = arith.constant 0 : index
    %c1024 = arith.constant 1024 : index
    %24 = vector.load %arg9[%c0_27, %c1024] : memref<288x1152xbf16, #tpu.memory_space<vmem>>, vector<288x128xbf16>
    tpu.vector_store %arg9[%c0_27, %c1024], %23 {strides = array<i32>} : memref<288x1152xbf16, #tpu.memory_space<vmem>>, vector<288x128xbf16>,
    %c0_28 = arith.constant 0 : index
    %c0_29 = arith.constant 0 : index
    %25 = vector.load %arg9[%c0_28, %c0_29] : memref<288x1152xbf16, #tpu.memory_space<vmem>>, vector<288x1152xbf16>
    %c0_30 = arith.constant 0 : index
    %c0_31 = arith.constant 0 : index
    %26 = vector.load %arg2[%c0_30, %c0_31] : memref<1152x128xbf16, #tpu.memory_space<vmem>>, vector<1152x128xbf16>
    %cst_32 = arith.constant dense<0.000000e+00> : vector<288x128xf32>
    %27 = tpu.matmul %25, %26, %cst_32 {dimension_numbers = #tpu.dot_dimension_numbers<[1], [0], [0], [1], [0, 0, 1, 1], [], []>} : vector<288x1152xbf16>, vector<1152x128xbf16>, vector<288x128xf32> -> vector<288x128xf32>
    %c0_33 = arith.constant 0 : index
    %c0_34 = arith.constant 0 : index
    %28 = vector.load %arg3[%c0_33, %c0_34] : memref<1x128xf32, #tpu.memory_space<vmem>>, vector<1x128xf32>
    %29 = vector.broadcast %28 : vector<1x128xf32> to vector<288x128xf32>
    %30 = arith.addf %27, %29 : vector<288x128xf32>
    %cst_35 = arith.constant 0.000000e+00 : f32
    %31 = vector.broadcast %cst_35 : f32 to vector<288x128xf32>
    %32 = arith.maximumf %30, %31 : vector<288x128xf32>
    %33 = tpu.iota {dimensions = array<i32: 0>} : vector<288x1xi32>
    %c18_i32 = arith.constant 18 : i32
    %c0_i32 = arith.constant 0 : i32
    %34 = arith.cmpi eq, %c18_i32, %c0_i32 : i32
    %c1_i32 = arith.constant 1 : i32
    %35 = arith.select %34, %c1_i32, %c18_i32 : i32
    %36 = vector.broadcast %35 : i32 to vector<288x1xi32>
    %37 = arith.remsi %33, %36 : vector<288x1xi32>
    %c0_i32_36 = arith.constant 0 : i32
    %38 = vector.broadcast %c0_i32_36 : i32 to vector<288x1xi32>
    %39 = arith.cmpi ne, %37, %38 : vector<288x1xi32>
    %c0_i32_37 = arith.constant 0 : i32
    %40 = vector.broadcast %c0_i32_37 : i32 to vector<288x1xi32>
    %41 = arith.cmpi slt, %37, %40 : vector<288x1xi32>
    %c0_i32_38 = arith.constant 0 : i32
    %42 = arith.cmpi slt, %35, %c0_i32_38 : i32
    %43 = vector.broadcast %42 : i1 to vector<288x1xi1>
    %44 = vector.broadcast %43 : vector<288x1xi1> to vector<288x1xi1>
    %45 = arith.xori %41, %44 : vector<288x1xi1>
    %46 = arith.andi %45, %39 : vector<288x1xi1>
    %47 = vector.broadcast %35 : i32 to vector<288x1xi32>
    %48 = arith.addi %37, %47 : vector<288x1xi32>
    %49 = arith.select %46, %48, %37 : vector<288x1xi1>, vector<288x1xi32>
    %c16_i32 = arith.constant 16 : i32
    %50 = vector.broadcast %c16_i32 : i32 to vector<288x1xi32>
    %51 = arith.cmpi slt, %49, %50 : vector<288x1xi32>
    %cst_39 = arith.constant 0.000000e+00 : f32
    %52 = vector.shape_cast %51 : vector<288x1xi1> to vector<288x1xi1>
    %53 = vector.broadcast %52 : vector<288x1xi1> to vector<288x128xi1>
    %54 = vector.broadcast %cst_39 : f32 to vector<288x128xf32>
    %55 = arith.select %53, %32, %54 : vector<288x128xi1>, vector<288x128xf32>
    %56 = arith.truncf %55 : vector<288x128xf32> to vector<288x128xbf16>
    %cst_40 = arith.constant 0.000000e+00 : bf16
    %57 = vector.broadcast %cst_40 : bf16 to vector<19x128xbf16>
    %c0_41 = arith.constant 0 : index
    %c0_42 = arith.constant 0 : index
    %58 = vector.load %arg8[%c0_41, %c0_42] : memref<328x128xbf16, #tpu.memory_space<vmem>>, vector<19x128xbf16>
    tpu.vector_store %arg8[%c0_41, %c0_42], %57 {strides = array<i32>} : memref<328x128xbf16, #tpu.memory_space<vmem>>, vector<19x128xbf16>,
    %c19_43 = arith.constant 19 : index
    %c0_44 = arith.constant 0 : index
    %59 = vector.load %arg8[%c19_43, %c0_44] : memref<328x128xbf16, #tpu.memory_space<vmem>>, vector<288x128xbf16>
    tpu.vector_store %arg8[%c19_43, %c0_44], %56 {strides = array<i32>} : memref<328x128xbf16, #tpu.memory_space<vmem>>, vector<288x128xbf16>,
    %cst_45 = arith.constant 0.000000e+00 : bf16
    %60 = vector.broadcast %cst_45 : bf16 to vector<21x128xbf16>
    %c307 = arith.constant 307 : index
    %c0_46 = arith.constant 0 : index
    %61 = vector.load %arg8[%c307, %c0_46] : memref<328x128xbf16, #tpu.memory_space<vmem>>, vector<21x128xbf16>
    tpu.vector_store %arg8[%c307, %c0_46], %60 {strides = array<i32>} : memref<328x128xbf16, #tpu.memory_space<vmem>>, vector<21x128xbf16>,
    %c0_47 = arith.constant 0 : index
    %c0_48 = arith.constant 0 : index
    %62 = vector.load %arg8[%c0_47, %c0_48] : memref<328x128xbf16, #tpu.memory_space<vmem>>, vector<288x128xbf16>
    %c0_49 = arith.constant 0 : index
    %c0_50 = arith.constant 0 : index
    %63 = vector.load %arg10[%c0_49, %c0_50] : memref<288x1152xbf16, #tpu.memory_space<vmem>>, vector<288x128xbf16>
    tpu.vector_store %arg10[%c0_49, %c0_50], %62 {strides = array<i32>} : memref<288x1152xbf16, #tpu.memory_space<vmem>>, vector<288x128xbf16>,
    %c1_51 = arith.constant 1 : index
    %c0_52 = arith.constant 0 : index
    %64 = vector.load %arg8[%c1_51, %c0_52] : memref<328x128xbf16, #tpu.memory_space<vmem>>, vector<288x128xbf16>
    %c0_53 = arith.constant 0 : index
    %c128_54 = arith.constant 128 : index
    %65 = vector.load %arg10[%c0_53, %c128_54] : memref<288x1152xbf16, #tpu.memory_space<vmem>>, vector<288x128xbf16>
    tpu.vector_store %arg10[%c0_53, %c128_54], %64 {strides = array<i32>} : memref<288x1152xbf16, #tpu.memory_space<vmem>>, vector<288x128xbf16>,
    %c2_55 = arith.constant 2 : index
    %c0_56 = arith.constant 0 : index
    %66 = vector.load %arg8[%c2_55, %c0_56] : memref<328x128xbf16, #tpu.memory_space<vmem>>, vector<288x128xbf16>
    %c0_57 = arith.constant 0 : index
    %c256_58 = arith.constant 256 : index
    %67 = vector.load %arg10[%c0_57, %c256_58] : memref<288x1152xbf16, #tpu.memory_space<vmem>>, vector<288x128xbf16>
    tpu.vector_store %arg10[%c0_57, %c256_58], %66 {strides = array<i32>} : memref<288x1152xbf16, #tpu.memory_space<vmem>>, vector<288x128xbf16>,
    %c18_59 = arith.constant 18 : index
    %c0_60 = arith.constant 0 : index
    %68 = vector.load %arg8[%c18_59, %c0_60] : memref<328x128xbf16, #tpu.memory_space<vmem>>, vector<288x128xbf16>
    %c0_61 = arith.constant 0 : index
    %c384_62 = arith.constant 384 : index
    %69 = vector.load %arg10[%c0_61, %c384_62] : memref<288x1152xbf16, #tpu.memory_space<vmem>>, vector<288x128xbf16>
    tpu.vector_store %arg10[%c0_61, %c384_62], %68 {strides = array<i32>} : memref<288x1152xbf16, #tpu.memory_space<vmem>>, vector<288x128xbf16>,
    %c19_63 = arith.constant 19 : index
    %c0_64 = arith.constant 0 : index
    %70 = vector.load %arg8[%c19_63, %c0_64] : memref<328x128xbf16, #tpu.memory_space<vmem>>, vector<288x128xbf16>
    %c0_65 = arith.constant 0 : index
    %c512_66 = arith.constant 512 : index
    %71 = vector.load %arg10[%c0_65, %c512_66] : memref<288x1152xbf16, #tpu.memory_space<vmem>>, vector<288x128xbf16>
    tpu.vector_store %arg10[%c0_65, %c512_66], %70 {strides = array<i32>} : memref<288x1152xbf16, #tpu.memory_space<vmem>>, vector<288x128xbf16>,
    %c20_67 = arith.constant 20 : index
    %c0_68 = arith.constant 0 : index
    %72 = vector.load %arg8[%c20_67, %c0_68] : memref<328x128xbf16, #tpu.memory_space<vmem>>, vector<288x128xbf16>
    %c0_69 = arith.constant 0 : index
    %c640_70 = arith.constant 640 : index
    %73 = vector.load %arg10[%c0_69, %c640_70] : memref<288x1152xbf16, #tpu.memory_space<vmem>>, vector<288x128xbf16>
    tpu.vector_store %arg10[%c0_69, %c640_70], %72 {strides = array<i32>} : memref<288x1152xbf16, #tpu.memory_space<vmem>>, vector<288x128xbf16>,
    %c36_71 = arith.constant 36 : index
    %c0_72 = arith.constant 0 : index
    %74 = vector.load %arg8[%c36_71, %c0_72] : memref<328x128xbf16, #tpu.memory_space<vmem>>, vector<288x128xbf16>
    %c0_73 = arith.constant 0 : index
    %c768_74 = arith.constant 768 : index
    %75 = vector.load %arg10[%c0_73, %c768_74] : memref<288x1152xbf16, #tpu.memory_space<vmem>>, vector<288x128xbf16>
    tpu.vector_store %arg10[%c0_73, %c768_74], %74 {strides = array<i32>} : memref<288x1152xbf16, #tpu.memory_space<vmem>>, vector<288x128xbf16>,
    %c37_75 = arith.constant 37 : index
    %c0_76 = arith.constant 0 : index
    %76 = vector.load %arg8[%c37_75, %c0_76] : memref<328x128xbf16, #tpu.memory_space<vmem>>, vector<288x128xbf16>
    %c0_77 = arith.constant 0 : index
    %c896_78 = arith.constant 896 : index
    %77 = vector.load %arg10[%c0_77, %c896_78] : memref<288x1152xbf16, #tpu.memory_space<vmem>>, vector<288x128xbf16>
    tpu.vector_store %arg10[%c0_77, %c896_78], %76 {strides = array<i32>} : memref<288x1152xbf16, #tpu.memory_space<vmem>>, vector<288x128xbf16>,
    %c38_79 = arith.constant 38 : index
    %c0_80 = arith.constant 0 : index
    %78 = vector.load %arg8[%c38_79, %c0_80] : memref<328x128xbf16, #tpu.memory_space<vmem>>, vector<288x128xbf16>
    %c0_81 = arith.constant 0 : index
    %c1024_82 = arith.constant 1024 : index
    %79 = vector.load %arg10[%c0_81, %c1024_82] : memref<288x1152xbf16, #tpu.memory_space<vmem>>, vector<288x128xbf16>
    tpu.vector_store %arg10[%c0_81, %c1024_82], %78 {strides = array<i32>} : memref<288x1152xbf16, #tpu.memory_space<vmem>>, vector<288x128xbf16>,
    %c0_83 = arith.constant 0 : index
    %c0_84 = arith.constant 0 : index
    %80 = vector.load %arg10[%c0_83, %c0_84] : memref<288x1152xbf16, #tpu.memory_space<vmem>>, vector<288x1152xbf16>
    %c0_85 = arith.constant 0 : index
    %c0_86 = arith.constant 0 : index
    %81 = vector.load %arg4[%c0_85, %c0_86] : memref<1152x128xbf16, #tpu.memory_space<vmem>>, vector<1152x128xbf16>
    %cst_87 = arith.constant dense<0.000000e+00> : vector<288x128xf32>
    %82 = tpu.matmul %80, %81, %cst_87 {dimension_numbers = #tpu.dot_dimension_numbers<[1], [0], [0], [1], [0, 0, 1, 1], [], []>} : vector<288x1152xbf16>, vector<1152x128xbf16>, vector<288x128xf32> -> vector<288x128xf32>
    %c0_88 = arith.constant 0 : index
    %c0_89 = arith.constant 0 : index
    %83 = vector.load %arg5[%c0_88, %c0_89] : memref<1x128xf32, #tpu.memory_space<vmem>>, vector<1x128xf32>
    %84 = vector.broadcast %83 : vector<1x128xf32> to vector<288x128xf32>
    %85 = arith.addf %82, %84 : vector<288x128xf32>
    %cst_90 = arith.constant 0.000000e+00 : f32
    %86 = vector.broadcast %cst_90 : f32 to vector<288x128xf32>
    %87 = arith.maximumf %85, %86 : vector<288x128xf32>
    %c0_91 = arith.constant 0 : index
    %c0_92 = arith.constant 0 : index
    %c0_93 = arith.constant 0 : index
    %88 = vector.load %arg6[%c0_91, %c0_92, %c0_93] : memref<1x288x128xf32, #tpu.memory_space<vmem>>, vector<1x288x128xf32>
    %89 = vector.shape_cast %88 : vector<1x288x128xf32> to vector<288x128xf32>
    %90 = vector.shape_cast %87 : vector<288x128xf32> to vector<1x288x128xf32>
    tpu.vector_store %arg6[%c0_91, %c0_92, %c0_93], %90 {strides = array<i32>} : memref<1x288x128xf32, #tpu.memory_space<vmem>>, vector<1x288x128xf32>,
    return
  }
  func.func @transform_0(%arg0: i32) -> (i32, i32, i32) {
    %c0_i32 = arith.constant 0 : i32
    %c0_i32_0 = arith.constant 0 : i32
    %c0_i32_1 = arith.constant 0 : i32
    return %arg0, %c0_i32, %c0_i32_0 : i32, i32, i32
  }
  func.func @transform_1(%arg0: i32) -> (i32, i32) {
    %c0_i32 = arith.constant 0 : i32
    %c0_i32_0 = arith.constant 0 : i32
    %c0_i32_1 = arith.constant 0 : i32
    return %c0_i32, %c0_i32_0 : i32, i32
  }
  func.func @transform_2(%arg0: i32) -> (i32, i32) {
    %c0_i32 = arith.constant 0 : i32
    %c0_i32_0 = arith.constant 0 : i32
    %c0_i32_1 = arith.constant 0 : i32
    return %c0_i32, %c0_i32_0 : i32, i32
  }
  func.func @transform_3(%arg0: i32) -> (i32, i32) {
    %c0_i32 = arith.constant 0 : i32
    %c0_i32_0 = arith.constant 0 : i32
    %c0_i32_1 = arith.constant 0 : i32
    return %c0_i32, %c0_i32_0 : i32, i32
  }
  func.func @transform_4(%arg0: i32) -> (i32, i32) {
    %c0_i32 = arith.constant 0 : i32
    %c0_i32_0 = arith.constant 0 : i32
    %c0_i32_1 = arith.constant 0 : i32
    return %c0_i32, %c0_i32_0 : i32, i32
  }
  func.func @transform_5(%arg0: i32) -> (i32, i32, i32) {
    %c0_i32 = arith.constant 0 : i32
    %c0_i32_0 = arith.constant 0 : i32
    %c0_i32_1 = arith.constant 0 : i32
    return %arg0, %c0_i32, %c0_i32_0 : i32, i32, i32
  }
}

</mosaic_0001>

<llo_original>
// kernel: double_conv_pallas.1
$region0: #{double_conv_pallas.1}
  #allocation0 [shape = 'u32[]', space=smem, size = 0x4, offset = 0x4, fixed_abs, tag = 'smem constant byte address 0x4 - core index']
  #allocation1 [shape = 'u32[72,128]{1,0:T(1,128)}', space=vmem, size = 0x9000, scoped, tag = 'internal scratch']
  #allocation2 [shape = 'bf16[328,128]{1,0:T(8,128)(2,1)}', space=vmem, size = 0x14800, scoped, tag = 'scratch operand']
  #allocation3 [shape = 'bf16[328,128]{1,0:T(8,128)(2,1)}', space=vmem, size = 0x14800, scoped, tag = 'scratch operand']
  #allocation4 [shape = 'bf16[288,1152]{1,0:T(8,128)(2,1)}', space=vmem, size = 0xa2000, scoped, tag = 'scratch operand']
  #allocation5 [shape = 'bf16[288,1152]{1,0:T(8,128)(2,1)}', space=vmem, size = 0xa2000, scoped, tag = 'scratch operand']
  %s0 = inlined_call_operand.vmem [shape: bf16[2,288,128], index: 0, kind: input, shape index: {}]
  %s1 = inlined_call_operand.vmem [shape: bf16[1152,128], index: 1, kind: input, shape index: {}]
  %s2 = inlined_call_operand.vmem [shape: f32[1,128], index: 2, kind: input, shape index: {}]
  %s3 = inlined_call_operand.vmem [shape: bf16[1152,128], index: 3, kind: input, shape index: {}]
  %s4 = inlined_call_operand.vmem [shape: f32[1,128], index: 4, kind: input, shape index: {}]
  %s5 = inlined_call_operand.vmem [shape: f32[2,288,128], index: 5, kind: output, shape index: {}]
  %s6 = sld [smem:[#allocation0]]
  $region53: #{double_conv_pallas.1} parent=0
    _
  %s8 = ssub.s32 1, %s6
  %s9 = scalar_select 0, %s8, %s6
  loop: start=0, step=1, limit=4
  $region2: #{double_conv_pallas.1} parent=0 // loop_pre_header
    _
  $region3: #{double_conv_pallas.1} parent=0 // loop_header
    %s11 = sphi 0, %s15
    %p12 = scmp.ge.s32.totalorder %s11, 4
    %s21 = sphi 0, %s23
    %s24 = sphi 0, %s21
    %s25 = sphi 0, %s24
    %s41 = sphi 0, %s25
    %s45 = sphi 0, %s45
    %s47 = sphi 0, %s45
    %s48 = sphi 0, %s47
    %s62 = sphi 0, %s48
    %s66 = sphi 0, %s66
    %s68 = sphi 0, %s66
    %s69 = sphi 0, %s68
    %s83 = sphi 0, %s69
    %s87 = sphi 0, %s87
    %s89 = sphi 0, %s87
    %s90 = sphi 0, %s89
    %s104 = sphi 0, %s90
    %s108 = sphi 0, %s108
    %s110 = sphi 0, %s108
    %s111 = sphi 0, %s110
    %s125 = sphi 0, %s111
    %s131 = sphi 0, %s133
    %s134 = sphi 0, %s131
    %s135 = sphi 0, %s134
    %s151 = sphi 0, %s135
  $region4: #{double_conv_pallas.1} parent=0 // loop_header_branch
    %14 = sbr.rel (%p12) target = $region8
  $region5: #{double_conv_pallas.1} parent=0 // loop_body
    %s16 = ssub.s32 %s11, 1
    %s17 = ssub.s32 %s11, 2
    %s18 = sadd.s32 %s11, 1
    %s19 = ssub.s32 %s11, %s18
    %p20 = scmp.eq.s32.totalorder %s19, 0
    %s22 = sadd.s32 %s21, 1
    %s23 = scalar_select %p20, %s21, %s22
    %p26 = pneg %p20
    %p27 = scmp.eq.s32.totalorder %s11, 1
    %p28 = por %p26, %p27
    %p29 = scmp.ne.s32.totalorder %s21, %s24
    %p30 = scmp.eq.s32.totalorder %s11, 0
    %p31 = por %p29, %p30
    %p32 = scmp.ne.s32.totalorder %s21, %s24
    %p33 = scmp.eq.s32.totalorder %s16, 1
    %p34 = por %p32, %p33
    %p35 = scmp.ne.s32.totalorder %s24, %s25
    %p36 = scmp.eq.s32.totalorder %s16, 0
    %p37 = por %p35, %p36
    %p38 = scmp.ne.s32.totalorder %s24, %s25
    %p39 = scmp.eq.s32.totalorder %s17, 1
    %p40 = por %p38, %p39
    %p42 = scmp.ne.s32.totalorder %s25, %s41
    %p43 = scmp.eq.s32.totalorder %s17, 0
    %p44 = por %p42, %p43
    %s46 = sadd.s32 %s45, 1
    %p49 = scmp.eq.s32.totalorder %s11, 1
    %p50 = scmp.ne.s32.totalorder %s45, %s47
    %p51 = scmp.eq.s32.totalorder %s11, 0
    %p52 = por %p50, %p51
    %p53 = scmp.ne.s32.totalorder %s45, %s47
    %p54 = scmp.eq.s32.totalorder %s16, 1
    %p55 = por %p53, %p54
    %p56 = scmp.ne.s32.totalorder %s47, %s48
    %p57 = scmp.eq.s32.totalorder %s16, 0
    %p58 = por %p56, %p57
    %p59 = scmp.ne.s32.totalorder %s47, %s48
    %p60 = scmp.eq.s32.totalorder %s17, 1
    %p61 = por %p59, %p60
    %p63 = scmp.ne.s32.totalorder %s48, %s62
    %p64 = scmp.eq.s32.totalorder %s17, 0
    %p65 = por %p63, %p64
    %s67 = sadd.s32 %s66, 1
    %p70 = scmp.eq.s32.totalorder %s11, 1
    %p71 = scmp.ne.s32.totalorder %s66, %s68
    %p72 = scmp.eq.s32.totalorder %s11, 0
    %p73 = por %p71, %p72
    %p74 = scmp.ne.s32.totalorder %s66, %s68
    %p75 = scmp.eq.s32.totalorder %s16, 1
    %p76 = por %p74, %p75
    %p77 = scmp.ne.s32.totalorder %s68, %s69
    %p78 = scmp.eq.s32.totalorder %s16, 0
    %p79 = por %p77, %p78
    %p80 = scmp.ne.s32.totalorder %s68, %s69
    %p81 = scmp.eq.s32.totalorder %s17, 1
    %p82 = por %p80, %p81
    %p84 = scmp.ne.s32.totalorder %s69, %s83
    %p85 = scmp.eq.s32.totalorder %s17, 0
    %p86 = por %p84, %p85
    %s88 = sadd.s32 %s87, 1
    %p91 = scmp.eq.s32.totalorder %s11, 1
    %p92 = scmp.ne.s32.totalorder %s87, %s89
    %p93 = scmp.eq.s32.totalorder %s11, 0
    %p94 = por %p92, %p93
    %p95 = scmp.ne.s32.totalorder %s87, %s89
    %p96 = scmp.eq.s32.totalorder %s16, 1
    %p97 = por %p95, %p96
    %p98 = scmp.ne.s32.totalorder %s89, %s90
    %p99 = scmp.eq.s32.totalorder %s16, 0
    %p100 = por %p98, %p99
    %p101 = scmp.ne.s32.totalorder %s89, %s90
    %p102 = scmp.eq.s32.totalorder %s17, 1
    %p103 = por %p101, %p102
    %p105 = scmp.ne.s32.totalorder %s90, %s104
    %p106 = scmp.eq.s32.totalorder %s17, 0
    %p107 = por %p105, %p106
    %s109 = sadd.s32 %s108, 1
    %p112 = scmp.eq.s32.totalorder %s11, 1
    %p113 = scmp.ne.s32.totalorder %s108, %s110
    %p114 = scmp.eq.s32.totalorder %s11, 0
    %p115 = por %p113, %p114
    %p116 = scmp.ne.s32.totalorder %s108, %s110
    %p117 = scmp.eq.s32.totalorder %s16, 1
    %p118 = por %p116, %p117
    %p119 = scmp.ne.s32.totalorder %s110, %s111
    %p120 = scmp.eq.s32.totalorder %s16, 0
    %p121 = por %p119, %p120
    %p122 = scmp.ne.s32.totalorder %s110, %s111
    %p123 = scmp.eq.s32.totalorder %s17, 1
    %p124 = por %p122, %p123
    %p126 = scmp.ne.s32.totalorder %s111, %s125
    %p127 = scmp.eq.s32.totalorder %s17, 0
    %p128 = por %p126, %p127
    %s129 = ssub.s32 %s11, %s18
    %p130 = scmp.eq.s32.totalorder %s129, 0
    %s132 = sadd.s32 %s131, 1
    %s133 = scalar_select %p130, %s131, %s132
    %p136 = pneg %p130
    %p137 = scmp.eq.s32.totalorder %s11, 1
    %p138 = por %p136, %p137
    %p139 = scmp.ne.s32.totalorder %s131, %s134
    %p140 = scmp.eq.s32.totalorder %s11, 0
    %p141 = por %p139, %p140
    %p142 = scmp.ne.s32.totalorder %s131, %s134
    %p143 = scmp.eq.s32.totalorder %s16, 1
    %p144 = por %p142, %p143
    %p145 = scmp.ne.s32.totalorder %s134, %s135
    %p146 = scmp.eq.s32.totalorder %s16, 0
    %p147 = por %p145, %p146
    %p148 = scmp.ne.s32.totalorder %s134, %s135
    %p149 = scmp.eq.s32.totalorder %s17, 1
    %p150 = por %p148, %p149
    %p152 = scmp.ne.s32.totalorder %s135, %s151
    %p153 = scmp.eq.s32.totalorder %s17, 0
    %p154 = por %p152, %p153
    %p155 = scmp.le.s32.totalorder 1, %s11
    %p156 = scmp.lt.s32.totalorder %s11, 3
    %p157 = pnand %p155, %p156
    %p158 = pneg %p157
    // Predicated region
    $region9: #{double_conv_pallas.1} parent=5 // pred_check
      _
    $region10: #{double_conv_pallas.1} parent=5 // pred_check_branch
      %160 = sbr.rel (%p157) target = $region12
    $region11: #{double_conv_pallas.1} parent=5 // pred_region
      %s161 = ssub.s32 %s11, 1
      // Predicated region
      $region13: #{double_conv_pallas.1} parent=11 // pred_check
        %p162 = pneg %p58
      $region14: #{double_conv_pallas.1} parent=11 // pred_check_branch
        %164 = sbr.rel (%p162) target = $region16
      $region15: #{double_conv_pallas.1} parent=11 // pred_region
        _
      $region16: #{double_conv_pallas.1} parent=11 // pred_fallthru
        _
      // Predicated region
      $region17: #{double_conv_pallas.1} parent=11 // pred_check
        %p165 = pneg %p79
      $region18: #{double_conv_pallas.1} parent=11 // pred_check_branch
        %167 = sbr.rel (%p165) target = $region20
      $region19: #{double_conv_pallas.1} parent=11 // pred_region
        _
      $region20: #{double_conv_pallas.1} parent=11 // pred_fallthru
        _
      // Predicated region
      $region21: #{double_conv_pallas.1} parent=11 // pred_check
        %p168 = pneg %p100
      $region22: #{double_conv_pallas.1} parent=11 // pred_check_branch
        %170 = sbr.rel (%p168) target = $region24
      $region23: #{double_conv_pallas.1} parent=11 // pred_region
        _
      $region24: #{double_conv_pallas.1} parent=11 // pred_fallthru
        _
      // Predicated region
      $region25: #{double_conv_pallas.1} parent=11 // pred_check
        %p171 = pneg %p121
      $region26: #{double_conv_pallas.1} parent=11 // pred_check_branch
        %173 = sbr.rel (%p171) target = $region28
      $region27: #{double_conv_pallas.1} parent=11 // pred_region
        _
      $region28: #{double_conv_pallas.1} parent=11 // pred_fallthru
        _
    $region12: #{double_conv_pallas.1} parent=5 // pred_fallthru
      _
    %p174 = scmp.lt.s32.totalorder %s11, 2
    // Predicated region
    $region29: #{double_conv_pallas.1} parent=5 // pred_check
      %p175 = pneg %p174
    $region30: #{double_conv_pallas.1} parent=5 // pred_check_branch
      %177 = sbr.rel (%p175) target = $region32
    $region31: #{double_conv_pallas.1} parent=5 // pred_region
      // Predicated region
      $region33: #{double_conv_pallas.1} parent=31 // pred_check
        %p178 = pneg %p31
      $region34: #{double_conv_pallas.1} parent=31 // pred_check_branch
        %180 = sbr.rel (%p178) target = $region36
      $region35: #{double_conv_pallas.1} parent=31 // pred_region
        %p181 = scmp.lt.s32.totalorder %s11, 1
        %s182 = scalar_select %p181, %s11, 1
        %s183 = smul.addr %s182, 36
        %s184 = smul.addr %s183, 4
        %s185 = scalar_lea.vmem %s0, %s184
      $region36: #{double_conv_pallas.1} parent=31 // pred_fallthru
        _
    $region32: #{double_conv_pallas.1} parent=5 // pred_fallthru
      _
    %p186 = scmp.le.s32.totalorder 1, %s11
    %p187 = scmp.lt.s32.totalorder %s11, 3
    %p188 = pnand %p186, %p187
    %p189 = pneg %p188
    // Predicated region
    $region37: #{double_conv_pallas.1} parent=5 // pred_check
      _
    $region38: #{double_conv_pallas.1} parent=5 // pred_check_branch
      %191 = sbr.rel (%p188) target = $region40
    $region39: #{double_conv_pallas.1} parent=5 // pred_region
      %s192 = ssub.s32 %s11, 1
      %p193 = scmp.lt.s32.totalorder %s16, 1
      %s194 = scalar_select %p193, %s16, 1
      %s195 = smul.addr %s194, 36
      %s196 = smul.addr %s195, 4
      %s197 = scalar_lea.vmem %s0, %s196
      %p198 = pneg %p37
      %p199 = pneg %p34
      %p200 = pneg %p58
      %p201 = pneg %p55
      %p202 = pneg %p79
      %p203 = pneg %p76
      %p204 = pneg %p100
      %p205 = pneg %p97
      %p206 = pneg %p121
      %p207 = pneg %p118
      %p208 = pneg %p147
      %p209 = pneg %p144
      %p210 = scmp.lt.s32.totalorder %s16, 1
      %s211 = scalar_select %p210, %s16, 1
      %s212 = smul.addr %s211, 36
      %s213 = smul.addr %s212, 8
      %s214 = scalar_lea.vmem %s5, %s213
      %p215 = scmp.lt.s32.totalorder %s16, 1
      %s216 = scalar_select %p215, %s16, 1
      %s217 = smul.addr %s216, 36
      %s218 = smul.addr %s217, 4
      %s219 = scalar_lea.vmem %s0, %s218
      %p220 = scmp.lt.s32.totalorder %s16, 1
      %s221 = scalar_select %p220, %s16, 1
      %s222 = smul.addr %s221, 36
      %s223 = smul.addr %s222, 8
      %s224 = scalar_lea.vmem %s5, %s223
      %226 = vst [vmem:[#allocation2] sm:$0xf] 0
      %227 = vst [vmem:[#allocation2 + $0x4] sm:$0xf] 0
      %228 = vst [vmem:[#allocation2 + $0x8] sm:$0x1] 0
      %v229 = vld [vmem:[%s219] sm:$0xf]
      %v230 = vld [vmem:[%s219 + $0x4] sm:$0xf]
      %v231 = vld [vmem:[%s219 + $0x8] sm:$0xf]
      %v232 = vld [vmem:[%s219 + $0xc] sm:$0xf]
      %v233 = vld [vmem:[%s219 + $0x10] sm:$0xf]
      %v234 = vld [vmem:[%s219 + $0x14] sm:$0xf]
      %v235 = vld [vmem:[%s219 + $0x18] sm:$0xf]
      %v236 = vld [vmem:[%s219 + $0x1c] sm:$0xf]
      %v237 = vld [vmem:[%s219 + $0x20] sm:$0xf]
      %v238 = vld [vmem:[%s219 + $0x24] sm:$0xf]
      %v239 = vld [vmem:[%s219 + $0x28] sm:$0xf]
      %v240 = vld [vmem:[%s219 + $0x2c] sm:$0xf]
      %v241 = vld [vmem:[%s219 + $0x30] sm:$0xf]
      %v242 = vld [vmem:[%s219 + $0x34] sm:$0xf]
      %v243 = vld [vmem:[%s219 + $0x38] sm:$0xf]
      %v244 = vld [vmem:[%s219 + $0x3c] sm:$0xf]
      %v245 = vld [vmem:[%s219 + $0x40] sm:$0xf]
      %v246 = vld [vmem:[%s219 + $0x44] sm:$0xf]
      %v247 = vld [vmem:[%s219 + $0x48] sm:$0xf]
      %v248 = vld [vmem:[%s219 + $0x4c] sm:$0xf]
      %v249 = vld [vmem:[%s219 + $0x50] sm:$0xf]
      %v250 = vld [vmem:[%s219 + $0x54] sm:$0xf]
      %v251 = vld [vmem:[%s219 + $0x58] sm:$0xf]
      %v252 = vld [vmem:[%s219 + $0x5c] sm:$0xf]
      %v253 = vld [vmem:[%s219 + $0x60] sm:$0xf]
      %v254 = vld [vmem:[%s219 + $0x64] sm:$0xf]
      %v255 = vld [vmem:[%s219 + $0x68] sm:$0xf]
      %v256 = vld [vmem:[%s219 + $0x6c] sm:$0xf]
      %v257 = vld [vmem:[%s219 + $0x70] sm:$0xf]
      %v258 = vld [vmem:[%s219 + $0x74] sm:$0xf]
      %v259 = vld [vmem:[%s219 + $0x78] sm:$0xf]
      %v260 = vld [vmem:[%s219 + $0x7c] sm:$0xf]
      %v261 = vld [vmem:[%s219 + $0x80] sm:$0xf]
      %v262 = vld [vmem:[%s219 + $0x84] sm:$0xf]
      %v263 = vld [vmem:[%s219 + $0x88] sm:$0xf]
      %v264 = vld [vmem:[%s219 + $0x8c] sm:$0xf]
      %vm301 = vcmask 1040384
      %vm302 = vcmask 1044484
      %vm303 = vmor %vm301, %vm302
      %v304 = vrot.slane %v229, 7
      %v305 = vrot.slane %v304, 4
      %v306 = vrot.slane %v230, 7
      %v307 = vsel %vm303, %v305, %v306
      %v308 = vrot.slane %v306, 4
      %v309 = vrot.slane %v231, 7
      %v310 = vsel %vm303, %v308, %v309
      %v311 = vrot.slane %v309, 4
      %v312 = vrot.slane %v232, 7
      %v313 = vsel %vm303, %v311, %v312
      %v314 = vrot.slane %v312, 4
      %v315 = vrot.slane %v233, 7
      %v316 = vsel %vm303, %v314, %v315
      %v317 = vrot.slane %v315, 4
      %v318 = vrot.slane %v234, 7
      %v319 = vsel %vm303, %v317, %v318
      %v320 = vrot.slane %v318, 4
      %v321 = vrot.slane %v235, 7
      %v322 = vsel %vm303, %v320, %v321
      %v323 = vrot.slane %v321, 4
      %v324 = vrot.slane %v236, 7
      %v325 = vsel %vm303, %v323, %v324
      %v326 = vrot.slane %v324, 4
      %v327 = vrot.slane %v237, 7
      %v328 = vsel %vm303, %v326, %v327
      %v329 = vrot.slane %v327, 4
      %v330 = vrot.slane %v238, 7
      %v331 = vsel %vm303, %v329, %v330
      %v332 = vrot.slane %v330, 4
      %v333 = vrot.slane %v239, 7
      %v334 = vsel %vm303, %v332, %v333
      %v335 = vrot.slane %v333, 4
      %v336 = vrot.slane %v240, 7
      %v337 = vsel %vm303, %v335, %v336
      %v338 = vrot.slane %v336, 4
      %v339 = vrot.slane %v241, 7
      %v340 = vsel %vm303, %v338, %v339
      %v341 = vrot.slane %v339, 4
      %v342 = vrot.slane %v242, 7
      %v343 = vsel %vm303, %v341, %v342
      %v344 = vrot.slane %v342, 4
      %v345 = vrot.slane %v243, 7
      %v346 = vsel %vm303, %v344, %v345
      %v347 = vrot.slane %v345, 4
      %v348 = vrot.slane %v244, 7
      %v349 = vsel %vm303, %v347, %v348
      %v350 = vrot.slane %v348, 4
      %v351 = vrot.slane %v245, 7
      %v352 = vsel %vm303, %v350, %v351
      %v353 = vrot.slane %v351, 4
      %v354 = vrot.slane %v246, 7
      %v355 = vsel %vm303, %v353, %v354
      %v356 = vrot.slane %v354, 4
      %v357 = vrot.slane %v247, 7
      %v358 = vsel %vm303, %v356, %v357
      %v359 = vrot.slane %v357, 4
      %v360 = vrot.slane %v248, 7
      %v361 = vsel %vm303, %v359, %v360
      %v362 = vrot.slane %v360, 4
      %v363 = vrot.slane %v249, 7
      %v364 = vsel %vm303, %v362, %v363
      %v365 = vrot.slane %v363, 4
      %v366 = vrot.slane %v250, 7
      %v367 = vsel %vm303, %v365, %v366
      %v368 = vrot.slane %v366, 4
      %v369 = vrot.slane %v251, 7
      %v370 = vsel %vm303, %v368, %v369
      %v371 = vrot.slane %v369, 4
      %v372 = vrot.slane %v252, 7
      %v373 = vsel %vm303, %v371, %v372
      %v374 = vrot.slane %v372, 4
      %v375 = vrot.slane %v253, 7
      %v376 = vsel %vm303, %v374, %v375
      %v377 = vrot.slane %v375, 4
      %v378 = vrot.slane %v254, 7
      %v379 = vsel %vm303, %v377, %v378
      %v380 = vrot.slane %v378, 4
      %v381 = vrot.slane %v255, 7
      %v382 = vsel %vm303, %v380, %v381
      %v383 = vrot.slane %v381, 4
      %v384 = vrot.slane %v256, 7
      %v385 = vsel %vm303, %v383, %v384
      %v386 = vrot.slane %v384, 4
      %v387 = vrot.slane %v257, 7
      %v388 = vsel %vm303, %v386, %v387
      %v389 = vrot.slane %v387, 4
      %v390 = vrot.slane %v258, 7
      %v391 = vsel %vm303, %v389, %v390
      %v392 = vrot.slane %v390, 4
      %v393 = vrot.slane %v259, 7
      %v394 = vsel %vm303, %v392, %v393
      %v395 = vrot.slane %v393, 4
      %v396 = vrot.slane %v260, 7
      %v397 = vsel %vm303, %v395, %v396
      %v398 = vrot.slane %v396, 4
      %v399 = vrot.slane %v261, 7
      %v400 = vsel %vm303, %v398, %v399
      %v401 = vrot.slane %v399, 4
      %v402 = vrot.slane %v262, 7
      %v403 = vsel %vm303, %v401, %v402
      %v404 = vrot.slane %v402, 4
      %v405 = vrot.slane %v263, 7
      %v406 = vsel %vm303, %v404, %v405
      %v407 = vrot.slane %v405, 4
      %v408 = vrot.slane %v264, 7
      %v409 = vsel %vm303, %v407, %v408
      %v410 = vrot.slane %v408, 4
      %448 = vst [vmem:[#allocation2 + $0x8] sm:$0xe] %v304
      %449 = vst [vmem:[#allocation2 + $0xc] sm:$0xf] %v307
      %450 = vst [vmem:[#allocation2 + $0x10] sm:$0xf] %v310
      %451 = vst [vmem:[#allocation2 + $0x14] sm:$0xf] %v313
      %452 = vst [vmem:[#allocation2 + $0x18] sm:$0xf] %v316
      %453 = vst [vmem:[#allocation2 + $0x1c] sm:$0xf] %v319
      %454 = vst [vmem:[#allocation2 + $0x20] sm:$0xf] %v322
      %455 = vst [vmem:[#allocation2 + $0x24] sm:$0xf] %v325
      %456 = vst [vmem:[#allocation2 + $0x28] sm:$0xf] %v328
      %457 = vst [vmem:[#allocation2 + $0x2c] sm:$0xf] %v331
      %458 = vst [vmem:[#allocation2 + $0x30] sm:$0xf] %v334
      %459 = vst [vmem:[#allocation2 + $0x34] sm:$0xf] %v337
      %460 = vst [vmem:[#allocation2 + $0x38] sm:$0xf] %v340
      %461 = vst [vmem:[#allocation2 + $0x3c] sm:$0xf] %v343
      %462 = vst [vmem:[#allocation2 + $0x40] sm:$0xf] %v346
      %463 = vst [vmem:[#allocation2 + $0x44] sm:$0xf] %v349
      %464 = vst [vmem:[#allocation2 + $0x48] sm:$0xf] %v352
      %465 = vst [vmem:[#allocation2 + $0x4c] sm:$0xf] %v355
      %466 = vst [vmem:[#allocation2 + $0x50] sm:$0xf] %v358
      %467 = vst [vmem:[#allocation2 + $0x54] sm:$0xf] %v361
      %468 = vst [vmem:[#allocation2 + $0x58] sm:$0xf] %v364
      %469 = vst [vmem:[#allocation2 + $0x5c] sm:$0xf] %v367
      %470 = vst [vmem:[#allocation2 + $0x60] sm:$0xf] %v370
      %471 = vst [vmem:[#allocation2 + $0x64] sm:$0xf] %v373
      %472 = vst [vmem:[#allocation2 + $0x68] sm:$0xf] %v376
      %473 = vst [vmem:[#allocation2 + $0x6c] sm:$0xf] %v379
      %474 = vst [vmem:[#allocation2 + $0x70] sm:$0xf] %v382
      %475 = vst [vmem:[#allocation2 + $0x74] sm:$0xf] %v385
      %476 = vst [vmem:[#allocation2 + $0x78] sm:$0xf] %v388
      %477 = vst [vmem:[#allocation2 + $0x7c] sm:$0xf] %v391
      %478 = vst [vmem:[#allocation2 + $0x80] sm:$0xf] %v394
      %479 = vst [vmem:[#allocation2 + $0x84] sm:$0xf] %v397
      %480 = vst [vmem:[#allocation2 + $0x88] sm:$0xf] %v400
      %481 = vst [vmem:[#allocation2 + $0x8c] sm:$0xf] %v403
      %482 = vst [vmem:[#allocation2 + $0x90] sm:$0xf] %v406
      %483 = vst [vmem:[#allocation2 + $0x94] sm:$0xf] %v409
      %484 = vst [vmem:[#allocation2 + $0x98] sm:$0x1] %v410
      %485 = vst [vmem:[#allocation2 + $0x98] sm:$0xe] 0
      %486 = vst [vmem:[#allocation2 + $0x9c] sm:$0xf] 0
      %487 = vst [vmem:[#allocation2 + $0xa0] sm:$0xf] 0
      %v488 = vld [vmem:[#allocation2] sm:$0xf]
      %v489 = vld [vmem:[#allocation2 + $0x4] sm:$0xf]
      %v490 = vld [vmem:[#allocation2 + $0x8] sm:$0xf]
      %v491 = vld [vmem:[#allocation2 + $0xc] sm:$0xf]
      %v492 = vld [vmem:[#allocation2 + $0x10] sm:$0xf]
      %v493 = vld [vmem:[#allocation2 + $0x14] sm:$0xf]
      %v494 = vld [vmem:[#allocation2 + $0x18] sm:$0xf]
      %v495 = vld [vmem:[#allocation2 + $0x1c] sm:$0xf]
      %v496 = vld [vmem:[#allocation2 + $0x20] sm:$0xf]
      %v497 = vld [vmem:[#allocation2 + $0x24] sm:$0xf]
      %v498 = vld [vmem:[#allocation2 + $0x28] sm:$0xf]
      %v499 = vld [vmem:[#allocation2 + $0x2c] sm:$0xf]
      %v500 = vld [vmem:[#allocation2 + $0x30] sm:$0xf]
      %v501 = vld [vmem:[#allocation2 + $0x34] sm:$0xf]
      %v502 = vld [vmem:[#allocation2 + $0x38] sm:$0xf]
      %v503 = vld [vmem:[#allocation2 + $0x3c] sm:$0xf]
      %v504 = vld [vmem:[#allocation2 + $0x40] sm:$0xf]
      %v505 = vld [vmem:[#allocation2 + $0x44] sm:$0xf]
      %v506 = vld [vmem:[#allocation2 + $0x48] sm:$0xf]
      %v507 = vld [vmem:[#allocation2 + $0x4c] sm:$0xf]
      %v508 = vld [vmem:[#allocation2 + $0x50] sm:$0xf]
      %v509 = vld [vmem:[#allocation2 + $0x54] sm:$0xf]
      %v510 = vld [vmem:[#allocation2 + $0x58] sm:$0xf]
      %v511 = vld [vmem:[#allocation2 + $0x5c] sm:$0xf]
      %v512 = vld [vmem:[#allocation2 + $0x60] sm:$0xf]
      %v513 = vld [vmem:[#allocation2 + $0x64] sm:$0xf]
      %v514 = vld [vmem:[#allocation2 + $0x68] sm:$0xf]
      %v515 = vld [vmem:[#allocation2 + $0x6c] sm:$0xf]
      %v516 = vld [vmem:[#allocation2 + $0x70] sm:$0xf]
      %v517 = vld [vmem:[#allocation2 + $0x74] sm:$0xf]
      %v518 = vld [vmem:[#allocation2 + $0x78] sm:$0xf]
      %v519 = vld [vmem:[#allocation2 + $0x7c] sm:$0xf]
      %v520 = vld [vmem:[#allocation2 + $0x80] sm:$0xf]
      %v521 = vld [vmem:[#allocation2 + $0x84] sm:$0xf]
      %v522 = vld [vmem:[#allocation2 + $0x88] sm:$0xf]
      %v523 = vld [vmem:[#allocation2 + $0x8c] sm:$0xf]
      %524 = vst [vmem:[#allocation4] sm:$0xf] %v488
      %525 = vst [vmem:[#allocation4 + $0x24] sm:$0xf] %v489
      %526 = vst [vmem:[#allocation4 + $0x48] sm:$0xf] %v490
      %527 = vst [vmem:[#allocation4 + $0x6c] sm:$0xf] %v491
      %528 = vst [vmem:[#allocation4 + $0x90] sm:$0xf] %v492
      %529 = vst [vmem:[#allocation4 + $0xb4] sm:$0xf] %v493
      %530 = vst [vmem:[#allocation4 + $0xd8] sm:$0xf] %v494
      %531 = vst [vmem:[#allocation4 + $0xfc] sm:$0xf] %v495
      %532 = vst [vmem:[#allocation4 + $0x120] sm:$0xf] %v496
      %533 = vst [vmem:[#allocation4 + $0x144] sm:$0xf] %v497
      %534 = vst [vmem:[#allocation4 + $0x168] sm:$0xf] %v498
      %535 = vst [vmem:[#allocation4 + $0x18c] sm:$0xf] %v499
      %536 = vst [vmem:[#allocation4 + $0x1b0] sm:$0xf] %v500
      %537 = vst [vmem:[#allocation4 + $0x1d4] sm:$0xf] %v501
      %538 = vst [vmem:[#allocation4 + $0x1f8] sm:$0xf] %v502
      %539 = vst [vmem:[#allocation4 + $0x21c] sm:$0xf] %v503
      %540 = vst [vmem:[#allocation4 + $0x240] sm:$0xf] %v504
      %541 = vst [vmem:[#allocation4 + $0x264] sm:$0xf] %v505
      %542 = vst [vmem:[#allocation4 + $0x288] sm:$0xf] %v506
      %543 = vst [vmem:[#allocation4 + $0x2ac] sm:$0xf] %v507
      %544 = vst [vmem:[#allocation4 + $0x2d0] sm:$0xf] %v508
      %545 = vst [vmem:[#allocation4 + $0x2f4] sm:$0xf] %v509
      %546 = vst [vmem:[#allocation4 + $0x318] sm:$0xf] %v510
      %547 = vst [vmem:[#allocation4 + $0x33c] sm:$0xf] %v511
      %548 = vst [vmem:[#allocation4 + $0x360] sm:$0xf] %v512
      %549 = vst [vmem:[#allocation4 + $0x384] sm:$0xf] %v513
      %550 = vst [vmem:[#allocation4 + $0x3a8] sm:$0xf] %v514
      %551 = vst [vmem:[#allocation4 + $0x3cc] sm:$0xf] %v515
      %552 = vst [vmem:[#allocation4 + $0x3f0] sm:$0xf] %v516
      %553 = vst [vmem:[#allocation4 + $0x414] sm:$0xf] %v517
      %554 = vst [vmem:[#allocation4 + $0x438] sm:$0xf] %v518
      %555 = vst [vmem:[#allocation4 + $0x45c] sm:$0xf] %v519
      %556 = vst [vmem:[#allocation4 + $0x480] sm:$0xf] %v520
      %557 = vst [vmem:[#allocation4 + $0x4a4] sm:$0xf] %v521
      %558 = vst [vmem:[#allocation4 + $0x4c8] sm:$0xf] %v522
      %559 = vst [vmem:[#allocation4 + $0x4ec] sm:$0xf] %v523
      %v560 = vld [vmem:[#allocation2] sm:$0xf]
      %v561 = vld [vmem:[#allocation2 + $0x4] sm:$0xf]
      %v562 = vld [vmem:[#allocation2 + $0x8] sm:$0xf]
      %v563 = vld [vmem:[#allocation2 + $0xc] sm:$0xf]
      %v564 = vld [vmem:[#allocation2 + $0x10] sm:$0xf]
      %v565 = vld [vmem:[#allocation2 + $0x14] sm:$0xf]
      %v566 = vld [vmem:[#allocation2 + $0x18] sm:$0xf]
      %v567 = vld [vmem:[#allocation2 + $0x1c] sm:$0xf]
      %v568 = vld [vmem:[#allocation2 + $0x20] sm:$0xf]
      %v569 = vld [vmem:[#allocation2 + $0x24] sm:$0xf]
      %v570 = vld [vmem:[#allocation2 + $0x28] sm:$0xf]
      %v571 = vld [vmem:[#allocation2 + $0x2c] sm:$0xf]
      %v572 = vld [vmem:[#allocation2 + $0x30] sm:$0xf]
      %v573 = vld [vmem:[#allocation2 + $0x34] sm:$0xf]
      %v574 = vld [vmem:[#allocation2 + $0x38] sm:$0xf]
      %v575 = vld [vmem:[#allocation2 + $0x3c] sm:$0xf]
      %v576 = vld [vmem:[#allocation2 + $0x40] sm:$0xf]
      %v577 = vld [vmem:[#allocation2 + $0x44] sm:$0xf]
      %v578 = vld [vmem:[#allocation2 + $0x48] sm:$0xf]
      %v579 = vld [vmem:[#allocation2 + $0x4c] sm:$0xf]
      %v580 = vld [vmem:[#allocation2 + $0x50] sm:$0xf]
      %v581 = vld [vmem:[#allocation2 + $0x54] sm:$0xf]
      %v582 = vld [vmem:[#allocation2 + $0x58] sm:$0xf]
      %v583 = vld [vmem:[#allocation2 + $0x5c] sm:$0xf]
      %v584 = vld [vmem:[#allocation2 + $0x60] sm:$0xf]
      %v585 = vld [vmem:[#allocation2 + $0x64] sm:$0xf]
      %v586 = vld [vmem:[#allocation2 + $0x68] sm:$0xf]
      %v587 = vld [vmem:[#allocation2 + $0x6c] sm:$0xf]
      %v588 = vld [vmem:[#allocation2 + $0x70] sm:$0xf]
      %v589 = vld [vmem:[#allocation2 + $0x74] sm:$0xf]
      %v590 = vld [vmem:[#allocation2 + $0x78] sm:$0xf]
      %v591 = vld [vmem:[#allocation2 + $0x7c] sm:$0xf]
      %v592 = vld [vmem:[#allocation2 + $0x80] sm:$0xf]
      %v593 = vld [vmem:[#allocation2 + $0x84] sm:$0xf]
      %v594 = vld [vmem:[#allocation2 + $0x88] sm:$0xf]
      %v595 = vld [vmem:[#allocation2 + $0x8c] sm:$0xf]
      %v596 = vld [vmem:[#allocation2 + $0x90] sm:$0x1]
      %vm597 = vsmask.f32 3328
      %vm598 = vsmask.f32 7440
      %vm599 = vmor %vm597, %vm598
      %v601 = vshrl.u32 %v560, 16
      %v603 = vrot.slane %v601, 4
      %v604 = vshll.u32 %v560, 16
      %v606 = vrot.slane %v604, 5
      %v607 = vor.u32 %v603, %v606
      %v608 = vrot.slane %v607, 4
      %v610 = vshll.u32 %v561, 16
      %v612 = vrot.slane %v610, 5
      %v613 = vsel %vm599, %v608, %v612
      %v614 = vshrl.u32 %v561, 16
      %v616 = vrot.slane %v614, 4
      %v617 = vor.u32 %v616, %v612
      %v618 = vrot.slane %v617, 4
      %v620 = vshll.u32 %v562, 16
      %v622 = vrot.slane %v620, 5
      %v623 = vsel %vm599, %v618, %v622
      %v624 = vshrl.u32 %v562, 16
      %v626 = vrot.slane %v624, 4
      %v627 = vor.u32 %v626, %v622
      %v628 = vrot.slane %v627, 4
      %v630 = vshll.u32 %v563, 16
      %v632 = vrot.slane %v630, 5
      %v633 = vsel %vm599, %v628, %v632
      %v634 = vshrl.u32 %v563, 16
      %v636 = vrot.slane %v634, 4
      %v637 = vor.u32 %v636, %v632
      %v638 = vrot.slane %v637, 4
      %v640 = vshll.u32 %v564, 16
      %v642 = vrot.slane %v640, 5
      %v643 = vsel %vm599, %v638, %v642
      %v644 = vshrl.u32 %v564, 16
      %v646 = vrot.slane %v644, 4
      %v647 = vor.u32 %v646, %v642
      %v648 = vrot.slane %v647, 4
      %v650 = vshll.u32 %v565, 16
      %v652 = vrot.slane %v650, 5
      %v653 = vsel %vm599, %v648, %v652
      %v654 = vshrl.u32 %v565, 16
      %v656 = vrot.slane %v654, 4
      %v657 = vor.u32 %v656, %v652
      %v658 = vrot.slane %v657, 4
      %v660 = vshll.u32 %v566, 16
      %v662 = vrot.slane %v660, 5
      %v663 = vsel %vm599, %v658, %v662
      %v664 = vshrl.u32 %v566, 16
      %v666 = vrot.slane %v664, 4
      %v667 = vor.u32 %v666, %v662
      %v668 = vrot.slane %v667, 4
      %v670 = vshll.u32 %v567, 16
      %v672 = vrot.slane %v670, 5
      %v673 = vsel %vm599, %v668, %v672
      %v674 = vshrl.u32 %v567, 16
      %v676 = vrot.slane %v674, 4
      %v677 = vor.u32 %v676, %v672
      %v678 = vrot.slane %v677, 4
      %v680 = vshll.u32 %v568, 16
      %v682 = vrot.slane %v680, 5
      %v683 = vsel %vm599, %v678, %v682
      %v684 = vshrl.u32 %v568, 16
      %v686 = vrot.slane %v684, 4
      %v687 = vor.u32 %v686, %v682
      %v688 = vrot.slane %v687, 4
      %v690 = vshll.u32 %v569, 16
      %v692 = vrot.slane %v690, 5
      %v693 = vsel %vm599, %v688, %v692
      %v694 = vshrl.u32 %v569, 16
      %v696 = vrot.slane %v694, 4
      %v697 = vor.u32 %v696, %v692
      %v698 = vrot.slane %v697, 4
      %v700 = vshll.u32 %v570, 16
      %v702 = vrot.slane %v700, 5
      %v703 = vsel %vm599, %v698, %v702
      %v704 = vshrl.u32 %v570, 16
      %v706 = vrot.slane %v704, 4
      %v707 = vor.u32 %v706, %v702
      %v708 = vrot.slane %v707, 4
      %v710 = vshll.u32 %v571, 16
      %v712 = vrot.slane %v710, 5
      %v713 = vsel %vm599, %v708, %v712
      %v714 = vshrl.u32 %v571, 16
      %v716 = vrot.slane %v714, 4
      %v717 = vor.u32 %v716, %v712
      %v718 = vrot.slane %v717, 4
      %v720 = vshll.u32 %v572, 16
      %v722 = vrot.slane %v720, 5
      %v723 = vsel %vm599, %v718, %v722
      %v724 = vshrl.u32 %v572, 16
      %v726 = vrot.slane %v724, 4
      %v727 = vor.u32 %v726, %v722
      %v728 = vrot.slane %v727, 4
      %v730 = vshll.u32 %v573, 16
      %v732 = vrot.slane %v730, 5
      %v733 = vsel %vm599, %v728, %v732
      %v734 = vshrl.u32 %v573, 16
      %v736 = vrot.slane %v734, 4
      %v737 = vor.u32 %v736, %v732
      %v738 = vrot.slane %v737, 4
      %v740 = vshll.u32 %v574, 16
      %v742 = vrot.slane %v740, 5
      %v743 = vsel %vm599, %v738, %v742
      %v744 = vshrl.u32 %v574, 16
      %v746 = vrot.slane %v744, 4
      %v747 = vor.u32 %v746, %v742
      %v748 = vrot.slane %v747, 4
      %v750 = vshll.u32 %v575, 16
      %v752 = vrot.slane %v750, 5
      %v753 = vsel %vm599, %v748, %v752
      %v754 = vshrl.u32 %v575, 16
      %v756 = vrot.slane %v754, 4
      %v757 = vor.u32 %v756, %v752
      %v758 = vrot.slane %v757, 4
      %v760 = vshll.u32 %v576, 16
      %v762 = vrot.slane %v760, 5
      %v763 = vsel %vm599, %v758, %v762
      %v764 = vshrl.u32 %v576, 16
      %v766 = vrot.slane %v764, 4
      %v767 = vor.u32 %v766, %v762
      %v768 = vrot.slane %v767, 4
      %v770 = vshll.u32 %v577, 16
      %v772 = vrot.slane %v770, 5
      %v773 = vsel %vm599, %v768, %v772
      %v774 = vshrl.u32 %v577, 16
      %v776 = vrot.slane %v774, 4
      %v777 = vor.u32 %v776, %v772
      %v778 = vrot.slane %v777, 4
      %v780 = vshll.u32 %v578, 16
      %v782 = vrot.slane %v780, 5
      %v783 = vsel %vm599, %v778, %v782
      %v784 = vshrl.u32 %v578, 16
      %v786 = vrot.slane %v784, 4
      %v787 = vor.u32 %v786, %v782
      %v788 = vrot.slane %v787, 4
      %v790 = vshll.u32 %v579, 16
      %v792 = vrot.slane %v790, 5
      %v793 = vsel %vm599, %v788, %v792
      %v794 = vshrl.u32 %v579, 16
      %v796 = vrot.slane %v794, 4
      %v797 = vor.u32 %v796, %v792
      %v798 = vrot.slane %v797, 4
      %v800 = vshll.u32 %v580, 16
      %v802 = vrot.slane %v800, 5
      %v803 = vsel %vm599, %v798, %v802
      %v804 = vshrl.u32 %v580, 16
      %v806 = vrot.slane %v804, 4
      %v807 = vor.u32 %v806, %v802
      %v808 = vrot.slane %v807, 4
      %v810 = vshll.u32 %v581, 16
      %v812 = vrot.slane %v810, 5
      %v813 = vsel %vm599, %v808, %v812
      %v814 = vshrl.u32 %v581, 16
      %v816 = vrot.slane %v814, 4
      %v817 = vor.u32 %v816, %v812
      %v818 = vrot.slane %v817, 4
      %v820 = vshll.u32 %v582, 16
      %v822 = vrot.slane %v820, 5
      %v823 = vsel %vm599, %v818, %v822
      %v824 = vshrl.u32 %v582, 16
      %v826 = vrot.slane %v824, 4
      %v827 = vor.u32 %v826, %v822
      %v828 = vrot.slane %v827, 4
      %v830 = vshll.u32 %v583, 16
      %v832 = vrot.slane %v830, 5
      %v833 = vsel %vm599, %v828, %v832
      %v834 = vshrl.u32 %v583, 16
      %v836 = vrot.slane %v834, 4
      %v837 = vor.u32 %v836, %v832
      %v838 = vrot.slane %v837, 4
      %v840 = vshll.u32 %v584, 16
      %v842 = vrot.slane %v840, 5
      %v843 = vsel %vm599, %v838, %v842
      %v844 = vshrl.u32 %v584, 16
      %v846 = vrot.slane %v844, 4
      %v847 = vor.u32 %v846, %v842
      %v848 = vrot.slane %v847, 4
      %v850 = vshll.u32 %v585, 16
      %v852 = vrot.slane %v850, 5
      %v853 = vsel %vm599, %v848, %v852
      %v854 = vshrl.u32 %v585, 16
      %v856 = vrot.slane %v854, 4
      %v857 = vor.u32 %v856, %v852
      %v858 = vrot.slane %v857, 4
      %v860 = vshll.u32 %v586, 16
      %v862 = vrot.slane %v860, 5
      %v863 = vsel %vm599, %v858, %v862
      %v864 = vshrl.u32 %v586, 16
      %v866 = vrot.slane %v864, 4
      %v867 = vor.u32 %v866, %v862
      %v868 = vrot.slane %v867, 4
      %v870 = vshll.u32 %v587, 16
      %v872 = vrot.slane %v870, 5
      %v873 = vsel %vm599, %v868, %v872
      %v874 = vshrl.u32 %v587, 16
      %v876 = vrot.slane %v874, 4
      %v877 = vor.u32 %v876, %v872
      %v878 = vrot.slane %v877, 4
      %v880 = vshll.u32 %v588, 16
      %v882 = vrot.slane %v880, 5
      %v883 = vsel %vm599, %v878, %v882
      %v884 = vshrl.u32 %v588, 16
      %v886 = vrot.slane %v884, 4
      %v887 = vor.u32 %v886, %v882
      %v888 = vrot.slane %v887, 4
      %v890 = vshll.u32 %v589, 16
      %v892 = vrot.slane %v890, 5
      %v893 = vsel %vm599, %v888, %v892
      %v894 = vshrl.u32 %v589, 16
      %v896 = vrot.slane %v894, 4
      %v897 = vor.u32 %v896, %v892
      %v898 = vrot.slane %v897, 4
      %v900 = vshll.u32 %v590, 16
      %v902 = vrot.slane %v900, 5
      %v903 = vsel %vm599, %v898, %v902
      %v904 = vshrl.u32 %v590, 16
      %v906 = vrot.slane %v904, 4
      %v907 = vor.u32 %v906, %v902
      %v908 = vrot.slane %v907, 4
      %v910 = vshll.u32 %v591, 16
      %v912 = vrot.slane %v910, 5
      %v913 = vsel %vm599, %v908, %v912
      %v914 = vshrl.u32 %v591, 16
      %v916 = vrot.slane %v914, 4
      %v917 = vor.u32 %v916, %v912
      %v918 = vrot.slane %v917, 4
      %v920 = vshll.u32 %v592, 16
      %v922 = vrot.slane %v920, 5
      %v923 = vsel %vm599, %v918, %v922
      %v924 = vshrl.u32 %v592, 16
      %v926 = vrot.slane %v924, 4
      %v927 = vor.u32 %v926, %v922
      %v928 = vrot.slane %v927, 4
      %v930 = vshll.u32 %v593, 16
      %v932 = vrot.slane %v930, 5
      %v933 = vsel %vm599, %v928, %v932
      %v934 = vshrl.u32 %v593, 16
      %v936 = vrot.slane %v934, 4
      %v937 = vor.u32 %v936, %v932
      %v938 = vrot.slane %v937, 4
      %v940 = vshll.u32 %v594, 16
      %v942 = vrot.slane %v940, 5
      %v943 = vsel %vm599, %v938, %v942
      %v944 = vshrl.u32 %v594, 16
      %v946 = vrot.slane %v944, 4
      %v947 = vor.u32 %v946, %v942
      %v948 = vrot.slane %v947, 4
      %v950 = vshll.u32 %v595, 16
      %v952 = vrot.slane %v950, 5
      %v953 = vsel %vm599, %v948, %v952
      %v954 = vshrl.u32 %v595, 16
      %v956 = vrot.slane %v954, 4
      %v957 = vor.u32 %v956, %v952
      %v958 = vrot.slane %v957, 4
      %v960 = vshll.u32 %v596, 16
      %v962 = vrot.slane %v960, 5
      %v963 = vsel %vm599, %v958, %v962
      %1000 = vst [vmem:[#allocation4 + $0x4] sm:$0xf] %v613
      %1001 = vst [vmem:[#allocation4 + $0x28] sm:$0xf] %v623
      %1002 = vst [vmem:[#allocation4 + $0x4c] sm:$0xf] %v633
      %1003 = vst [vmem:[#allocation4 + $0x70] sm:$0xf] %v643
      %1004 = vst [vmem:[#allocation4 + $0x94] sm:$0xf] %v653
      %1005 = vst [vmem:[#allocation4 + $0xb8] sm:$0xf] %v663
      %1006 = vst [vmem:[#allocation4 + $0xdc] sm:$0xf] %v673
      %1007 = vst [vmem:[#allocation4 + $0x100] sm:$0xf] %v683
      %1008 = vst [vmem:[#allocation4 + $0x124] sm:$0xf] %v693
      %1009 = vst [vmem:[#allocation4 + $0x148] sm:$0xf] %v703
      %1010 = vst [vmem:[#allocation4 + $0x16c] sm:$0xf] %v713
      %1011 = vst [vmem:[#allocation4 + $0x190] sm:$0xf] %v723
      %1012 = vst [vmem:[#allocation4 + $0x1b4] sm:$0xf] %v733
      %1013 = vst [vmem:[#allocation4 + $0x1d8] sm:$0xf] %v743
      %1014 = vst [vmem:[#allocation4 + $0x1fc] sm:$0xf] %v753
      %1015 = vst [vmem:[#allocation4 + $0x220] sm:$0xf] %v763
      %1016 = vst [vmem:[#allocation4 + $0x244] sm:$0xf] %v773
      %1017 = vst [vmem:[#allocation4 + $0x268] sm:$0xf] %v783
      %1018 = vst [vmem:[#allocation4 + $0x28c] sm:$0xf] %v793
      %1019 = vst [vmem:[#allocation4 + $0x2b0] sm:$0xf] %v803
      %1020 = vst [vmem:[#allocation4 + $0x2d4] sm:$0xf] %v813
      %1021 = vst [vmem:[#allocation4 + $0x2f8] sm:$0xf] %v823
      %1022 = vst [vmem:[#allocation4 + $0x31c] sm:$0xf] %v833
      %1023 = vst [vmem:[#allocation4 + $0x340] sm:$0xf] %v843
      %1024 = vst [vmem:[#allocation4 + $0x364] sm:$0xf] %v853
      %1025 = vst [vmem:[#allocation4 + $0x388] sm:$0xf] %v863
      %1026 = vst [vmem:[#allocation4 + $0x3ac] sm:$0xf] %v873
      %1027 = vst [vmem:[#allocation4 + $0x3d0] sm:$0xf] %v883
      %1028 = vst [vmem:[#allocation4 + $0x3f4] sm:$0xf] %v893
      %1029 = vst [vmem:[#allocation4 + $0x418] sm:$0xf] %v903
      %1030 = vst [vmem:[#allocation4 + $0x43c] sm:$0xf] %v913
      %1031 = vst [vmem:[#allocation4 + $0x460] sm:$0xf] %v923
      %1032 = vst [vmem:[#allocation4 + $0x484] sm:$0xf] %v933
      %1033 = vst [vmem:[#allocation4 + $0x4a8] sm:$0xf] %v943
      %1034 = vst [vmem:[#allocation4 + $0x4cc] sm:$0xf] %v953
      %1035 = vst [vmem:[#allocation4 + $0x4f0] sm:$0xf] %v963
      %v1036 = vld [vmem:[#allocation2] sm:$0xe]
      %v1037 = vld [vmem:[#allocation2 + $0x4] sm:$0xf]
      %v1038 = vld [vmem:[#allocation2 + $0x8] sm:$0xf]
      %v1039 = vld [vmem:[#allocation2 + $0xc] sm:$0xf]
      %v1040 = vld [vmem:[#allocation2 + $0x10] sm:$0xf]
      %v1041 = vld [vmem:[#allocation2 + $0x14] sm:$0xf]
      %v1042 = vld [vmem:[#allocation2 + $0x18] sm:$0xf]
      %v1043 = vld [vmem:[#allocation2 + $0x1c] sm:$0xf]
      %v1044 = vld [vmem:[#allocation2 + $0x20] sm:$0xf]
      %v1045 = vld [vmem:[#allocation2 + $0x24] sm:$0xf]
      %v1046 = vld [vmem:[#allocation2 + $0x28] sm:$0xf]
      %v1047 = vld [vmem:[#allocation2 + $0x2c] sm:$0xf]
      %v1048 = vld [vmem:[#allocation2 + $0x30] sm:$0xf]
      %v1049 = vld [vmem:[#allocation2 + $0x34] sm:$0xf]
      %v1050 = vld [vmem:[#allocation2 + $0x38] sm:$0xf]
      %v1051 = vld [vmem:[#allocation2 + $0x3c] sm:$0xf]
      %v1052 = vld [vmem:[#allocation2 + $0x40] sm:$0xf]
      %v1053 = vld [vmem:[#allocation2 + $0x44] sm:$0xf]
      %v1054 = vld [vmem:[#allocation2 + $0x48] sm:$0xf]
      %v1055 = vld [vmem:[#allocation2 + $0x4c] sm:$0xf]
      %v1056 = vld [vmem:[#allocation2 + $0x50] sm:$0xf]
      %v1057 = vld [vmem:[#allocation2 + $0x54] sm:$0xf]
      %v1058 = vld [vmem:[#allocation2 + $0x58] sm:$0xf]
      %v1059 = vld [vmem:[#allocation2 + $0x5c] sm:$0xf]
      %v1060 = vld [vmem:[#allocation2 + $0x60] sm:$0xf]
      %v1061 = vld [vmem:[#allocation2 + $0x64] sm:$0xf]
      %v1062 = vld [vmem:[#allocation2 + $0x68] sm:$0xf]
      %v1063 = vld [vmem:[#allocation2 + $0x6c] sm:$0xf]
      %v1064 = vld [vmem:[#allocation2 + $0x70] sm:$0xf]
      %v1065 = vld [vmem:[#allocation2 + $0x74] sm:$0xf]
      %v1066 = vld [vmem:[#allocation2 + $0x78] sm:$0xf]
      %v1067 = vld [vmem:[#allocation2 + $0x7c] sm:$0xf]
      %v1068 = vld [vmem:[#allocation2 + $0x80] sm:$0xf]
      %v1069 = vld [vmem:[#allocation2 + $0x84] sm:$0xf]
      %v1070 = vld [vmem:[#allocation2 + $0x88] sm:$0xf]
      %v1071 = vld [vmem:[#allocation2 + $0x8c] sm:$0xf]
      %v1072 = vld [vmem:[#allocation2 + $0x90] sm:$0x1]
      %vm1110 = vcmask 1042432
      %vm1111 = vcmask 1046532
      %vm1112 = vmor %vm1110, %vm1111
      %v1113 = vrot.slane %v1036, 5
      %v1114 = vrot.slane %v1113, 4
      %v1115 = vrot.slane %v1037, 5
      %v1116 = vsel %vm1112, %v1114, %v1115
      %v1117 = vrot.slane %v1115, 4
      %v1118 = vrot.slane %v1038, 5
      %v1119 = vsel %vm1112, %v1117, %v1118
      %v1120 = vrot.slane %v1118, 4
      %v1121 = vrot.slane %v1039, 5
      %v1122 = vsel %vm1112, %v1120, %v1121
      %v1123 = vrot.slane %v1121, 4
      %v1124 = vrot.slane %v1040, 5
      %v1125 = vsel %vm1112, %v1123, %v1124
      %v1126 = vrot.slane %v1124, 4
      %v1127 = vrot.slane %v1041, 5
      %v1128 = vsel %vm1112, %v1126, %v1127
      %v1129 = vrot.slane %v1127, 4
      %v1130 = vrot.slane %v1042, 5
      %v1131 = vsel %vm1112, %v1129, %v1130
      %v1132 = vrot.slane %v1130, 4
      %v1133 = vrot.slane %v1043, 5
      %v1134 = vsel %vm1112, %v1132, %v1133
      %v1135 = vrot.slane %v1133, 4
      %v1136 = vrot.slane %v1044, 5
      %v1137 = vsel %vm1112, %v1135, %v1136
      %v1138 = vrot.slane %v1136, 4
      %v1139 = vrot.slane %v1045, 5
      %v1140 = vsel %vm1112, %v1138, %v1139
      %v1141 = vrot.slane %v1139, 4
      %v1142 = vrot.slane %v1046, 5
      %v1143 = vsel %vm1112, %v1141, %v1142
      %v1144 = vrot.slane %v1142, 4
      %v1145 = vrot.slane %v1047, 5
      %v1146 = vsel %vm1112, %v1144, %v1145
      %v1147 = vrot.slane %v1145, 4
      %v1148 = vrot.slane %v1048, 5
      %v1149 = vsel %vm1112, %v1147, %v1148
      %v1150 = vrot.slane %v1148, 4
      %v1151 = vrot.slane %v1049, 5
      %v1152 = vsel %vm1112, %v1150, %v1151
      %v1153 = vrot.slane %v1151, 4
      %v1154 = vrot.slane %v1050, 5
      %v1155 = vsel %vm1112, %v1153, %v1154
      %v1156 = vrot.slane %v1154, 4
      %v1157 = vrot.slane %v1051, 5
      %v1158 = vsel %vm1112, %v1156, %v1157
      %v1159 = vrot.slane %v1157, 4
      %v1160 = vrot.slane %v1052, 5
      %v1161 = vsel %vm1112, %v1159, %v1160
      %v1162 = vrot.slane %v1160, 4
      %v1163 = vrot.slane %v1053, 5
      %v1164 = vsel %vm1112, %v1162, %v1163
      %v1165 = vrot.slane %v1163, 4
      %v1166 = vrot.slane %v1054, 5
      %v1167 = vsel %vm1112, %v1165, %v1166
      %v1168 = vrot.slane %v1166, 4
      %v1169 = vrot.slane %v1055, 5
      %v1170 = vsel %vm1112, %v1168, %v1169
      %v1171 = vrot.slane %v1169, 4
      %v1172 = vrot.slane %v1056, 5
      %v1173 = vsel %vm1112, %v1171, %v1172
      %v1174 = vrot.slane %v1172, 4
      %v1175 = vrot.slane %v1057, 5
      %v1176 = vsel %vm1112, %v1174, %v1175
      %v1177 = vrot.slane %v1175, 4
      %v1178 = vrot.slane %v1058, 5
      %v1179 = vsel %vm1112, %v1177, %v1178
      %v1180 = vrot.slane %v1178, 4
      %v1181 = vrot.slane %v1059, 5
      %v1182 = vsel %vm1112, %v1180, %v1181
      %v1183 = vrot.slane %v1181, 4
      %v1184 = vrot.slane %v1060, 5
      %v1185 = vsel %vm1112, %v1183, %v1184
      %v1186 = vrot.slane %v1184, 4
      %v1187 = vrot.slane %v1061, 5
      %v1188 = vsel %vm1112, %v1186, %v1187
      %v1189 = vrot.slane %v1187, 4
      %v1190 = vrot.slane %v1062, 5
      %v1191 = vsel %vm1112, %v1189, %v1190
      %v1192 = vrot.slane %v1190, 4
      %v1193 = vrot.slane %v1063, 5
      %v1194 = vsel %vm1112, %v1192, %v1193
      %v1195 = vrot.slane %v1193, 4
      %v1196 = vrot.slane %v1064, 5
      %v1197 = vsel %vm1112, %v1195, %v1196
      %v1198 = vrot.slane %v1196, 4
      %v1199 = vrot.slane %v1065, 5
      %v1200 = vsel %vm1112, %v1198, %v1199
      %v1201 = vrot.slane %v1199, 4
      %v1202 = vrot.slane %v1066, 5
      %v1203 = vsel %vm1112, %v1201, %v1202
      %v1204 = vrot.slane %v1202, 4
      %v1205 = vrot.slane %v1067, 5
      %v1206 = vsel %vm1112, %v1204, %v1205
      %v1207 = vrot.slane %v1205, 4
      %v1208 = vrot.slane %v1068, 5
      %v1209 = vsel %vm1112, %v1207, %v1208
      %v1210 = vrot.slane %v1208, 4
      %v1211 = vrot.slane %v1069, 5
      %v1212 = vsel %vm1112, %v1210, %v1211
      %v1213 = vrot.slane %v1211, 4
      %v1214 = vrot.slane %v1070, 5
      %v1215 = vsel %vm1112, %v1213, %v1214
      %v1216 = vrot.slane %v1214, 4
      %v1217 = vrot.slane %v1071, 5
      %v1218 = vsel %vm1112, %v1216, %v1217
      %v1219 = vrot.slane %v1217, 4
      %v1220 = vrot.slane %v1072, 5
      %v1221 = vsel %vm1112, %v1219, %v1220
      %1258 = vst [vmem:[#allocation4 + $0x8] sm:$0xf] %v1116
      %1259 = vst [vmem:[#allocation4 + $0x2c] sm:$0xf] %v1119
      %1260 = vst [vmem:[#allocation4 + $0x50] sm:$0xf] %v1122
      %1261 = vst [vmem:[#allocation4 + $0x74] sm:$0xf] %v1125
      %1262 = vst [vmem:[#allocation4 + $0x98] sm:$0xf] %v1128
      %1263 = vst [vmem:[#allocation4 + $0xbc] sm:$0xf] %v1131
      %1264 = vst [vmem:[#allocation4 + $0xe0] sm:$0xf] %v1134
      %1265 = vst [vmem:[#allocation4 + $0x104] sm:$0xf] %v1137
      %1266 = vst [vmem:[#allocation4 + $0x128] sm:$0xf] %v1140
      %1267 = vst [vmem:[#allocation4 + $0x14c] sm:$0xf] %v1143
      %1268 = vst [vmem:[#allocation4 + $0x170] sm:$0xf] %v1146
      %1269 = vst [vmem:[#allocation4 + $0x194] sm:$0xf] %v1149
      %1270 = vst [vmem:[#allocation4 + $0x1b8] sm:$0xf] %v1152
      %1271 = vst [vmem:[#allocation4 + $0x1dc] sm:$0xf] %v1155
      %1272 = vst [vmem:[#allocation4 + $0x200] sm:$0xf] %v1158
      %1273 = vst [vmem:[#allocation4 + $0x224] sm:$0xf] %v1161
      %1274 = vst [vmem:[#allocation4 + $0x248] sm:$0xf] %v1164
      %1275 = vst [vmem:[#allocation4 + $0x26c] sm:$0xf] %v1167
      %1276 = vst [vmem:[#allocation4 + $0x290] sm:$0xf] %v1170
      %1277 = vst [vmem:[#allocation4 + $0x2b4] sm:$0xf] %v1173
      %1278 = vst [vmem:[#allocation4 + $0x2d8] sm:$0xf] %v1176
      %1279 = vst [vmem:[#allocation4 + $0x2fc] sm:$0xf] %v1179
      %1280 = vst [vmem:[#allocation4 + $0x320] sm:$0xf] %v1182
      %1281 = vst [vmem:[#allocation4 + $0x344] sm:$0xf] %v1185
      %1282 = vst [vmem:[#allocation4 + $0x368] sm:$0xf] %v1188
      %1283 = vst [vmem:[#allocation4 + $0x38c] sm:$0xf] %v1191
      %1284 = vst [vmem:[#allocation4 + $0x3b0] sm:$0xf] %v1194
      %1285 = vst [vmem:[#allocation4 + $0x3d4] sm:$0xf] %v1197
      %1286 = vst [vmem:[#allocation4 + $0x3f8] sm:$0xf] %v1200
      %1287 = vst [vmem:[#allocation4 + $0x41c] sm:$0xf] %v1203
      %1288 = vst [vmem:[#allocation4 + $0x440] sm:$0xf] %v1206
      %1289 = vst [vmem:[#allocation4 + $0x464] sm:$0xf] %v1209
      %1290 = vst [vmem:[#allocation4 + $0x488] sm:$0xf] %v1212
      %1291 = vst [vmem:[#allocation4 + $0x4ac] sm:$0xf] %v1215
      %1292 = vst [vmem:[#allocation4 + $0x4d0] sm:$0xf] %v1218
      %1293 = vst [vmem:[#allocation4 + $0x4f4] sm:$0xf] %v1221
      %v1294 = vld [vmem:[#allocation2 + $0x8] sm:$0xe]
      %v1295 = vld [vmem:[#allocation2 + $0xc] sm:$0xf]
      %v1296 = vld [vmem:[#allocation2 + $0x10] sm:$0xf]
      %v1297 = vld [vmem:[#allocation2 + $0x14] sm:$0xf]
      %v1298 = vld [vmem:[#allocation2 + $0x18] sm:$0xf]
      %v1299 = vld [vmem:[#allocation2 + $0x1c] sm:$0xf]
      %v1300 = vld [vmem:[#allocation2 + $0x20] sm:$0xf]
      %v1301 = vld [vmem:[#allocation2 + $0x24] sm:$0xf]
      %v1302 = vld [vmem:[#allocation2 + $0x28] sm:$0xf]
      %v1303 = vld [vmem:[#allocation2 + $0x2c] sm:$0xf]
      %v1304 = vld [vmem:[#allocation2 + $0x30] sm:$0xf]
      %v1305 = vld [vmem:[#allocation2 + $0x34] sm:$0xf]
      %v1306 = vld [vmem:[#allocation2 + $0x38] sm:$0xf]
      %v1307 = vld [vmem:[#allocation2 + $0x3c] sm:$0xf]
      %v1308 = vld [vmem:[#allocation2 + $0x40] sm:$0xf]
      %v1309 = vld [vmem:[#allocation2 + $0x44] sm:$0xf]
      %v1310 = vld [vmem:[#allocation2 + $0x48] sm:$0xf]
      %v1311 = vld [vmem:[#allocation2 + $0x4c] sm:$0xf]
      %v1312 = vld [vmem:[#allocation2 + $0x50] sm:$0xf]
      %v1313 = vld [vmem:[#allocation2 + $0x54] sm:$0xf]
      %v1314 = vld [vmem:[#allocation2 + $0x58] sm:$0xf]
      %v1315 = vld [vmem:[#allocation2 + $0x5c] sm:$0xf]
      %v1316 = vld [vmem:[#allocation2 + $0x60] sm:$0xf]
      %v1317 = vld [vmem:[#allocation2 + $0x64] sm:$0xf]
      %v1318 = vld [vmem:[#allocation2 + $0x68] sm:$0xf]
      %v1319 = vld [vmem:[#allocation2 + $0x6c] sm:$0xf]
      %v1320 = vld [vmem:[#allocation2 + $0x70] sm:$0xf]
      %v1321 = vld [vmem:[#allocation2 + $0x74] sm:$0xf]
      %v1322 = vld [vmem:[#allocation2 + $0x78] sm:$0xf]
      %v1323 = vld [vmem:[#allocation2 + $0x7c] sm:$0xf]
      %v1324 = vld [vmem:[#allocation2 + $0x80] sm:$0xf]
      %v1325 = vld [vmem:[#allocation2 + $0x84] sm:$0xf]
      %v1326 = vld [vmem:[#allocation2 + $0x88] sm:$0xf]
      %v1327 = vld [vmem:[#allocation2 + $0x8c] sm:$0xf]
      %v1328 = vld [vmem:[#allocation2 + $0x90] sm:$0xf]
      %v1329 = vld [vmem:[#allocation2 + $0x94] sm:$0xf]
      %v1330 = vld [vmem:[#allocation2 + $0x98] sm:$0x1]
      %v1368 = vrot.slane %v1294, 5
      %v1369 = vrot.slane %v1368, 4
      %v1370 = vrot.slane %v1295, 5
      %v1371 = vsel %vm1112, %v1369, %v1370
      %v1372 = vrot.slane %v1370, 4
      %v1373 = vrot.slane %v1296, 5
      %v1374 = vsel %vm1112, %v1372, %v1373
      %v1375 = vrot.slane %v1373, 4
      %v1376 = vrot.slane %v1297, 5
      %v1377 = vsel %vm1112, %v1375, %v1376
      %v1378 = vrot.slane %v1376, 4
      %v1379 = vrot.slane %v1298, 5
      %v1380 = vsel %vm1112, %v1378, %v1379
      %v1381 = vrot.slane %v1379, 4
      %v1382 = vrot.slane %v1299, 5
      %v1383 = vsel %vm1112, %v1381, %v1382
      %v1384 = vrot.slane %v1382, 4
      %v1385 = vrot.slane %v1300, 5
      %v1386 = vsel %vm1112, %v1384, %v1385
      %v1387 = vrot.slane %v1385, 4
      %v1388 = vrot.slane %v1301, 5
      %v1389 = vsel %vm1112, %v1387, %v1388
      %v1390 = vrot.slane %v1388, 4
      %v1391 = vrot.slane %v1302, 5
      %v1392 = vsel %vm1112, %v1390, %v1391
      %v1393 = vrot.slane %v1391, 4
      %v1394 = vrot.slane %v1303, 5
      %v1395 = vsel %vm1112, %v1393, %v1394
      %v1396 = vrot.slane %v1394, 4
      %v1397 = vrot.slane %v1304, 5
      %v1398 = vsel %vm1112, %v1396, %v1397
      %v1399 = vrot.slane %v1397, 4
      %v1400 = vrot.slane %v1305, 5
      %v1401 = vsel %vm1112, %v1399, %v1400
      %v1402 = vrot.slane %v1400, 4
      %v1403 = vrot.slane %v1306, 5
      %v1404 = vsel %vm1112, %v1402, %v1403
      %v1405 = vrot.slane %v1403, 4
      %v1406 = vrot.slane %v1307, 5
      %v1407 = vsel %vm1112, %v1405, %v1406
      %v1408 = vrot.slane %v1406, 4
      %v1409 = vrot.slane %v1308, 5
      %v1410 = vsel %vm1112, %v1408, %v1409
      %v1411 = vrot.slane %v1409, 4
      %v1412 = vrot.slane %v1309, 5
      %v1413 = vsel %vm1112, %v1411, %v1412
      %v1414 = vrot.slane %v1412, 4
      %v1415 = vrot.slane %v1310, 5
      %v1416 = vsel %vm1112, %v1414, %v1415
      %v1417 = vrot.slane %v1415, 4
      %v1418 = vrot.slane %v1311, 5
      %v1419 = vsel %vm1112, %v1417, %v1418
      %v1420 = vrot.slane %v1418, 4
      %v1421 = vrot.slane %v1312, 5
      %v1422 = vsel %vm1112, %v1420, %v1421
      %v1423 = vrot.slane %v1421, 4
      %v1424 = vrot.slane %v1313, 5
      %v1425 = vsel %vm1112, %v1423, %v1424
      %v1426 = vrot.slane %v1424, 4
      %v1427 = vrot.slane %v1314, 5
      %v1428 = vsel %vm1112, %v1426, %v1427
      %v1429 = vrot.slane %v1427, 4
      %v1430 = vrot.slane %v1315, 5
      %v1431 = vsel %vm1112, %v1429, %v1430
      %v1432 = vrot.slane %v1430, 4
      %v1433 = vrot.slane %v1316, 5
      %v1434 = vsel %vm1112, %v1432, %v1433
      %v1435 = vrot.slane %v1433, 4
      %v1436 = vrot.slane %v1317, 5
      %v1437 = vsel %vm1112, %v1435, %v1436
      %v1438 = vrot.slane %v1436, 4
      %v1439 = vrot.slane %v1318, 5
      %v1440 = vsel %vm1112, %v1438, %v1439
      %v1441 = vrot.slane %v1439, 4
      %v1442 = vrot.slane %v1319, 5
      %v1443 = vsel %vm1112, %v1441, %v1442
      %v1444 = vrot.slane %v1442, 4
      %v1445 = vrot.slane %v1320, 5
      %v1446 = vsel %vm1112, %v1444, %v1445
      %v1447 = vrot.slane %v1445, 4
      %v1448 = vrot.slane %v1321, 5
      %v1449 = vsel %vm1112, %v1447, %v1448
      %v1450 = vrot.slane %v1448, 4
      %v1451 = vrot.slane %v1322, 5
      %v1452 = vsel %vm1112, %v1450, %v1451
      %v1453 = vrot.slane %v1451, 4
      %v1454 = vrot.slane %v1323, 5
      %v1455 = vsel %vm1112, %v1453, %v1454
      %v1456 = vrot.slane %v1454, 4
      %v1457 = vrot.slane %v1324, 5
      %v1458 = vsel %vm1112, %v1456, %v1457
      %v1459 = vrot.slane %v1457, 4
      %v1460 = vrot.slane %v1325, 5
      %v1461 = vsel %vm1112, %v1459, %v1460
      %v1462 = vrot.slane %v1460, 4
      %v1463 = vrot.slane %v1326, 5
      %v1464 = vsel %vm1112, %v1462, %v1463
      %v1465 = vrot.slane %v1463, 4
      %v1466 = vrot.slane %v1327, 5
      %v1467 = vsel %vm1112, %v1465, %v1466
      %v1468 = vrot.slane %v1466, 4
      %v1469 = vrot.slane %v1328, 5
      %v1470 = vsel %vm1112, %v1468, %v1469
      %v1471 = vrot.slane %v1469, 4
      %v1472 = vrot.slane %v1329, 5
      %v1473 = vsel %vm1112, %v1471, %v1472
      %v1474 = vrot.slane %v1472, 4
      %v1475 = vrot.slane %v1330, 5
      %v1476 = vsel %vm1112, %v1474, %v1475
      %1513 = vst [vmem:[#allocation4 + $0xc] sm:$0xf] %v1371
      %1514 = vst [vmem:[#allocation4 + $0x30] sm:$0xf] %v1374
      %1515 = vst [vmem:[#allocation4 + $0x54] sm:$0xf] %v1377
      %1516 = vst [vmem:[#allocation4 + $0x78] sm:$0xf] %v1380
      %1517 = vst [vmem:[#allocation4 + $0x9c] sm:$0xf] %v1383
      %1518 = vst [vmem:[#allocation4 + $0xc0] sm:$0xf] %v1386
      %1519 = vst [vmem:[#allocation4 + $0xe4] sm:$0xf] %v1389
      %1520 = vst [vmem:[#allocation4 + $0x108] sm:$0xf] %v1392
      %1521 = vst [vmem:[#allocation4 + $0x12c] sm:$0xf] %v1395
      %1522 = vst [vmem:[#allocation4 + $0x150] sm:$0xf] %v1398
      %1523 = vst [vmem:[#allocation4 + $0x174] sm:$0xf] %v1401
      %1524 = vst [vmem:[#allocation4 + $0x198] sm:$0xf] %v1404
      %1525 = vst [vmem:[#allocation4 + $0x1bc] sm:$0xf] %v1407
      %1526 = vst [vmem:[#allocation4 + $0x1e0] sm:$0xf] %v1410
      %1527 = vst [vmem:[#allocation4 + $0x204] sm:$0xf] %v1413
      %1528 = vst [vmem:[#allocation4 + $0x228] sm:$0xf] %v1416
      %1529 = vst [vmem:[#allocation4 + $0x24c] sm:$0xf] %v1419
      %1530 = vst [vmem:[#allocation4 + $0x270] sm:$0xf] %v1422
      %1531 = vst [vmem:[#allocation4 + $0x294] sm:$0xf] %v1425
      %1532 = vst [vmem:[#allocation4 + $0x2b8] sm:$0xf] %v1428
      %1533 = vst [vmem:[#allocation4 + $0x2dc] sm:$0xf] %v1431
      %1534 = vst [vmem:[#allocation4 + $0x300] sm:$0xf] %v1434
      %1535 = vst [vmem:[#allocation4 + $0x324] sm:$0xf] %v1437
      %1536 = vst [vmem:[#allocation4 + $0x348] sm:$0xf] %v1440
      %1537 = vst [vmem:[#allocation4 + $0x36c] sm:$0xf] %v1443
      %1538 = vst [vmem:[#allocation4 + $0x390] sm:$0xf] %v1446
      %1539 = vst [vmem:[#allocation4 + $0x3b4] sm:$0xf] %v1449
      %1540 = vst [vmem:[#allocation4 + $0x3d8] sm:$0xf] %v1452
      %1541 = vst [vmem:[#allocation4 + $0x3fc] sm:$0xf] %v1455
      %1542 = vst [vmem:[#allocation4 + $0x420] sm:$0xf] %v1458
      %1543 = vst [vmem:[#allocation4 + $0x444] sm:$0xf] %v1461
      %1544 = vst [vmem:[#allocation4 + $0x468] sm:$0xf] %v1464
      %1545 = vst [vmem:[#allocation4 + $0x48c] sm:$0xf] %v1467
      %1546 = vst [vmem:[#allocation4 + $0x4b0] sm:$0xf] %v1470
      %1547 = vst [vmem:[#allocation4 + $0x4d4] sm:$0xf] %v1473
      %1548 = vst [vmem:[#allocation4 + $0x4f8] sm:$0xf] %v1476
      %v1549 = vld [vmem:[#allocation2 + $0x8] sm:$0xe]
      %v1550 = vld [vmem:[#allocation2 + $0xc] sm:$0xf]
      %v1551 = vld [vmem:[#allocation2 + $0x10] sm:$0xf]
      %v1552 = vld [vmem:[#allocation2 + $0x14] sm:$0xf]
      %v1553 = vld [vmem:[#allocation2 + $0x18] sm:$0xf]
      %v1554 = vld [vmem:[#allocation2 + $0x1c] sm:$0xf]
      %v1555 = vld [vmem:[#allocation2 + $0x20] sm:$0xf]
      %v1556 = vld [vmem:[#allocation2 + $0x24] sm:$0xf]
      %v1557 = vld [vmem:[#allocation2 + $0x28] sm:$0xf]
      %v1558 = vld [vmem:[#allocation2 + $0x2c] sm:$0xf]
      %v1559 = vld [vmem:[#allocation2 + $0x30] sm:$0xf]
      %v1560 = vld [vmem:[#allocation2 + $0x34] sm:$0xf]
      %v1561 = vld [vmem:[#allocation2 + $0x38] sm:$0xf]
      %v1562 = vld [vmem:[#allocation2 + $0x3c] sm:$0xf]
      %v1563 = vld [vmem:[#allocation2 + $0x40] sm:$0xf]
      %v1564 = vld [vmem:[#allocation2 + $0x44] sm:$0xf]
      %v1565 = vld [vmem:[#allocation2 + $0x48] sm:$0xf]
      %v1566 = vld [vmem:[#allocation2 + $0x4c] sm:$0xf]
      %v1567 = vld [vmem:[#allocation2 + $0x50] sm:$0xf]
      %v1568 = vld [vmem:[#allocation2 + $0x54] sm:$0xf]
      %v1569 = vld [vmem:[#allocation2 + $0x58] sm:$0xf]
      %v1570 = vld [vmem:[#allocation2 + $0x5c] sm:$0xf]
      %v1571 = vld [vmem:[#allocation2 + $0x60] sm:$0xf]
      %v1572 = vld [vmem:[#allocation2 + $0x64] sm:$0xf]
      %v1573 = vld [vmem:[#allocation2 + $0x68] sm:$0xf]
      %v1574 = vld [vmem:[#allocation2 + $0x6c] sm:$0xf]
      %v1575 = vld [vmem:[#allocation2 + $0x70] sm:$0xf]
      %v1576 = vld [vmem:[#allocation2 + $0x74] sm:$0xf]
      %v1577 = vld [vmem:[#allocation2 + $0x78] sm:$0xf]
      %v1578 = vld [vmem:[#allocation2 + $0x7c] sm:$0xf]
      %v1579 = vld [vmem:[#allocation2 + $0x80] sm:$0xf]
      %v1580 = vld [vmem:[#allocation2 + $0x84] sm:$0xf]
      %v1581 = vld [vmem:[#allocation2 + $0x88] sm:$0xf]
      %v1582 = vld [vmem:[#allocation2 + $0x8c] sm:$0xf]
      %v1583 = vld [vmem:[#allocation2 + $0x90] sm:$0xf]
      %v1584 = vld [vmem:[#allocation2 + $0x94] sm:$0xf]
      %v1585 = vld [vmem:[#allocation2 + $0x98] sm:$0x3]
      %vm1586 = vsmask.f32 2304
      %vm1587 = vsmask.f32 6416
      %vm1588 = vmor %vm1586, %vm1587
      %v1590 = vshrl.u32 %v1549, 16
      %v1592 = vrot.slane %v1590, 5
      %v1593 = vshll.u32 %v1549, 16
      %v1595 = vrot.slane %v1593, 6
      %v1596 = vor.u32 %v1592, %v1595
      %v1597 = vrot.slane %v1596, 4
      %v1599 = vshrl.u32 %v1550, 16
      %v1601 = vrot.slane %v1599, 5
      %v1602 = vshll.u32 %v1550, 16
      %v1604 = vrot.slane %v1602, 6
      %v1605 = vor.u32 %v1601, %v1604
      %v1606 = vsel %vm1588, %v1597, %v1605
      %v1607 = vrot.slane %v1605, 4
      %v1609 = vshrl.u32 %v1551, 16
      %v1611 = vrot.slane %v1609, 5
      %v1612 = vshll.u32 %v1551, 16
      %v1614 = vrot.slane %v1612, 6
      %v1615 = vor.u32 %v1611, %v1614
      %v1616 = vsel %vm1588, %v1607, %v1615
      %v1617 = vrot.slane %v1615, 4
      %v1619 = vshrl.u32 %v1552, 16
      %v1621 = vrot.slane %v1619, 5
      %v1622 = vshll.u32 %v1552, 16
      %v1624 = vrot.slane %v1622, 6
      %v1625 = vor.u32 %v1621, %v1624
      %v1626 = vsel %vm1588, %v1617, %v1625
      %v1627 = vrot.slane %v1625, 4
      %v1629 = vshrl.u32 %v1553, 16
      %v1631 = vrot.slane %v1629, 5
      %v1632 = vshll.u32 %v1553, 16
      %v1634 = vrot.slane %v1632, 6
      %v1635 = vor.u32 %v1631, %v1634
      %v1636 = vsel %vm1588, %v1627, %v1635
      %v1637 = vrot.slane %v1635, 4
      %v1639 = vshrl.u32 %v1554, 16
      %v1641 = vrot.slane %v1639, 5
      %v1642 = vshll.u32 %v1554, 16
      %v1644 = vrot.slane %v1642, 6
      %v1645 = vor.u32 %v1641, %v1644
      %v1646 = vsel %vm1588, %v1637, %v1645
      %v1647 = vrot.slane %v1645, 4
      %v1649 = vshrl.u32 %v1555, 16
      %v1651 = vrot.slane %v1649, 5
      %v1652 = vshll.u32 %v1555, 16
      %v1654 = vrot.slane %v1652, 6
      %v1655 = vor.u32 %v1651, %v1654
      %v1656 = vsel %vm1588, %v1647, %v1655
      %v1657 = vrot.slane %v1655, 4
      %v1659 = vshrl.u32 %v1556, 16
      %v1661 = vrot.slane %v1659, 5
      %v1662 = vshll.u32 %v1556, 16
      %v1664 = vrot.slane %v1662, 6
      %v1665 = vor.u32 %v1661, %v1664
      %v1666 = vsel %vm1588, %v1657, %v1665
      %v1667 = vrot.slane %v1665, 4
      %v1669 = vshrl.u32 %v1557, 16
      %v1671 = vrot.slane %v1669, 5
      %v1672 = vshll.u32 %v1557, 16
      %v1674 = vrot.slane %v1672, 6
      %v1675 = vor.u32 %v1671, %v1674
      %v1676 = vsel %vm1588, %v1667, %v1675
      %v1677 = vrot.slane %v1675, 4
      %v1679 = vshrl.u32 %v1558, 16
      %v1681 = vrot.slane %v1679, 5
      %v1682 = vshll.u32 %v1558, 16
      %v1684 = vrot.slane %v1682, 6
      %v1685 = vor.u32 %v1681, %v1684
      %v1686 = vsel %vm1588, %v1677, %v1685
      %v1687 = vrot.slane %v1685, 4
      %v1689 = vshrl.u32 %v1559, 16
      %v1691 = vrot.slane %v1689, 5
      %v1692 = vshll.u32 %v1559, 16
      %v1694 = vrot.slane %v1692, 6
      %v1695 = vor.u32 %v1691, %v1694
      %v1696 = vsel %vm1588, %v1687, %v1695
      %v1697 = vrot.slane %v1695, 4
      %v1699 = vshrl.u32 %v1560, 16
      %v1701 = vrot.slane %v1699, 5
      %v1702 = vshll.u32 %v1560, 16
      %v1704 = vrot.slane %v1702, 6
      %v1705 = vor.u32 %v1701, %v1704
      %v1706 = vsel %vm1588, %v1697, %v1705
      %v1707 = vrot.slane %v1705, 4
      %v1709 = vshrl.u32 %v1561, 16
      %v1711 = vrot.slane %v1709, 5
      %v1712 = vshll.u32 %v1561, 16
      %v1714 = vrot.slane %v1712, 6
      %v1715 = vor.u32 %v1711, %v1714
      %v1716 = vsel %vm1588, %v1707, %v1715
      %v1717 = vrot.slane %v1715, 4
      %v1719 = vshrl.u32 %v1562, 16
      %v1721 = vrot.slane %v1719, 5
      %v1722 = vshll.u32 %v1562, 16
      %v1724 = vrot.slane %v1722, 6
      %v1725 = vor.u32 %v1721, %v1724
      %v1726 = vsel %vm1588, %v1717, %v1725
      %v1727 = vrot.slane %v1725, 4
      %v1729 = vshrl.u32 %v1563, 16
      %v1731 = vrot.slane %v1729, 5
      %v1732 = vshll.u32 %v1563, 16
      %v1734 = vrot.slane %v1732, 6
      %v1735 = vor.u32 %v1731, %v1734
      %v1736 = vsel %vm1588, %v1727, %v1735
      %v1737 = vrot.slane %v1735, 4
      %v1739 = vshrl.u32 %v1564, 16
      %v1741 = vrot.slane %v1739, 5
      %v1742 = vshll.u32 %v1564, 16
      %v1744 = vrot.slane %v1742, 6
      %v1745 = vor.u32 %v1741, %v1744
      %v1746 = vsel %vm1588, %v1737, %v1745
      %v1747 = vrot.slane %v1745, 4
      %v1749 = vshrl.u32 %v1565, 16
      %v1751 = vrot.slane %v1749, 5
      %v1752 = vshll.u32 %v1565, 16
      %v1754 = vrot.slane %v1752, 6
      %v1755 = vor.u32 %v1751, %v1754
      %v1756 = vsel %vm1588, %v1747, %v1755
      %v1757 = vrot.slane %v1755, 4
      %v1759 = vshrl.u32 %v1566, 16
      %v1761 = vrot.slane %v1759, 5
      %v1762 = vshll.u32 %v1566, 16
      %v1764 = vrot.slane %v1762, 6
      %v1765 = vor.u32 %v1761, %v1764
      %v1766 = vsel %vm1588, %v1757, %v1765
      %v1767 = vrot.slane %v1765, 4
      %v1769 = vshrl.u32 %v1567, 16
      %v1771 = vrot.slane %v1769, 5
      %v1772 = vshll.u32 %v1567, 16
      %v1774 = vrot.slane %v1772, 6
      %v1775 = vor.u32 %v1771, %v1774
      %v1776 = vsel %vm1588, %v1767, %v1775
      %v1777 = vrot.slane %v1775, 4
      %v1779 = vshrl.u32 %v1568, 16
      %v1781 = vrot.slane %v1779, 5
      %v1782 = vshll.u32 %v1568, 16
      %v1784 = vrot.slane %v1782, 6
      %v1785 = vor.u32 %v1781, %v1784
      %v1786 = vsel %vm1588, %v1777, %v1785
      %v1787 = vrot.slane %v1785, 4
      %v1789 = vshrl.u32 %v1569, 16
      %v1791 = vrot.slane %v1789, 5
      %v1792 = vshll.u32 %v1569, 16
      %v1794 = vrot.slane %v1792, 6
      %v1795 = vor.u32 %v1791, %v1794
      %v1796 = vsel %vm1588, %v1787, %v1795
      %v1797 = vrot.slane %v1795, 4
      %v1799 = vshrl.u32 %v1570, 16
      %v1801 = vrot.slane %v1799, 5
      %v1802 = vshll.u32 %v1570, 16
      %v1804 = vrot.slane %v1802, 6
      %v1805 = vor.u32 %v1801, %v1804
      %v1806 = vsel %vm1588, %v1797, %v1805
      %v1807 = vrot.slane %v1805, 4
      %v1809 = vshrl.u32 %v1571, 16
      %v1811 = vrot.slane %v1809, 5
      %v1812 = vshll.u32 %v1571, 16
      %v1814 = vrot.slane %v1812, 6
      %v1815 = vor.u32 %v1811, %v1814
      %v1816 = vsel %vm1588, %v1807, %v1815
      %v1817 = vrot.slane %v1815, 4
      %v1819 = vshrl.u32 %v1572, 16
      %v1821 = vrot.slane %v1819, 5
      %v1822 = vshll.u32 %v1572, 16
      %v1824 = vrot.slane %v1822, 6
      %v1825 = vor.u32 %v1821, %v1824
      %v1826 = vsel %vm1588, %v1817, %v1825
      %v1827 = vrot.slane %v1825, 4
      %v1829 = vshrl.u32 %v1573, 16
      %v1831 = vrot.slane %v1829, 5
      %v1832 = vshll.u32 %v1573, 16
      %v1834 = vrot.slane %v1832, 6
      %v1835 = vor.u32 %v1831, %v1834
      %v1836 = vsel %vm1588, %v1827, %v1835
      %v1837 = vrot.slane %v1835, 4
      %v1839 = vshrl.u32 %v1574, 16
      %v1841 = vrot.slane %v1839, 5
      %v1842 = vshll.u32 %v1574, 16
      %v1844 = vrot.slane %v1842, 6
      %v1845 = vor.u32 %v1841, %v1844
      %v1846 = vsel %vm1588, %v1837, %v1845
      %v1847 = vrot.slane %v1845, 4
      %v1849 = vshrl.u32 %v1575, 16
      %v1851 = vrot.slane %v1849, 5
      %v1852 = vshll.u32 %v1575, 16
      %v1854 = vrot.slane %v1852, 6
      %v1855 = vor.u32 %v1851, %v1854
      %v1856 = vsel %vm1588, %v1847, %v1855
      %v1857 = vrot.slane %v1855, 4
      %v1859 = vshrl.u32 %v1576, 16
      %v1861 = vrot.slane %v1859, 5
      %v1862 = vshll.u32 %v1576, 16
      %v1864 = vrot.slane %v1862, 6
      %v1865 = vor.u32 %v1861, %v1864
      %v1866 = vsel %vm1588, %v1857, %v1865
      %v1867 = vrot.slane %v1865, 4
      %v1869 = vshrl.u32 %v1577, 16
      %v1871 = vrot.slane %v1869, 5
      %v1872 = vshll.u32 %v1577, 16
      %v1874 = vrot.slane %v1872, 6
      %v1875 = vor.u32 %v1871, %v1874
      %v1876 = vsel %vm1588, %v1867, %v1875
      %v1877 = vrot.slane %v1875, 4
      %v1879 = vshrl.u32 %v1578, 16
      %v1881 = vrot.slane %v1879, 5
      %v1882 = vshll.u32 %v1578, 16
      %v1884 = vrot.slane %v1882, 6
      %v1885 = vor.u32 %v1881, %v1884
      %v1886 = vsel %vm1588, %v1877, %v1885
      %v1887 = vrot.slane %v1885, 4
      %v1889 = vshrl.u32 %v1579, 16
      %v1891 = vrot.slane %v1889, 5
      %v1892 = vshll.u32 %v1579, 16
      %v1894 = vrot.slane %v1892, 6
      %v1895 = vor.u32 %v1891, %v1894
      %v1896 = vsel %vm1588, %v1887, %v1895
      %v1897 = vrot.slane %v1895, 4
      %v1899 = vshrl.u32 %v1580, 16
      %v1901 = vrot.slane %v1899, 5
      %v1902 = vshll.u32 %v1580, 16
      %v1904 = vrot.slane %v1902, 6
      %v1905 = vor.u32 %v1901, %v1904
      %v1906 = vsel %vm1588, %v1897, %v1905
      %v1907 = vrot.slane %v1905, 4
      %v1909 = vshrl.u32 %v1581, 16
      %v1911 = vrot.slane %v1909, 5
      %v1912 = vshll.u32 %v1581, 16
      %v1914 = vrot.slane %v1912, 6
      %v1915 = vor.u32 %v1911, %v1914
      %v1916 = vsel %vm1588, %v1907, %v1915
      %v1917 = vrot.slane %v1915, 4
      %v1919 = vshrl.u32 %v1582, 16
      %v1921 = vrot.slane %v1919, 5
      %v1922 = vshll.u32 %v1582, 16
      %v1924 = vrot.slane %v1922, 6
      %v1925 = vor.u32 %v1921, %v1924
      %v1926 = vsel %vm1588, %v1917, %v1925
      %v1927 = vrot.slane %v1925, 4
      %v1929 = vshrl.u32 %v1583, 16
      %v1931 = vrot.slane %v1929, 5
      %v1932 = vshll.u32 %v1583, 16
      %v1934 = vrot.slane %v1932, 6
      %v1935 = vor.u32 %v1931, %v1934
      %v1936 = vsel %vm1588, %v1927, %v1935
      %v1937 = vrot.slane %v1935, 4
      %v1939 = vshrl.u32 %v1584, 16
      %v1941 = vrot.slane %v1939, 5
      %v1942 = vshll.u32 %v1584, 16
      %v1944 = vrot.slane %v1942, 6
      %v1945 = vor.u32 %v1941, %v1944
      %v1946 = vsel %vm1588, %v1937, %v1945
      %v1947 = vrot.slane %v1945, 4
      %v1949 = vshrl.u32 %v1585, 16
      %v1951 = vrot.slane %v1949, 5
      %v1952 = vshll.u32 %v1585, 16
      %v1954 = vrot.slane %v1952, 6
      %v1955 = vor.u32 %v1951, %v1954
      %v1956 = vsel %vm1588, %v1947, %v1955
      %1993 = vst [vmem:[#allocation4 + $0x10] sm:$0xf] %v1606
      %1994 = vst [vmem:[#allocation4 + $0x34] sm:$0xf] %v1616
      %1995 = vst [vmem:[#allocation4 + $0x58] sm:$0xf] %v1626
      %1996 = vst [vmem:[#allocation4 + $0x7c] sm:$0xf] %v1636
      %1997 = vst [vmem:[#allocation4 + $0xa0] sm:$0xf] %v1646
      %1998 = vst [vmem:[#allocation4 + $0xc4] sm:$0xf] %v1656
      %1999 = vst [vmem:[#allocation4 + $0xe8] sm:$0xf] %v1666
      %2000 = vst [vmem:[#allocation4 + $0x10c] sm:$0xf] %v1676
      %2001 = vst [vmem:[#allocation4 + $0x130] sm:$0xf] %v1686
      %2002 = vst [vmem:[#allocation4 + $0x154] sm:$0xf] %v1696
      %2003 = vst [vmem:[#allocation4 + $0x178] sm:$0xf] %v1706
      %2004 = vst [vmem:[#allocation4 + $0x19c] sm:$0xf] %v1716
      %2005 = vst [vmem:[#allocation4 + $0x1c0] sm:$0xf] %v1726
      %2006 = vst [vmem:[#allocation4 + $0x1e4] sm:$0xf] %v1736
      %2007 = vst [vmem:[#allocation4 + $0x208] sm:$0xf] %v1746
      %2008 = vst [vmem:[#allocation4 + $0x22c] sm:$0xf] %v1756
      %2009 = vst [vmem:[#allocation4 + $0x250] sm:$0xf] %v1766
      %2010 = vst [vmem:[#allocation4 + $0x274] sm:$0xf] %v1776
      %2011 = vst [vmem:[#allocation4 + $0x298] sm:$0xf] %v1786
      %2012 = vst [vmem:[#allocation4 + $0x2bc] sm:$0xf] %v1796
      %2013 = vst [vmem:[#allocation4 + $0x2e0] sm:$0xf] %v1806
      %2014 = vst [vmem:[#allocation4 + $0x304] sm:$0xf] %v1816
      %2015 = vst [vmem:[#allocation4 + $0x328] sm:$0xf] %v1826
      %2016 = vst [vmem:[#allocation4 + $0x34c] sm:$0xf] %v1836
      %2017 = vst [vmem:[#allocation4 + $0x370] sm:$0xf] %v1846
      %2018 = vst [vmem:[#allocation4 + $0x394] sm:$0xf] %v1856
      %2019 = vst [vmem:[#allocation4 + $0x3b8] sm:$0xf] %v1866
      %2020 = vst [vmem:[#allocation4 + $0x3dc] sm:$0xf] %v1876
      %2021 = vst [vmem:[#allocation4 + $0x400] sm:$0xf] %v1886
      %2022 = vst [vmem:[#allocation4 + $0x424] sm:$0xf] %v1896
      %2023 = vst [vmem:[#allocation4 + $0x448] sm:$0xf] %v1906
      %2024 = vst [vmem:[#allocation4 + $0x46c] sm:$0xf] %v1916
      %2025 = vst [vmem:[#allocation4 + $0x490] sm:$0xf] %v1926
      %2026 = vst [vmem:[#allocation4 + $0x4b4] sm:$0xf] %v1936
      %2027 = vst [vmem:[#allocation4 + $0x4d8] sm:$0xf] %v1946
      %2028 = vst [vmem:[#allocation4 + $0x4fc] sm:$0xf] %v1956
      %v2029 = vld [vmem:[#allocation2 + $0x8] sm:$0xc]
      %v2030 = vld [vmem:[#allocation2 + $0xc] sm:$0xf]
      %v2031 = vld [vmem:[#allocation2 + $0x10] sm:$0xf]
      %v2032 = vld [vmem:[#allocation2 + $0x14] sm:$0xf]
      %v2033 = vld [vmem:[#allocation2 + $0x18] sm:$0xf]
      %v2034 = vld [vmem:[#allocation2 + $0x1c] sm:$0xf]
      %v2035 = vld [vmem:[#allocation2 + $0x20] sm:$0xf]
      %v2036 = vld [vmem:[#allocation2 + $0x24] sm:$0xf]
      %v2037 = vld [vmem:[#allocation2 + $0x28] sm:$0xf]
      %v2038 = vld [vmem:[#allocation2 + $0x2c] sm:$0xf]
      %v2039 = vld [vmem:[#allocation2 + $0x30] sm:$0xf]
      %v2040 = vld [vmem:[#allocation2 + $0x34] sm:$0xf]
      %v2041 = vld [vmem:[#allocation2 + $0x38] sm:$0xf]
      %v2042 = vld [vmem:[#allocation2 + $0x3c] sm:$0xf]
      %v2043 = vld [vmem:[#allocation2 + $0x40] sm:$0xf]
      %v2044 = vld [vmem:[#allocation2 + $0x44] sm:$0xf]
      %v2045 = vld [vmem:[#allocation2 + $0x48] sm:$0xf]
      %v2046 = vld [vmem:[#allocation2 + $0x4c] sm:$0xf]
      %v2047 = vld [vmem:[#allocation2 + $0x50] sm:$0xf]
      %v2048 = vld [vmem:[#allocation2 + $0x54] sm:$0xf]
      %v2049 = vld [vmem:[#allocation2 + $0x58] sm:$0xf]
      %v2050 = vld [vmem:[#allocation2 + $0x5c] sm:$0xf]
      %v2051 = vld [vmem:[#allocation2 + $0x60] sm:$0xf]
      %v2052 = vld [vmem:[#allocation2 + $0x64] sm:$0xf]
      %v2053 = vld [vmem:[#allocation2 + $0x68] sm:$0xf]
      %v2054 = vld [vmem:[#allocation2 + $0x6c] sm:$0xf]
      %v2055 = vld [vmem:[#allocation2 + $0x70] sm:$0xf]
      %v2056 = vld [vmem:[#allocation2 + $0x74] sm:$0xf]
      %v2057 = vld [vmem:[#allocation2 + $0x78] sm:$0xf]
      %v2058 = vld [vmem:[#allocation2 + $0x7c] sm:$0xf]
      %v2059 = vld [vmem:[#allocation2 + $0x80] sm:$0xf]
      %v2060 = vld [vmem:[#allocation2 + $0x84] sm:$0xf]
      %v2061 = vld [vmem:[#allocation2 + $0x88] sm:$0xf]
      %v2062 = vld [vmem:[#allocation2 + $0x8c] sm:$0xf]
      %v2063 = vld [vmem:[#allocation2 + $0x90] sm:$0xf]
      %v2064 = vld [vmem:[#allocation2 + $0x94] sm:$0xf]
      %v2065 = vld [vmem:[#allocation2 + $0x98] sm:$0x3]
      %vm2103 = vcmask 1041408
      %vm2104 = vcmask 1045508
      %vm2105 = vmor %vm2103, %vm2104
      %v2106 = vrot.slane %v2029, 6
      %v2107 = vrot.slane %v2106, 4
      %v2108 = vrot.slane %v2030, 6
      %v2109 = vsel %vm2105, %v2107, %v2108
      %v2110 = vrot.slane %v2108, 4
      %v2111 = vrot.slane %v2031, 6
      %v2112 = vsel %vm2105, %v2110, %v2111
      %v2113 = vrot.slane %v2111, 4
      %v2114 = vrot.slane %v2032, 6
      %v2115 = vsel %vm2105, %v2113, %v2114
      %v2116 = vrot.slane %v2114, 4
      %v2117 = vrot.slane %v2033, 6
      %v2118 = vsel %vm2105, %v2116, %v2117
      %v2119 = vrot.slane %v2117, 4
      %v2120 = vrot.slane %v2034, 6
      %v2121 = vsel %vm2105, %v2119, %v2120
      %v2122 = vrot.slane %v2120, 4
      %v2123 = vrot.slane %v2035, 6
      %v2124 = vsel %vm2105, %v2122, %v2123
      %v2125 = vrot.slane %v2123, 4
      %v2126 = vrot.slane %v2036, 6
      %v2127 = vsel %vm2105, %v2125, %v2126
      %v2128 = vrot.slane %v2126, 4
      %v2129 = vrot.slane %v2037, 6
      %v2130 = vsel %vm2105, %v2128, %v2129
      %v2131 = vrot.slane %v2129, 4
      %v2132 = vrot.slane %v2038, 6
      %v2133 = vsel %vm2105, %v2131, %v2132
      %v2134 = vrot.slane %v2132, 4
      %v2135 = vrot.slane %v2039, 6
      %v2136 = vsel %vm2105, %v2134, %v2135
      %v2137 = vrot.slane %v2135, 4
      %v2138 = vrot.slane %v2040, 6
      %v2139 = vsel %vm2105, %v2137, %v2138
      %v2140 = vrot.slane %v2138, 4
      %v2141 = vrot.slane %v2041, 6
      %v2142 = vsel %vm2105, %v2140, %v2141
      %v2143 = vrot.slane %v2141, 4
      %v2144 = vrot.slane %v2042, 6
      %v2145 = vsel %vm2105, %v2143, %v2144
      %v2146 = vrot.slane %v2144, 4
      %v2147 = vrot.slane %v2043, 6
      %v2148 = vsel %vm2105, %v2146, %v2147
      %v2149 = vrot.slane %v2147, 4
      %v2150 = vrot.slane %v2044, 6
      %v2151 = vsel %vm2105, %v2149, %v2150
      %v2152 = vrot.slane %v2150, 4
      %v2153 = vrot.slane %v2045, 6
      %v2154 = vsel %vm2105, %v2152, %v2153
      %v2155 = vrot.slane %v2153, 4
      %v2156 = vrot.slane %v2046, 6
      %v2157 = vsel %vm2105, %v2155, %v2156
      %v2158 = vrot.slane %v2156, 4
      %v2159 = vrot.slane %v2047, 6
      %v2160 = vsel %vm2105, %v2158, %v2159
      %v2161 = vrot.slane %v2159, 4
      %v2162 = vrot.slane %v2048, 6
      %v2163 = vsel %vm2105, %v2161, %v2162
      %v2164 = vrot.slane %v2162, 4
      %v2165 = vrot.slane %v2049, 6
      %v2166 = vsel %vm2105, %v2164, %v2165
      %v2167 = vrot.slane %v2165, 4
      %v2168 = vrot.slane %v2050, 6
      %v2169 = vsel %vm2105, %v2167, %v2168
      %v2170 = vrot.slane %v2168, 4
      %v2171 = vrot.slane %v2051, 6
      %v2172 = vsel %vm2105, %v2170, %v2171
      %v2173 = vrot.slane %v2171, 4
      %v2174 = vrot.slane %v2052, 6
      %v2175 = vsel %vm2105, %v2173, %v2174
      %v2176 = vrot.slane %v2174, 4
      %v2177 = vrot.slane %v2053, 6
      %v2178 = vsel %vm2105, %v2176, %v2177
      %v2179 = vrot.slane %v2177, 4
      %v2180 = vrot.slane %v2054, 6
      %v2181 = vsel %vm2105, %v2179, %v2180
      %v2182 = vrot.slane %v2180, 4
      %v2183 = vrot.slane %v2055, 6
      %v2184 = vsel %vm2105, %v2182, %v2183
      %v2185 = vrot.slane %v2183, 4
      %v2186 = vrot.slane %v2056, 6
      %v2187 = vsel %vm2105, %v2185, %v2186
      %v2188 = vrot.slane %v2186, 4
      %v2189 = vrot.slane %v2057, 6
      %v2190 = vsel %vm2105, %v2188, %v2189
      %v2191 = vrot.slane %v2189, 4
      %v2192 = vrot.slane %v2058, 6
      %v2193 = vsel %vm2105, %v2191, %v2192
      %v2194 = vrot.slane %v2192, 4
      %v2195 = vrot.slane %v2059, 6
      %v2196 = vsel %vm2105, %v2194, %v2195
      %v2197 = vrot.slane %v2195, 4
      %v2198 = vrot.slane %v2060, 6
      %v2199 = vsel %vm2105, %v2197, %v2198
      %v2200 = vrot.slane %v2198, 4
      %v2201 = vrot.slane %v2061, 6
      %v2202 = vsel %vm2105, %v2200, %v2201
      %v2203 = vrot.slane %v2201, 4
      %v2204 = vrot.slane %v2062, 6
      %v2205 = vsel %vm2105, %v2203, %v2204
      %v2206 = vrot.slane %v2204, 4
      %v2207 = vrot.slane %v2063, 6
      %v2208 = vsel %vm2105, %v2206, %v2207
      %v2209 = vrot.slane %v2207, 4
      %v2210 = vrot.slane %v2064, 6
      %v2211 = vsel %vm2105, %v2209, %v2210
      %v2212 = vrot.slane %v2210, 4
      %v2213 = vrot.slane %v2065, 6
      %v2214 = vsel %vm2105, %v2212, %v2213
      %2251 = vst [vmem:[#allocation4 + $0x14] sm:$0xf] %v2109
      %2252 = vst [vmem:[#allocation4 + $0x38] sm:$0xf] %v2112
      %2253 = vst [vmem:[#allocation4 + $0x5c] sm:$0xf] %v2115
      %2254 = vst [vmem:[#allocation4 + $0x80] sm:$0xf] %v2118
      %2255 = vst [vmem:[#allocation4 + $0xa4] sm:$0xf] %v2121
      %2256 = vst [vmem:[#allocation4 + $0xc8] sm:$0xf] %v2124
      %2257 = vst [vmem:[#allocation4 + $0xec] sm:$0xf] %v2127
      %2258 = vst [vmem:[#allocation4 + $0x110] sm:$0xf] %v2130
      %2259 = vst [vmem:[#allocation4 + $0x134] sm:$0xf] %v2133
      %2260 = vst [vmem:[#allocation4 + $0x158] sm:$0xf] %v2136
      %2261 = vst [vmem:[#allocation4 + $0x17c] sm:$0xf] %v2139
      %2262 = vst [vmem:[#allocation4 + $0x1a0] sm:$0xf] %v2142
      %2263 = vst [vmem:[#allocation4 + $0x1c4] sm:$0xf] %v2145
      %2264 = vst [vmem:[#allocation4 + $0x1e8] sm:$0xf] %v2148
      %2265 = vst [vmem:[#allocation4 + $0x20c] sm:$0xf] %v2151
      %2266 = vst [vmem:[#allocation4 + $0x230] sm:$0xf] %v2154
      %2267 = vst [vmem:[#allocation4 + $0x254] sm:$0xf] %v2157
      %2268 = vst [vmem:[#allocation4 + $0x278] sm:$0xf] %v2160
      %2269 = vst [vmem:[#allocation4 + $0x29c] sm:$0xf] %v2163
      %2270 = vst [vmem:[#allocation4 + $0x2c0] sm:$0xf] %v2166
      %2271 = vst [vmem:[#allocation4 + $0x2e4] sm:$0xf] %v2169
      %2272 = vst [vmem:[#allocation4 + $0x308] sm:$0xf] %v2172
      %2273 = vst [vmem:[#allocation4 + $0x32c] sm:$0xf] %v2175
      %2274 = vst [vmem:[#allocation4 + $0x350] sm:$0xf] %v2178
      %2275 = vst [vmem:[#allocation4 + $0x374] sm:$0xf] %v2181
      %2276 = vst [vmem:[#allocation4 + $0x398] sm:$0xf] %v2184
      %2277 = vst [vmem:[#allocation4 + $0x3bc] sm:$0xf] %v2187
      %2278 = vst [vmem:[#allocation4 + $0x3e0] sm:$0xf] %v2190
      %2279 = vst [vmem:[#allocation4 + $0x404] sm:$0xf] %v2193
      %2280 = vst [vmem:[#allocation4 + $0x428] sm:$0xf] %v2196
      %2281 = vst [vmem:[#allocation4 + $0x44c] sm:$0xf] %v2199
      %2282 = vst [vmem:[#allocation4 + $0x470] sm:$0xf] %v2202
      %2283 = vst [vmem:[#allocation4 + $0x494] sm:$0xf] %v2205
      %2284 = vst [vmem:[#allocation4 + $0x4b8] sm:$0xf] %v2208
      %2285 = vst [vmem:[#allocation4 + $0x4dc] sm:$0xf] %v2211
      %2286 = vst [vmem:[#allocation4 + $0x500] sm:$0xf] %v2214
      %v2287 = vld [vmem:[#allocation2 + $0x10] sm:$0xc]
      %v2288 = vld [vmem:[#allocation2 + $0x14] sm:$0xf]
      %v2289 = vld [vmem:[#allocation2 + $0x18] sm:$0xf]
      %v2290 = vld [vmem:[#allocation2 + $0x1c] sm:$0xf]
      %v2291 = vld [vmem:[#allocation2 + $0x20] sm:$0xf]
      %v2292 = vld [vmem:[#allocation2 + $0x24] sm:$0xf]
      %v2293 = vld [vmem:[#allocation2 + $0x28] sm:$0xf]
      %v2294 = vld [vmem:[#allocation2 + $0x2c] sm:$0xf]
      %v2295 = vld [vmem:[#allocation2 + $0x30] sm:$0xf]
      %v2296 = vld [vmem:[#allocation2 + $0x34] sm:$0xf]
      %v2297 = vld [vmem:[#allocation2 + $0x38] sm:$0xf]
      %v2298 = vld [vmem:[#allocation2 + $0x3c] sm:$0xf]
      %v2299 = vld [vmem:[#allocation2 + $0x40] sm:$0xf]
      %v2300 = vld [vmem:[#allocation2 + $0x44] sm:$0xf]
      %v2301 = vld [vmem:[#allocation2 + $0x48] sm:$0xf]
      %v2302 = vld [vmem:[#allocation2 + $0x4c] sm:$0xf]
      %v2303 = vld [vmem:[#allocation2 + $0x50] sm:$0xf]
      %v2304 = vld [vmem:[#allocation2 + $0x54] sm:$0xf]
      %v2305 = vld [vmem:[#allocation2 + $0x58] sm:$0xf]
      %v2306 = vld [vmem:[#allocation2 + $0x5c] sm:$0xf]
      %v2307 = vld [vmem:[#allocation2 + $0x60] sm:$0xf]
      %v2308 = vld [vmem:[#allocation2 + $0x64] sm:$0xf]
      %v2309 = vld [vmem:[#allocation2 + $0x68] sm:$0xf]
      %v2310 = vld [vmem:[#allocation2 + $0x6c] sm:$0xf]
      %v2311 = vld [vmem:[#allocation2 + $0x70] sm:$0xf]
      %v2312 = vld [vmem:[#allocation2 + $0x74] sm:$0xf]
      %v2313 = vld [vmem:[#allocation2 + $0x78] sm:$0xf]
      %v2314 = vld [vmem:[#allocation2 + $0x7c] sm:$0xf]
      %v2315 = vld [vmem:[#allocation2 + $0x80] sm:$0xf]
      %v2316 = vld [vmem:[#allocation2 + $0x84] sm:$0xf]
      %v2317 = vld [vmem:[#allocation2 + $0x88] sm:$0xf]
      %v2318 = vld [vmem:[#allocation2 + $0x8c] sm:$0xf]
      %v2319 = vld [vmem:[#allocation2 + $0x90] sm:$0xf]
      %v2320 = vld [vmem:[#allocation2 + $0x94] sm:$0xf]
      %v2321 = vld [vmem:[#allocation2 + $0x98] sm:$0xf]
      %v2322 = vld [vmem:[#allocation2 + $0x9c] sm:$0xf]
      %v2323 = vld [vmem:[#allocation2 + $0xa0] sm:$0x3]
      %v2361 = vrot.slane %v2287, 6
      %v2362 = vrot.slane %v2361, 4
      %v2363 = vrot.slane %v2288, 6
      %v2364 = vsel %vm2105, %v2362, %v2363
      %v2365 = vrot.slane %v2363, 4
      %v2366 = vrot.slane %v2289, 6
      %v2367 = vsel %vm2105, %v2365, %v2366
      %v2368 = vrot.slane %v2366, 4
      %v2369 = vrot.slane %v2290, 6
      %v2370 = vsel %vm2105, %v2368, %v2369
      %v2371 = vrot.slane %v2369, 4
      %v2372 = vrot.slane %v2291, 6
      %v2373 = vsel %vm2105, %v2371, %v2372
      %v2374 = vrot.slane %v2372, 4
      %v2375 = vrot.slane %v2292, 6
      %v2376 = vsel %vm2105, %v2374, %v2375
      %v2377 = vrot.slane %v2375, 4
      %v2378 = vrot.slane %v2293, 6
      %v2379 = vsel %vm2105, %v2377, %v2378
      %v2380 = vrot.slane %v2378, 4
      %v2381 = vrot.slane %v2294, 6
      %v2382 = vsel %vm2105, %v2380, %v2381
      %v2383 = vrot.slane %v2381, 4
      %v2384 = vrot.slane %v2295, 6
      %v2385 = vsel %vm2105, %v2383, %v2384
      %v2386 = vrot.slane %v2384, 4
      %v2387 = vrot.slane %v2296, 6
      %v2388 = vsel %vm2105, %v2386, %v2387
      %v2389 = vrot.slane %v2387, 4
      %v2390 = vrot.slane %v2297, 6
      %v2391 = vsel %vm2105, %v2389, %v2390
      %v2392 = vrot.slane %v2390, 4
      %v2393 = vrot.slane %v2298, 6
      %v2394 = vsel %vm2105, %v2392, %v2393
      %v2395 = vrot.slane %v2393, 4
      %v2396 = vrot.slane %v2299, 6
      %v2397 = vsel %vm2105, %v2395, %v2396
      %v2398 = vrot.slane %v2396, 4
      %v2399 = vrot.slane %v2300, 6
      %v2400 = vsel %vm2105, %v2398, %v2399
      %v2401 = vrot.slane %v2399, 4
      %v2402 = vrot.slane %v2301, 6
      %v2403 = vsel %vm2105, %v2401, %v2402
      %v2404 = vrot.slane %v2402, 4
      %v2405 = vrot.slane %v2302, 6
      %v2406 = vsel %vm2105, %v2404, %v2405
      %v2407 = vrot.slane %v2405, 4
      %v2408 = vrot.slane %v2303, 6
      %v2409 = vsel %vm2105, %v2407, %v2408
      %v2410 = vrot.slane %v2408, 4
      %v2411 = vrot.slane %v2304, 6
      %v2412 = vsel %vm2105, %v2410, %v2411
      %v2413 = vrot.slane %v2411, 4
      %v2414 = vrot.slane %v2305, 6
      %v2415 = vsel %vm2105, %v2413, %v2414
      %v2416 = vrot.slane %v2414, 4
      %v2417 = vrot.slane %v2306, 6
      %v2418 = vsel %vm2105, %v2416, %v2417
      %v2419 = vrot.slane %v2417, 4
      %v2420 = vrot.slane %v2307, 6
      %v2421 = vsel %vm2105, %v2419, %v2420
      %v2422 = vrot.slane %v2420, 4
      %v2423 = vrot.slane %v2308, 6
      %v2424 = vsel %vm2105, %v2422, %v2423
      %v2425 = vrot.slane %v2423, 4
      %v2426 = vrot.slane %v2309, 6
      %v2427 = vsel %vm2105, %v2425, %v2426
      %v2428 = vrot.slane %v2426, 4
      %v2429 = vrot.slane %v2310, 6
      %v2430 = vsel %vm2105, %v2428, %v2429
      %v2431 = vrot.slane %v2429, 4
      %v2432 = vrot.slane %v2311, 6
      %v2433 = vsel %vm2105, %v2431, %v2432
      %v2434 = vrot.slane %v2432, 4
      %v2435 = vrot.slane %v2312, 6
      %v2436 = vsel %vm2105, %v2434, %v2435
      %v2437 = vrot.slane %v2435, 4
      %v2438 = vrot.slane %v2313, 6
      %v2439 = vsel %vm2105, %v2437, %v2438
      %v2440 = vrot.slane %v2438, 4
      %v2441 = vrot.slane %v2314, 6
      %v2442 = vsel %vm2105, %v2440, %v2441
      %v2443 = vrot.slane %v2441, 4
      %v2444 = vrot.slane %v2315, 6
      %v2445 = vsel %vm2105, %v2443, %v2444
      %v2446 = vrot.slane %v2444, 4
      %v2447 = vrot.slane %v2316, 6
      %v2448 = vsel %vm2105, %v2446, %v2447
      %v2449 = vrot.slane %v2447, 4
      %v2450 = vrot.slane %v2317, 6
      %v2451 = vsel %vm2105, %v2449, %v2450
      %v2452 = vrot.slane %v2450, 4
      %v2453 = vrot.slane %v2318, 6
      %v2454 = vsel %vm2105, %v2452, %v2453
      %v2455 = vrot.slane %v2453, 4
      %v2456 = vrot.slane %v2319, 6
      %v2457 = vsel %vm2105, %v2455, %v2456
      %v2458 = vrot.slane %v2456, 4
      %v2459 = vrot.slane %v2320, 6
      %v2460 = vsel %vm2105, %v2458, %v2459
      %v2461 = vrot.slane %v2459, 4
      %v2462 = vrot.slane %v2321, 6
      %v2463 = vsel %vm2105, %v2461, %v2462
      %v2464 = vrot.slane %v2462, 4
      %v2465 = vrot.slane %v2322, 6
      %v2466 = vsel %vm2105, %v2464, %v2465
      %v2467 = vrot.slane %v2465, 4
      %v2468 = vrot.slane %v2323, 6
      %v2469 = vsel %vm2105, %v2467, %v2468
      %2506 = vst [vmem:[#allocation4 + $0x18] sm:$0xf] %v2364
      %2507 = vst [vmem:[#allocation4 + $0x3c] sm:$0xf] %v2367
      %2508 = vst [vmem:[#allocation4 + $0x60] sm:$0xf] %v2370
      %2509 = vst [vmem:[#allocation4 + $0x84] sm:$0xf] %v2373
      %2510 = vst [vmem:[#allocation4 + $0xa8] sm:$0xf] %v2376
      %2511 = vst [vmem:[#allocation4 + $0xcc] sm:$0xf] %v2379
      %2512 = vst [vmem:[#allocation4 + $0xf0] sm:$0xf] %v2382
      %2513 = vst [vmem:[#allocation4 + $0x114] sm:$0xf] %v2385
      %2514 = vst [vmem:[#allocation4 + $0x138] sm:$0xf] %v2388
      %2515 = vst [vmem:[#allocation4 + $0x15c] sm:$0xf] %v2391
      %2516 = vst [vmem:[#allocation4 + $0x180] sm:$0xf] %v2394
      %2517 = vst [vmem:[#allocation4 + $0x1a4] sm:$0xf] %v2397
      %2518 = vst [vmem:[#allocation4 + $0x1c8] sm:$0xf] %v2400
      %2519 = vst [vmem:[#allocation4 + $0x1ec] sm:$0xf] %v2403
      %2520 = vst [vmem:[#allocation4 + $0x210] sm:$0xf] %v2406
      %2521 = vst [vmem:[#allocation4 + $0x234] sm:$0xf] %v2409
      %2522 = vst [vmem:[#allocation4 + $0x258] sm:$0xf] %v2412
      %2523 = vst [vmem:[#allocation4 + $0x27c] sm:$0xf] %v2415
      %2524 = vst [vmem:[#allocation4 + $0x2a0] sm:$0xf] %v2418
      %2525 = vst [vmem:[#allocation4 + $0x2c4] sm:$0xf] %v2421
      %2526 = vst [vmem:[#allocation4 + $0x2e8] sm:$0xf] %v2424
      %2527 = vst [vmem:[#allocation4 + $0x30c] sm:$0xf] %v2427
      %2528 = vst [vmem:[#allocation4 + $0x330] sm:$0xf] %v2430
      %2529 = vst [vmem:[#allocation4 + $0x354] sm:$0xf] %v2433
      %2530 = vst [vmem:[#allocation4 + $0x378] sm:$0xf] %v2436
      %2531 = vst [vmem:[#allocation4 + $0x39c] sm:$0xf] %v2439
      %2532 = vst [vmem:[#allocation4 + $0x3c0] sm:$0xf] %v2442
      %2533 = vst [vmem:[#allocation4 + $0x3e4] sm:$0xf] %v2445
      %2534 = vst [vmem:[#allocation4 + $0x408] sm:$0xf] %v2448
      %2535 = vst [vmem:[#allocation4 + $0x42c] sm:$0xf] %v2451
      %2536 = vst [vmem:[#allocation4 + $0x450] sm:$0xf] %v2454
      %2537 = vst [vmem:[#allocation4 + $0x474] sm:$0xf] %v2457
      %2538 = vst [vmem:[#allocation4 + $0x498] sm:$0xf] %v2460
      %2539 = vst [vmem:[#allocation4 + $0x4bc] sm:$0xf] %v2463
      %2540 = vst [vmem:[#allocation4 + $0x4e0] sm:$0xf] %v2466
      %2541 = vst [vmem:[#allocation4 + $0x504] sm:$0xf] %v2469
      %v2542 = vld [vmem:[#allocation2 + $0x10] sm:$0xc]
      %v2543 = vld [vmem:[#allocation2 + $0x14] sm:$0xf]
      %v2544 = vld [vmem:[#allocation2 + $0x18] sm:$0xf]
      %v2545 = vld [vmem:[#allocation2 + $0x1c] sm:$0xf]
      %v2546 = vld [vmem:[#allocation2 + $0x20] sm:$0xf]
      %v2547 = vld [vmem:[#allocation2 + $0x24] sm:$0xf]
      %v2548 = vld [vmem:[#allocation2 + $0x28] sm:$0xf]
      %v2549 = vld [vmem:[#allocation2 + $0x2c] sm:$0xf]
      %v2550 = vld [vmem:[#allocation2 + $0x30] sm:$0xf]
      %v2551 = vld [vmem:[#allocation2 + $0x34] sm:$0xf]
      %v2552 = vld [vmem:[#allocation2 + $0x38] sm:$0xf]
      %v2553 = vld [vmem:[#allocation2 + $0x3c] sm:$0xf]
      %v2554 = vld [vmem:[#allocation2 + $0x40] sm:$0xf]
      %v2555 = vld [vmem:[#allocation2 + $0x44] sm:$0xf]
      %v2556 = vld [vmem:[#allocation2 + $0x48] sm:$0xf]
      %v2557 = vld [vmem:[#allocation2 + $0x4c] sm:$0xf]
      %v2558 = vld [vmem:[#allocation2 + $0x50] sm:$0xf]
      %v2559 = vld [vmem:[#allocation2 + $0x54] sm:$0xf]
      %v2560 = vld [vmem:[#allocation2 + $0x58] sm:$0xf]
      %v2561 = vld [vmem:[#allocation2 + $0x5c] sm:$0xf]
      %v2562 = vld [vmem:[#allocation2 + $0x60] sm:$0xf]
      %v2563 = vld [vmem:[#allocation2 + $0x64] sm:$0xf]
      %v2564 = vld [vmem:[#allocation2 + $0x68] sm:$0xf]
      %v2565 = vld [vmem:[#allocation2 + $0x6c] sm:$0xf]
      %v2566 = vld [vmem:[#allocation2 + $0x70] sm:$0xf]
      %v2567 = vld [vmem:[#allocation2 + $0x74] sm:$0xf]
      %v2568 = vld [vmem:[#allocation2 + $0x78] sm:$0xf]
      %v2569 = vld [vmem:[#allocation2 + $0x7c] sm:$0xf]
      %v2570 = vld [vmem:[#allocation2 + $0x80] sm:$0xf]
      %v2571 = vld [vmem:[#allocation2 + $0x84] sm:$0xf]
      %v2572 = vld [vmem:[#allocation2 + $0x88] sm:$0xf]
      %v2573 = vld [vmem:[#allocation2 + $0x8c] sm:$0xf]
      %v2574 = vld [vmem:[#allocation2 + $0x90] sm:$0xf]
      %v2575 = vld [vmem:[#allocation2 + $0x94] sm:$0xf]
      %v2576 = vld [vmem:[#allocation2 + $0x98] sm:$0xf]
      %v2577 = vld [vmem:[#allocation2 + $0x9c] sm:$0xf]
      %v2578 = vld [vmem:[#allocation2 + $0xa0] sm:$0x7]
      %vm2579 = vsmask.f32 1280
      %vm2580 = vsmask.f32 5392
      %vm2581 = vmor %vm2579, %vm2580
      %v2583 = vshrl.u32 %v2542, 16
      %v2585 = vrot.slane %v2583, 6
      %v2586 = vshll.u32 %v2542, 16
      %v2588 = vrot.slane %v2586, 7
      %v2589 = vor.u32 %v2585, %v2588
      %v2590 = vrot.slane %v2589, 4
      %v2592 = vshrl.u32 %v2543, 16
      %v2594 = vrot.slane %v2592, 6
      %v2595 = vshll.u32 %v2543, 16
      %v2597 = vrot.slane %v2595, 7
      %v2598 = vor.u32 %v2594, %v2597
      %v2599 = vsel %vm2581, %v2590, %v2598
      %v2600 = vrot.slane %v2598, 4
      %v2602 = vshrl.u32 %v2544, 16
      %v2604 = vrot.slane %v2602, 6
      %v2605 = vshll.u32 %v2544, 16
      %v2607 = vrot.slane %v2605, 7
      %v2608 = vor.u32 %v2604, %v2607
      %v2609 = vsel %vm2581, %v2600, %v2608
      %v2610 = vrot.slane %v2608, 4
      %v2612 = vshrl.u32 %v2545, 16
      %v2614 = vrot.slane %v2612, 6
      %v2615 = vshll.u32 %v2545, 16
      %v2617 = vrot.slane %v2615, 7
      %v2618 = vor.u32 %v2614, %v2617
      %v2619 = vsel %vm2581, %v2610, %v2618
      %v2620 = vrot.slane %v2618, 4
      %v2622 = vshrl.u32 %v2546, 16
      %v2624 = vrot.slane %v2622, 6
      %v2625 = vshll.u32 %v2546, 16
      %v2627 = vrot.slane %v2625, 7
      %v2628 = vor.u32 %v2624, %v2627
      %v2629 = vsel %vm2581, %v2620, %v2628
      %v2630 = vrot.slane %v2628, 4
      %v2632 = vshrl.u32 %v2547, 16
      %v2634 = vrot.slane %v2632, 6
      %v2635 = vshll.u32 %v2547, 16
      %v2637 = vrot.slane %v2635, 7
      %v2638 = vor.u32 %v2634, %v2637
      %v2639 = vsel %vm2581, %v2630, %v2638
      %v2640 = vrot.slane %v2638, 4
      %v2642 = vshrl.u32 %v2548, 16
      %v2644 = vrot.slane %v2642, 6
      %v2645 = vshll.u32 %v2548, 16
      %v2647 = vrot.slane %v2645, 7
      %v2648 = vor.u32 %v2644, %v2647
      %v2649 = vsel %vm2581, %v2640, %v2648
      %v2650 = vrot.slane %v2648, 4
      %v2652 = vshrl.u32 %v2549, 16
      %v2654 = vrot.slane %v2652, 6
      %v2655 = vshll.u32 %v2549, 16
      %v2657 = vrot.slane %v2655, 7
      %v2658 = vor.u32 %v2654, %v2657
      %v2659 = vsel %vm2581, %v2650, %v2658
      %v2660 = vrot.slane %v2658, 4
      %v2662 = vshrl.u32 %v2550, 16
      %v2664 = vrot.slane %v2662, 6
      %v2665 = vshll.u32 %v2550, 16
      %v2667 = vrot.slane %v2665, 7
      %v2668 = vor.u32 %v2664, %v2667
      %v2669 = vsel %vm2581, %v2660, %v2668
      %v2670 = vrot.slane %v2668, 4
      %v2672 = vshrl.u32 %v2551, 16
      %v2674 = vrot.slane %v2672, 6
      %v2675 = vshll.u32 %v2551, 16
      %v2677 = vrot.slane %v2675, 7
      %v2678 = vor.u32 %v2674, %v2677
      %v2679 = vsel %vm2581, %v2670, %v2678
      %v2680 = vrot.slane %v2678, 4
      %v2682 = vshrl.u32 %v2552, 16
      %v2684 = vrot.slane %v2682, 6
      %v2685 = vshll.u32 %v2552, 16
      %v2687 = vrot.slane %v2685, 7
      %v2688 = vor.u32 %v2684, %v2687
      %v2689 = vsel %vm2581, %v2680, %v2688
      %v2690 = vrot.slane %v2688, 4
      %v2692 = vshrl.u32 %v2553, 16
      %v2694 = vrot.slane %v2692, 6
      %v2695 = vshll.u32 %v2553, 16
      %v2697 = vrot.slane %v2695, 7
      %v2698 = vor.u32 %v2694, %v2697
      %v2699 = vsel %vm2581, %v2690, %v2698
      %v2700 = vrot.slane %v2698, 4
      %v2702 = vshrl.u32 %v2554, 16
      %v2704 = vrot.slane %v2702, 6
      %v2705 = vshll.u32 %v2554, 16
      %v2707 = vrot.slane %v2705, 7
      %v2708 = vor.u32 %v2704, %v2707
      %v2709 = vsel %vm2581, %v2700, %v2708
      %v2710 = vrot.slane %v2708, 4
      %v2712 = vshrl.u32 %v2555, 16
      %v2714 = vrot.slane %v2712, 6
      %v2715 = vshll.u32 %v2555, 16
      %v2717 = vrot.slane %v2715, 7
      %v2718 = vor.u32 %v2714, %v2717
      %v2719 = vsel %vm2581, %v2710, %v2718
      %v2720 = vrot.slane %v2718, 4
      %v2722 = vshrl.u32 %v2556, 16
      %v2724 = vrot.slane %v2722, 6
      %v2725 = vshll.u32 %v2556, 16
      %v2727 = vrot.slane %v2725, 7
      %v2728 = vor.u32 %v2724, %v2727
      %v2729 = vsel %vm2581, %v2720, %v2728
      %v2730 = vrot.slane %v2728, 4
      %v2732 = vshrl.u32 %v2557, 16
      %v2734 = vrot.slane %v2732, 6
      %v2735 = vshll.u32 %v2557, 16
      %v2737 = vrot.slane %v2735, 7
      %v2738 = vor.u32 %v2734, %v2737
      %v2739 = vsel %vm2581, %v2730, %v2738
      %v2740 = vrot.slane %v2738, 4
      %v2742 = vshrl.u32 %v2558, 16
      %v2744 = vrot.slane %v2742, 6
      %v2745 = vshll.u32 %v2558, 16
      %v2747 = vrot.slane %v2745, 7
      %v2748 = vor.u32 %v2744, %v2747
      %v2749 = vsel %vm2581, %v2740, %v2748
      %v2750 = vrot.slane %v2748, 4
      %v2752 = vshrl.u32 %v2559, 16
      %v2754 = vrot.slane %v2752, 6
      %v2755 = vshll.u32 %v2559, 16
      %v2757 = vrot.slane %v2755, 7
      %v2758 = vor.u32 %v2754, %v2757
      %v2759 = vsel %vm2581, %v2750, %v2758
      %v2760 = vrot.slane %v2758, 4
      %v2762 = vshrl.u32 %v2560, 16
      %v2764 = vrot.slane %v2762, 6
      %v2765 = vshll.u32 %v2560, 16
      %v2767 = vrot.slane %v2765, 7
      %v2768 = vor.u32 %v2764, %v2767
      %v2769 = vsel %vm2581, %v2760, %v2768
      %v2770 = vrot.slane %v2768, 4
      %v2772 = vshrl.u32 %v2561, 16
      %v2774 = vrot.slane %v2772, 6
      %v2775 = vshll.u32 %v2561, 16
      %v2777 = vrot.slane %v2775, 7
      %v2778 = vor.u32 %v2774, %v2777
      %v2779 = vsel %vm2581, %v2770, %v2778
      %v2780 = vrot.slane %v2778, 4
      %v2782 = vshrl.u32 %v2562, 16
      %v2784 = vrot.slane %v2782, 6
      %v2785 = vshll.u32 %v2562, 16
      %v2787 = vrot.slane %v2785, 7
      %v2788 = vor.u32 %v2784, %v2787
      %v2789 = vsel %vm2581, %v2780, %v2788
      %v2790 = vrot.slane %v2788, 4
      %v2792 = vshrl.u32 %v2563, 16
      %v2794 = vrot.slane %v2792, 6
      %v2795 = vshll.u32 %v2563, 16
      %v2797 = vrot.slane %v2795, 7
      %v2798 = vor.u32 %v2794, %v2797
      %v2799 = vsel %vm2581, %v2790, %v2798
      %v2800 = vrot.slane %v2798, 4
      %v2802 = vshrl.u32 %v2564, 16
      %v2804 = vrot.slane %v2802, 6
      %v2805 = vshll.u32 %v2564, 16
      %v2807 = vrot.slane %v2805, 7
      %v2808 = vor.u32 %v2804, %v2807
      %v2809 = vsel %vm2581, %v2800, %v2808
      %v2810 = vrot.slane %v2808, 4
      %v2812 = vshrl.u32 %v2565, 16
      %v2814 = vrot.slane %v2812, 6
      %v2815 = vshll.u32 %v2565, 16
      %v2817 = vrot.slane %v2815, 7
      %v2818 = vor.u32 %v2814, %v2817
      %v2819 = vsel %vm2581, %v2810, %v2818
      %v2820 = vrot.slane %v2818, 4
      %v2822 = vshrl.u32 %v2566, 16
      %v2824 = vrot.slane %v2822, 6
      %v2825 = vshll.u32 %v2566, 16
      %v2827 = vrot.slane %v2825, 7
      %v2828 = vor.u32 %v2824, %v2827
      %v2829 = vsel %vm2581, %v2820, %v2828
      %v2830 = vrot.slane %v2828, 4
      %v2832 = vshrl.u32 %v2567, 16
      %v2834 = vrot.slane %v2832, 6
      %v2835 = vshll.u32 %v2567, 16
      %v2837 = vrot.slane %v2835, 7
      %v2838 = vor.u32 %v2834, %v2837
      %v2839 = vsel %vm2581, %v2830, %v2838
      %v2840 = vrot.slane %v2838, 4
      %v2842 = vshrl.u32 %v2568, 16
      %v2844 = vrot.slane %v2842, 6
      %v2845 = vshll.u32 %v2568, 16
      %v2847 = vrot.slane %v2845, 7
      %v2848 = vor.u32 %v2844, %v2847
      %v2849 = vsel %vm2581, %v2840, %v2848
      %v2850 = vrot.slane %v2848, 4
      %v2852 = vshrl.u32 %v2569, 16
      %v2854 = vrot.slane %v2852, 6
      %v2855 = vshll.u32 %v2569, 16
      %v2857 = vrot.slane %v2855, 7
      %v2858 = vor.u32 %v2854, %v2857
      %v2859 = vsel %vm2581, %v2850, %v2858
      %v2860 = vrot.slane %v2858, 4
      %v2862 = vshrl.u32 %v2570, 16
      %v2864 = vrot.slane %v2862, 6
      %v2865 = vshll.u32 %v2570, 16
      %v2867 = vrot.slane %v2865, 7
      %v2868 = vor.u32 %v2864, %v2867
      %v2869 = vsel %vm2581, %v2860, %v2868
      %v2870 = vrot.slane %v2868, 4
      %v2872 = vshrl.u32 %v2571, 16
      %v2874 = vrot.slane %v2872, 6
      %v2875 = vshll.u32 %v2571, 16
      %v2877 = vrot.slane %v2875, 7
      %v2878 = vor.u32 %v2874, %v2877
      %v2879 = vsel %vm2581, %v2870, %v2878
      %v2880 = vrot.slane %v2878, 4
      %v2882 = vshrl.u32 %v2572, 16
      %v2884 = vrot.slane %v2882, 6
      %v2885 = vshll.u32 %v2572, 16
      %v2887 = vrot.slane %v2885, 7
      %v2888 = vor.u32 %v2884, %v2887
      %v2889 = vsel %vm2581, %v2880, %v2888
      %v2890 = vrot.slane %v2888, 4
      %v2892 = vshrl.u32 %v2573, 16
      %v2894 = vrot.slane %v2892, 6
      %v2895 = vshll.u32 %v2573, 16
      %v2897 = vrot.slane %v2895, 7
      %v2898 = vor.u32 %v2894, %v2897
      %v2899 = vsel %vm2581, %v2890, %v2898
      %v2900 = vrot.slane %v2898, 4
      %v2902 = vshrl.u32 %v2574, 16
      %v2904 = vrot.slane %v2902, 6
      %v2905 = vshll.u32 %v2574, 16
      %v2907 = vrot.slane %v2905, 7
      %v2908 = vor.u32 %v2904, %v2907
      %v2909 = vsel %vm2581, %v2900, %v2908
      %v2910 = vrot.slane %v2908, 4
      %v2912 = vshrl.u32 %v2575, 16
      %v2914 = vrot.slane %v2912, 6
      %v2915 = vshll.u32 %v2575, 16
      %v2917 = vrot.slane %v2915, 7
      %v2918 = vor.u32 %v2914, %v2917
      %v2919 = vsel %vm2581, %v2910, %v2918
      %v2920 = vrot.slane %v2918, 4
      %v2922 = vshrl.u32 %v2576, 16
      %v2924 = vrot.slane %v2922, 6
      %v2925 = vshll.u32 %v2576, 16
      %v2927 = vrot.slane %v2925, 7
      %v2928 = vor.u32 %v2924, %v2927
      %v2929 = vsel %vm2581, %v2920, %v2928
      %v2930 = vrot.slane %v2928, 4
      %v2932 = vshrl.u32 %v2577, 16
      %v2934 = vrot.slane %v2932, 6
      %v2935 = vshll.u32 %v2577, 16
      %v2937 = vrot.slane %v2935, 7
      %v2938 = vor.u32 %v2934, %v2937
      %v2939 = vsel %vm2581, %v2930, %v2938
      %v2940 = vrot.slane %v2938, 4
      %v2942 = vshrl.u32 %v2578, 16
      %v2944 = vrot.slane %v2942, 6
      %v2945 = vshll.u32 %v2578, 16
      %v2947 = vrot.slane %v2945, 7
      %v2948 = vor.u32 %v2944, %v2947
      %v2949 = vsel %vm2581, %v2940, %v2948
      %2986 = vst [vmem:[#allocation4 + $0x1c] sm:$0xf] %v2599
      %2987 = vst [vmem:[#allocation4 + $0x40] sm:$0xf] %v2609
      %2988 = vst [vmem:[#allocation4 + $0x64] sm:$0xf] %v2619
      %2989 = vst [vmem:[#allocation4 + $0x88] sm:$0xf] %v2629
      %2990 = vst [vmem:[#allocation4 + $0xac] sm:$0xf] %v2639
      %2991 = vst [vmem:[#allocation4 + $0xd0] sm:$0xf] %v2649
      %2992 = vst [vmem:[#allocation4 + $0xf4] sm:$0xf] %v2659
      %2993 = vst [vmem:[#allocation4 + $0x118] sm:$0xf] %v2669
      %2994 = vst [vmem:[#allocation4 + $0x13c] sm:$0xf] %v2679
      %2995 = vst [vmem:[#allocation4 + $0x160] sm:$0xf] %v2689
      %2996 = vst [vmem:[#allocation4 + $0x184] sm:$0xf] %v2699
      %2997 = vst [vmem:[#allocation4 + $0x1a8] sm:$0xf] %v2709
      %2998 = vst [vmem:[#allocation4 + $0x1cc] sm:$0xf] %v2719
      %2999 = vst [vmem:[#allocation4 + $0x1f0] sm:$0xf] %v2729
      %3000 = vst [vmem:[#allocation4 + $0x214] sm:$0xf] %v2739
      %3001 = vst [vmem:[#allocation4 + $0x238] sm:$0xf] %v2749
      %3002 = vst [vmem:[#allocation4 + $0x25c] sm:$0xf] %v2759
      %3003 = vst [vmem:[#allocation4 + $0x280] sm:$0xf] %v2769
      %3004 = vst [vmem:[#allocation4 + $0x2a4] sm:$0xf] %v2779
      %3005 = vst [vmem:[#allocation4 + $0x2c8] sm:$0xf] %v2789
      %3006 = vst [vmem:[#allocation4 + $0x2ec] sm:$0xf] %v2799
      %3007 = vst [vmem:[#allocation4 + $0x310] sm:$0xf] %v2809
      %3008 = vst [vmem:[#allocation4 + $0x334] sm:$0xf] %v2819
      %3009 = vst [vmem:[#allocation4 + $0x358] sm:$0xf] %v2829
      %3010 = vst [vmem:[#allocation4 + $0x37c] sm:$0xf] %v2839
      %3011 = vst [vmem:[#allocation4 + $0x3a0] sm:$0xf] %v2849
      %3012 = vst [vmem:[#allocation4 + $0x3c4] sm:$0xf] %v2859
      %3013 = vst [vmem:[#allocation4 + $0x3e8] sm:$0xf] %v2869
      %3014 = vst [vmem:[#allocation4 + $0x40c] sm:$0xf] %v2879
      %3015 = vst [vmem:[#allocation4 + $0x430] sm:$0xf] %v2889
      %3016 = vst [vmem:[#allocation4 + $0x454] sm:$0xf] %v2899
      %3017 = vst [vmem:[#allocation4 + $0x478] sm:$0xf] %v2909
      %3018 = vst [vmem:[#allocation4 + $0x49c] sm:$0xf] %v2919
      %3019 = vst [vmem:[#allocation4 + $0x4c0] sm:$0xf] %v2929
      %3020 = vst [vmem:[#allocation4 + $0x4e4] sm:$0xf] %v2939
      %3021 = vst [vmem:[#allocation4 + $0x508] sm:$0xf] %v2949
      %v3022 = vld [vmem:[#allocation2 + $0x10] sm:$0x8]
      %v3023 = vld [vmem:[#allocation2 + $0x14] sm:$0xf]
      %v3024 = vld [vmem:[#allocation2 + $0x18] sm:$0xf]
      %v3025 = vld [vmem:[#allocation2 + $0x1c] sm:$0xf]
      %v3026 = vld [vmem:[#allocation2 + $0x20] sm:$0xf]
      %v3027 = vld [vmem:[#allocation2 + $0x24] sm:$0xf]
      %v3028 = vld [vmem:[#allocation2 + $0x28] sm:$0xf]
      %v3029 = vld [vmem:[#allocation2 + $0x2c] sm:$0xf]
      %v3030 = vld [vmem:[#allocation2 + $0x30] sm:$0xf]
      %v3031 = vld [vmem:[#allocation2 + $0x34] sm:$0xf]
      %v3032 = vld [vmem:[#allocation2 + $0x38] sm:$0xf]
      %v3033 = vld [vmem:[#allocation2 + $0x3c] sm:$0xf]
      %v3034 = vld [vmem:[#allocation2 + $0x40] sm:$0xf]
      %v3035 = vld [vmem:[#allocation2 + $0x44] sm:$0xf]
      %v3036 = vld [vmem:[#allocation2 + $0x48] sm:$0xf]
      %v3037 = vld [vmem:[#allocation2 + $0x4c] sm:$0xf]
      %v3038 = vld [vmem:[#allocation2 + $0x50] sm:$0xf]
      %v3039 = vld [vmem:[#allocation2 + $0x54] sm:$0xf]
      %v3040 = vld [vmem:[#allocation2 + $0x58] sm:$0xf]
      %v3041 = vld [vmem:[#allocation2 + $0x5c] sm:$0xf]
      %v3042 = vld [vmem:[#allocation2 + $0x60] sm:$0xf]
      %v3043 = vld [vmem:[#allocation2 + $0x64] sm:$0xf]
      %v3044 = vld [vmem:[#allocation2 + $0x68] sm:$0xf]
      %v3045 = vld [vmem:[#allocation2 + $0x6c] sm:$0xf]
      %v3046 = vld [vmem:[#allocation2 + $0x70] sm:$0xf]
      %v3047 = vld [vmem:[#allocation2 + $0x74] sm:$0xf]
      %v3048 = vld [vmem:[#allocation2 + $0x78] sm:$0xf]
      %v3049 = vld [vmem:[#allocation2 + $0x7c] sm:$0xf]
      %v3050 = vld [vmem:[#allocation2 + $0x80] sm:$0xf]
      %v3051 = vld [vmem:[#allocation2 + $0x84] sm:$0xf]
      %v3052 = vld [vmem:[#allocation2 + $0x88] sm:$0xf]
      %v3053 = vld [vmem:[#allocation2 + $0x8c] sm:$0xf]
      %v3054 = vld [vmem:[#allocation2 + $0x90] sm:$0xf]
      %v3055 = vld [vmem:[#allocation2 + $0x94] sm:$0xf]
      %v3056 = vld [vmem:[#allocation2 + $0x98] sm:$0xf]
      %v3057 = vld [vmem:[#allocation2 + $0x9c] sm:$0xf]
      %v3058 = vld [vmem:[#allocation2 + $0xa0] sm:$0x7]
      %v3096 = vrot.slane %v3022, 7
      %v3097 = vrot.slane %v3096, 4
      %v3098 = vrot.slane %v3023, 7
      %v3099 = vsel %vm303, %v3097, %v3098
      %v3100 = vrot.slane %v3098, 4
      %v3101 = vrot.slane %v3024, 7
      %v3102 = vsel %vm303, %v3100, %v3101
      %v3103 = vrot.slane %v3101, 4
      %v3104 = vrot.slane %v3025, 7
      %v3105 = vsel %vm303, %v3103, %v3104
      %v3106 = vrot.slane %v3104, 4
      %v3107 = vrot.slane %v3026, 7
      %v3108 = vsel %vm303, %v3106, %v3107
      %v3109 = vrot.slane %v3107, 4
      %v3110 = vrot.slane %v3027, 7
      %v3111 = vsel %vm303, %v3109, %v3110
      %v3112 = vrot.slane %v3110, 4
      %v3113 = vrot.slane %v3028, 7
      %v3114 = vsel %vm303, %v3112, %v3113
      %v3115 = vrot.slane %v3113, 4
      %v3116 = vrot.slane %v3029, 7
      %v3117 = vsel %vm303, %v3115, %v3116
      %v3118 = vrot.slane %v3116, 4
      %v3119 = vrot.slane %v3030, 7
      %v3120 = vsel %vm303, %v3118, %v3119
      %v3121 = vrot.slane %v3119, 4
      %v3122 = vrot.slane %v3031, 7
      %v3123 = vsel %vm303, %v3121, %v3122
      %v3124 = vrot.slane %v3122, 4
      %v3125 = vrot.slane %v3032, 7
      %v3126 = vsel %vm303, %v3124, %v3125
      %v3127 = vrot.slane %v3125, 4
      %v3128 = vrot.slane %v3033, 7
      %v3129 = vsel %vm303, %v3127, %v3128
      %v3130 = vrot.slane %v3128, 4
      %v3131 = vrot.slane %v3034, 7
      %v3132 = vsel %vm303, %v3130, %v3131
      %v3133 = vrot.slane %v3131, 4
      %v3134 = vrot.slane %v3035, 7
      %v3135 = vsel %vm303, %v3133, %v3134
      %v3136 = vrot.slane %v3134, 4
      %v3137 = vrot.slane %v3036, 7
      %v3138 = vsel %vm303, %v3136, %v3137
      %v3139 = vrot.slane %v3137, 4
      %v3140 = vrot.slane %v3037, 7
      %v3141 = vsel %vm303, %v3139, %v3140
      %v3142 = vrot.slane %v3140, 4
      %v3143 = vrot.slane %v3038, 7
      %v3144 = vsel %vm303, %v3142, %v3143
      %v3145 = vrot.slane %v3143, 4
      %v3146 = vrot.slane %v3039, 7
      %v3147 = vsel %vm303, %v3145, %v3146
      %v3148 = vrot.slane %v3146, 4
      %v3149 = vrot.slane %v3040, 7
      %v3150 = vsel %vm303, %v3148, %v3149
      %v3151 = vrot.slane %v3149, 4
      %v3152 = vrot.slane %v3041, 7
      %v3153 = vsel %vm303, %v3151, %v3152
      %v3154 = vrot.slane %v3152, 4
      %v3155 = vrot.slane %v3042, 7
      %v3156 = vsel %vm303, %v3154, %v3155
      %v3157 = vrot.slane %v3155, 4
      %v3158 = vrot.slane %v3043, 7
      %v3159 = vsel %vm303, %v3157, %v3158
      %v3160 = vrot.slane %v3158, 4
      %v3161 = vrot.slane %v3044, 7
      %v3162 = vsel %vm303, %v3160, %v3161
      %v3163 = vrot.slane %v3161, 4
      %v3164 = vrot.slane %v3045, 7
      %v3165 = vsel %vm303, %v3163, %v3164
      %v3166 = vrot.slane %v3164, 4
      %v3167 = vrot.slane %v3046, 7
      %v3168 = vsel %vm303, %v3166, %v3167
      %v3169 = vrot.slane %v3167, 4
      %v3170 = vrot.slane %v3047, 7
      %v3171 = vsel %vm303, %v3169, %v3170
      %v3172 = vrot.slane %v3170, 4
      %v3173 = vrot.slane %v3048, 7
      %v3174 = vsel %vm303, %v3172, %v3173
      %v3175 = vrot.slane %v3173, 4
      %v3176 = vrot.slane %v3049, 7
      %v3177 = vsel %vm303, %v3175, %v3176
      %v3178 = vrot.slane %v3176, 4
      %v3179 = vrot.slane %v3050, 7
      %v3180 = vsel %vm303, %v3178, %v3179
      %v3181 = vrot.slane %v3179, 4
      %v3182 = vrot.slane %v3051, 7
      %v3183 = vsel %vm303, %v3181, %v3182
      %v3184 = vrot.slane %v3182, 4
      %v3185 = vrot.slane %v3052, 7
      %v3186 = vsel %vm303, %v3184, %v3185
      %v3187 = vrot.slane %v3185, 4
      %v3188 = vrot.slane %v3053, 7
      %v3189 = vsel %vm303, %v3187, %v3188
      %v3190 = vrot.slane %v3188, 4
      %v3191 = vrot.slane %v3054, 7
      %v3192 = vsel %vm303, %v3190, %v3191
      %v3193 = vrot.slane %v3191, 4
      %v3194 = vrot.slane %v3055, 7
      %v3195 = vsel %vm303, %v3193, %v3194
      %v3196 = vrot.slane %v3194, 4
      %v3197 = vrot.slane %v3056, 7
      %v3198 = vsel %vm303, %v3196, %v3197
      %v3199 = vrot.slane %v3197, 4
      %v3200 = vrot.slane %v3057, 7
      %v3201 = vsel %vm303, %v3199, %v3200
      %v3202 = vrot.slane %v3200, 4
      %v3203 = vrot.slane %v3058, 7
      %v3204 = vsel %vm303, %v3202, %v3203
      %3241 = vst [vmem:[#allocation4 + $0x20] sm:$0xf] %v3099
      %3242 = vst [vmem:[#allocation4 + $0x44] sm:$0xf] %v3102
      %3243 = vst [vmem:[#allocation4 + $0x68] sm:$0xf] %v3105
      %3244 = vst [vmem:[#allocation4 + $0x8c] sm:$0xf] %v3108
      %3245 = vst [vmem:[#allocation4 + $0xb0] sm:$0xf] %v3111
      %3246 = vst [vmem:[#allocation4 + $0xd4] sm:$0xf] %v3114
      %3247 = vst [vmem:[#allocation4 + $0xf8] sm:$0xf] %v3117
      %3248 = vst [vmem:[#allocation4 + $0x11c] sm:$0xf] %v3120
      %3249 = vst [vmem:[#allocation4 + $0x140] sm:$0xf] %v3123
      %3250 = vst [vmem:[#allocation4 + $0x164] sm:$0xf] %v3126
      %3251 = vst [vmem:[#allocation4 + $0x188] sm:$0xf] %v3129
      %3252 = vst [vmem:[#allocation4 + $0x1ac] sm:$0xf] %v3132
      %3253 = vst [vmem:[#allocation4 + $0x1d0] sm:$0xf] %v3135
      %3254 = vst [vmem:[#allocation4 + $0x1f4] sm:$0xf] %v3138
      %3255 = vst [vmem:[#allocation4 + $0x218] sm:$0xf] %v3141
      %3256 = vst [vmem:[#allocation4 + $0x23c] sm:$0xf] %v3144
      %3257 = vst [vmem:[#allocation4 + $0x260] sm:$0xf] %v3147
      %3258 = vst [vmem:[#allocation4 + $0x284] sm:$0xf] %v3150
      %3259 = vst [vmem:[#allocation4 + $0x2a8] sm:$0xf] %v3153
      %3260 = vst [vmem:[#allocation4 + $0x2cc] sm:$0xf] %v3156
      %3261 = vst [vmem:[#allocation4 + $0x2f0] sm:$0xf] %v3159
      %3262 = vst [vmem:[#allocation4 + $0x314] sm:$0xf] %v3162
      %3263 = vst [vmem:[#allocation4 + $0x338] sm:$0xf] %v3165
      %3264 = vst [vmem:[#allocation4 + $0x35c] sm:$0xf] %v3168
      %3265 = vst [vmem:[#allocation4 + $0x380] sm:$0xf] %v3171
      %3266 = vst [vmem:[#allocation4 + $0x3a4] sm:$0xf] %v3174
      %3267 = vst [vmem:[#allocation4 + $0x3c8] sm:$0xf] %v3177
      %3268 = vst [vmem:[#allocation4 + $0x3ec] sm:$0xf] %v3180
      %3269 = vst [vmem:[#allocation4 + $0x410] sm:$0xf] %v3183
      %3270 = vst [vmem:[#allocation4 + $0x434] sm:$0xf] %v3186
      %3271 = vst [vmem:[#allocation4 + $0x458] sm:$0xf] %v3189
      %3272 = vst [vmem:[#allocation4 + $0x47c] sm:$0xf] %v3192
      %3273 = vst [vmem:[#allocation4 + $0x4a0] sm:$0xf] %v3195
      %3274 = vst [vmem:[#allocation4 + $0x4c4] sm:$0xf] %v3198
      %3275 = vst [vmem:[#allocation4 + $0x4e8] sm:$0xf] %v3201
      %3276 = vst [vmem:[#allocation4 + $0x50c] sm:$0xf] %v3204
      %v3277 = vld [vmem:[#allocation4] sm:$0xff]
      %v3278 = vld [vmem:[#allocation4 + $0x8] sm:$0xff]
      %v3279 = vld [vmem:[#allocation4 + $0x10] sm:$0xff]
      %v3280 = vld [vmem:[#allocation4 + $0x18] sm:$0xff]
      %v3281 = vld [vmem:[#allocation4 + $0x20] sm:$0xf]
      %v3282 = vld [vmem:[#allocation4 + $0x24] sm:$0xff]
      %v3283 = vld [vmem:[#allocation4 + $0x2c] sm:$0xff]
      %v3284 = vld [vmem:[#allocation4 + $0x34] sm:$0xff]
      %v3285 = vld [vmem:[#allocation4 + $0x3c] sm:$0xff]
      %v3286 = vld [vmem:[#allocation4 + $0x44] sm:$0xf]
      %v3287 = vld [vmem:[#allocation4 + $0x48] sm:$0xff]
      %v3288 = vld [vmem:[#allocation4 + $0x50] sm:$0xff]
      %v3289 = vld [vmem:[#allocation4 + $0x58] sm:$0xff]
      %v3290 = vld [vmem:[#allocation4 + $0x60] sm:$0xff]
      %v3291 = vld [vmem:[#allocation4 + $0x68] sm:$0xf]
      %v3292 = vld [vmem:[#allocation4 + $0x6c] sm:$0xff]
      %v3293 = vld [vmem:[#allocation4 + $0x74] sm:$0xff]
      %v3294 = vld [vmem:[#allocation4 + $0x7c] sm:$0xff]
      %v3295 = vld [vmem:[#allocation4 + $0x84] sm:$0xff]
      %v3296 = vld [vmem:[#allocation4 + $0x8c] sm:$0xf]
      %v3297 = vld [vmem:[#allocation4 + $0x90] sm:$0xff]
      %v3298 = vld [vmem:[#allocation4 + $0x98] sm:$0xff]
      %v3299 = vld [vmem:[#allocation4 + $0xa0] sm:$0xff]
      %v3300 = vld [vmem:[#allocation4 + $0xa8] sm:$0xff]
      %v3301 = vld [vmem:[#allocation4 + $0xb0] sm:$0xf]
      %v3302 = vld [vmem:[#allocation4 + $0xb4] sm:$0xff]
      %v3303 = vld [vmem:[#allocation4 + $0xbc] sm:$0xff]
      %v3304 = vld [vmem:[#allocation4 + $0xc4] sm:$0xff]
      %v3305 = vld [vmem:[#allocation4 + $0xcc] sm:$0xff]
      %v3306 = vld [vmem:[#allocation4 + $0xd4] sm:$0xf]
      %v3307 = vld [vmem:[#allocation4 + $0xd8] sm:$0xff]
      %v3308 = vld [vmem:[#allocation4 + $0xe0] sm:$0xff]
      %v3309 = vld [vmem:[#allocation4 + $0xe8] sm:$0xff]
      %v3310 = vld [vmem:[#allocation4 + $0xf0] sm:$0xff]
      %v3311 = vld [vmem:[#allocation4 + $0xf8] sm:$0xf]
      %v3312 = vld [vmem:[#allocation4 + $0xfc] sm:$0xff]
      %v3313 = vld [vmem:[#allocation4 + $0x104] sm:$0xff]
      %v3314 = vld [vmem:[#allocation4 + $0x10c] sm:$0xff]
      %v3315 = vld [vmem:[#allocation4 + $0x114] sm:$0xff]
      %v3316 = vld [vmem:[#allocation4 + $0x11c] sm:$0xf]
      %v3317 = vld [vmem:[#allocation4 + $0x120] sm:$0xff]
      %v3318 = vld [vmem:[#allocation4 + $0x128] sm:$0xff]
      %v3319 = vld [vmem:[#allocation4 + $0x130] sm:$0xff]
      %v3320 = vld [vmem:[#allocation4 + $0x138] sm:$0xff]
      %v3321 = vld [vmem:[#allocation4 + $0x140] sm:$0xf]
      %v3322 = vld [vmem:[#allocation4 + $0x144] sm:$0xff]
      %v3323 = vld [vmem:[#allocation4 + $0x14c] sm:$0xff]
      %v3324 = vld [vmem:[#allocation4 + $0x154] sm:$0xff]
      %v3325 = vld [vmem:[#allocation4 + $0x15c] sm:$0xff]
      %v3326 = vld [vmem:[#allocation4 + $0x164] sm:$0xf]
      %v3327 = vld [vmem:[#allocation4 + $0x168] sm:$0xff]
      %v3328 = vld [vmem:[#allocation4 + $0x170] sm:$0xff]
      %v3329 = vld [vmem:[#allocation4 + $0x178] sm:$0xff]
      %v3330 = vld [vmem:[#allocation4 + $0x180] sm:$0xff]
      %v3331 = vld [vmem:[#allocation4 + $0x188] sm:$0xf]
      %v3332 = vld [vmem:[#allocation4 + $0x18c] sm:$0xff]
      %v3333 = vld [vmem:[#allocation4 + $0x194] sm:$0xff]
      %v3334 = vld [vmem:[#allocation4 + $0x19c] sm:$0xff]
      %v3335 = vld [vmem:[#allocation4 + $0x1a4] sm:$0xff]
      %v3336 = vld [vmem:[#allocation4 + $0x1ac] sm:$0xf]
      %v3337 = vld [vmem:[#allocation4 + $0x1b0] sm:$0xff]
      %v3338 = vld [vmem:[#allocation4 + $0x1b8] sm:$0xff]
      %v3339 = vld [vmem:[#allocation4 + $0x1c0] sm:$0xff]
      %v3340 = vld [vmem:[#allocation4 + $0x1c8] sm:$0xff]
      %v3341 = vld [vmem:[#allocation4 + $0x1d0] sm:$0xf]
      %v3342 = vld [vmem:[#allocation4 + $0x1d4] sm:$0xff]
      %v3343 = vld [vmem:[#allocation4 + $0x1dc] sm:$0xff]
      %v3344 = vld [vmem:[#allocation4 + $0x1e4] sm:$0xff]
      %v3345 = vld [vmem:[#allocation4 + $0x1ec] sm:$0xff]
      %v3346 = vld [vmem:[#allocation4 + $0x1f4] sm:$0xf]
      %v3347 = vld [vmem:[#allocation4 + $0x1f8] sm:$0xff]
      %v3348 = vld [vmem:[#allocation4 + $0x200] sm:$0xff]
      %v3349 = vld [vmem:[#allocation4 + $0x208] sm:$0xff]
      %v3350 = vld [vmem:[#allocation4 + $0x210] sm:$0xff]
      %v3351 = vld [vmem:[#allocation4 + $0x218] sm:$0xf]
      %v3352 = vld [vmem:[#allocation4 + $0x21c] sm:$0xff]
      %v3353 = vld [vmem:[#allocation4 + $0x224] sm:$0xff]
      %v3354 = vld [vmem:[#allocation4 + $0x22c] sm:$0xff]
      %v3355 = vld [vmem:[#allocation4 + $0x234] sm:$0xff]
      %v3356 = vld [vmem:[#allocation4 + $0x23c] sm:$0xf]
      %v3357 = vld [vmem:[#allocation4 + $0x240] sm:$0xff]
      %v3358 = vld [vmem:[#allocation4 + $0x248] sm:$0xff]
      %v3359 = vld [vmem:[#allocation4 + $0x250] sm:$0xff]
      %v3360 = vld [vmem:[#allocation4 + $0x258] sm:$0xff]
      %v3361 = vld [vmem:[#allocation4 + $0x260] sm:$0xf]
      %v3362 = vld [vmem:[#allocation4 + $0x264] sm:$0xff]
      %v3363 = vld [vmem:[#allocation4 + $0x26c] sm:$0xff]
      %v3364 = vld [vmem:[#allocation4 + $0x274] sm:$0xff]
      %v3365 = vld [vmem:[#allocation4 + $0x27c] sm:$0xff]
      %v3366 = vld [vmem:[#allocation4 + $0x284] sm:$0xf]
      %v3367 = vld [vmem:[#allocation4 + $0x288] sm:$0xff]
      %v3368 = vld [vmem:[#allocation4 + $0x290] sm:$0xff]
      %v3369 = vld [vmem:[#allocation4 + $0x298] sm:$0xff]
      %v3370 = vld [vmem:[#allocation4 + $0x2a0] sm:$0xff]
      %v3371 = vld [vmem:[#allocation4 + $0x2a8] sm:$0xf]
      %v3372 = vld [vmem:[#allocation4 + $0x2ac] sm:$0xff]
      %v3373 = vld [vmem:[#allocation4 + $0x2b4] sm:$0xff]
      %v3374 = vld [vmem:[#allocation4 + $0x2bc] sm:$0xff]
      %v3375 = vld [vmem:[#allocation4 + $0x2c4] sm:$0xff]
      %v3376 = vld [vmem:[#allocation4 + $0x2cc] sm:$0xf]
      %v3377 = vld [vmem:[#allocation4 + $0x2d0] sm:$0xff]
      %v3378 = vld [vmem:[#allocation4 + $0x2d8] sm:$0xff]
      %v3379 = vld [vmem:[#allocation4 + $0x2e0] sm:$0xff]
      %v3380 = vld [vmem:[#allocation4 + $0x2e8] sm:$0xff]
      %v3381 = vld [vmem:[#allocation4 + $0x2f0] sm:$0xf]
      %v3382 = vld [vmem:[#allocation4 + $0x2f4] sm:$0xff]
      %v3383 = vld [vmem:[#allocation4 + $0x2fc] sm:$0xff]
      %v3384 = vld [vmem:[#allocation4 + $0x304] sm:$0xff]
      %v3385 = vld [vmem:[#allocation4 + $0x30c] sm:$0xff]
      %v3386 = vld [vmem:[#allocation4 + $0x314] sm:$0xf]
      %v3387 = vld [vmem:[#allocation4 + $0x318] sm:$0xff]
      %v3388 = vld [vmem:[#allocation4 + $0x320] sm:$0xff]
      %v3389 = vld [vmem:[#allocation4 + $0x328] sm:$0xff]
      %v3390 = vld [vmem:[#allocation4 + $0x330] sm:$0xff]
      %v3391 = vld [vmem:[#allocation4 + $0x338] sm:$0xf]
      %v3392 = vld [vmem:[#allocation4 + $0x33c] sm:$0xff]
      %v3393 = vld [vmem:[#allocation4 + $0x344] sm:$0xff]
      %v3394 = vld [vmem:[#allocation4 + $0x34c] sm:$0xff]
      %v3395 = vld [vmem:[#allocation4 + $0x354] sm:$0xff]
      %v3396 = vld [vmem:[#allocation4 + $0x35c] sm:$0xf]
      %v3397 = vld [vmem:[#allocation4 + $0x360] sm:$0xff]
      %v3398 = vld [vmem:[#allocation4 + $0x368] sm:$0xff]
      %v3399 = vld [vmem:[#allocation4 + $0x370] sm:$0xff]
      %v3400 = vld [vmem:[#allocation4 + $0x378] sm:$0xff]
      %v3401 = vld [vmem:[#allocation4 + $0x380] sm:$0xf]
      %v3402 = vld [vmem:[#allocation4 + $0x384] sm:$0xff]
      %v3403 = vld [vmem:[#allocation4 + $0x38c] sm:$0xff]
      %v3404 = vld [vmem:[#allocation4 + $0x394] sm:$0xff]
      %v3405 = vld [vmem:[#allocation4 + $0x39c] sm:$0xff]
      %v3406 = vld [vmem:[#allocation4 + $0x3a4] sm:$0xf]
      %v3407 = vld [vmem:[#allocation4 + $0x3a8] sm:$0xff]
      %v3408 = vld [vmem:[#allocation4 + $0x3b0] sm:$0xff]
      %v3409 = vld [vmem:[#allocation4 + $0x3b8] sm:$0xff]
      %v3410 = vld [vmem:[#allocation4 + $0x3c0] sm:$0xff]
      %v3411 = vld [vmem:[#allocation4 + $0x3c8] sm:$0xf]
      %v3412 = vld [vmem:[#allocation4 + $0x3cc] sm:$0xff]
      %v3413 = vld [vmem:[#allocation4 + $0x3d4] sm:$0xff]
      %v3414 = vld [vmem:[#allocation4 + $0x3dc] sm:$0xff]
      %v3415 = vld [vmem:[#allocation4 + $0x3e4] sm:$0xff]
      %v3416 = vld [vmem:[#allocation4 + $0x3ec] sm:$0xf]
      %v3417 = vld [vmem:[#allocation4 + $0x3f0] sm:$0xff]
      %v3418 = vld [vmem:[#allocation4 + $0x3f8] sm:$0xff]
      %v3419 = vld [vmem:[#allocation4 + $0x400] sm:$0xff]
      %v3420 = vld [vmem:[#allocation4 + $0x408] sm:$0xff]
      %v3421 = vld [vmem:[#allocation4 + $0x410] sm:$0xf]
      %v3422 = vld [vmem:[#allocation4 + $0x414] sm:$0xff]
      %v3423 = vld [vmem:[#allocation4 + $0x41c] sm:$0xff]
      %v3424 = vld [vmem:[#allocation4 + $0x424] sm:$0xff]
      %v3425 = vld [vmem:[#allocation4 + $0x42c] sm:$0xff]
      %v3426 = vld [vmem:[#allocation4 + $0x434] sm:$0xf]
      %v3427 = vld [vmem:[#allocation4 + $0x438] sm:$0xff]
      %v3428 = vld [vmem:[#allocation4 + $0x440] sm:$0xff]
      %v3429 = vld [vmem:[#allocation4 + $0x448] sm:$0xff]
      %v3430 = vld [vmem:[#allocation4 + $0x450] sm:$0xff]
      %v3431 = vld [vmem:[#allocation4 + $0x458] sm:$0xf]
      %v3432 = vld [vmem:[#allocation4 + $0x45c] sm:$0xff]
      %v3433 = vld [vmem:[#allocation4 + $0x464] sm:$0xff]
      %v3434 = vld [vmem:[#allocation4 + $0x46c] sm:$0xff]
      %v3435 = vld [vmem:[#allocation4 + $0x474] sm:$0xff]
      %v3436 = vld [vmem:[#allocation4 + $0x47c] sm:$0xf]
      %v3437 = vld [vmem:[#allocation4 + $0x480] sm:$0xff]
      %v3438 = vld [vmem:[#allocation4 + $0x488] sm:$0xff]
      %v3439 = vld [vmem:[#allocation4 + $0x490] sm:$0xff]
      %v3440 = vld [vmem:[#allocation4 + $0x498] sm:$0xff]
      %v3441 = vld [vmem:[#allocation4 + $0x4a0] sm:$0xf]
      %v3442 = vld [vmem:[#allocation4 + $0x4a4] sm:$0xff]
      %v3443 = vld [vmem:[#allocation4 + $0x4ac] sm:$0xff]
      %v3444 = vld [vmem:[#allocation4 + $0x4b4] sm:$0xff]
      %v3445 = vld [vmem:[#allocation4 + $0x4bc] sm:$0xff]
      %v3446 = vld [vmem:[#allocation4 + $0x4c4] sm:$0xf]
      %v3447 = vld [vmem:[#allocation4 + $0x4c8] sm:$0xff]
      %v3448 = vld [vmem:[#allocation4 + $0x4d0] sm:$0xff]
      %v3449 = vld [vmem:[#allocation4 + $0x4d8] sm:$0xff]
      %v3450 = vld [vmem:[#allocation4 + $0x4e0] sm:$0xff]
      %v3451 = vld [vmem:[#allocation4 + $0x4e8] sm:$0xf]
      %v3452 = vld [vmem:[#allocation4 + $0x4ec] sm:$0xff]
      %v3453 = vld [vmem:[#allocation4 + $0x4f4] sm:$0xff]
      %v3454 = vld [vmem:[#allocation4 + $0x4fc] sm:$0xff]
      %v3455 = vld [vmem:[#allocation4 + $0x504] sm:$0xff]
      %v3456 = vld [vmem:[#allocation4 + $0x50c] sm:$0xf]
      %v3457 = vld [vmem:[%s1] sm:$0xf]
      %v3458 = vld [vmem:[%s1 + $0x4] sm:$0xf]
      %v3459 = vld [vmem:[%s1 + $0x8] sm:$0xf]
      %v3460 = vld [vmem:[%s1 + $0xc] sm:$0xf]
      %v3461 = vld [vmem:[%s1 + $0x10] sm:$0xf]
      %v3462 = vld [vmem:[%s1 + $0x14] sm:$0xf]
      %v3463 = vld [vmem:[%s1 + $0x18] sm:$0xf]
      %v3464 = vld [vmem:[%s1 + $0x1c] sm:$0xf]
      %v3465 = vld [vmem:[%s1 + $0x20] sm:$0xf]
      %v3466 = vld [vmem:[%s1 + $0x24] sm:$0xf]
      %v3467 = vld [vmem:[%s1 + $0x28] sm:$0xf]
      %v3468 = vld [vmem:[%s1 + $0x2c] sm:$0xf]
      %v3469 = vld [vmem:[%s1 + $0x30] sm:$0xf]
      %v3470 = vld [vmem:[%s1 + $0x34] sm:$0xf]
      %v3471 = vld [vmem:[%s1 + $0x38] sm:$0xf]
      %v3472 = vld [vmem:[%s1 + $0x3c] sm:$0xf]
      %v3473 = vld [vmem:[%s1 + $0x40] sm:$0xf]
      %v3474 = vld [vmem:[%s1 + $0x44] sm:$0xf]
      %v3475 = vld [vmem:[%s1 + $0x48] sm:$0xf]
      %v3476 = vld [vmem:[%s1 + $0x4c] sm:$0xf]
      %v3477 = vld [vmem:[%s1 + $0x50] sm:$0xf]
      %v3478 = vld [vmem:[%s1 + $0x54] sm:$0xf]
      %v3479 = vld [vmem:[%s1 + $0x58] sm:$0xf]
      %v3480 = vld [vmem:[%s1 + $0x5c] sm:$0xf]
      %v3481 = vld [vmem:[%s1 + $0x60] sm:$0xf]
      %v3482 = vld [vmem:[%s1 + $0x64] sm:$0xf]
      %v3483 = vld [vmem:[%s1 + $0x68] sm:$0xf]
      %v3484 = vld [vmem:[%s1 + $0x6c] sm:$0xf]
      %v3485 = vld [vmem:[%s1 + $0x70] sm:$0xf]
      %v3486 = vld [vmem:[%s1 + $0x74] sm:$0xf]
      %v3487 = vld [vmem:[%s1 + $0x78] sm:$0xf]
      %v3488 = vld [vmem:[%s1 + $0x7c] sm:$0xf]
      %v3489 = vld [vmem:[%s1 + $0x80] sm:$0xf]
      %v3490 = vld [vmem:[%s1 + $0x84] sm:$0xf]
      %v3491 = vld [vmem:[%s1 + $0x88] sm:$0xf]
      %v3492 = vld [vmem:[%s1 + $0x8c] sm:$0xf]
      %v3493 = vld [vmem:[%s1 + $0x90] sm:$0xf]
      %v3494 = vld [vmem:[%s1 + $0x94] sm:$0xf]
      %v3495 = vld [vmem:[%s1 + $0x98] sm:$0xf]
      %v3496 = vld [vmem:[%s1 + $0x9c] sm:$0xf]
      %v3497 = vld [vmem:[%s1 + $0xa0] sm:$0xf]
      %v3498 = vld [vmem:[%s1 + $0xa4] sm:$0xf]
      %v3499 = vld [vmem:[%s1 + $0xa8] sm:$0xf]
      %v3500 = vld [vmem:[%s1 + $0xac] sm:$0xf]
      %v3501 = vld [vmem:[%s1 + $0xb0] sm:$0xf]
      %v3502 = vld [vmem:[%s1 + $0xb4] sm:$0xf]
      %v3503 = vld [vmem:[%s1 + $0xb8] sm:$0xf]
      %v3504 = vld [vmem:[%s1 + $0xbc] sm:$0xf]
      %v3505 = vld [vmem:[%s1 + $0xc0] sm:$0xf]
      %v3506 = vld [vmem:[%s1 + $0xc4] sm:$0xf]
      %v3507 = vld [vmem:[%s1 + $0xc8] sm:$0xf]
      %v3508 = vld [vmem:[%s1 + $0xcc] sm:$0xf]
      %v3509 = vld [vmem:[%s1 + $0xd0] sm:$0xf]
      %v3510 = vld [vmem:[%s1 + $0xd4] sm:$0xf]
      %v3511 = vld [vmem:[%s1 + $0xd8] sm:$0xf]
      %v3512 = vld [vmem:[%s1 + $0xdc] sm:$0xf]
      %v3513 = vld [vmem:[%s1 + $0xe0] sm:$0xf]
      %v3514 = vld [vmem:[%s1 + $0xe4] sm:$0xf]
      %v3515 = vld [vmem:[%s1 + $0xe8] sm:$0xf]
      %v3516 = vld [vmem:[%s1 + $0xec] sm:$0xf]
      %v3517 = vld [vmem:[%s1 + $0xf0] sm:$0xf]
      %v3518 = vld [vmem:[%s1 + $0xf4] sm:$0xf]
      %v3519 = vld [vmem:[%s1 + $0xf8] sm:$0xf]
      %v3520 = vld [vmem:[%s1 + $0xfc] sm:$0xf]
      %v3521 = vld [vmem:[%s1 + $0x100] sm:$0xf]
      %v3522 = vld [vmem:[%s1 + $0x104] sm:$0xf]
      %v3523 = vld [vmem:[%s1 + $0x108] sm:$0xf]
      %v3524 = vld [vmem:[%s1 + $0x10c] sm:$0xf]
      %v3525 = vld [vmem:[%s1 + $0x110] sm:$0xf]
      %v3526 = vld [vmem:[%s1 + $0x114] sm:$0xf]
      %v3527 = vld [vmem:[%s1 + $0x118] sm:$0xf]
      %v3528 = vld [vmem:[%s1 + $0x11c] sm:$0xf]
      %v3529 = vld [vmem:[%s1 + $0x120] sm:$0xf]
      %v3530 = vld [vmem:[%s1 + $0x124] sm:$0xf]
      %v3531 = vld [vmem:[%s1 + $0x128] sm:$0xf]
      %v3532 = vld [vmem:[%s1 + $0x12c] sm:$0xf]
      %v3533 = vld [vmem:[%s1 + $0x130] sm:$0xf]
      %v3534 = vld [vmem:[%s1 + $0x134] sm:$0xf]
      %v3535 = vld [vmem:[%s1 + $0x138] sm:$0xf]
      %v3536 = vld [vmem:[%s1 + $0x13c] sm:$0xf]
      %v3537 = vld [vmem:[%s1 + $0x140] sm:$0xf]
      %v3538 = vld [vmem:[%s1 + $0x144] sm:$0xf]
      %v3539 = vld [vmem:[%s1 + $0x148] sm:$0xf]
      %v3540 = vld [vmem:[%s1 + $0x14c] sm:$0xf]
      %v3541 = vld [vmem:[%s1 + $0x150] sm:$0xf]
      %v3542 = vld [vmem:[%s1 + $0x154] sm:$0xf]
      %v3543 = vld [vmem:[%s1 + $0x158] sm:$0xf]
      %v3544 = vld [vmem:[%s1 + $0x15c] sm:$0xf]
      %v3545 = vld [vmem:[%s1 + $0x160] sm:$0xf]
      %v3546 = vld [vmem:[%s1 + $0x164] sm:$0xf]
      %v3547 = vld [vmem:[%s1 + $0x168] sm:$0xf]
      %v3548 = vld [vmem:[%s1 + $0x16c] sm:$0xf]
      %v3549 = vld [vmem:[%s1 + $0x170] sm:$0xf]
      %v3550 = vld [vmem:[%s1 + $0x174] sm:$0xf]
      %v3551 = vld [vmem:[%s1 + $0x178] sm:$0xf]
      %v3552 = vld [vmem:[%s1 + $0x17c] sm:$0xf]
      %v3553 = vld [vmem:[%s1 + $0x180] sm:$0xf]
      %v3554 = vld [vmem:[%s1 + $0x184] sm:$0xf]
      %v3555 = vld [vmem:[%s1 + $0x188] sm:$0xf]
      %v3556 = vld [vmem:[%s1 + $0x18c] sm:$0xf]
      %v3557 = vld [vmem:[%s1 + $0x190] sm:$0xf]
      %v3558 = vld [vmem:[%s1 + $0x194] sm:$0xf]
      %v3559 = vld [vmem:[%s1 + $0x198] sm:$0xf]
      %v3560 = vld [vmem:[%s1 + $0x19c] sm:$0xf]
      %v3561 = vld [vmem:[%s1 + $0x1a0] sm:$0xf]
      %v3562 = vld [vmem:[%s1 + $0x1a4] sm:$0xf]
      %v3563 = vld [vmem:[%s1 + $0x1a8] sm:$0xf]
      %v3564 = vld [vmem:[%s1 + $0x1ac] sm:$0xf]
      %v3565 = vld [vmem:[%s1 + $0x1b0] sm:$0xf]
      %v3566 = vld [vmem:[%s1 + $0x1b4] sm:$0xf]
      %v3567 = vld [vmem:[%s1 + $0x1b8] sm:$0xf]
      %v3568 = vld [vmem:[%s1 + $0x1bc] sm:$0xf]
      %v3569 = vld [vmem:[%s1 + $0x1c0] sm:$0xf]
      %v3570 = vld [vmem:[%s1 + $0x1c4] sm:$0xf]
      %v3571 = vld [vmem:[%s1 + $0x1c8] sm:$0xf]
      %v3572 = vld [vmem:[%s1 + $0x1cc] sm:$0xf]
      %v3573 = vld [vmem:[%s1 + $0x1d0] sm:$0xf]
      %v3574 = vld [vmem:[%s1 + $0x1d4] sm:$0xf]
      %v3575 = vld [vmem:[%s1 + $0x1d8] sm:$0xf]
      %v3576 = vld [vmem:[%s1 + $0x1dc] sm:$0xf]
      %v3577 = vld [vmem:[%s1 + $0x1e0] sm:$0xf]
      %v3578 = vld [vmem:[%s1 + $0x1e4] sm:$0xf]
      %v3579 = vld [vmem:[%s1 + $0x1e8] sm:$0xf]
      %v3580 = vld [vmem:[%s1 + $0x1ec] sm:$0xf]
      %v3581 = vld [vmem:[%s1 + $0x1f0] sm:$0xf]
      %v3582 = vld [vmem:[%s1 + $0x1f4] sm:$0xf]
      %v3583 = vld [vmem:[%s1 + $0x1f8] sm:$0xf]
      %v3584 = vld [vmem:[%s1 + $0x1fc] sm:$0xf]
      %v3585 = vld [vmem:[%s1 + $0x200] sm:$0xf]
      %v3586 = vld [vmem:[%s1 + $0x204] sm:$0xf]
      %v3587 = vld [vmem:[%s1 + $0x208] sm:$0xf]
      %v3588 = vld [vmem:[%s1 + $0x20c] sm:$0xf]
      %v3589 = vld [vmem:[%s1 + $0x210] sm:$0xf]
      %v3590 = vld [vmem:[%s1 + $0x214] sm:$0xf]
      %v3591 = vld [vmem:[%s1 + $0x218] sm:$0xf]
      %v3592 = vld [vmem:[%s1 + $0x21c] sm:$0xf]
      %v3593 = vld [vmem:[%s1 + $0x220] sm:$0xf]
      %v3594 = vld [vmem:[%s1 + $0x224] sm:$0xf]
      %v3595 = vld [vmem:[%s1 + $0x228] sm:$0xf]
      %v3596 = vld [vmem:[%s1 + $0x22c] sm:$0xf]
      %v3597 = vld [vmem:[%s1 + $0x230] sm:$0xf]
      %v3598 = vld [vmem:[%s1 + $0x234] sm:$0xf]
      %v3599 = vld [vmem:[%s1 + $0x238] sm:$0xf]
      %v3600 = vld [vmem:[%s1 + $0x23c] sm:$0xf]
      %v3601 = vld [vmem:[%s2] sm:$0x1]
      %v3603 = vperm.slane %v3601, 0
      %v3785 = vunpack.c.l.b16 %v3277
      %v3786 = vunpack.c.h.b16 %v3277
      %v3787 = vunpack.c.l.b16 %v3278
      %v3788 = vunpack.c.h.b16 %v3278
      %v3789 = vunpack.c.l.b16 %v3279
      %v3790 = vunpack.c.h.b16 %v3279
      %v3791 = vunpack.c.l.b16 %v3280
      %v3792 = vunpack.c.h.b16 %v3280
      %v3793 = vunpack.c.l.b16 %v3281
      %v3794 = vunpack.c.l.b16 %v3282
      %v3795 = vunpack.c.h.b16 %v3282
      %v3796 = vunpack.c.l.b16 %v3283
      %v3797 = vunpack.c.h.b16 %v3283
      %v3798 = vunpack.c.l.b16 %v3284
      %v3799 = vunpack.c.h.b16 %v3284
      %v3800 = vunpack.c.l.b16 %v3285
      %v3801 = vunpack.c.h.b16 %v3285
      %v3802 = vunpack.c.l.b16 %v3286
      %v3803 = vunpack.c.l.b16 %v3287
      %v3804 = vunpack.c.h.b16 %v3287
      %v3805 = vunpack.c.l.b16 %v3288
      %v3806 = vunpack.c.h.b16 %v3288
      %v3807 = vunpack.c.l.b16 %v3289
      %v3808 = vunpack.c.h.b16 %v3289
      %v3809 = vunpack.c.l.b16 %v3290
      %v3810 = vunpack.c.h.b16 %v3290
      %v3811 = vunpack.c.l.b16 %v3291
      %v3812 = vunpack.c.l.b16 %v3292
      %v3813 = vunpack.c.h.b16 %v3292
      %v3814 = vunpack.c.l.b16 %v3293
      %v3815 = vunpack.c.h.b16 %v3293
      %v3816 = vunpack.c.l.b16 %v3294
      %v3817 = vunpack.c.h.b16 %v3294
      %v3818 = vunpack.c.l.b16 %v3295
      %v3819 = vunpack.c.h.b16 %v3295
      %v3820 = vunpack.c.l.b16 %v3296
      %v3821 = vunpack.c.l.b16 %v3297
      %v3822 = vunpack.c.h.b16 %v3297
      %v3823 = vunpack.c.l.b16 %v3298
      %v3824 = vunpack.c.h.b16 %v3298
      %v3825 = vunpack.c.l.b16 %v3299
      %v3826 = vunpack.c.h.b16 %v3299
      %v3827 = vunpack.c.l.b16 %v3300
      %v3828 = vunpack.c.h.b16 %v3300
      %v3829 = vunpack.c.l.b16 %v3301
      %v3830 = vunpack.c.l.b16 %v3302
      %v3831 = vunpack.c.h.b16 %v3302
      %v3832 = vunpack.c.l.b16 %v3303
      %v3833 = vunpack.c.h.b16 %v3303
      %v3834 = vunpack.c.l.b16 %v3304
      %v3835 = vunpack.c.h.b16 %v3304
      %v3836 = vunpack.c.l.b16 %v3305
      %v3837 = vunpack.c.h.b16 %v3305
      %v3838 = vunpack.c.l.b16 %v3306
      %v3839 = vunpack.c.l.b16 %v3307
      %v3840 = vunpack.c.h.b16 %v3307
      %v3841 = vunpack.c.l.b16 %v3308
      %v3842 = vunpack.c.h.b16 %v3308
      %v3843 = vunpack.c.l.b16 %v3309
      %v3844 = vunpack.c.h.b16 %v3309
      %v3845 = vunpack.c.l.b16 %v3310
      %v3846 = vunpack.c.h.b16 %v3310
      %v3847 = vunpack.c.l.b16 %v3311
      %v3848 = vunpack.c.l.b16 %v3312
      %v3849 = vunpack.c.h.b16 %v3312
      %v3850 = vunpack.c.l.b16 %v3313
      %v3851 = vunpack.c.h.b16 %v3313
      %v3852 = vunpack.c.l.b16 %v3314
      %v3853 = vunpack.c.h.b16 %v3314
      %v3854 = vunpack.c.l.b16 %v3315
      %v3855 = vunpack.c.h.b16 %v3315
      %v3856 = vunpack.c.l.b16 %v3316
      %v3857 = vunpack.c.l.b16 %v3317
      %v3858 = vunpack.c.h.b16 %v3317
      %v3859 = vunpack.c.l.b16 %v3318
      %v3860 = vunpack.c.h.b16 %v3318
      %v3861 = vunpack.c.l.b16 %v3319
      %v3862 = vunpack.c.h.b16 %v3319
      %v3863 = vunpack.c.l.b16 %v3320
      %v3864 = vunpack.c.h.b16 %v3320
      %v3865 = vunpack.c.l.b16 %v3321
      %v3866 = vunpack.c.l.b16 %v3322
      %v3867 = vunpack.c.h.b16 %v3322
      %v3868 = vunpack.c.l.b16 %v3323
      %v3869 = vunpack.c.h.b16 %v3323
      %v3870 = vunpack.c.l.b16 %v3324
      %v3871 = vunpack.c.h.b16 %v3324
      %v3872 = vunpack.c.l.b16 %v3325
      %v3873 = vunpack.c.h.b16 %v3325
      %v3874 = vunpack.c.l.b16 %v3326
      %v3875 = vunpack.c.l.b16 %v3327
      %v3876 = vunpack.c.h.b16 %v3327
      %v3877 = vunpack.c.l.b16 %v3328
      %v3878 = vunpack.c.h.b16 %v3328
      %v3879 = vunpack.c.l.b16 %v3329
      %v3880 = vunpack.c.h.b16 %v3329
      %v3881 = vunpack.c.l.b16 %v3330
      %v3882 = vunpack.c.h.b16 %v3330
      %v3883 = vunpack.c.l.b16 %v3331
      %v3884 = vunpack.c.l.b16 %v3332
      %v3885 = vunpack.c.h.b16 %v3332
      %v3886 = vunpack.c.l.b16 %v3333
      %v3887 = vunpack.c.h.b16 %v3333
      %v3888 = vunpack.c.l.b16 %v3334
      %v3889 = vunpack.c.h.b16 %v3334
      %v3890 = vunpack.c.l.b16 %v3335
      %v3891 = vunpack.c.h.b16 %v3335
      %v3892 = vunpack.c.l.b16 %v3336
      %v3893 = vunpack.c.l.b16 %v3337
      %v3894 = vunpack.c.h.b16 %v3337
      %v3895 = vunpack.c.l.b16 %v3338
      %v3896 = vunpack.c.h.b16 %v3338
      %v3897 = vunpack.c.l.b16 %v3339
      %v3898 = vunpack.c.h.b16 %v3339
      %v3899 = vunpack.c.l.b16 %v3340
      %v3900 = vunpack.c.h.b16 %v3340
      %v3901 = vunpack.c.l.b16 %v3341
      %v3902 = vunpack.c.l.b16 %v3342
      %v3903 = vunpack.c.h.b16 %v3342
      %v3904 = vunpack.c.l.b16 %v3343
      %v3905 = vunpack.c.h.b16 %v3343
      %v3906 = vunpack.c.l.b16 %v3344
      %v3907 = vunpack.c.h.b16 %v3344
      %v3908 = vunpack.c.l.b16 %v3345
      %v3909 = vunpack.c.h.b16 %v3345
      %v3910 = vunpack.c.l.b16 %v3346
      %v3911 = vunpack.c.l.b16 %v3347
      %v3912 = vunpack.c.h.b16 %v3347
      %v3913 = vunpack.c.l.b16 %v3348
      %v3914 = vunpack.c.h.b16 %v3348
      %v3915 = vunpack.c.l.b16 %v3349
      %v3916 = vunpack.c.h.b16 %v3349
      %v3917 = vunpack.c.l.b16 %v3350
      %v3918 = vunpack.c.h.b16 %v3350
      %v3919 = vunpack.c.l.b16 %v3351
      %v3920 = vunpack.c.l.b16 %v3352
      %v3921 = vunpack.c.h.b16 %v3352
      %v3922 = vunpack.c.l.b16 %v3353
      %v3923 = vunpack.c.h.b16 %v3353
      %v3924 = vunpack.c.l.b16 %v3354
      %v3925 = vunpack.c.h.b16 %v3354
      %v3926 = vunpack.c.l.b16 %v3355
      %v3927 = vunpack.c.h.b16 %v3355
      %v3928 = vunpack.c.l.b16 %v3356
      %v3929 = vunpack.c.l.b16 %v3357
      %v3930 = vunpack.c.h.b16 %v3357
      %v3931 = vunpack.c.l.b16 %v3358
      %v3932 = vunpack.c.h.b16 %v3358
      %v3933 = vunpack.c.l.b16 %v3359
      %v3934 = vunpack.c.h.b16 %v3359
      %v3935 = vunpack.c.l.b16 %v3360
      %v3936 = vunpack.c.h.b16 %v3360
      %v3937 = vunpack.c.l.b16 %v3361
      %v3938 = vunpack.c.l.b16 %v3362
      %v3939 = vunpack.c.h.b16 %v3362
      %v3940 = vunpack.c.l.b16 %v3363
      %v3941 = vunpack.c.h.b16 %v3363
      %v3942 = vunpack.c.l.b16 %v3364
      %v3943 = vunpack.c.h.b16 %v3364
      %v3944 = vunpack.c.l.b16 %v3365
      %v3945 = vunpack.c.h.b16 %v3365
      %v3946 = vunpack.c.l.b16 %v3366
      %v3947 = vunpack.c.l.b16 %v3367
      %v3948 = vunpack.c.h.b16 %v3367
      %v3949 = vunpack.c.l.b16 %v3368
      %v3950 = vunpack.c.h.b16 %v3368
      %v3951 = vunpack.c.l.b16 %v3369
      %v3952 = vunpack.c.h.b16 %v3369
      %v3953 = vunpack.c.l.b16 %v3370
      %v3954 = vunpack.c.h.b16 %v3370
      %v3955 = vunpack.c.l.b16 %v3371
      %v3956 = vunpack.c.l.b16 %v3372
      %v3957 = vunpack.c.h.b16 %v3372
      %v3958 = vunpack.c.l.b16 %v3373
      %v3959 = vunpack.c.h.b16 %v3373
      %v3960 = vunpack.c.l.b16 %v3374
      %v3961 = vunpack.c.h.b16 %v3374
      %v3962 = vunpack.c.l.b16 %v3375
      %v3963 = vunpack.c.h.b16 %v3375
      %v3964 = vunpack.c.l.b16 %v3376
      %v3965 = vunpack.c.l.b16 %v3377
      %v3966 = vunpack.c.h.b16 %v3377
      %v3967 = vunpack.c.l.b16 %v3378
      %v3968 = vunpack.c.h.b16 %v3378
      %v3969 = vunpack.c.l.b16 %v3379
      %v3970 = vunpack.c.h.b16 %v3379
      %v3971 = vunpack.c.l.b16 %v3380
      %v3972 = vunpack.c.h.b16 %v3380
      %v3973 = vunpack.c.l.b16 %v3381
      %v3974 = vunpack.c.l.b16 %v3382
      %v3975 = vunpack.c.h.b16 %v3382
      %v3976 = vunpack.c.l.b16 %v3383
      %v3977 = vunpack.c.h.b16 %v3383
      %v3978 = vunpack.c.l.b16 %v3384
      %v3979 = vunpack.c.h.b16 %v3384
      %v3980 = vunpack.c.l.b16 %v3385
      %v3981 = vunpack.c.h.b16 %v3385
      %v3982 = vunpack.c.l.b16 %v3386
      %v3983 = vunpack.c.l.b16 %v3387
      %v3984 = vunpack.c.h.b16 %v3387
      %v3985 = vunpack.c.l.b16 %v3388
      %v3986 = vunpack.c.h.b16 %v3388
      %v3987 = vunpack.c.l.b16 %v3389
      %v3988 = vunpack.c.h.b16 %v3389
      %v3989 = vunpack.c.l.b16 %v3390
      %v3990 = vunpack.c.h.b16 %v3390
      %v3991 = vunpack.c.l.b16 %v3391
      %v3992 = vunpack.c.l.b16 %v3392
      %v3993 = vunpack.c.h.b16 %v3392
      %v3994 = vunpack.c.l.b16 %v3393
      %v3995 = vunpack.c.h.b16 %v3393
      %v3996 = vunpack.c.l.b16 %v3394
      %v3997 = vunpack.c.h.b16 %v3394
      %v3998 = vunpack.c.l.b16 %v3395
      %v3999 = vunpack.c.h.b16 %v3395
      %v4000 = vunpack.c.l.b16 %v3396
      %v4001 = vunpack.c.l.b16 %v3397
      %v4002 = vunpack.c.h.b16 %v3397
      %v4003 = vunpack.c.l.b16 %v3398
      %v4004 = vunpack.c.h.b16 %v3398
      %v4005 = vunpack.c.l.b16 %v3399
      %v4006 = vunpack.c.h.b16 %v3399
      %v4007 = vunpack.c.l.b16 %v3400
      %v4008 = vunpack.c.h.b16 %v3400
      %v4009 = vunpack.c.l.b16 %v3401
      %v4010 = vunpack.c.l.b16 %v3402
      %v4011 = vunpack.c.h.b16 %v3402
      %v4012 = vunpack.c.l.b16 %v3403
      %v4013 = vunpack.c.h.b16 %v3403
      %v4014 = vunpack.c.l.b16 %v3404
      %v4015 = vunpack.c.h.b16 %v3404
      %v4016 = vunpack.c.l.b16 %v3405
      %v4017 = vunpack.c.h.b16 %v3405
      %v4018 = vunpack.c.l.b16 %v3406
      %v4019 = vunpack.c.l.b16 %v3407
      %v4020 = vunpack.c.h.b16 %v3407
      %v4021 = vunpack.c.l.b16 %v3408
      %v4022 = vunpack.c.h.b16 %v3408
      %v4023 = vunpack.c.l.b16 %v3409
      %v4024 = vunpack.c.h.b16 %v3409
      %v4025 = vunpack.c.l.b16 %v3410
      %v4026 = vunpack.c.h.b16 %v3410
      %v4027 = vunpack.c.l.b16 %v3411
      %v4028 = vunpack.c.l.b16 %v3412
      %v4029 = vunpack.c.h.b16 %v3412
      %v4030 = vunpack.c.l.b16 %v3413
      %v4031 = vunpack.c.h.b16 %v3413
      %v4032 = vunpack.c.l.b16 %v3414
      %v4033 = vunpack.c.h.b16 %v3414
      %v4034 = vunpack.c.l.b16 %v3415
      %v4035 = vunpack.c.h.b16 %v3415
      %v4036 = vunpack.c.l.b16 %v3416
      %v4037 = vunpack.c.l.b16 %v3417
      %v4038 = vunpack.c.h.b16 %v3417
      %v4039 = vunpack.c.l.b16 %v3418
      %v4040 = vunpack.c.h.b16 %v3418
      %v4041 = vunpack.c.l.b16 %v3419
      %v4042 = vunpack.c.h.b16 %v3419
      %v4043 = vunpack.c.l.b16 %v3420
      %v4044 = vunpack.c.h.b16 %v3420
      %v4045 = vunpack.c.l.b16 %v3421
      %v4046 = vunpack.c.l.b16 %v3422
      %v4047 = vunpack.c.h.b16 %v3422
      %v4048 = vunpack.c.l.b16 %v3423
      %v4049 = vunpack.c.h.b16 %v3423
      %v4050 = vunpack.c.l.b16 %v3424
      %v4051 = vunpack.c.h.b16 %v3424
      %v4052 = vunpack.c.l.b16 %v3425
      %v4053 = vunpack.c.h.b16 %v3425
      %v4054 = vunpack.c.l.b16 %v3426
      %v4055 = vunpack.c.l.b16 %v3427
      %v4056 = vunpack.c.h.b16 %v3427
      %v4057 = vunpack.c.l.b16 %v3428
      %v4058 = vunpack.c.h.b16 %v3428
      %v4059 = vunpack.c.l.b16 %v3429
      %v4060 = vunpack.c.h.b16 %v3429
      %v4061 = vunpack.c.l.b16 %v3430
      %v4062 = vunpack.c.h.b16 %v3430
      %v4063 = vunpack.c.l.b16 %v3431
      %v4064 = vunpack.c.l.b16 %v3432
      %v4065 = vunpack.c.h.b16 %v3432
      %v4066 = vunpack.c.l.b16 %v3433
      %v4067 = vunpack.c.h.b16 %v3433
      %v4068 = vunpack.c.l.b16 %v3434
      %v4069 = vunpack.c.h.b16 %v3434
      %v4070 = vunpack.c.l.b16 %v3435
      %v4071 = vunpack.c.h.b16 %v3435
      %v4072 = vunpack.c.l.b16 %v3436
      %v4073 = vunpack.c.l.b16 %v3437
      %v4074 = vunpack.c.h.b16 %v3437
      %v4075 = vunpack.c.l.b16 %v3438
      %v4076 = vunpack.c.h.b16 %v3438
      %v4077 = vunpack.c.l.b16 %v3439
      %v4078 = vunpack.c.h.b16 %v3439
      %v4079 = vunpack.c.l.b16 %v3440
      %v4080 = vunpack.c.h.b16 %v3440
      %v4081 = vunpack.c.l.b16 %v3441
      %v4082 = vunpack.c.l.b16 %v3442
      %v4083 = vunpack.c.h.b16 %v3442
      %v4084 = vunpack.c.l.b16 %v3443
      %v4085 = vunpack.c.h.b16 %v3443
      %v4086 = vunpack.c.l.b16 %v3444
      %v4087 = vunpack.c.h.b16 %v3444
      %v4088 = vunpack.c.l.b16 %v3445
      %v4089 = vunpack.c.h.b16 %v3445
      %v4090 = vunpack.c.l.b16 %v3446
      %v4091 = vunpack.c.l.b16 %v3447
      %v4092 = vunpack.c.h.b16 %v3447
      %v4093 = vunpack.c.l.b16 %v3448
      %v4094 = vunpack.c.h.b16 %v3448
      %v4095 = vunpack.c.l.b16 %v3449
      %v4096 = vunpack.c.h.b16 %v3449
      %v4097 = vunpack.c.l.b16 %v3450
      %v4098 = vunpack.c.h.b16 %v3450
      %v4099 = vunpack.c.l.b16 %v3451
      %v4100 = vunpack.c.l.b16 %v3452
      %v4101 = vunpack.c.h.b16 %v3452
      %v4102 = vunpack.c.l.b16 %v3453
      %v4103 = vunpack.c.h.b16 %v3453
      %v4104 = vunpack.c.l.b16 %v3454
      %v4105 = vunpack.c.h.b16 %v3454
      %v4106 = vunpack.c.l.b16 %v3455
      %v4107 = vunpack.c.h.b16 %v3455
      %v4108 = vunpack.c.l.b16 %v3456
      %v4109 = vpack.c.b16 %v3794, %v3785
      %v4110 = vpack.c.b16 %v3795, %v3786
      %v4111 = vpack.c.b16 %v3796, %v3787
      %v4112 = vpack.c.b16 %v3797, %v3788
      %v4113 = vpack.c.b16 %v3798, %v3789
      %v4114 = vpack.c.b16 %v3799, %v3790
      %v4115 = vpack.c.b16 %v3800, %v3791
      %v4116 = vpack.c.b16 %v3801, %v3792
      %v4117 = vpack.c.b16 %v3802, %v3793
      %v4118 = vpack.c.b16 %v3812, %v3803
      %v4119 = vpack.c.b16 %v3813, %v3804
      %v4120 = vpack.c.b16 %v3814, %v3805
      %v4121 = vpack.c.b16 %v3815, %v3806
      %v4122 = vpack.c.b16 %v3816, %v3807
      %v4123 = vpack.c.b16 %v3817, %v3808
      %v4124 = vpack.c.b16 %v3818, %v3809
      %v4125 = vpack.c.b16 %v3819, %v3810
      %v4126 = vpack.c.b16 %v3820, %v3811
      %v4127 = vpack.c.b16 %v3830, %v3821
      %v4128 = vpack.c.b16 %v3831, %v3822
      %v4129 = vpack.c.b16 %v3832, %v3823
      %v4130 = vpack.c.b16 %v3833, %v3824
      %v4131 = vpack.c.b16 %v3834, %v3825
      %v4132 = vpack.c.b16 %v3835, %v3826
      %v4133 = vpack.c.b16 %v3836, %v3827
      %v4134 = vpack.c.b16 %v3837, %v3828
      %v4135 = vpack.c.b16 %v3838, %v3829
      %v4136 = vpack.c.b16 %v3848, %v3839
      %v4137 = vpack.c.b16 %v3849, %v3840
      %v4138 = vpack.c.b16 %v3850, %v3841
      %v4139 = vpack.c.b16 %v3851, %v3842
      %v4140 = vpack.c.b16 %v3852, %v3843
      %v4141 = vpack.c.b16 %v3853, %v3844
      %v4142 = vpack.c.b16 %v3854, %v3845
      %v4143 = vpack.c.b16 %v3855, %v3846
      %v4144 = vpack.c.b16 %v3856, %v3847
      %v4145 = vpack.c.b16 %v3866, %v3857
      %v4146 = vpack.c.b16 %v3867, %v3858
      %v4147 = vpack.c.b16 %v3868, %v3859
      %v4148 = vpack.c.b16 %v3869, %v3860
      %v4149 = vpack.c.b16 %v3870, %v3861
      %v4150 = vpack.c.b16 %v3871, %v3862
      %v4151 = vpack.c.b16 %v3872, %v3863
      %v4152 = vpack.c.b16 %v3873, %v3864
      %v4153 = vpack.c.b16 %v3874, %v3865
      %v4154 = vpack.c.b16 %v3884, %v3875
      %v4155 = vpack.c.b16 %v3885, %v3876
      %v4156 = vpack.c.b16 %v3886, %v3877
      %v4157 = vpack.c.b16 %v3887, %v3878
      %v4158 = vpack.c.b16 %v3888, %v3879
      %v4159 = vpack.c.b16 %v3889, %v3880
      %v4160 = vpack.c.b16 %v3890, %v3881
      %v4161 = vpack.c.b16 %v3891, %v3882
      %v4162 = vpack.c.b16 %v3892, %v3883
      %v4163 = vpack.c.b16 %v3902, %v3893
      %v4164 = vpack.c.b16 %v3903, %v3894
      %v4165 = vpack.c.b16 %v3904, %v3895
      %v4166 = vpack.c.b16 %v3905, %v3896
      %v4167 = vpack.c.b16 %v3906, %v3897
      %v4168 = vpack.c.b16 %v3907, %v3898
      %v4169 = vpack.c.b16 %v3908, %v3899
      %v4170 = vpack.c.b16 %v3909, %v3900
      %v4171 = vpack.c.b16 %v3910, %v3901
      %v4172 = vpack.c.b16 %v3920, %v3911
      %v4173 = vpack.c.b16 %v3921, %v3912
      %v4174 = vpack.c.b16 %v3922, %v3913
      %v4175 = vpack.c.b16 %v3923, %v3914
      %v4176 = vpack.c.b16 %v3924, %v3915
      %v4177 = vpack.c.b16 %v3925, %v3916
      %v4178 = vpack.c.b16 %v3926, %v3917
      %v4179 = vpack.c.b16 %v3927, %v3918
      %v4180 = vpack.c.b16 %v3928, %v3919
      %v4181 = vpack.c.b16 %v3938, %v3929
      %v4182 = vpack.c.b16 %v3939, %v3930
      %v4183 = vpack.c.b16 %v3940, %v3931
      %v4184 = vpack.c.b16 %v3941, %v3932
      %v4185 = vpack.c.b16 %v3942, %v3933
      %v4186 = vpack.c.b16 %v3943, %v3934
      %v4187 = vpack.c.b16 %v3944, %v3935
      %v4188 = vpack.c.b16 %v3945, %v3936
      %v4189 = vpack.c.b16 %v3946, %v3937
      %v4190 = vpack.c.b16 %v3956, %v3947
      %v4191 = vpack.c.b16 %v3957, %v3948
      %v4192 = vpack.c.b16 %v3958, %v3949
      %v4193 = vpack.c.b16 %v3959, %v3950
      %v4194 = vpack.c.b16 %v3960, %v3951
      %v4195 = vpack.c.b16 %v3961, %v3952
      %v4196 = vpack.c.b16 %v3962, %v3953
      %v4197 = vpack.c.b16 %v3963, %v3954
      %v4198 = vpack.c.b16 %v3964, %v3955
      %v4199 = vpack.c.b16 %v3974, %v3965
      %v4200 = vpack.c.b16 %v3975, %v3966
      %v4201 = vpack.c.b16 %v3976, %v3967
      %v4202 = vpack.c.b16 %v3977, %v3968
      %v4203 = vpack.c.b16 %v3978, %v3969
      %v4204 = vpack.c.b16 %v3979, %v3970
      %v4205 = vpack.c.b16 %v3980, %v3971
      %v4206 = vpack.c.b16 %v3981, %v3972
      %v4207 = vpack.c.b16 %v3982, %v3973
      %v4208 = vpack.c.b16 %v3992, %v3983
      %v4209 = vpack.c.b16 %v3993, %v3984
      %v4210 = vpack.c.b16 %v3994, %v3985
      %v4211 = vpack.c.b16 %v3995, %v3986
      %v4212 = vpack.c.b16 %v3996, %v3987
      %v4213 = vpack.c.b16 %v3997, %v3988
      %v4214 = vpack.c.b16 %v3998, %v3989
      %v4215 = vpack.c.b16 %v3999, %v3990
      %v4216 = vpack.c.b16 %v4000, %v3991
      %v4217 = vpack.c.b16 %v4010, %v4001
      %v4218 = vpack.c.b16 %v4011, %v4002
      %v4219 = vpack.c.b16 %v4012, %v4003
      %v4220 = vpack.c.b16 %v4013, %v4004
      %v4221 = vpack.c.b16 %v4014, %v4005
      %v4222 = vpack.c.b16 %v4015, %v4006
      %v4223 = vpack.c.b16 %v4016, %v4007
      %v4224 = vpack.c.b16 %v4017, %v4008
      %v4225 = vpack.c.b16 %v4018, %v4009
      %v4226 = vpack.c.b16 %v4028, %v4019
      %v4227 = vpack.c.b16 %v4029, %v4020
      %v4228 = vpack.c.b16 %v4030, %v4021
      %v4229 = vpack.c.b16 %v4031, %v4022
      %v4230 = vpack.c.b16 %v4032, %v4023
      %v4231 = vpack.c.b16 %v4033, %v4024
      %v4232 = vpack.c.b16 %v4034, %v4025
      %v4233 = vpack.c.b16 %v4035, %v4026
      %v4234 = vpack.c.b16 %v4036, %v4027
      %v4235 = vpack.c.b16 %v4046, %v4037
      %v4236 = vpack.c.b16 %v4047, %v4038
      %v4237 = vpack.c.b16 %v4048, %v4039
      %v4238 = vpack.c.b16 %v4049, %v4040
      %v4239 = vpack.c.b16 %v4050, %v4041
      %v4240 = vpack.c.b16 %v4051, %v4042
      %v4241 = vpack.c.b16 %v4052, %v4043
      %v4242 = vpack.c.b16 %v4053, %v4044
      %v4243 = vpack.c.b16 %v4054, %v4045
      %v4244 = vpack.c.b16 %v4064, %v4055
      %v4245 = vpack.c.b16 %v4065, %v4056
      %v4246 = vpack.c.b16 %v4066, %v4057
      %v4247 = vpack.c.b16 %v4067, %v4058
      %v4248 = vpack.c.b16 %v4068, %v4059
      %v4249 = vpack.c.b16 %v4069, %v4060
      %v4250 = vpack.c.b16 %v4070, %v4061
      %v4251 = vpack.c.b16 %v4071, %v4062
      %v4252 = vpack.c.b16 %v4072, %v4063
      %v4253 = vpack.c.b16 %v4082, %v4073
      %v4254 = vpack.c.b16 %v4083, %v4074
      %v4255 = vpack.c.b16 %v4084, %v4075
      %v4256 = vpack.c.b16 %v4085, %v4076
      %v4257 = vpack.c.b16 %v4086, %v4077
      %v4258 = vpack.c.b16 %v4087, %v4078
      %v4259 = vpack.c.b16 %v4088, %v4079
      %v4260 = vpack.c.b16 %v4089, %v4080
      %v4261 = vpack.c.b16 %v4090, %v4081
      %v4262 = vpack.c.b16 %v4100, %v4091
      %v4263 = vpack.c.b16 %v4101, %v4092
      %v4264 = vpack.c.b16 %v4102, %v4093
      %v4265 = vpack.c.b16 %v4103, %v4094
      %v4266 = vpack.c.b16 %v4104, %v4095
      %v4267 = vpack.c.b16 %v4105, %v4096
      %v4268 = vpack.c.b16 %v4106, %v4097
      %v4269 = vpack.c.b16 %v4107, %v4098
      %v4270 = vpack.c.b16 %v4108, %v4099
      %v4577 = vunpack.c.l.b16 %v3457
      %v4578 = vunpack.c.l.b16 %v3458
      %v4579 = vunpack.c.l.b16 %v3459
      %v4580 = vunpack.c.l.b16 %v3460
      %v4581 = vunpack.c.l.b16 %v3461
      %v4582 = vunpack.c.l.b16 %v3462
      %v4583 = vunpack.c.l.b16 %v3463
      %v4584 = vunpack.c.l.b16 %v3464
      %v4585 = vunpack.c.l.b16 %v3465
      %v4586 = vunpack.c.l.b16 %v3466
      %v4587 = vunpack.c.l.b16 %v3467
      %v4588 = vunpack.c.l.b16 %v3468
      %v4589 = vunpack.c.l.b16 %v3469
      %v4590 = vunpack.c.l.b16 %v3470
      %v4591 = vunpack.c.l.b16 %v3471
      %v4592 = vunpack.c.l.b16 %v3472
      %v4593 = vunpack.c.l.b16 %v3473
      %v4594 = vunpack.c.l.b16 %v3474
      %v4595 = vunpack.c.l.b16 %v3475
      %v4596 = vunpack.c.l.b16 %v3476
      %v4597 = vunpack.c.l.b16 %v3477
      %v4598 = vunpack.c.l.b16 %v3478
      %v4599 = vunpack.c.l.b16 %v3479
      %v4600 = vunpack.c.l.b16 %v3480
      %v4601 = vunpack.c.l.b16 %v3481
      %v4602 = vunpack.c.l.b16 %v3482
      %v4603 = vunpack.c.l.b16 %v3483
      %v4604 = vunpack.c.l.b16 %v3484
      %v4605 = vunpack.c.l.b16 %v3485
      %v4606 = vunpack.c.l.b16 %v3486
      %v4607 = vunpack.c.l.b16 %v3487
      %v4608 = vunpack.c.l.b16 %v3488
      %v4609 = vunpack.c.l.b16 %v3489
      %v4610 = vunpack.c.l.b16 %v3490
      %v4611 = vunpack.c.l.b16 %v3491
      %v4612 = vunpack.c.l.b16 %v3492
      %v4613 = vunpack.c.l.b16 %v3493
      %v4614 = vunpack.c.l.b16 %v3494
      %v4615 = vunpack.c.l.b16 %v3495
      %v4616 = vunpack.c.l.b16 %v3496
      %v4617 = vunpack.c.l.b16 %v3497
      %v4618 = vunpack.c.l.b16 %v3498
      %v4619 = vunpack.c.l.b16 %v3499
      %v4620 = vunpack.c.l.b16 %v3500
      %v4621 = vunpack.c.l.b16 %v3501
      %v4622 = vunpack.c.l.b16 %v3502
      %v4623 = vunpack.c.l.b16 %v3503
      %v4624 = vunpack.c.l.b16 %v3504
      %v4625 = vunpack.c.l.b16 %v3505
      %v4626 = vunpack.c.l.b16 %v3506
      %v4627 = vunpack.c.l.b16 %v3507
      %v4628 = vunpack.c.l.b16 %v3508
      %v4629 = vunpack.c.l.b16 %v3509
      %v4630 = vunpack.c.l.b16 %v3510
      %v4631 = vunpack.c.l.b16 %v3511
      %v4632 = vunpack.c.l.b16 %v3512
      %v4633 = vunpack.c.l.b16 %v3513
      %v4634 = vunpack.c.l.b16 %v3514
      %v4635 = vunpack.c.l.b16 %v3515
      %v4636 = vunpack.c.l.b16 %v3516
      %v4637 = vunpack.c.l.b16 %v3517
      %v4638 = vunpack.c.l.b16 %v3518
      %v4639 = vunpack.c.l.b16 %v3519
      %v4640 = vunpack.c.l.b16 %v3520
      %v4641 = vunpack.c.l.b16 %v3521
      %v4642 = vunpack.c.l.b16 %v3522
      %v4643 = vunpack.c.l.b16 %v3523
      %v4644 = vunpack.c.l.b16 %v3524
      %v4645 = vunpack.c.l.b16 %v3525
      %v4646 = vunpack.c.l.b16 %v3526
      %v4647 = vunpack.c.l.b16 %v3527
      %v4648 = vunpack.c.l.b16 %v3528
      %v4649 = vunpack.c.l.b16 %v3529
      %v4650 = vunpack.c.l.b16 %v3530
      %v4651 = vunpack.c.l.b16 %v3531
      %v4652 = vunpack.c.l.b16 %v3532
      %v4653 = vunpack.c.l.b16 %v3533
      %v4654 = vunpack.c.l.b16 %v3534
      %v4655 = vunpack.c.l.b16 %v3535
      %v4656 = vunpack.c.l.b16 %v3536
      %v4657 = vunpack.c.l.b16 %v3537
      %v4658 = vunpack.c.l.b16 %v3538
      %v4659 = vunpack.c.l.b16 %v3539
      %v4660 = vunpack.c.l.b16 %v3540
      %v4661 = vunpack.c.l.b16 %v3541
      %v4662 = vunpack.c.l.b16 %v3542
      %v4663 = vunpack.c.l.b16 %v3543
      %v4664 = vunpack.c.l.b16 %v3544
      %v4665 = vunpack.c.l.b16 %v3545
      %v4666 = vunpack.c.l.b16 %v3546
      %v4667 = vunpack.c.l.b16 %v3547
      %v4668 = vunpack.c.l.b16 %v3548
      %v4669 = vunpack.c.l.b16 %v3549
      %v4670 = vunpack.c.l.b16 %v3550
      %v4671 = vunpack.c.l.b16 %v3551
      %v4672 = vunpack.c.l.b16 %v3552
      %v4673 = vunpack.c.l.b16 %v3553
      %v4674 = vunpack.c.l.b16 %v3554
      %v4675 = vunpack.c.l.b16 %v3555
      %v4676 = vunpack.c.l.b16 %v3556
      %v4677 = vunpack.c.l.b16 %v3557
      %v4678 = vunpack.c.l.b16 %v3558
      %v4679 = vunpack.c.l.b16 %v3559
      %v4680 = vunpack.c.l.b16 %v3560
      %v4681 = vunpack.c.l.b16 %v3561
      %v4682 = vunpack.c.l.b16 %v3562
      %v4683 = vunpack.c.l.b16 %v3563
      %v4684 = vunpack.c.l.b16 %v3564
      %v4685 = vunpack.c.l.b16 %v3565
      %v4686 = vunpack.c.l.b16 %v3566
      %v4687 = vunpack.c.l.b16 %v3567
      %v4688 = vunpack.c.l.b16 %v3568
      %v4689 = vunpack.c.l.b16 %v3569
      %v4690 = vunpack.c.l.b16 %v3570
      %v4691 = vunpack.c.l.b16 %v3571
      %v4692 = vunpack.c.l.b16 %v3572
      %v4693 = vunpack.c.l.b16 %v3573
      %v4694 = vunpack.c.l.b16 %v3574
      %v4695 = vunpack.c.l.b16 %v3575
      %v4696 = vunpack.c.l.b16 %v3576
      %v4697 = vunpack.c.l.b16 %v3577
      %v4698 = vunpack.c.l.b16 %v3578
      %v4699 = vunpack.c.l.b16 %v3579
      %v4700 = vunpack.c.l.b16 %v3580
      %v4701 = vunpack.c.l.b16 %v3581
      %v4702 = vunpack.c.l.b16 %v3582
      %v4703 = vunpack.c.l.b16 %v3583
      %v4704 = vunpack.c.l.b16 %v3584
      %v4705 = vunpack.c.l.b16 %v3585
      %v4706 = vunpack.c.l.b16 %v3586
      %v4707 = vunpack.c.l.b16 %v3587
      %v4708 = vunpack.c.l.b16 %v3588
      %v4709 = vunpack.c.l.b16 %v3589
      %v4710 = vunpack.c.l.b16 %v3590
      %v4711 = vunpack.c.l.b16 %v3591
      %v4712 = vunpack.c.l.b16 %v3592
      %v4713 = vunpack.c.l.b16 %v3593
      %v4714 = vunpack.c.l.b16 %v3594
      %v4715 = vunpack.c.l.b16 %v3595
      %v4716 = vunpack.c.l.b16 %v3596
      %v4717 = vunpack.c.l.b16 %v3597
      %v4718 = vunpack.c.l.b16 %v3598
      %v4719 = vunpack.c.l.b16 %v3599
      %v4720 = vunpack.c.l.b16 %v3600
      %v4721 = vpack.c.b16 %v4578, %v4577
      %v4722 = vpack.c.b16 %v4580, %v4579
      %v4723 = vpack.c.b16 %v4582, %v4581
      %v4724 = vpack.c.b16 %v4584, %v4583
      %v4725 = vpack.c.b16 %v4586, %v4585
      %v4726 = vpack.c.b16 %v4588, %v4587
      %v4727 = vpack.c.b16 %v4590, %v4589
      %v4728 = vpack.c.b16 %v4592, %v4591
      %v4729 = vpack.c.b16 %v4594, %v4593
      %v4730 = vpack.c.b16 %v4596, %v4595
      %v4731 = vpack.c.b16 %v4598, %v4597
      %v4732 = vpack.c.b16 %v4600, %v4599
      %v4733 = vpack.c.b16 %v4602, %v4601
      %v4734 = vpack.c.b16 %v4604, %v4603
      %v4735 = vpack.c.b16 %v4606, %v4605
      %v4736 = vpack.c.b16 %v4608, %v4607
      %v4737 = vpack.c.b16 %v4610, %v4609
      %v4738 = vpack.c.b16 %v4612, %v4611
      %v4739 = vpack.c.b16 %v4614, %v4613
      %v4740 = vpack.c.b16 %v4616, %v4615
      %v4741 = vpack.c.b16 %v4618, %v4617
      %v4742 = vpack.c.b16 %v4620, %v4619
      %v4743 = vpack.c.b16 %v4622, %v4621
      %v4744 = vpack.c.b16 %v4624, %v4623
      %v4745 = vpack.c.b16 %v4626, %v4625
      %v4746 = vpack.c.b16 %v4628, %v4627
      %v4747 = vpack.c.b16 %v4630, %v4629
      %v4748 = vpack.c.b16 %v4632, %v4631
      %v4749 = vpack.c.b16 %v4634, %v4633
      %v4750 = vpack.c.b16 %v4636, %v4635
      %v4751 = vpack.c.b16 %v4638, %v4637
      %v4752 = vpack.c.b16 %v4640, %v4639
      %v4753 = vpack.c.b16 %v4642, %v4641
      %v4754 = vpack.c.b16 %v4644, %v4643
      %v4755 = vpack.c.b16 %v4646, %v4645
      %v4756 = vpack.c.b16 %v4648, %v4647
      %v4757 = vpack.c.b16 %v4650, %v4649
      %v4758 = vpack.c.b16 %v4652, %v4651
      %v4759 = vpack.c.b16 %v4654, %v4653
      %v4760 = vpack.c.b16 %v4656, %v4655
      %v4761 = vpack.c.b16 %v4658, %v4657
      %v4762 = vpack.c.b16 %v4660, %v4659
      %v4763 = vpack.c.b16 %v4662, %v4661
      %v4764 = vpack.c.b16 %v4664, %v4663
      %v4765 = vpack.c.b16 %v4666, %v4665
      %v4766 = vpack.c.b16 %v4668, %v4667
      %v4767 = vpack.c.b16 %v4670, %v4669
      %v4768 = vpack.c.b16 %v4672, %v4671
      %v4769 = vpack.c.b16 %v4674, %v4673
      %v4770 = vpack.c.b16 %v4676, %v4675
      %v4771 = vpack.c.b16 %v4678, %v4677
      %v4772 = vpack.c.b16 %v4680, %v4679
      %v4773 = vpack.c.b16 %v4682, %v4681
      %v4774 = vpack.c.b16 %v4684, %v4683
      %v4775 = vpack.c.b16 %v4686, %v4685
      %v4776 = vpack.c.b16 %v4688, %v4687
      %v4777 = vpack.c.b16 %v4690, %v4689
      %v4778 = vpack.c.b16 %v4692, %v4691
      %v4779 = vpack.c.b16 %v4694, %v4693
      %v4780 = vpack.c.b16 %v4696, %v4695
      %v4781 = vpack.c.b16 %v4698, %v4697
      %v4782 = vpack.c.b16 %v4700, %v4699
      %v4783 = vpack.c.b16 %v4702, %v4701
      %v4784 = vpack.c.b16 %v4704, %v4703
      %v4785 = vpack.c.b16 %v4706, %v4705
      %v4786 = vpack.c.b16 %v4708, %v4707
      %v4787 = vpack.c.b16 %v4710, %v4709
      %v4788 = vpack.c.b16 %v4712, %v4711
      %v4789 = vpack.c.b16 %v4714, %v4713
      %v4790 = vpack.c.b16 %v4716, %v4715
      %v4791 = vpack.c.b16 %v4718, %v4717
      %v4792 = vpack.c.b16 %v4720, %v4719
      %4865 = vmatpush.bf16.msra.mxu0 %v4728
      %4866 = vmatpush.bf16.msra.mxu0 %v4727
      %4867 = vmatpush.bf16.msra.mxu0 %v4726
      %4868 = vmatpush.bf16.msra.mxu0 %v4725
      %4869 = vmatpush.bf16.msra.mxu0 %v4724
      %4870 = vmatpush.bf16.msra.mxu0 %v4723
      %4871 = vmatpush.bf16.msra.mxu0 %v4722
      %4872 = vmatpush.bf16.msra.mxu0 %v4721
      %4873 = vmatmul.bf16.gmra.mxu0 %v4109
      %v4874 = vpop.f32.mrf.mxu0
      %v4875 = vadd.f32 %v3603, %v4874
      %v4876 = vpop.f32.mrf.mxu0
      %v4877 = vadd.f32 %v3603, %v4876
      %4878 = vmatmul.bf16.gmra.mxu0 %v4118
      %v4879 = vpop.f32.mrf.mxu0
      %v4880 = vadd.f32 %v3603, %v4879
      %v4881 = vpop.f32.mrf.mxu0
      %v4882 = vadd.f32 %v3603, %v4881
      %4883 = vmatmul.bf16.gmra.mxu0 %v4127
      %v4884 = vpop.f32.mrf.mxu0
      %v4885 = vadd.f32 %v3603, %v4884
      %v4886 = vpop.f32.mrf.mxu0
      %v4887 = vadd.f32 %v3603, %v4886
      %4888 = vmatmul.bf16.gmra.mxu0 %v4136
      %v4889 = vpop.f32.mrf.mxu0
      %v4890 = vadd.f32 %v3603, %v4889
      %v4891 = vpop.f32.mrf.mxu0
      %v4892 = vadd.f32 %v3603, %v4891
      %4893 = vmatmul.bf16.gmra.mxu0 %v4145
      %v4894 = vpop.f32.mrf.mxu0
      %v4895 = vadd.f32 %v3603, %v4894
      %v4896 = vpop.f32.mrf.mxu0
      %v4897 = vadd.f32 %v3603, %v4896
      %4898 = vmatmul.bf16.gmra.mxu0 %v4154
      %v4899 = vpop.f32.mrf.mxu0
      %v4900 = vadd.f32 %v3603, %v4899
      %v4901 = vpop.f32.mrf.mxu0
      %v4902 = vadd.f32 %v3603, %v4901
      %4903 = vmatmul.bf16.gmra.mxu0 %v4163
      %v4904 = vpop.f32.mrf.mxu0
      %v4905 = vadd.f32 %v3603, %v4904
      %v4906 = vpop.f32.mrf.mxu0
      %v4907 = vadd.f32 %v3603, %v4906
      %4908 = vmatmul.bf16.gmra.mxu0 %v4172
      %v4909 = vpop.f32.mrf.mxu0
      %v4910 = vadd.f32 %v3603, %v4909
      %v4911 = vpop.f32.mrf.mxu0
      %v4912 = vadd.f32 %v3603, %v4911
      %4913 = vmatmul.bf16.gmra.mxu0 %v4181
      %v4914 = vpop.f32.mrf.mxu0
      %v4915 = vadd.f32 %v3603, %v4914
      %v4916 = vpop.f32.mrf.mxu0
      %v4917 = vadd.f32 %v3603, %v4916
      %4918 = vmatmul.bf16.gmra.mxu0 %v4190
      %v4919 = vpop.f32.mrf.mxu0
      %v4920 = vadd.f32 %v3603, %v4919
      %v4921 = vpop.f32.mrf.mxu0
      %v4922 = vadd.f32 %v3603, %v4921
      %4923 = vmatmul.bf16.gmra.mxu0 %v4199
      %v4924 = vpop.f32.mrf.mxu0
      %v4925 = vadd.f32 %v3603, %v4924
      %v4926 = vpop.f32.mrf.mxu0
      %v4927 = vadd.f32 %v3603, %v4926
      %4928 = vmatmul.bf16.gmra.mxu0 %v4208
      %v4929 = vpop.f32.mrf.mxu0
      %v4930 = vadd.f32 %v3603, %v4929
      %v4931 = vpop.f32.mrf.mxu0
      %v4932 = vadd.f32 %v3603, %v4931
      %4933 = vmatmul.bf16.gmra.mxu0 %v4217
      %v4934 = vpop.f32.mrf.mxu0
      %v4935 = vadd.f32 %v3603, %v4934
      %v4936 = vpop.f32.mrf.mxu0
      %v4937 = vadd.f32 %v3603, %v4936
      %4938 = vmatmul.bf16.gmra.mxu0 %v4226
      %v4939 = vpop.f32.mrf.mxu0
      %v4940 = vadd.f32 %v3603, %v4939
      %v4941 = vpop.f32.mrf.mxu0
      %v4942 = vadd.f32 %v3603, %v4941
      %4943 = vmatmul.bf16.gmra.mxu0 %v4235
      %v4944 = vpop.f32.mrf.mxu0
      %v4945 = vadd.f32 %v3603, %v4944
      %v4946 = vpop.f32.mrf.mxu0
      %v4947 = vadd.f32 %v3603, %v4946
      %4948 = vmatmul.bf16.gmra.mxu0 %v4244
      %v4949 = vpop.f32.mrf.mxu0
      %v4950 = vadd.f32 %v3603, %v4949
      %v4951 = vpop.f32.mrf.mxu0
      %v4952 = vadd.f32 %v3603, %v4951
      %4953 = vmatmul.bf16.gmra.mxu0 %v4253
      %v4954 = vpop.f32.mrf.mxu0
      %v4955 = vadd.f32 %v3603, %v4954
      %v4956 = vpop.f32.mrf.mxu0
      %v4957 = vadd.f32 %v3603, %v4956
      %4958 = vmatmul.bf16.gmra.mxu0 %v4262
      %v4959 = vpop.f32.mrf.mxu0
      %v4960 = vadd.f32 %v3603, %v4959
      %v4961 = vpop.f32.mrf.mxu0
      %v4962 = vadd.f32 %v3603, %v4961
      %4963 = vdwg.mxu0
      %4964 = vmatpush.bf16.msra.mxu0 %v4736
      %4965 = vmatpush.bf16.msra.mxu0 %v4735
      %4966 = vmatpush.bf16.msra.mxu0 %v4734
      %4967 = vmatpush.bf16.msra.mxu0 %v4733
      %4968 = vmatpush.bf16.msra.mxu0 %v4732
      %4969 = vmatpush.bf16.msra.mxu0 %v4731
      %4970 = vmatpush.bf16.msra.mxu0 %v4730
      %4971 = vmatpush.bf16.msra.mxu0 %v4729
      %4972 = vmatmul.bf16.gmra.mxu0 %v4110
      %v4973 = vpop.f32.mrf.mxu0
      %v4974 = vadd.f32 %v4875, %v4973
      %v4975 = vpop.f32.mrf.mxu0
      %v4976 = vadd.f32 %v4877, %v4975
      %4977 = vmatmul.bf16.gmra.mxu0 %v4119
      %v4978 = vpop.f32.mrf.mxu0
      %v4979 = vadd.f32 %v4880, %v4978
      %v4980 = vpop.f32.mrf.mxu0
      %v4981 = vadd.f32 %v4882, %v4980
      %4982 = vmatmul.bf16.gmra.mxu0 %v4128
      %v4983 = vpop.f32.mrf.mxu0
      %v4984 = vadd.f32 %v4885, %v4983
      %v4985 = vpop.f32.mrf.mxu0
      %v4986 = vadd.f32 %v4887, %v4985
      %4987 = vmatmul.bf16.gmra.mxu0 %v4137
      %v4988 = vpop.f32.mrf.mxu0
      %v4989 = vadd.f32 %v4890, %v4988
      %v4990 = vpop.f32.mrf.mxu0
      %v4991 = vadd.f32 %v4892, %v4990
      %4992 = vmatmul.bf16.gmra.mxu0 %v4146
      %v4993 = vpop.f32.mrf.mxu0
      %v4994 = vadd.f32 %v4895, %v4993
      %v4995 = vpop.f32.mrf.mxu0
      %v4996 = vadd.f32 %v4897, %v4995
      %4997 = vmatmul.bf16.gmra.mxu0 %v4155
      %v4998 = vpop.f32.mrf.mxu0
      %v4999 = vadd.f32 %v4900, %v4998
      %v5000 = vpop.f32.mrf.mxu0
      %v5001 = vadd.f32 %v4902, %v5000
      %5002 = vmatmul.bf16.gmra.mxu0 %v4164
      %v5003 = vpop.f32.mrf.mxu0
      %v5004 = vadd.f32 %v4905, %v5003
      %v5005 = vpop.f32.mrf.mxu0
      %v5006 = vadd.f32 %v4907, %v5005
      %5007 = vmatmul.bf16.gmra.mxu0 %v4173
      %v5008 = vpop.f32.mrf.mxu0
      %v5009 = vadd.f32 %v4910, %v5008
      %v5010 = vpop.f32.mrf.mxu0
      %v5011 = vadd.f32 %v4912, %v5010
      %5012 = vmatmul.bf16.gmra.mxu0 %v4182
      %v5013 = vpop.f32.mrf.mxu0
      %v5014 = vadd.f32 %v4915, %v5013
      %v5015 = vpop.f32.mrf.mxu0
      %v5016 = vadd.f32 %v4917, %v5015
      %5017 = vmatmul.bf16.gmra.mxu0 %v4191
      %v5018 = vpop.f32.mrf.mxu0
      %v5019 = vadd.f32 %v4920, %v5018
      %v5020 = vpop.f32.mrf.mxu0
      %v5021 = vadd.f32 %v4922, %v5020
      %5022 = vmatmul.bf16.gmra.mxu0 %v4200
      %v5023 = vpop.f32.mrf.mxu0
      %v5024 = vadd.f32 %v4925, %v5023
      %v5025 = vpop.f32.mrf.mxu0
      %v5026 = vadd.f32 %v4927, %v5025
      %5027 = vmatmul.bf16.gmra.mxu0 %v4209
      %v5028 = vpop.f32.mrf.mxu0
      %v5029 = vadd.f32 %v4930, %v5028
      %v5030 = vpop.f32.mrf.mxu0
      %v5031 = vadd.f32 %v4932, %v5030
      %5032 = vmatmul.bf16.gmra.mxu0 %v4218
      %v5033 = vpop.f32.mrf.mxu0
      %v5034 = vadd.f32 %v4935, %v5033
      %v5035 = vpop.f32.mrf.mxu0
      %v5036 = vadd.f32 %v4937, %v5035
      %5037 = vmatmul.bf16.gmra.mxu0 %v4227
      %v5038 = vpop.f32.mrf.mxu0
      %v5039 = vadd.f32 %v4940, %v5038
      %v5040 = vpop.f32.mrf.mxu0
      %v5041 = vadd.f32 %v4942, %v5040
      %5042 = vmatmul.bf16.gmra.mxu0 %v4236
      %v5043 = vpop.f32.mrf.mxu0
      %v5044 = vadd.f32 %v4945, %v5043
      %v5045 = vpop.f32.mrf.mxu0
      %v5046 = vadd.f32 %v4947, %v5045
      %5047 = vmatmul.bf16.gmra.mxu0 %v4245
      %v5048 = vpop.f32.mrf.mxu0
      %v5049 = vadd.f32 %v4950, %v5048
      %v5050 = vpop.f32.mrf.mxu0
      %v5051 = vadd.f32 %v4952, %v5050
      %5052 = vmatmul.bf16.gmra.mxu0 %v4254
      %v5053 = vpop.f32.mrf.mxu0
      %v5054 = vadd.f32 %v4955, %v5053
      %v5055 = vpop.f32.mrf.mxu0
      %v5056 = vadd.f32 %v4957, %v5055
      %5057 = vmatmul.bf16.gmra.mxu0 %v4263
      %v5058 = vpop.f32.mrf.mxu0
      %v5059 = vadd.f32 %v4960, %v5058
      %v5060 = vpop.f32.mrf.mxu0
      %v5061 = vadd.f32 %v4962, %v5060
      %5062 = vdwg.mxu0
      %5063 = vmatpush.bf16.msra.mxu0 %v4744
      %5064 = vmatpush.bf16.msra.mxu0 %v4743
      %5065 = vmatpush.bf16.msra.mxu0 %v4742
      %5066 = vmatpush.bf16.msra.mxu0 %v4741
      %5067 = vmatpush.bf16.msra.mxu0 %v4740
      %5068 = vmatpush.bf16.msra.mxu0 %v4739
      %5069 = vmatpush.bf16.msra.mxu0 %v4738
      %5070 = vmatpush.bf16.msra.mxu0 %v4737
      %5071 = vmatmul.bf16.gmra.mxu0 %v4111
      %v5072 = vpop.f32.mrf.mxu0
      %v5073 = vadd.f32 %v4974, %v5072
      %v5074 = vpop.f32.mrf.mxu0
      %v5075 = vadd.f32 %v4976, %v5074
      %5076 = vmatmul.bf16.gmra.mxu0 %v4120
      %v5077 = vpop.f32.mrf.mxu0
      %v5078 = vadd.f32 %v4979, %v5077
      %v5079 = vpop.f32.mrf.mxu0
      %v5080 = vadd.f32 %v4981, %v5079
      %5081 = vmatmul.bf16.gmra.mxu0 %v4129
      %v5082 = vpop.f32.mrf.mxu0
      %v5083 = vadd.f32 %v4984, %v5082
      %v5084 = vpop.f32.mrf.mxu0
      %v5085 = vadd.f32 %v4986, %v5084
      %5086 = vmatmul.bf16.gmra.mxu0 %v4138
      %v5087 = vpop.f32.mrf.mxu0
      %v5088 = vadd.f32 %v4989, %v5087
      %v5089 = vpop.f32.mrf.mxu0
      %v5090 = vadd.f32 %v4991, %v5089
      %5091 = vmatmul.bf16.gmra.mxu0 %v4147
      %v5092 = vpop.f32.mrf.mxu0
      %v5093 = vadd.f32 %v4994, %v5092
      %v5094 = vpop.f32.mrf.mxu0
      %v5095 = vadd.f32 %v4996, %v5094
      %5096 = vmatmul.bf16.gmra.mxu0 %v4156
      %v5097 = vpop.f32.mrf.mxu0
      %v5098 = vadd.f32 %v4999, %v5097
      %v5099 = vpop.f32.mrf.mxu0
      %v5100 = vadd.f32 %v5001, %v5099
      %5101 = vmatmul.bf16.gmra.mxu0 %v4165
      %v5102 = vpop.f32.mrf.mxu0
      %v5103 = vadd.f32 %v5004, %v5102
      %v5104 = vpop.f32.mrf.mxu0
      %v5105 = vadd.f32 %v5006, %v5104
      %5106 = vmatmul.bf16.gmra.mxu0 %v4174
      %v5107 = vpop.f32.mrf.mxu0
      %v5108 = vadd.f32 %v5009, %v5107
      %v5109 = vpop.f32.mrf.mxu0
      %v5110 = vadd.f32 %v5011, %v5109
      %5111 = vmatmul.bf16.gmra.mxu0 %v4183
      %v5112 = vpop.f32.mrf.mxu0
      %v5113 = vadd.f32 %v5014, %v5112
      %v5114 = vpop.f32.mrf.mxu0
      %v5115 = vadd.f32 %v5016, %v5114
      %5116 = vmatmul.bf16.gmra.mxu0 %v4192
      %v5117 = vpop.f32.mrf.mxu0
      %v5118 = vadd.f32 %v5019, %v5117
      %v5119 = vpop.f32.mrf.mxu0
      %v5120 = vadd.f32 %v5021, %v5119
      %5121 = vmatmul.bf16.gmra.mxu0 %v4201
      %v5122 = vpop.f32.mrf.mxu0
      %v5123 = vadd.f32 %v5024, %v5122
      %v5124 = vpop.f32.mrf.mxu0
      %v5125 = vadd.f32 %v5026, %v5124
      %5126 = vmatmul.bf16.gmra.mxu0 %v4210
      %v5127 = vpop.f32.mrf.mxu0
      %v5128 = vadd.f32 %v5029, %v5127
      %v5129 = vpop.f32.mrf.mxu0
      %v5130 = vadd.f32 %v5031, %v5129
      %5131 = vmatmul.bf16.gmra.mxu0 %v4219
      %v5132 = vpop.f32.mrf.mxu0
      %v5133 = vadd.f32 %v5034, %v5132
      %v5134 = vpop.f32.mrf.mxu0
      %v5135 = vadd.f32 %v5036, %v5134
      %5136 = vmatmul.bf16.gmra.mxu0 %v4228
      %v5137 = vpop.f32.mrf.mxu0
      %v5138 = vadd.f32 %v5039, %v5137
      %v5139 = vpop.f32.mrf.mxu0
      %v5140 = vadd.f32 %v5041, %v5139
      %5141 = vmatmul.bf16.gmra.mxu0 %v4237
      %v5142 = vpop.f32.mrf.mxu0
      %v5143 = vadd.f32 %v5044, %v5142
      %v5144 = vpop.f32.mrf.mxu0
      %v5145 = vadd.f32 %v5046, %v5144
      %5146 = vmatmul.bf16.gmra.mxu0 %v4246
      %v5147 = vpop.f32.mrf.mxu0
      %v5148 = vadd.f32 %v5049, %v5147
      %v5149 = vpop.f32.mrf.mxu0
      %v5150 = vadd.f32 %v5051, %v5149
      %5151 = vmatmul.bf16.gmra.mxu0 %v4255
      %v5152 = vpop.f32.mrf.mxu0
      %v5153 = vadd.f32 %v5054, %v5152
      %v5154 = vpop.f32.mrf.mxu0
      %v5155 = vadd.f32 %v5056, %v5154
      %5156 = vmatmul.bf16.gmra.mxu0 %v4264
      %v5157 = vpop.f32.mrf.mxu0
      %v5158 = vadd.f32 %v5059, %v5157
      %v5159 = vpop.f32.mrf.mxu0
      %v5160 = vadd.f32 %v5061, %v5159
      %5161 = vdwg.mxu0
      %5162 = vmatpush.bf16.msra.mxu0 %v4752
      %5163 = vmatpush.bf16.msra.mxu0 %v4751
      %5164 = vmatpush.bf16.msra.mxu0 %v4750
      %5165 = vmatpush.bf16.msra.mxu0 %v4749
      %5166 = vmatpush.bf16.msra.mxu0 %v4748
      %5167 = vmatpush.bf16.msra.mxu0 %v4747
      %5168 = vmatpush.bf16.msra.mxu0 %v4746
      %5169 = vmatpush.bf16.msra.mxu0 %v4745
      %5170 = vmatmul.bf16.gmra.mxu0 %v4112
      %v5171 = vpop.f32.mrf.mxu0
      %v5172 = vadd.f32 %v5073, %v5171
      %v5173 = vpop.f32.mrf.mxu0
      %v5174 = vadd.f32 %v5075, %v5173
      %5175 = vmatmul.bf16.gmra.mxu0 %v4121
      %v5176 = vpop.f32.mrf.mxu0
      %v5177 = vadd.f32 %v5078, %v5176
      %v5178 = vpop.f32.mrf.mxu0
      %v5179 = vadd.f32 %v5080, %v5178
      %5180 = vmatmul.bf16.gmra.mxu0 %v4130
      %v5181 = vpop.f32.mrf.mxu0
      %v5182 = vadd.f32 %v5083, %v5181
      %v5183 = vpop.f32.mrf.mxu0
      %v5184 = vadd.f32 %v5085, %v5183
      %5185 = vmatmul.bf16.gmra.mxu0 %v4139
      %v5186 = vpop.f32.mrf.mxu0
      %v5187 = vadd.f32 %v5088, %v5186
      %v5188 = vpop.f32.mrf.mxu0
      %v5189 = vadd.f32 %v5090, %v5188
      %5190 = vmatmul.bf16.gmra.mxu0 %v4148
      %v5191 = vpop.f32.mrf.mxu0
      %v5192 = vadd.f32 %v5093, %v5191
      %v5193 = vpop.f32.mrf.mxu0
      %v5194 = vadd.f32 %v5095, %v5193
      %5195 = vmatmul.bf16.gmra.mxu0 %v4157
      %v5196 = vpop.f32.mrf.mxu0
      %v5197 = vadd.f32 %v5098, %v5196
      %v5198 = vpop.f32.mrf.mxu0
      %v5199 = vadd.f32 %v5100, %v5198
      %5200 = vmatmul.bf16.gmra.mxu0 %v4166
      %v5201 = vpop.f32.mrf.mxu0
      %v5202 = vadd.f32 %v5103, %v5201
      %v5203 = vpop.f32.mrf.mxu0
      %v5204 = vadd.f32 %v5105, %v5203
      %5205 = vmatmul.bf16.gmra.mxu0 %v4175
      %v5206 = vpop.f32.mrf.mxu0
      %v5207 = vadd.f32 %v5108, %v5206
      %v5208 = vpop.f32.mrf.mxu0
      %v5209 = vadd.f32 %v5110, %v5208
      %5210 = vmatmul.bf16.gmra.mxu0 %v4184
      %v5211 = vpop.f32.mrf.mxu0
      %v5212 = vadd.f32 %v5113, %v5211
      %v5213 = vpop.f32.mrf.mxu0
      %v5214 = vadd.f32 %v5115, %v5213
      %5215 = vmatmul.bf16.gmra.mxu0 %v4193
      %v5216 = vpop.f32.mrf.mxu0
      %v5217 = vadd.f32 %v5118, %v5216
      %v5218 = vpop.f32.mrf.mxu0
      %v5219 = vadd.f32 %v5120, %v5218
      %5220 = vmatmul.bf16.gmra.mxu0 %v4202
      %v5221 = vpop.f32.mrf.mxu0
      %v5222 = vadd.f32 %v5123, %v5221
      %v5223 = vpop.f32.mrf.mxu0
      %v5224 = vadd.f32 %v5125, %v5223
      %5225 = vmatmul.bf16.gmra.mxu0 %v4211
      %v5226 = vpop.f32.mrf.mxu0
      %v5227 = vadd.f32 %v5128, %v5226
      %v5228 = vpop.f32.mrf.mxu0
      %v5229 = vadd.f32 %v5130, %v5228
      %5230 = vmatmul.bf16.gmra.mxu0 %v4220
      %v5231 = vpop.f32.mrf.mxu0
      %v5232 = vadd.f32 %v5133, %v5231
      %v5233 = vpop.f32.mrf.mxu0
      %v5234 = vadd.f32 %v5135, %v5233
      %5235 = vmatmul.bf16.gmra.mxu0 %v4229
      %v5236 = vpop.f32.mrf.mxu0
      %v5237 = vadd.f32 %v5138, %v5236
      %v5238 = vpop.f32.mrf.mxu0
      %v5239 = vadd.f32 %v5140, %v5238
      %5240 = vmatmul.bf16.gmra.mxu0 %v4238
      %v5241 = vpop.f32.mrf.mxu0
      %v5242 = vadd.f32 %v5143, %v5241
      %v5243 = vpop.f32.mrf.mxu0
      %v5244 = vadd.f32 %v5145, %v5243
      %5245 = vmatmul.bf16.gmra.mxu0 %v4247
      %v5246 = vpop.f32.mrf.mxu0
      %v5247 = vadd.f32 %v5148, %v5246
      %v5248 = vpop.f32.mrf.mxu0
      %v5249 = vadd.f32 %v5150, %v5248
      %5250 = vmatmul.bf16.gmra.mxu0 %v4256
      %v5251 = vpop.f32.mrf.mxu0
      %v5252 = vadd.f32 %v5153, %v5251
      %v5253 = vpop.f32.mrf.mxu0
      %v5254 = vadd.f32 %v5155, %v5253
      %5255 = vmatmul.bf16.gmra.mxu0 %v4265
      %v5256 = vpop.f32.mrf.mxu0
      %v5257 = vadd.f32 %v5158, %v5256
      %v5258 = vpop.f32.mrf.mxu0
      %v5259 = vadd.f32 %v5160, %v5258
      %5260 = vdwg.mxu0
      %5261 = vmatpush.bf16.msra.mxu0 %v4760
      %5262 = vmatpush.bf16.msra.mxu0 %v4759
      %5263 = vmatpush.bf16.msra.mxu0 %v4758
      %5264 = vmatpush.bf16.msra.mxu0 %v4757
      %5265 = vmatpush.bf16.msra.mxu0 %v4756
      %5266 = vmatpush.bf16.msra.mxu0 %v4755
      %5267 = vmatpush.bf16.msra.mxu0 %v4754
      %5268 = vmatpush.bf16.msra.mxu0 %v4753
      %5269 = vmatmul.bf16.gmra.mxu0 %v4113
      %v5270 = vpop.f32.mrf.mxu0
      %v5271 = vadd.f32 %v5172, %v5270
      %v5272 = vpop.f32.mrf.mxu0
      %v5273 = vadd.f32 %v5174, %v5272
      %5274 = vmatmul.bf16.gmra.mxu0 %v4122
      %v5275 = vpop.f32.mrf.mxu0
      %v5276 = vadd.f32 %v5177, %v5275
      %v5277 = vpop.f32.mrf.mxu0
      %v5278 = vadd.f32 %v5179, %v5277
      %5279 = vmatmul.bf16.gmra.mxu0 %v4131
      %v5280 = vpop.f32.mrf.mxu0
      %v5281 = vadd.f32 %v5182, %v5280
      %v5282 = vpop.f32.mrf.mxu0
      %v5283 = vadd.f32 %v5184, %v5282
      %5284 = vmatmul.bf16.gmra.mxu0 %v4140
      %v5285 = vpop.f32.mrf.mxu0
      %v5286 = vadd.f32 %v5187, %v5285
      %v5287 = vpop.f32.mrf.mxu0
      %v5288 = vadd.f32 %v5189, %v5287
      %5289 = vmatmul.bf16.gmra.mxu0 %v4149
      %v5290 = vpop.f32.mrf.mxu0
      %v5291 = vadd.f32 %v5192, %v5290
      %v5292 = vpop.f32.mrf.mxu0
      %v5293 = vadd.f32 %v5194, %v5292
      %5294 = vmatmul.bf16.gmra.mxu0 %v4158
      %v5295 = vpop.f32.mrf.mxu0
      %v5296 = vadd.f32 %v5197, %v5295
      %v5297 = vpop.f32.mrf.mxu0
      %v5298 = vadd.f32 %v5199, %v5297
      %5299 = vmatmul.bf16.gmra.mxu0 %v4167
      %v5300 = vpop.f32.mrf.mxu0
      %v5301 = vadd.f32 %v5202, %v5300
      %v5302 = vpop.f32.mrf.mxu0
      %v5303 = vadd.f32 %v5204, %v5302
      %5304 = vmatmul.bf16.gmra.mxu0 %v4176
      %v5305 = vpop.f32.mrf.mxu0
      %v5306 = vadd.f32 %v5207, %v5305
      %v5307 = vpop.f32.mrf.mxu0
      %v5308 = vadd.f32 %v5209, %v5307
      %5309 = vmatmul.bf16.gmra.mxu0 %v4185
      %v5310 = vpop.f32.mrf.mxu0
      %v5311 = vadd.f32 %v5212, %v5310
      %v5312 = vpop.f32.mrf.mxu0
      %v5313 = vadd.f32 %v5214, %v5312
      %5314 = vmatmul.bf16.gmra.mxu0 %v4194
      %v5315 = vpop.f32.mrf.mxu0
      %v5316 = vadd.f32 %v5217, %v5315
      %v5317 = vpop.f32.mrf.mxu0
      %v5318 = vadd.f32 %v5219, %v5317
      %5319 = vmatmul.bf16.gmra.mxu0 %v4203
      %v5320 = vpop.f32.mrf.mxu0
      %v5321 = vadd.f32 %v5222, %v5320
      %v5322 = vpop.f32.mrf.mxu0
      %v5323 = vadd.f32 %v5224, %v5322
      %5324 = vmatmul.bf16.gmra.mxu0 %v4212
      %v5325 = vpop.f32.mrf.mxu0
      %v5326 = vadd.f32 %v5227, %v5325
      %v5327 = vpop.f32.mrf.mxu0
      %v5328 = vadd.f32 %v5229, %v5327
      %5329 = vmatmul.bf16.gmra.mxu0 %v4221
      %v5330 = vpop.f32.mrf.mxu0
      %v5331 = vadd.f32 %v5232, %v5330
      %v5332 = vpop.f32.mrf.mxu0
      %v5333 = vadd.f32 %v5234, %v5332
      %5334 = vmatmul.bf16.gmra.mxu0 %v4230
      %v5335 = vpop.f32.mrf.mxu0
      %v5336 = vadd.f32 %v5237, %v5335
      %v5337 = vpop.f32.mrf.mxu0
      %v5338 = vadd.f32 %v5239, %v5337
      %5339 = vmatmul.bf16.gmra.mxu0 %v4239
      %v5340 = vpop.f32.mrf.mxu0
      %v5341 = vadd.f32 %v5242, %v5340
      %v5342 = vpop.f32.mrf.mxu0
      %v5343 = vadd.f32 %v5244, %v5342
      %5344 = vmatmul.bf16.gmra.mxu0 %v4248
      %v5345 = vpop.f32.mrf.mxu0
      %v5346 = vadd.f32 %v5247, %v5345
      %v5347 = vpop.f32.mrf.mxu0
      %v5348 = vadd.f32 %v5249, %v5347
      %5349 = vmatmul.bf16.gmra.mxu0 %v4257
      %v5350 = vpop.f32.mrf.mxu0
      %v5351 = vadd.f32 %v5252, %v5350
      %v5352 = vpop.f32.mrf.mxu0
      %v5353 = vadd.f32 %v5254, %v5352
      %5354 = vmatmul.bf16.gmra.mxu0 %v4266
      %v5355 = vpop.f32.mrf.mxu0
      %v5356 = vadd.f32 %v5257, %v5355
      %v5357 = vpop.f32.mrf.mxu0
      %v5358 = vadd.f32 %v5259, %v5357
      %5359 = vdwg.mxu0
      %5360 = vmatpush.bf16.msra.mxu0 %v4768
      %5361 = vmatpush.bf16.msra.mxu0 %v4767
      %5362 = vmatpush.bf16.msra.mxu0 %v4766
      %5363 = vmatpush.bf16.msra.mxu0 %v4765
      %5364 = vmatpush.bf16.msra.mxu0 %v4764
      %5365 = vmatpush.bf16.msra.mxu0 %v4763
      %5366 = vmatpush.bf16.msra.mxu0 %v4762
      %5367 = vmatpush.bf16.msra.mxu0 %v4761
      %5368 = vmatmul.bf16.gmra.mxu0 %v4114
      %v5369 = vpop.f32.mrf.mxu0
      %v5370 = vadd.f32 %v5271, %v5369
      %v5371 = vpop.f32.mrf.mxu0
      %v5372 = vadd.f32 %v5273, %v5371
      %5373 = vmatmul.bf16.gmra.mxu0 %v4123
      %v5374 = vpop.f32.mrf.mxu0
      %v5375 = vadd.f32 %v5276, %v5374
      %v5376 = vpop.f32.mrf.mxu0
      %v5377 = vadd.f32 %v5278, %v5376
      %5378 = vmatmul.bf16.gmra.mxu0 %v4132
      %v5379 = vpop.f32.mrf.mxu0
      %v5380 = vadd.f32 %v5281, %v5379
      %v5381 = vpop.f32.mrf.mxu0
      %v5382 = vadd.f32 %v5283, %v5381
      %5383 = vmatmul.bf16.gmra.mxu0 %v4141
      %v5384 = vpop.f32.mrf.mxu0
      %v5385 = vadd.f32 %v5286, %v5384
      %v5386 = vpop.f32.mrf.mxu0
      %v5387 = vadd.f32 %v5288, %v5386
      %5388 = vmatmul.bf16.gmra.mxu0 %v4150
      %v5389 = vpop.f32.mrf.mxu0
      %v5390 = vadd.f32 %v5291, %v5389
      %v5391 = vpop.f32.mrf.mxu0
      %v5392 = vadd.f32 %v5293, %v5391
      %5393 = vmatmul.bf16.gmra.mxu0 %v4159
      %v5394 = vpop.f32.mrf.mxu0
      %v5395 = vadd.f32 %v5296, %v5394
      %v5396 = vpop.f32.mrf.mxu0
      %v5397 = vadd.f32 %v5298, %v5396
      %5398 = vmatmul.bf16.gmra.mxu0 %v4168
      %v5399 = vpop.f32.mrf.mxu0
      %v5400 = vadd.f32 %v5301, %v5399
      %v5401 = vpop.f32.mrf.mxu0
      %v5402 = vadd.f32 %v5303, %v5401
      %5403 = vmatmul.bf16.gmra.mxu0 %v4177
      %v5404 = vpop.f32.mrf.mxu0
      %v5405 = vadd.f32 %v5306, %v5404
      %v5406 = vpop.f32.mrf.mxu0
      %v5407 = vadd.f32 %v5308, %v5406
      %5408 = vmatmul.bf16.gmra.mxu0 %v4186
      %v5409 = vpop.f32.mrf.mxu0
      %v5410 = vadd.f32 %v5311, %v5409
      %v5411 = vpop.f32.mrf.mxu0
      %v5412 = vadd.f32 %v5313, %v5411
      %5413 = vmatmul.bf16.gmra.mxu0 %v4195
      %v5414 = vpop.f32.mrf.mxu0
      %v5415 = vadd.f32 %v5316, %v5414
      %v5416 = vpop.f32.mrf.mxu0
      %v5417 = vadd.f32 %v5318, %v5416
      %5418 = vmatmul.bf16.gmra.mxu0 %v4204
      %v5419 = vpop.f32.mrf.mxu0
      %v5420 = vadd.f32 %v5321, %v5419
      %v5421 = vpop.f32.mrf.mxu0
      %v5422 = vadd.f32 %v5323, %v5421
      %5423 = vmatmul.bf16.gmra.mxu0 %v4213
      %v5424 = vpop.f32.mrf.mxu0
      %v5425 = vadd.f32 %v5326, %v5424
      %v5426 = vpop.f32.mrf.mxu0
      %v5427 = vadd.f32 %v5328, %v5426
      %5428 = vmatmul.bf16.gmra.mxu0 %v4222
      %v5429 = vpop.f32.mrf.mxu0
      %v5430 = vadd.f32 %v5331, %v5429
      %v5431 = vpop.f32.mrf.mxu0
      %v5432 = vadd.f32 %v5333, %v5431
      %5433 = vmatmul.bf16.gmra.mxu0 %v4231
      %v5434 = vpop.f32.mrf.mxu0
      %v5435 = vadd.f32 %v5336, %v5434
      %v5436 = vpop.f32.mrf.mxu0
      %v5437 = vadd.f32 %v5338, %v5436
      %5438 = vmatmul.bf16.gmra.mxu0 %v4240
      %v5439 = vpop.f32.mrf.mxu0
      %v5440 = vadd.f32 %v5341, %v5439
      %v5441 = vpop.f32.mrf.mxu0
      %v5442 = vadd.f32 %v5343, %v5441
      %5443 = vmatmul.bf16.gmra.mxu0 %v4249
      %v5444 = vpop.f32.mrf.mxu0
      %v5445 = vadd.f32 %v5346, %v5444
      %v5446 = vpop.f32.mrf.mxu0
      %v5447 = vadd.f32 %v5348, %v5446
      %5448 = vmatmul.bf16.gmra.mxu0 %v4258
      %v5449 = vpop.f32.mrf.mxu0
      %v5450 = vadd.f32 %v5351, %v5449
      %v5451 = vpop.f32.mrf.mxu0
      %v5452 = vadd.f32 %v5353, %v5451
      %5453 = vmatmul.bf16.gmra.mxu0 %v4267
      %v5454 = vpop.f32.mrf.mxu0
      %v5455 = vadd.f32 %v5356, %v5454
      %v5456 = vpop.f32.mrf.mxu0
      %v5457 = vadd.f32 %v5358, %v5456
      %5458 = vdwg.mxu0
      %5459 = vmatpush.bf16.msra.mxu0 %v4776
      %5460 = vmatpush.bf16.msra.mxu0 %v4775
      %5461 = vmatpush.bf16.msra.mxu0 %v4774
      %5462 = vmatpush.bf16.msra.mxu0 %v4773
      %5463 = vmatpush.bf16.msra.mxu0 %v4772
      %5464 = vmatpush.bf16.msra.mxu0 %v4771
      %5465 = vmatpush.bf16.msra.mxu0 %v4770
      %5466 = vmatpush.bf16.msra.mxu0 %v4769
      %5467 = vmatmul.bf16.gmra.mxu0 %v4115
      %v5468 = vpop.f32.mrf.mxu0
      %v5469 = vadd.f32 %v5370, %v5468
      %v5470 = vpop.f32.mrf.mxu0
      %v5471 = vadd.f32 %v5372, %v5470
      %5472 = vmatmul.bf16.gmra.mxu0 %v4124
      %v5473 = vpop.f32.mrf.mxu0
      %v5474 = vadd.f32 %v5375, %v5473
      %v5475 = vpop.f32.mrf.mxu0
      %v5476 = vadd.f32 %v5377, %v5475
      %5477 = vmatmul.bf16.gmra.mxu0 %v4133
      %v5478 = vpop.f32.mrf.mxu0
      %v5479 = vadd.f32 %v5380, %v5478
      %v5480 = vpop.f32.mrf.mxu0
      %v5481 = vadd.f32 %v5382, %v5480
      %5482 = vmatmul.bf16.gmra.mxu0 %v4142
      %v5483 = vpop.f32.mrf.mxu0
      %v5484 = vadd.f32 %v5385, %v5483
      %v5485 = vpop.f32.mrf.mxu0
      %v5486 = vadd.f32 %v5387, %v5485
      %5487 = vmatmul.bf16.gmra.mxu0 %v4151
      %v5488 = vpop.f32.mrf.mxu0
      %v5489 = vadd.f32 %v5390, %v5488
      %v5490 = vpop.f32.mrf.mxu0
      %v5491 = vadd.f32 %v5392, %v5490
      %5492 = vmatmul.bf16.gmra.mxu0 %v4160
      %v5493 = vpop.f32.mrf.mxu0
      %v5494 = vadd.f32 %v5395, %v5493
      %v5495 = vpop.f32.mrf.mxu0
      %v5496 = vadd.f32 %v5397, %v5495
      %5497 = vmatmul.bf16.gmra.mxu0 %v4169
      %v5498 = vpop.f32.mrf.mxu0
      %v5499 = vadd.f32 %v5400, %v5498
      %v5500 = vpop.f32.mrf.mxu0
      %v5501 = vadd.f32 %v5402, %v5500
      %5502 = vmatmul.bf16.gmra.mxu0 %v4178
      %v5503 = vpop.f32.mrf.mxu0
      %v5504 = vadd.f32 %v5405, %v5503
      %v5505 = vpop.f32.mrf.mxu0
      %v5506 = vadd.f32 %v5407, %v5505
      %5507 = vmatmul.bf16.gmra.mxu0 %v4187
      %v5508 = vpop.f32.mrf.mxu0
      %v5509 = vadd.f32 %v5410, %v5508
      %v5510 = vpop.f32.mrf.mxu0
      %v5511 = vadd.f32 %v5412, %v5510
      %5512 = vmatmul.bf16.gmra.mxu0 %v4196
      %v5513 = vpop.f32.mrf.mxu0
      %v5514 = vadd.f32 %v5415, %v5513
      %v5515 = vpop.f32.mrf.mxu0
      %v5516 = vadd.f32 %v5417, %v5515
      %5517 = vmatmul.bf16.gmra.mxu0 %v4205
      %v5518 = vpop.f32.mrf.mxu0
      %v5519 = vadd.f32 %v5420, %v5518
      %v5520 = vpop.f32.mrf.mxu0
      %v5521 = vadd.f32 %v5422, %v5520
      %5522 = vmatmul.bf16.gmra.mxu0 %v4214
      %v5523 = vpop.f32.mrf.mxu0
      %v5524 = vadd.f32 %v5425, %v5523
      %v5525 = vpop.f32.mrf.mxu0
      %v5526 = vadd.f32 %v5427, %v5525
      %5527 = vmatmul.bf16.gmra.mxu0 %v4223
      %v5528 = vpop.f32.mrf.mxu0
      %v5529 = vadd.f32 %v5430, %v5528
      %v5530 = vpop.f32.mrf.mxu0
      %v5531 = vadd.f32 %v5432, %v5530
      %5532 = vmatmul.bf16.gmra.mxu0 %v4232
      %v5533 = vpop.f32.mrf.mxu0
      %v5534 = vadd.f32 %v5435, %v5533
      %v5535 = vpop.f32.mrf.mxu0
      %v5536 = vadd.f32 %v5437, %v5535
      %5537 = vmatmul.bf16.gmra.mxu0 %v4241
      %v5538 = vpop.f32.mrf.mxu0
      %v5539 = vadd.f32 %v5440, %v5538
      %v5540 = vpop.f32.mrf.mxu0
      %v5541 = vadd.f32 %v5442, %v5540
      %5542 = vmatmul.bf16.gmra.mxu0 %v4250
      %v5543 = vpop.f32.mrf.mxu0
      %v5544 = vadd.f32 %v5445, %v5543
      %v5545 = vpop.f32.mrf.mxu0
      %v5546 = vadd.f32 %v5447, %v5545
      %5547 = vmatmul.bf16.gmra.mxu0 %v4259
      %v5548 = vpop.f32.mrf.mxu0
      %v5549 = vadd.f32 %v5450, %v5548
      %v5550 = vpop.f32.mrf.mxu0
      %v5551 = vadd.f32 %v5452, %v5550
      %5552 = vmatmul.bf16.gmra.mxu0 %v4268
      %v5553 = vpop.f32.mrf.mxu0
      %v5554 = vadd.f32 %v5455, %v5553
      %v5555 = vpop.f32.mrf.mxu0
      %v5556 = vadd.f32 %v5457, %v5555
      %5557 = vdwg.mxu0
      %5558 = vmatpush.bf16.msra.mxu0 %v4784
      %5559 = vmatpush.bf16.msra.mxu0 %v4783
      %5560 = vmatpush.bf16.msra.mxu0 %v4782
      %5561 = vmatpush.bf16.msra.mxu0 %v4781
      %5562 = vmatpush.bf16.msra.mxu0 %v4780
      %5563 = vmatpush.bf16.msra.mxu0 %v4779
      %5564 = vmatpush.bf16.msra.mxu0 %v4778
      %5565 = vmatpush.bf16.msra.mxu0 %v4777
      %5566 = vmatmul.bf16.gmra.mxu0 %v4116
      %v5567 = vpop.f32.mrf.mxu0
      %v5568 = vadd.f32 %v5469, %v5567
      %v5569 = vpop.f32.mrf.mxu0
      %v5570 = vadd.f32 %v5471, %v5569
      %5571 = vmatmul.bf16.gmra.mxu0 %v4125
      %v5572 = vpop.f32.mrf.mxu0
      %v5573 = vadd.f32 %v5474, %v5572
      %v5574 = vpop.f32.mrf.mxu0
      %v5575 = vadd.f32 %v5476, %v5574
      %5576 = vmatmul.bf16.gmra.mxu0 %v4134
      %v5577 = vpop.f32.mrf.mxu0
      %v5578 = vadd.f32 %v5479, %v5577
      %v5579 = vpop.f32.mrf.mxu0
      %v5580 = vadd.f32 %v5481, %v5579
      %5581 = vmatmul.bf16.gmra.mxu0 %v4143
      %v5582 = vpop.f32.mrf.mxu0
      %v5583 = vadd.f32 %v5484, %v5582
      %v5584 = vpop.f32.mrf.mxu0
      %v5585 = vadd.f32 %v5486, %v5584
      %5586 = vmatmul.bf16.gmra.mxu0 %v4152
      %v5587 = vpop.f32.mrf.mxu0
      %v5588 = vadd.f32 %v5489, %v5587
      %v5589 = vpop.f32.mrf.mxu0
      %v5590 = vadd.f32 %v5491, %v5589
      %5591 = vmatmul.bf16.gmra.mxu0 %v4161
      %v5592 = vpop.f32.mrf.mxu0
      %v5593 = vadd.f32 %v5494, %v5592
      %v5594 = vpop.f32.mrf.mxu0
      %v5595 = vadd.f32 %v5496, %v5594
      %5596 = vmatmul.bf16.gmra.mxu0 %v4170
      %v5597 = vpop.f32.mrf.mxu0
      %v5598 = vadd.f32 %v5499, %v5597
      %v5599 = vpop.f32.mrf.mxu0
      %v5600 = vadd.f32 %v5501, %v5599
      %5601 = vmatmul.bf16.gmra.mxu0 %v4179
      %v5602 = vpop.f32.mrf.mxu0
      %v5603 = vadd.f32 %v5504, %v5602
      %v5604 = vpop.f32.mrf.mxu0
      %v5605 = vadd.f32 %v5506, %v5604
      %5606 = vmatmul.bf16.gmra.mxu0 %v4188
      %v5607 = vpop.f32.mrf.mxu0
      %v5608 = vadd.f32 %v5509, %v5607
      %v5609 = vpop.f32.mrf.mxu0
      %v5610 = vadd.f32 %v5511, %v5609
      %5611 = vmatmul.bf16.gmra.mxu0 %v4197
      %v5612 = vpop.f32.mrf.mxu0
      %v5613 = vadd.f32 %v5514, %v5612
      %v5614 = vpop.f32.mrf.mxu0
      %v5615 = vadd.f32 %v5516, %v5614
      %5616 = vmatmul.bf16.gmra.mxu0 %v4206
      %v5617 = vpop.f32.mrf.mxu0
      %v5618 = vadd.f32 %v5519, %v5617
      %v5619 = vpop.f32.mrf.mxu0
      %v5620 = vadd.f32 %v5521, %v5619
      %5621 = vmatmul.bf16.gmra.mxu0 %v4215
      %v5622 = vpop.f32.mrf.mxu0
      %v5623 = vadd.f32 %v5524, %v5622
      %v5624 = vpop.f32.mrf.mxu0
      %v5625 = vadd.f32 %v5526, %v5624
      %5626 = vmatmul.bf16.gmra.mxu0 %v4224
      %v5627 = vpop.f32.mrf.mxu0
      %v5628 = vadd.f32 %v5529, %v5627
      %v5629 = vpop.f32.mrf.mxu0
      %v5630 = vadd.f32 %v5531, %v5629
      %5631 = vmatmul.bf16.gmra.mxu0 %v4233
      %v5632 = vpop.f32.mrf.mxu0
      %v5633 = vadd.f32 %v5534, %v5632
      %v5634 = vpop.f32.mrf.mxu0
      %v5635 = vadd.f32 %v5536, %v5634
      %5636 = vmatmul.bf16.gmra.mxu0 %v4242
      %v5637 = vpop.f32.mrf.mxu0
      %v5638 = vadd.f32 %v5539, %v5637
      %v5639 = vpop.f32.mrf.mxu0
      %v5640 = vadd.f32 %v5541, %v5639
      %5641 = vmatmul.bf16.gmra.mxu0 %v4251
      %v5642 = vpop.f32.mrf.mxu0
      %v5643 = vadd.f32 %v5544, %v5642
      %v5644 = vpop.f32.mrf.mxu0
      %v5645 = vadd.f32 %v5546, %v5644
      %5646 = vmatmul.bf16.gmra.mxu0 %v4260
      %v5647 = vpop.f32.mrf.mxu0
      %v5648 = vadd.f32 %v5549, %v5647
      %v5649 = vpop.f32.mrf.mxu0
      %v5650 = vadd.f32 %v5551, %v5649
      %5651 = vmatmul.bf16.gmra.mxu0 %v4269
      %v5652 = vpop.f32.mrf.mxu0
      %v5653 = vadd.f32 %v5554, %v5652
      %v5654 = vpop.f32.mrf.mxu0
      %v5655 = vadd.f32 %v5556, %v5654
      %5656 = vdwg.mxu0
      %5657 = vmatpush.bf16.msra.mxu0 %v4792
      %5658 = vmatpush.bf16.msra.mxu0 %v4791
      %5659 = vmatpush.bf16.msra.mxu0 %v4790
      %5660 = vmatpush.bf16.msra.mxu0 %v4789
      %5661 = vmatpush.bf16.msra.mxu0 %v4788
      %5662 = vmatpush.bf16.msra.mxu0 %v4787
      %5663 = vmatpush.bf16.msra.mxu0 %v4786
      %5664 = vmatpush.bf16.msra.mxu0 %v4785
      %5665 = vmatmul.bf16.gmra.mxu0 %v4117
      %v5666 = vpop.f32.mrf.mxu0
      %v5667 = vadd.f32 %v5568, %v5666
      %v5668 = vpop.f32.mrf.mxu0
      %v5669 = vadd.f32 %v5570, %v5668
      %5670 = vmatmul.bf16.gmra.mxu0 %v4126
      %v5671 = vpop.f32.mrf.mxu0
      %v5672 = vadd.f32 %v5573, %v5671
      %v5673 = vpop.f32.mrf.mxu0
      %v5674 = vadd.f32 %v5575, %v5673
      %5675 = vmatmul.bf16.gmra.mxu0 %v4135
      %v5676 = vpop.f32.mrf.mxu0
      %v5677 = vadd.f32 %v5578, %v5676
      %v5678 = vpop.f32.mrf.mxu0
      %v5679 = vadd.f32 %v5580, %v5678
      %5680 = vmatmul.bf16.gmra.mxu0 %v4144
      %v5681 = vpop.f32.mrf.mxu0
      %v5682 = vadd.f32 %v5583, %v5681
      %v5683 = vpop.f32.mrf.mxu0
      %v5684 = vadd.f32 %v5585, %v5683
      %5685 = vmatmul.bf16.gmra.mxu0 %v4153
      %v5686 = vpop.f32.mrf.mxu0
      %v5687 = vadd.f32 %v5588, %v5686
      %v5688 = vpop.f32.mrf.mxu0
      %v5689 = vadd.f32 %v5590, %v5688
      %5690 = vmatmul.bf16.gmra.mxu0 %v4162
      %v5691 = vpop.f32.mrf.mxu0
      %v5692 = vadd.f32 %v5593, %v5691
      %v5693 = vpop.f32.mrf.mxu0
      %v5694 = vadd.f32 %v5595, %v5693
      %5695 = vmatmul.bf16.gmra.mxu0 %v4171
      %v5696 = vpop.f32.mrf.mxu0
      %v5697 = vadd.f32 %v5598, %v5696
      %v5698 = vpop.f32.mrf.mxu0
      %v5699 = vadd.f32 %v5600, %v5698
      %5700 = vmatmul.bf16.gmra.mxu0 %v4180
      %v5701 = vpop.f32.mrf.mxu0
      %v5702 = vadd.f32 %v5603, %v5701
      %v5703 = vpop.f32.mrf.mxu0
      %v5704 = vadd.f32 %v5605, %v5703
      %5705 = vmatmul.bf16.gmra.mxu0 %v4189
      %v5706 = vpop.f32.mrf.mxu0
      %v5707 = vadd.f32 %v5608, %v5706
      %v5708 = vpop.f32.mrf.mxu0
      %v5709 = vadd.f32 %v5610, %v5708
      %5710 = vmatmul.bf16.gmra.mxu0 %v4198
      %v5711 = vpop.f32.mrf.mxu0
      %v5712 = vadd.f32 %v5613, %v5711
      %v5713 = vpop.f32.mrf.mxu0
      %v5714 = vadd.f32 %v5615, %v5713
      %5715 = vmatmul.bf16.gmra.mxu0 %v4207
      %v5716 = vpop.f32.mrf.mxu0
      %v5717 = vadd.f32 %v5618, %v5716
      %v5718 = vpop.f32.mrf.mxu0
      %v5719 = vadd.f32 %v5620, %v5718
      %5720 = vmatmul.bf16.gmra.mxu0 %v4216
      %v5721 = vpop.f32.mrf.mxu0
      %v5722 = vadd.f32 %v5623, %v5721
      %v5723 = vpop.f32.mrf.mxu0
      %v5724 = vadd.f32 %v5625, %v5723
      %5725 = vmatmul.bf16.gmra.mxu0 %v4225
      %v5726 = vpop.f32.mrf.mxu0
      %v5727 = vadd.f32 %v5628, %v5726
      %v5728 = vpop.f32.mrf.mxu0
      %v5729 = vadd.f32 %v5630, %v5728
      %5730 = vmatmul.bf16.gmra.mxu0 %v4234
      %v5731 = vpop.f32.mrf.mxu0
      %v5732 = vadd.f32 %v5633, %v5731
      %v5733 = vpop.f32.mrf.mxu0
      %v5734 = vadd.f32 %v5635, %v5733
      %5735 = vmatmul.bf16.gmra.mxu0 %v4243
      %v5736 = vpop.f32.mrf.mxu0
      %v5737 = vadd.f32 %v5638, %v5736
      %v5738 = vpop.f32.mrf.mxu0
      %v5739 = vadd.f32 %v5640, %v5738
      %5740 = vmatmul.bf16.gmra.mxu0 %v4252
      %v5741 = vpop.f32.mrf.mxu0
      %v5742 = vadd.f32 %v5643, %v5741
      %v5743 = vpop.f32.mrf.mxu0
      %v5744 = vadd.f32 %v5645, %v5743
      %5745 = vmatmul.bf16.gmra.mxu0 %v4261
      %v5746 = vpop.f32.mrf.mxu0
      %v5747 = vadd.f32 %v5648, %v5746
      %v5748 = vpop.f32.mrf.mxu0
      %v5749 = vadd.f32 %v5650, %v5748
      %5750 = vmatmul.bf16.gmra.mxu0 %v4270
      %v5751 = vpop.f32.mrf.mxu0
      %v5752 = vadd.f32 %v5653, %v5751
      %v5753 = vpop.f32.mrf.mxu0
      %v5754 = vadd.f32 %v5655, %v5753
      %5755 = vdwg.mxu0
      %v5756 = vmax.f32 %v5667, 0.0
      %v5757 = vmax.f32 %v5669, 0.0
      %v5758 = vmax.f32 %v5672, 0.0
      %v5759 = vmax.f32 %v5674, 0.0
      %v5760 = vmax.f32 %v5677, 0.0
      %v5761 = vmax.f32 %v5679, 0.0
      %v5762 = vmax.f32 %v5682, 0.0
      %v5763 = vmax.f32 %v5684, 0.0
      %v5764 = vmax.f32 %v5687, 0.0
      %v5765 = vmax.f32 %v5689, 0.0
      %v5766 = vmax.f32 %v5692, 0.0
      %v5767 = vmax.f32 %v5694, 0.0
      %v5768 = vmax.f32 %v5697, 0.0
      %v5769 = vmax.f32 %v5699, 0.0
      %v5770 = vmax.f32 %v5702, 0.0
      %v5771 = vmax.f32 %v5704, 0.0
      %v5772 = vmax.f32 %v5707, 0.0
      %v5773 = vmax.f32 %v5709, 0.0
      %v5774 = vmax.f32 %v5712, 0.0
      %v5775 = vmax.f32 %v5714, 0.0
      %v5776 = vmax.f32 %v5717, 0.0
      %v5777 = vmax.f32 %v5719, 0.0
      %v5778 = vmax.f32 %v5722, 0.0
      %v5779 = vmax.f32 %v5724, 0.0
      %v5780 = vmax.f32 %v5727, 0.0
      %v5781 = vmax.f32 %v5729, 0.0
      %v5782 = vmax.f32 %v5732, 0.0
      %v5783 = vmax.f32 %v5734, 0.0
      %v5784 = vmax.f32 %v5737, 0.0
      %v5785 = vmax.f32 %v5739, 0.0
      %v5786 = vmax.f32 %v5742, 0.0
      %v5787 = vmax.f32 %v5744, 0.0
      %v5788 = vmax.f32 %v5747, 0.0
      %v5789 = vmax.f32 %v5749, 0.0
      %v5790 = vmax.f32 %v5752, 0.0
      %v5791 = vmax.f32 %v5754, 0.0
      %v5792 = vlaneseq
      %v5793 = vshrl.u32 %v5792, 7
      %v5794 = vadd.s32 %v5793, 8
      %v5795 = vadd.s32 %v5793, 16
      %v5796 = vadd.s32 %v5793, 24
      %v5797 = vadd.s32 %v5793, 32
      %v5798 = vadd.s32 %v5793, 40
      %v5799 = vadd.s32 %v5793, 48
      %v5800 = vadd.s32 %v5793, 56
      %v5801 = vadd.s32 %v5793, 64
      %v5802 = vadd.s32 %v5793, 72
      %v5803 = vadd.s32 %v5793, 80
      %v5804 = vadd.s32 %v5793, 88
      %v5805 = vadd.s32 %v5793, 96
      %v5806 = vadd.s32 %v5793, 104
      %v5807 = vadd.s32 %v5793, 112
      %v5808 = vadd.s32 %v5793, 120
      %v5809 = vadd.s32 %v5793, 128
      %v5810 = vadd.s32 %v5793, 136
      %v5811 = vadd.s32 %v5793, 144
      %v5812 = vadd.s32 %v5793, 152
      %v5813 = vadd.s32 %v5793, 160
      %v5814 = vadd.s32 %v5793, 168
      %v5815 = vadd.s32 %v5793, 176
      %v5816 = vadd.s32 %v5793, 184
      %v5817 = vadd.s32 %v5793, 192
      %v5818 = vadd.s32 %v5793, 200
      %v5819 = vadd.s32 %v5793, 208
      %v5820 = vadd.s32 %v5793, 216
      %v5821 = vadd.s32 %v5793, 224
      %v5822 = vadd.s32 %v5793, 232
      %v5823 = vadd.s32 %v5793, 240
      %v5824 = vadd.s32 %v5793, 248
      %v5825 = vadd.s32 %v5793, 256
      %v5826 = vadd.s32 %v5793, 264
      %v5827 = vadd.s32 %v5793, 272
      %v5828 = vadd.s32 %v5793, 280
      %vm5829 = vcmp.lt.s32.totalorder %v5793, 0
      %v5830 = vsub.s32 0, %v5793
      %v5831 = vsel %vm5829, %v5830, %v5793
      %v5832 = vand.u32 %v5831, 65535
      %v5833 = vshrl.u32 %v5831, 16
      %v5835 = vmul.u32 %v5832, 14564
      %v5836 = vmul.u32 %v5832, 58254
      %v5837 = vmul.u32 %v5833, 14564
      %v5838 = vmul.u32 %v5833, 58254
      %v5839 = vshll.u32 %v5836, 16
      %v5840 = vshrl.u32 %v5836, 16
      %v5841 = vshll.u32 %v5837, 16
      %v5842 = vshrl.u32 %v5837, 16
      %vm5843 = vc.u32 %v5835, %v5839
      %v5844 = vsel %vm5843, 1, 0
      %v5845 = vadd.s32 %v5835, %v5839
      %v5846 = vadd.s32 %v5838, %v5844
      %vm5847 = vc.u32 %v5845, %v5841
      %v5848 = vsel %vm5847, 1, 0
      %v5849 = vadd.s32 %v5845, %v5841
      %v5850 = vadd.s32 %v5846, %v5848
      %v5851 = vadd.s32 %v5850, %v5840
      %v5852 = vadd.s32 %v5851, %v5842
      %v5853 = vshrl.u32 %v5852, 4
      %v5854 = vmul.u32 %v5853, 18
      %v5855 = vsub.s32 %v5831, %v5854
      %v5856 = vsub.s32 0, %v5855
      %v5857 = vsel %vm5829, %v5856, %v5855
      %vm5858 = vcmp.lt.s32.totalorder %v5794, 0
      %v5859 = vsub.s32 0, %v5794
      %v5860 = vsel %vm5858, %v5859, %v5794
      %v5861 = vand.u32 %v5860, 65535
      %v5862 = vshrl.u32 %v5860, 16
      %v5864 = vmul.u32 %v5861, 14564
      %v5865 = vmul.u32 %v5861, 58254
      %v5866 = vmul.u32 %v5862, 14564
      %v5867 = vmul.u32 %v5862, 58254
      %v5868 = vshll.u32 %v5865, 16
      %v5869 = vshrl.u32 %v5865, 16
      %v5870 = vshll.u32 %v5866, 16
      %v5871 = vshrl.u32 %v5866, 16
      %vm5872 = vc.u32 %v5864, %v5868
      %v5873 = vsel %vm5872, 1, 0
      %v5874 = vadd.s32 %v5864, %v5868
      %v5875 = vadd.s32 %v5867, %v5873
      %vm5876 = vc.u32 %v5874, %v5870
      %v5877 = vsel %vm5876, 1, 0
      %v5878 = vadd.s32 %v5874, %v5870
      %v5879 = vadd.s32 %v5875, %v5877
      %v5880 = vadd.s32 %v5879, %v5869
      %v5881 = vadd.s32 %v5880, %v5871
      %v5882 = vshrl.u32 %v5881, 4
      %v5883 = vmul.u32 %v5882, 18
      %v5884 = vsub.s32 %v5860, %v5883
      %v5885 = vsub.s32 0, %v5884
      %v5886 = vsel %vm5858, %v5885, %v5884
      %vm5887 = vcmp.lt.s32.totalorder %v5795, 0
      %v5888 = vsub.s32 0, %v5795
      %v5889 = vsel %vm5887, %v5888, %v5795
      %v5890 = vand.u32 %v5889, 65535
      %v5891 = vshrl.u32 %v5889, 16
      %v5893 = vmul.u32 %v5890, 14564
      %v5894 = vmul.u32 %v5890, 58254
      %v5895 = vmul.u32 %v5891, 14564
      %v5896 = vmul.u32 %v5891, 58254
      %v5897 = vshll.u32 %v5894, 16
      %v5898 = vshrl.u32 %v5894, 16
      %v5899 = vshll.u32 %v5895, 16
      %v5900 = vshrl.u32 %v5895, 16
      %vm5901 = vc.u32 %v5893, %v5897
      %v5902 = vsel %vm5901, 1, 0
      %v5903 = vadd.s32 %v5893, %v5897
      %v5904 = vadd.s32 %v5896, %v5902
      %vm5905 = vc.u32 %v5903, %v5899
      %v5906 = vsel %vm5905, 1, 0
      %v5907 = vadd.s32 %v5903, %v5899
      %v5908 = vadd.s32 %v5904, %v5906
      %v5909 = vadd.s32 %v5908, %v5898
      %v5910 = vadd.s32 %v5909, %v5900
      %v5911 = vshrl.u32 %v5910, 4
      %v5912 = vmul.u32 %v5911, 18
      %v5913 = vsub.s32 %v5889, %v5912
      %v5914 = vsub.s32 0, %v5913
      %v5915 = vsel %vm5887, %v5914, %v5913
      %vm5916 = vcmp.lt.s32.totalorder %v5796, 0
      %v5917 = vsub.s32 0, %v5796
      %v5918 = vsel %vm5916, %v5917, %v5796
      %v5919 = vand.u32 %v5918, 65535
      %v5920 = vshrl.u32 %v5918, 16
      %v5922 = vmul.u32 %v5919, 14564
      %v5923 = vmul.u32 %v5919, 58254
      %v5924 = vmul.u32 %v5920, 14564
      %v5925 = vmul.u32 %v5920, 58254
      %v5926 = vshll.u32 %v5923, 16
      %v5927 = vshrl.u32 %v5923, 16
      %v5928 = vshll.u32 %v5924, 16
      %v5929 = vshrl.u32 %v5924, 16
      %vm5930 = vc.u32 %v5922, %v5926
      %v5931 = vsel %vm5930, 1, 0
      %v5932 = vadd.s32 %v5922, %v5926
      %v5933 = vadd.s32 %v5925, %v5931
      %vm5934 = vc.u32 %v5932, %v5928
      %v5935 = vsel %vm5934, 1, 0
      %v5936 = vadd.s32 %v5932, %v5928
      %v5937 = vadd.s32 %v5933, %v5935
      %v5938 = vadd.s32 %v5937, %v5927
      %v5939 = vadd.s32 %v5938, %v5929
      %v5940 = vshrl.u32 %v5939, 4
      %v5941 = vmul.u32 %v5940, 18
      %v5942 = vsub.s32 %v5918, %v5941
      %v5943 = vsub.s32 0, %v5942
      %v5944 = vsel %vm5916, %v5943, %v5942
      %vm5945 = vcmp.lt.s32.totalorder %v5797, 0
      %v5946 = vsub.s32 0, %v5797
      %v5947 = vsel %vm5945, %v5946, %v5797
      %v5948 = vand.u32 %v5947, 65535
      %v5949 = vshrl.u32 %v5947, 16
      %v5951 = vmul.u32 %v5948, 14564
      %v5952 = vmul.u32 %v5948, 58254
      %v5953 = vmul.u32 %v5949, 14564
      %v5954 = vmul.u32 %v5949, 58254
      %v5955 = vshll.u32 %v5952, 16
      %v5956 = vshrl.u32 %v5952, 16
      %v5957 = vshll.u32 %v5953, 16
      %v5958 = vshrl.u32 %v5953, 16
      %vm5959 = vc.u32 %v5951, %v5955
      %v5960 = vsel %vm5959, 1, 0
      %v5961 = vadd.s32 %v5951, %v5955
      %v5962 = vadd.s32 %v5954, %v5960
      %vm5963 = vc.u32 %v5961, %v5957
      %v5964 = vsel %vm5963, 1, 0
      %v5965 = vadd.s32 %v5961, %v5957
      %v5966 = vadd.s32 %v5962, %v5964
      %v5967 = vadd.s32 %v5966, %v5956
      %v5968 = vadd.s32 %v5967, %v5958
      %v5969 = vshrl.u32 %v5968, 4
      %v5970 = vmul.u32 %v5969, 18
      %v5971 = vsub.s32 %v5947, %v5970
      %v5972 = vsub.s32 0, %v5971
      %v5973 = vsel %vm5945, %v5972, %v5971
      %vm5974 = vcmp.lt.s32.totalorder %v5798, 0
      %v5975 = vsub.s32 0, %v5798
      %v5976 = vsel %vm5974, %v5975, %v5798
      %v5977 = vand.u32 %v5976, 65535
      %v5978 = vshrl.u32 %v5976, 16
      %v5980 = vmul.u32 %v5977, 14564
      %v5981 = vmul.u32 %v5977, 58254
      %v5982 = vmul.u32 %v5978, 14564
      %v5983 = vmul.u32 %v5978, 58254
      %v5984 = vshll.u32 %v5981, 16
      %v5985 = vshrl.u32 %v5981, 16
      %v5986 = vshll.u32 %v5982, 16
      %v5987 = vshrl.u32 %v5982, 16
      %vm5988 = vc.u32 %v5980, %v5984
      %v5989 = vsel %vm5988, 1, 0
      %v5990 = vadd.s32 %v5980, %v5984
      %v5991 = vadd.s32 %v5983, %v5989
      %vm5992 = vc.u32 %v5990, %v5986
      %v5993 = vsel %vm5992, 1, 0
      %v5994 = vadd.s32 %v5990, %v5986
      %v5995 = vadd.s32 %v5991, %v5993
      %v5996 = vadd.s32 %v5995, %v5985
      %v5997 = vadd.s32 %v5996, %v5987
      %v5998 = vshrl.u32 %v5997, 4
      %v5999 = vmul.u32 %v5998, 18
      %v6000 = vsub.s32 %v5976, %v5999
      %v6001 = vsub.s32 0, %v6000
      %v6002 = vsel %vm5974, %v6001, %v6000
      %vm6003 = vcmp.lt.s32.totalorder %v5799, 0
      %v6004 = vsub.s32 0, %v5799
      %v6005 = vsel %vm6003, %v6004, %v5799
      %v6006 = vand.u32 %v6005, 65535
      %v6007 = vshrl.u32 %v6005, 16
      %v6009 = vmul.u32 %v6006, 14564
      %v6010 = vmul.u32 %v6006, 58254
      %v6011 = vmul.u32 %v6007, 14564
      %v6012 = vmul.u32 %v6007, 58254
      %v6013 = vshll.u32 %v6010, 16
      %v6014 = vshrl.u32 %v6010, 16
      %v6015 = vshll.u32 %v6011, 16
      %v6016 = vshrl.u32 %v6011, 16
      %vm6017 = vc.u32 %v6009, %v6013
      %v6018 = vsel %vm6017, 1, 0
      %v6019 = vadd.s32 %v6009, %v6013
      %v6020 = vadd.s32 %v6012, %v6018
      %vm6021 = vc.u32 %v6019, %v6015
      %v6022 = vsel %vm6021, 1, 0
      %v6023 = vadd.s32 %v6019, %v6015
      %v6024 = vadd.s32 %v6020, %v6022
      %v6025 = vadd.s32 %v6024, %v6014
      %v6026 = vadd.s32 %v6025, %v6016
      %v6027 = vshrl.u32 %v6026, 4
      %v6028 = vmul.u32 %v6027, 18
      %v6029 = vsub.s32 %v6005, %v6028
      %v6030 = vsub.s32 0, %v6029
      %v6031 = vsel %vm6003, %v6030, %v6029
      %vm6032 = vcmp.lt.s32.totalorder %v5800, 0
      %v6033 = vsub.s32 0, %v5800
      %v6034 = vsel %vm6032, %v6033, %v5800
      %v6035 = vand.u32 %v6034, 65535
      %v6036 = vshrl.u32 %v6034, 16
      %v6038 = vmul.u32 %v6035, 14564
      %v6039 = vmul.u32 %v6035, 58254
      %v6040 = vmul.u32 %v6036, 14564
      %v6041 = vmul.u32 %v6036, 58254
      %v6042 = vshll.u32 %v6039, 16
      %v6043 = vshrl.u32 %v6039, 16
      %v6044 = vshll.u32 %v6040, 16
      %v6045 = vshrl.u32 %v6040, 16
      %vm6046 = vc.u32 %v6038, %v6042
      %v6047 = vsel %vm6046, 1, 0
      %v6048 = vadd.s32 %v6038, %v6042
      %v6049 = vadd.s32 %v6041, %v6047
      %vm6050 = vc.u32 %v6048, %v6044
      %v6051 = vsel %vm6050, 1, 0
      %v6052 = vadd.s32 %v6048, %v6044
      %v6053 = vadd.s32 %v6049, %v6051
      %v6054 = vadd.s32 %v6053, %v6043
      %v6055 = vadd.s32 %v6054, %v6045
      %v6056 = vshrl.u32 %v6055, 4
      %v6057 = vmul.u32 %v6056, 18
      %v6058 = vsub.s32 %v6034, %v6057
      %v6059 = vsub.s32 0, %v6058
      %v6060 = vsel %vm6032, %v6059, %v6058
      %vm6061 = vcmp.lt.s32.totalorder %v5801, 0
      %v6062 = vsub.s32 0, %v5801
      %v6063 = vsel %vm6061, %v6062, %v5801
      %v6064 = vand.u32 %v6063, 65535
      %v6065 = vshrl.u32 %v6063, 16
      %v6067 = vmul.u32 %v6064, 14564
      %v6068 = vmul.u32 %v6064, 58254
      %v6069 = vmul.u32 %v6065, 14564
      %v6070 = vmul.u32 %v6065, 58254
      %v6071 = vshll.u32 %v6068, 16
      %v6072 = vshrl.u32 %v6068, 16
      %v6073 = vshll.u32 %v6069, 16
      %v6074 = vshrl.u32 %v6069, 16
      %vm6075 = vc.u32 %v6067, %v6071
      %v6076 = vsel %vm6075, 1, 0
      %v6077 = vadd.s32 %v6067, %v6071
      %v6078 = vadd.s32 %v6070, %v6076
      %vm6079 = vc.u32 %v6077, %v6073
      %v6080 = vsel %vm6079, 1, 0
      %v6081 = vadd.s32 %v6077, %v6073
      %v6082 = vadd.s32 %v6078, %v6080
      %v6083 = vadd.s32 %v6082, %v6072
      %v6084 = vadd.s32 %v6083, %v6074
      %v6085 = vshrl.u32 %v6084, 4
      %v6086 = vmul.u32 %v6085, 18
      %v6087 = vsub.s32 %v6063, %v6086
      %v6088 = vsub.s32 0, %v6087
      %v6089 = vsel %vm6061, %v6088, %v6087
      %vm6090 = vcmp.lt.s32.totalorder %v5802, 0
      %v6091 = vsub.s32 0, %v5802
      %v6092 = vsel %vm6090, %v6091, %v5802
      %v6093 = vand.u32 %v6092, 65535
      %v6094 = vshrl.u32 %v6092, 16
      %v6096 = vmul.u32 %v6093, 14564
      %v6097 = vmul.u32 %v6093, 58254
      %v6098 = vmul.u32 %v6094, 14564
      %v6099 = vmul.u32 %v6094, 58254
      %v6100 = vshll.u32 %v6097, 16
      %v6101 = vshrl.u32 %v6097, 16
      %v6102 = vshll.u32 %v6098, 16
      %v6103 = vshrl.u32 %v6098, 16
      %vm6104 = vc.u32 %v6096, %v6100
      %v6105 = vsel %vm6104, 1, 0
      %v6106 = vadd.s32 %v6096, %v6100
      %v6107 = vadd.s32 %v6099, %v6105
      %vm6108 = vc.u32 %v6106, %v6102
      %v6109 = vsel %vm6108, 1, 0
      %v6110 = vadd.s32 %v6106, %v6102
      %v6111 = vadd.s32 %v6107, %v6109
      %v6112 = vadd.s32 %v6111, %v6101
      %v6113 = vadd.s32 %v6112, %v6103
      %v6114 = vshrl.u32 %v6113, 4
      %v6115 = vmul.u32 %v6114, 18
      %v6116 = vsub.s32 %v6092, %v6115
      %v6117 = vsub.s32 0, %v6116
      %v6118 = vsel %vm6090, %v6117, %v6116
      %vm6119 = vcmp.lt.s32.totalorder %v5803, 0
      %v6120 = vsub.s32 0, %v5803
      %v6121 = vsel %vm6119, %v6120, %v5803
      %v6122 = vand.u32 %v6121, 65535
      %v6123 = vshrl.u32 %v6121, 16
      %v6125 = vmul.u32 %v6122, 14564
      %v6126 = vmul.u32 %v6122, 58254
      %v6127 = vmul.u32 %v6123, 14564
      %v6128 = vmul.u32 %v6123, 58254
      %v6129 = vshll.u32 %v6126, 16
      %v6130 = vshrl.u32 %v6126, 16
      %v6131 = vshll.u32 %v6127, 16
      %v6132 = vshrl.u32 %v6127, 16
      %vm6133 = vc.u32 %v6125, %v6129
      %v6134 = vsel %vm6133, 1, 0
      %v6135 = vadd.s32 %v6125, %v6129
      %v6136 = vadd.s32 %v6128, %v6134
      %vm6137 = vc.u32 %v6135, %v6131
      %v6138 = vsel %vm6137, 1, 0
      %v6139 = vadd.s32 %v6135, %v6131
      %v6140 = vadd.s32 %v6136, %v6138
      %v6141 = vadd.s32 %v6140, %v6130
      %v6142 = vadd.s32 %v6141, %v6132
      %v6143 = vshrl.u32 %v6142, 4
      %v6144 = vmul.u32 %v6143, 18
      %v6145 = vsub.s32 %v6121, %v6144
      %v6146 = vsub.s32 0, %v6145
      %v6147 = vsel %vm6119, %v6146, %v6145
      %vm6148 = vcmp.lt.s32.totalorder %v5804, 0
      %v6149 = vsub.s32 0, %v5804
      %v6150 = vsel %vm6148, %v6149, %v5804
      %v6151 = vand.u32 %v6150, 65535
      %v6152 = vshrl.u32 %v6150, 16
      %v6154 = vmul.u32 %v6151, 14564
      %v6155 = vmul.u32 %v6151, 58254
      %v6156 = vmul.u32 %v6152, 14564
      %v6157 = vmul.u32 %v6152, 58254
      %v6158 = vshll.u32 %v6155, 16
      %v6159 = vshrl.u32 %v6155, 16
      %v6160 = vshll.u32 %v6156, 16
      %v6161 = vshrl.u32 %v6156, 16
      %vm6162 = vc.u32 %v6154, %v6158
      %v6163 = vsel %vm6162, 1, 0
      %v6164 = vadd.s32 %v6154, %v6158
      %v6165 = vadd.s32 %v6157, %v6163
      %vm6166 = vc.u32 %v6164, %v6160
      %v6167 = vsel %vm6166, 1, 0
      %v6168 = vadd.s32 %v6164, %v6160
      %v6169 = vadd.s32 %v6165, %v6167
      %v6170 = vadd.s32 %v6169, %v6159
      %v6171 = vadd.s32 %v6170, %v6161
      %v6172 = vshrl.u32 %v6171, 4
      %v6173 = vmul.u32 %v6172, 18
      %v6174 = vsub.s32 %v6150, %v6173
      %v6175 = vsub.s32 0, %v6174
      %v6176 = vsel %vm6148, %v6175, %v6174
      %vm6177 = vcmp.lt.s32.totalorder %v5805, 0
      %v6178 = vsub.s32 0, %v5805
      %v6179 = vsel %vm6177, %v6178, %v5805
      %v6180 = vand.u32 %v6179, 65535
      %v6181 = vshrl.u32 %v6179, 16
      %v6183 = vmul.u32 %v6180, 14564
      %v6184 = vmul.u32 %v6180, 58254
      %v6185 = vmul.u32 %v6181, 14564
      %v6186 = vmul.u32 %v6181, 58254
      %v6187 = vshll.u32 %v6184, 16
      %v6188 = vshrl.u32 %v6184, 16
      %v6189 = vshll.u32 %v6185, 16
      %v6190 = vshrl.u32 %v6185, 16
      %vm6191 = vc.u32 %v6183, %v6187
      %v6192 = vsel %vm6191, 1, 0
      %v6193 = vadd.s32 %v6183, %v6187
      %v6194 = vadd.s32 %v6186, %v6192
      %vm6195 = vc.u32 %v6193, %v6189
      %v6196 = vsel %vm6195, 1, 0
      %v6197 = vadd.s32 %v6193, %v6189
      %v6198 = vadd.s32 %v6194, %v6196
      %v6199 = vadd.s32 %v6198, %v6188
      %v6200 = vadd.s32 %v6199, %v6190
      %v6201 = vshrl.u32 %v6200, 4
      %v6202 = vmul.u32 %v6201, 18
      %v6203 = vsub.s32 %v6179, %v6202
      %v6204 = vsub.s32 0, %v6203
      %v6205 = vsel %vm6177, %v6204, %v6203
      %vm6206 = vcmp.lt.s32.totalorder %v5806, 0
      %v6207 = vsub.s32 0, %v5806
      %v6208 = vsel %vm6206, %v6207, %v5806
      %v6209 = vand.u32 %v6208, 65535
      %v6210 = vshrl.u32 %v6208, 16
      %v6212 = vmul.u32 %v6209, 14564
      %v6213 = vmul.u32 %v6209, 58254
      %v6214 = vmul.u32 %v6210, 14564
      %v6215 = vmul.u32 %v6210, 58254
      %v6216 = vshll.u32 %v6213, 16
      %v6217 = vshrl.u32 %v6213, 16
      %v6218 = vshll.u32 %v6214, 16
      %v6219 = vshrl.u32 %v6214, 16
      %vm6220 = vc.u32 %v6212, %v6216
      %v6221 = vsel %vm6220, 1, 0
      %v6222 = vadd.s32 %v6212, %v6216
      %v6223 = vadd.s32 %v6215, %v6221
      %vm6224 = vc.u32 %v6222, %v6218
      %v6225 = vsel %vm6224, 1, 0
      %v6226 = vadd.s32 %v6222, %v6218
      %v6227 = vadd.s32 %v6223, %v6225
      %v6228 = vadd.s32 %v6227, %v6217
      %v6229 = vadd.s32 %v6228, %v6219
      %v6230 = vshrl.u32 %v6229, 4
      %v6231 = vmul.u32 %v6230, 18
      %v6232 = vsub.s32 %v6208, %v6231
      %v6233 = vsub.s32 0, %v6232
      %v6234 = vsel %vm6206, %v6233, %v6232
      %vm6235 = vcmp.lt.s32.totalorder %v5807, 0
      %v6236 = vsub.s32 0, %v5807
      %v6237 = vsel %vm6235, %v6236, %v5807
      %v6238 = vand.u32 %v6237, 65535
      %v6239 = vshrl.u32 %v6237, 16
      %v6241 = vmul.u32 %v6238, 14564
      %v6242 = vmul.u32 %v6238, 58254
      %v6243 = vmul.u32 %v6239, 14564
      %v6244 = vmul.u32 %v6239, 58254
      %v6245 = vshll.u32 %v6242, 16
      %v6246 = vshrl.u32 %v6242, 16
      %v6247 = vshll.u32 %v6243, 16
      %v6248 = vshrl.u32 %v6243, 16
      %vm6249 = vc.u32 %v6241, %v6245
      %v6250 = vsel %vm6249, 1, 0
      %v6251 = vadd.s32 %v6241, %v6245
      %v6252 = vadd.s32 %v6244, %v6250
      %vm6253 = vc.u32 %v6251, %v6247
      %v6254 = vsel %vm6253, 1, 0
      %v6255 = vadd.s32 %v6251, %v6247
      %v6256 = vadd.s32 %v6252, %v6254
      %v6257 = vadd.s32 %v6256, %v6246
      %v6258 = vadd.s32 %v6257, %v6248
      %v6259 = vshrl.u32 %v6258, 4
      %v6260 = vmul.u32 %v6259, 18
      %v6261 = vsub.s32 %v6237, %v6260
      %v6262 = vsub.s32 0, %v6261
      %v6263 = vsel %vm6235, %v6262, %v6261
      %vm6264 = vcmp.lt.s32.totalorder %v5808, 0
      %v6265 = vsub.s32 0, %v5808
      %v6266 = vsel %vm6264, %v6265, %v5808
      %v6267 = vand.u32 %v6266, 65535
      %v6268 = vshrl.u32 %v6266, 16
      %v6270 = vmul.u32 %v6267, 14564
      %v6271 = vmul.u32 %v6267, 58254
      %v6272 = vmul.u32 %v6268, 14564
      %v6273 = vmul.u32 %v6268, 58254
      %v6274 = vshll.u32 %v6271, 16
      %v6275 = vshrl.u32 %v6271, 16
      %v6276 = vshll.u32 %v6272, 16
      %v6277 = vshrl.u32 %v6272, 16
      %vm6278 = vc.u32 %v6270, %v6274
      %v6279 = vsel %vm6278, 1, 0
      %v6280 = vadd.s32 %v6270, %v6274
      %v6281 = vadd.s32 %v6273, %v6279
      %vm6282 = vc.u32 %v6280, %v6276
      %v6283 = vsel %vm6282, 1, 0
      %v6284 = vadd.s32 %v6280, %v6276
      %v6285 = vadd.s32 %v6281, %v6283
      %v6286 = vadd.s32 %v6285, %v6275
      %v6287 = vadd.s32 %v6286, %v6277
      %v6288 = vshrl.u32 %v6287, 4
      %v6289 = vmul.u32 %v6288, 18
      %v6290 = vsub.s32 %v6266, %v6289
      %v6291 = vsub.s32 0, %v6290
      %v6292 = vsel %vm6264, %v6291, %v6290
      %vm6293 = vcmp.lt.s32.totalorder %v5809, 0
      %v6294 = vsub.s32 0, %v5809
      %v6295 = vsel %vm6293, %v6294, %v5809
      %v6296 = vand.u32 %v6295, 65535
      %v6297 = vshrl.u32 %v6295, 16
      %v6299 = vmul.u32 %v6296, 14564
      %v6300 = vmul.u32 %v6296, 58254
      %v6301 = vmul.u32 %v6297, 14564
      %v6302 = vmul.u32 %v6297, 58254
      %v6303 = vshll.u32 %v6300, 16
      %v6304 = vshrl.u32 %v6300, 16
      %v6305 = vshll.u32 %v6301, 16
      %v6306 = vshrl.u32 %v6301, 16
      %vm6307 = vc.u32 %v6299, %v6303
      %v6308 = vsel %vm6307, 1, 0
      %v6309 = vadd.s32 %v6299, %v6303
      %v6310 = vadd.s32 %v6302, %v6308
      %vm6311 = vc.u32 %v6309, %v6305
      %v6312 = vsel %vm6311, 1, 0
      %v6313 = vadd.s32 %v6309, %v6305
      %v6314 = vadd.s32 %v6310, %v6312
      %v6315 = vadd.s32 %v6314, %v6304
      %v6316 = vadd.s32 %v6315, %v6306
      %v6317 = vshrl.u32 %v6316, 4
      %v6318 = vmul.u32 %v6317, 18
      %v6319 = vsub.s32 %v6295, %v6318
      %v6320 = vsub.s32 0, %v6319
      %v6321 = vsel %vm6293, %v6320, %v6319
      %vm6322 = vcmp.lt.s32.totalorder %v5810, 0
      %v6323 = vsub.s32 0, %v5810
      %v6324 = vsel %vm6322, %v6323, %v5810
      %v6325 = vand.u32 %v6324, 65535
      %v6326 = vshrl.u32 %v6324, 16
      %v6328 = vmul.u32 %v6325, 14564
      %v6329 = vmul.u32 %v6325, 58254
      %v6330 = vmul.u32 %v6326, 14564
      %v6331 = vmul.u32 %v6326, 58254
      %v6332 = vshll.u32 %v6329, 16
      %v6333 = vshrl.u32 %v6329, 16
      %v6334 = vshll.u32 %v6330, 16
      %v6335 = vshrl.u32 %v6330, 16
      %vm6336 = vc.u32 %v6328, %v6332
      %v6337 = vsel %vm6336, 1, 0
      %v6338 = vadd.s32 %v6328, %v6332
      %v6339 = vadd.s32 %v6331, %v6337
      %vm6340 = vc.u32 %v6338, %v6334
      %v6341 = vsel %vm6340, 1, 0
      %v6342 = vadd.s32 %v6338, %v6334
      %v6343 = vadd.s32 %v6339, %v6341
      %v6344 = vadd.s32 %v6343, %v6333
      %v6345 = vadd.s32 %v6344, %v6335
      %v6346 = vshrl.u32 %v6345, 4
      %v6347 = vmul.u32 %v6346, 18
      %v6348 = vsub.s32 %v6324, %v6347
      %v6349 = vsub.s32 0, %v6348
      %v6350 = vsel %vm6322, %v6349, %v6348
      %vm6351 = vcmp.lt.s32.totalorder %v5811, 0
      %v6352 = vsub.s32 0, %v5811
      %v6353 = vsel %vm6351, %v6352, %v5811
      %v6354 = vand.u32 %v6353, 65535
      %v6355 = vshrl.u32 %v6353, 16
      %v6357 = vmul.u32 %v6354, 14564
      %v6358 = vmul.u32 %v6354, 58254
      %v6359 = vmul.u32 %v6355, 14564
      %v6360 = vmul.u32 %v6355, 58254
      %v6361 = vshll.u32 %v6358, 16
      %v6362 = vshrl.u32 %v6358, 16
      %v6363 = vshll.u32 %v6359, 16
      %v6364 = vshrl.u32 %v6359, 16
      %vm6365 = vc.u32 %v6357, %v6361
      %v6366 = vsel %vm6365, 1, 0
      %v6367 = vadd.s32 %v6357, %v6361
      %v6368 = vadd.s32 %v6360, %v6366
      %vm6369 = vc.u32 %v6367, %v6363
      %v6370 = vsel %vm6369, 1, 0
      %v6371 = vadd.s32 %v6367, %v6363
      %v6372 = vadd.s32 %v6368, %v6370
      %v6373 = vadd.s32 %v6372, %v6362
      %v6374 = vadd.s32 %v6373, %v6364
      %v6375 = vshrl.u32 %v6374, 4
      %v6376 = vmul.u32 %v6375, 18
      %v6377 = vsub.s32 %v6353, %v6376
      %v6378 = vsub.s32 0, %v6377
      %v6379 = vsel %vm6351, %v6378, %v6377
      %vm6380 = vcmp.lt.s32.totalorder %v5812, 0
      %v6381 = vsub.s32 0, %v5812
      %v6382 = vsel %vm6380, %v6381, %v5812
      %v6383 = vand.u32 %v6382, 65535
      %v6384 = vshrl.u32 %v6382, 16
      %v6386 = vmul.u32 %v6383, 14564
      %v6387 = vmul.u32 %v6383, 58254
      %v6388 = vmul.u32 %v6384, 14564
      %v6389 = vmul.u32 %v6384, 58254
      %v6390 = vshll.u32 %v6387, 16
      %v6391 = vshrl.u32 %v6387, 16
      %v6392 = vshll.u32 %v6388, 16
      %v6393 = vshrl.u32 %v6388, 16
      %vm6394 = vc.u32 %v6386, %v6390
      %v6395 = vsel %vm6394, 1, 0
      %v6396 = vadd.s32 %v6386, %v6390
      %v6397 = vadd.s32 %v6389, %v6395
      %vm6398 = vc.u32 %v6396, %v6392
      %v6399 = vsel %vm6398, 1, 0
      %v6400 = vadd.s32 %v6396, %v6392
      %v6401 = vadd.s32 %v6397, %v6399
      %v6402 = vadd.s32 %v6401, %v6391
      %v6403 = vadd.s32 %v6402, %v6393
      %v6404 = vshrl.u32 %v6403, 4
      %v6405 = vmul.u32 %v6404, 18
      %v6406 = vsub.s32 %v6382, %v6405
      %v6407 = vsub.s32 0, %v6406
      %v6408 = vsel %vm6380, %v6407, %v6406
      %vm6409 = vcmp.lt.s32.totalorder %v5813, 0
      %v6410 = vsub.s32 0, %v5813
      %v6411 = vsel %vm6409, %v6410, %v5813
      %v6412 = vand.u32 %v6411, 65535
      %v6413 = vshrl.u32 %v6411, 16
      %v6415 = vmul.u32 %v6412, 14564
      %v6416 = vmul.u32 %v6412, 58254
      %v6417 = vmul.u32 %v6413, 14564
      %v6418 = vmul.u32 %v6413, 58254
      %v6419 = vshll.u32 %v6416, 16
      %v6420 = vshrl.u32 %v6416, 16
      %v6421 = vshll.u32 %v6417, 16
      %v6422 = vshrl.u32 %v6417, 16
      %vm6423 = vc.u32 %v6415, %v6419
      %v6424 = vsel %vm6423, 1, 0
      %v6425 = vadd.s32 %v6415, %v6419
      %v6426 = vadd.s32 %v6418, %v6424
      %vm6427 = vc.u32 %v6425, %v6421
      %v6428 = vsel %vm6427, 1, 0
      %v6429 = vadd.s32 %v6425, %v6421
      %v6430 = vadd.s32 %v6426, %v6428
      %v6431 = vadd.s32 %v6430, %v6420
      %v6432 = vadd.s32 %v6431, %v6422
      %v6433 = vshrl.u32 %v6432, 4
      %v6434 = vmul.u32 %v6433, 18
      %v6435 = vsub.s32 %v6411, %v6434
      %v6436 = vsub.s32 0, %v6435
      %v6437 = vsel %vm6409, %v6436, %v6435
      %vm6438 = vcmp.lt.s32.totalorder %v5814, 0
      %v6439 = vsub.s32 0, %v5814
      %v6440 = vsel %vm6438, %v6439, %v5814
      %v6441 = vand.u32 %v6440, 65535
      %v6442 = vshrl.u32 %v6440, 16
      %v6444 = vmul.u32 %v6441, 14564
      %v6445 = vmul.u32 %v6441, 58254
      %v6446 = vmul.u32 %v6442, 14564
      %v6447 = vmul.u32 %v6442, 58254
      %v6448 = vshll.u32 %v6445, 16
      %v6449 = vshrl.u32 %v6445, 16
      %v6450 = vshll.u32 %v6446, 16
      %v6451 = vshrl.u32 %v6446, 16
      %vm6452 = vc.u32 %v6444, %v6448
      %v6453 = vsel %vm6452, 1, 0
      %v6454 = vadd.s32 %v6444, %v6448
      %v6455 = vadd.s32 %v6447, %v6453
      %vm6456 = vc.u32 %v6454, %v6450
      %v6457 = vsel %vm6456, 1, 0
      %v6458 = vadd.s32 %v6454, %v6450
      %v6459 = vadd.s32 %v6455, %v6457
      %v6460 = vadd.s32 %v6459, %v6449
      %v6461 = vadd.s32 %v6460, %v6451
      %v6462 = vshrl.u32 %v6461, 4
      %v6463 = vmul.u32 %v6462, 18
      %v6464 = vsub.s32 %v6440, %v6463
      %v6465 = vsub.s32 0, %v6464
      %v6466 = vsel %vm6438, %v6465, %v6464
      %vm6467 = vcmp.lt.s32.totalorder %v5815, 0
      %v6468 = vsub.s32 0, %v5815
      %v6469 = vsel %vm6467, %v6468, %v5815
      %v6470 = vand.u32 %v6469, 65535
      %v6471 = vshrl.u32 %v6469, 16
      %v6473 = vmul.u32 %v6470, 14564
      %v6474 = vmul.u32 %v6470, 58254
      %v6475 = vmul.u32 %v6471, 14564
      %v6476 = vmul.u32 %v6471, 58254
      %v6477 = vshll.u32 %v6474, 16
      %v6478 = vshrl.u32 %v6474, 16
      %v6479 = vshll.u32 %v6475, 16
      %v6480 = vshrl.u32 %v6475, 16
      %vm6481 = vc.u32 %v6473, %v6477
      %v6482 = vsel %vm6481, 1, 0
      %v6483 = vadd.s32 %v6473, %v6477
      %v6484 = vadd.s32 %v6476, %v6482
      %vm6485 = vc.u32 %v6483, %v6479
      %v6486 = vsel %vm6485, 1, 0
      %v6487 = vadd.s32 %v6483, %v6479
      %v6488 = vadd.s32 %v6484, %v6486
      %v6489 = vadd.s32 %v6488, %v6478
      %v6490 = vadd.s32 %v6489, %v6480
      %v6491 = vshrl.u32 %v6490, 4
      %v6492 = vmul.u32 %v6491, 18
      %v6493 = vsub.s32 %v6469, %v6492
      %v6494 = vsub.s32 0, %v6493
      %v6495 = vsel %vm6467, %v6494, %v6493
      %vm6496 = vcmp.lt.s32.totalorder %v5816, 0
      %v6497 = vsub.s32 0, %v5816
      %v6498 = vsel %vm6496, %v6497, %v5816
      %v6499 = vand.u32 %v6498, 65535
      %v6500 = vshrl.u32 %v6498, 16
      %v6502 = vmul.u32 %v6499, 14564
      %v6503 = vmul.u32 %v6499, 58254
      %v6504 = vmul.u32 %v6500, 14564
      %v6505 = vmul.u32 %v6500, 58254
      %v6506 = vshll.u32 %v6503, 16
      %v6507 = vshrl.u32 %v6503, 16
      %v6508 = vshll.u32 %v6504, 16
      %v6509 = vshrl.u32 %v6504, 16
      %vm6510 = vc.u32 %v6502, %v6506
      %v6511 = vsel %vm6510, 1, 0
      %v6512 = vadd.s32 %v6502, %v6506
      %v6513 = vadd.s32 %v6505, %v6511
      %vm6514 = vc.u32 %v6512, %v6508
      %v6515 = vsel %vm6514, 1, 0
      %v6516 = vadd.s32 %v6512, %v6508
      %v6517 = vadd.s32 %v6513, %v6515
      %v6518 = vadd.s32 %v6517, %v6507
      %v6519 = vadd.s32 %v6518, %v6509
      %v6520 = vshrl.u32 %v6519, 4
      %v6521 = vmul.u32 %v6520, 18
      %v6522 = vsub.s32 %v6498, %v6521
      %v6523 = vsub.s32 0, %v6522
      %v6524 = vsel %vm6496, %v6523, %v6522
      %vm6525 = vcmp.lt.s32.totalorder %v5817, 0
      %v6526 = vsub.s32 0, %v5817
      %v6527 = vsel %vm6525, %v6526, %v5817
      %v6528 = vand.u32 %v6527, 65535
      %v6529 = vshrl.u32 %v6527, 16
      %v6531 = vmul.u32 %v6528, 14564
      %v6532 = vmul.u32 %v6528, 58254
      %v6533 = vmul.u32 %v6529, 14564
      %v6534 = vmul.u32 %v6529, 58254
      %v6535 = vshll.u32 %v6532, 16
      %v6536 = vshrl.u32 %v6532, 16
      %v6537 = vshll.u32 %v6533, 16
      %v6538 = vshrl.u32 %v6533, 16
      %vm6539 = vc.u32 %v6531, %v6535
      %v6540 = vsel %vm6539, 1, 0
      %v6541 = vadd.s32 %v6531, %v6535
      %v6542 = vadd.s32 %v6534, %v6540
      %vm6543 = vc.u32 %v6541, %v6537
      %v6544 = vsel %vm6543, 1, 0
      %v6545 = vadd.s32 %v6541, %v6537
      %v6546 = vadd.s32 %v6542, %v6544
      %v6547 = vadd.s32 %v6546, %v6536
      %v6548 = vadd.s32 %v6547, %v6538
      %v6549 = vshrl.u32 %v6548, 4
      %v6550 = vmul.u32 %v6549, 18
      %v6551 = vsub.s32 %v6527, %v6550
      %v6552 = vsub.s32 0, %v6551
      %v6553 = vsel %vm6525, %v6552, %v6551
      %vm6554 = vcmp.lt.s32.totalorder %v5818, 0
      %v6555 = vsub.s32 0, %v5818
      %v6556 = vsel %vm6554, %v6555, %v5818
      %v6557 = vand.u32 %v6556, 65535
      %v6558 = vshrl.u32 %v6556, 16
      %v6560 = vmul.u32 %v6557, 14564
      %v6561 = vmul.u32 %v6557, 58254
      %v6562 = vmul.u32 %v6558, 14564
      %v6563 = vmul.u32 %v6558, 58254
      %v6564 = vshll.u32 %v6561, 16
      %v6565 = vshrl.u32 %v6561, 16
      %v6566 = vshll.u32 %v6562, 16
      %v6567 = vshrl.u32 %v6562, 16
      %vm6568 = vc.u32 %v6560, %v6564
      %v6569 = vsel %vm6568, 1, 0
      %v6570 = vadd.s32 %v6560, %v6564
      %v6571 = vadd.s32 %v6563, %v6569
      %vm6572 = vc.u32 %v6570, %v6566
      %v6573 = vsel %vm6572, 1, 0
      %v6574 = vadd.s32 %v6570, %v6566
      %v6575 = vadd.s32 %v6571, %v6573
      %v6576 = vadd.s32 %v6575, %v6565
      %v6577 = vadd.s32 %v6576, %v6567
      %v6578 = vshrl.u32 %v6577, 4
      %v6579 = vmul.u32 %v6578, 18
      %v6580 = vsub.s32 %v6556, %v6579
      %v6581 = vsub.s32 0, %v6580
      %v6582 = vsel %vm6554, %v6581, %v6580
      %vm6583 = vcmp.lt.s32.totalorder %v5819, 0
      %v6584 = vsub.s32 0, %v5819
      %v6585 = vsel %vm6583, %v6584, %v5819
      %v6586 = vand.u32 %v6585, 65535
      %v6587 = vshrl.u32 %v6585, 16
      %v6589 = vmul.u32 %v6586, 14564
      %v6590 = vmul.u32 %v6586, 58254
      %v6591 = vmul.u32 %v6587, 14564
      %v6592 = vmul.u32 %v6587, 58254
      %v6593 = vshll.u32 %v6590, 16
      %v6594 = vshrl.u32 %v6590, 16
      %v6595 = vshll.u32 %v6591, 16
      %v6596 = vshrl.u32 %v6591, 16
      %vm6597 = vc.u32 %v6589, %v6593
      %v6598 = vsel %vm6597, 1, 0
      %v6599 = vadd.s32 %v6589, %v6593
      %v6600 = vadd.s32 %v6592, %v6598
      %vm6601 = vc.u32 %v6599, %v6595
      %v6602 = vsel %vm6601, 1, 0
      %v6603 = vadd.s32 %v6599, %v6595
      %v6604 = vadd.s32 %v6600, %v6602
      %v6605 = vadd.s32 %v6604, %v6594
      %v6606 = vadd.s32 %v6605, %v6596
      %v6607 = vshrl.u32 %v6606, 4
      %v6608 = vmul.u32 %v6607, 18
      %v6609 = vsub.s32 %v6585, %v6608
      %v6610 = vsub.s32 0, %v6609
      %v6611 = vsel %vm6583, %v6610, %v6609
      %vm6612 = vcmp.lt.s32.totalorder %v5820, 0
      %v6613 = vsub.s32 0, %v5820
      %v6614 = vsel %vm6612, %v6613, %v5820
      %v6615 = vand.u32 %v6614, 65535
      %v6616 = vshrl.u32 %v6614, 16
      %v6618 = vmul.u32 %v6615, 14564
      %v6619 = vmul.u32 %v6615, 58254
      %v6620 = vmul.u32 %v6616, 14564
      %v6621 = vmul.u32 %v6616, 58254
      %v6622 = vshll.u32 %v6619, 16
      %v6623 = vshrl.u32 %v6619, 16
      %v6624 = vshll.u32 %v6620, 16
      %v6625 = vshrl.u32 %v6620, 16
      %vm6626 = vc.u32 %v6618, %v6622
      %v6627 = vsel %vm6626, 1, 0
      %v6628 = vadd.s32 %v6618, %v6622
      %v6629 = vadd.s32 %v6621, %v6627
      %vm6630 = vc.u32 %v6628, %v6624
      %v6631 = vsel %vm6630, 1, 0
      %v6632 = vadd.s32 %v6628, %v6624
      %v6633 = vadd.s32 %v6629, %v6631
      %v6634 = vadd.s32 %v6633, %v6623
      %v6635 = vadd.s32 %v6634, %v6625
      %v6636 = vshrl.u32 %v6635, 4
      %v6637 = vmul.u32 %v6636, 18
      %v6638 = vsub.s32 %v6614, %v6637
      %v6639 = vsub.s32 0, %v6638
      %v6640 = vsel %vm6612, %v6639, %v6638
      %vm6641 = vcmp.lt.s32.totalorder %v5821, 0
      %v6642 = vsub.s32 0, %v5821
      %v6643 = vsel %vm6641, %v6642, %v5821
      %v6644 = vand.u32 %v6643, 65535
      %v6645 = vshrl.u32 %v6643, 16
      %v6647 = vmul.u32 %v6644, 14564
      %v6648 = vmul.u32 %v6644, 58254
      %v6649 = vmul.u32 %v6645, 14564
      %v6650 = vmul.u32 %v6645, 58254
      %v6651 = vshll.u32 %v6648, 16
      %v6652 = vshrl.u32 %v6648, 16
      %v6653 = vshll.u32 %v6649, 16
      %v6654 = vshrl.u32 %v6649, 16
      %vm6655 = vc.u32 %v6647, %v6651
      %v6656 = vsel %vm6655, 1, 0
      %v6657 = vadd.s32 %v6647, %v6651
      %v6658 = vadd.s32 %v6650, %v6656
      %vm6659 = vc.u32 %v6657, %v6653
      %v6660 = vsel %vm6659, 1, 0
      %v6661 = vadd.s32 %v6657, %v6653
      %v6662 = vadd.s32 %v6658, %v6660
      %v6663 = vadd.s32 %v6662, %v6652
      %v6664 = vadd.s32 %v6663, %v6654
      %v6665 = vshrl.u32 %v6664, 4
      %v6666 = vmul.u32 %v6665, 18
      %v6667 = vsub.s32 %v6643, %v6666
      %v6668 = vsub.s32 0, %v6667
      %v6669 = vsel %vm6641, %v6668, %v6667
      %vm6670 = vcmp.lt.s32.totalorder %v5822, 0
      %v6671 = vsub.s32 0, %v5822
      %v6672 = vsel %vm6670, %v6671, %v5822
      %v6673 = vand.u32 %v6672, 65535
      %v6674 = vshrl.u32 %v6672, 16
      %v6676 = vmul.u32 %v6673, 14564
      %v6677 = vmul.u32 %v6673, 58254
      %v6678 = vmul.u32 %v6674, 14564
      %v6679 = vmul.u32 %v6674, 58254
      %v6680 = vshll.u32 %v6677, 16
      %v6681 = vshrl.u32 %v6677, 16
      %v6682 = vshll.u32 %v6678, 16
      %v6683 = vshrl.u32 %v6678, 16
      %vm6684 = vc.u32 %v6676, %v6680
      %v6685 = vsel %vm6684, 1, 0
      %v6686 = vadd.s32 %v6676, %v6680
      %v6687 = vadd.s32 %v6679, %v6685
      %vm6688 = vc.u32 %v6686, %v6682
      %v6689 = vsel %vm6688, 1, 0
      %v6690 = vadd.s32 %v6686, %v6682
      %v6691 = vadd.s32 %v6687, %v6689
      %v6692 = vadd.s32 %v6691, %v6681
      %v6693 = vadd.s32 %v6692, %v6683
      %v6694 = vshrl.u32 %v6693, 4
      %v6695 = vmul.u32 %v6694, 18
      %v6696 = vsub.s32 %v6672, %v6695
      %v6697 = vsub.s32 0, %v6696
      %v6698 = vsel %vm6670, %v6697, %v6696
      %vm6699 = vcmp.lt.s32.totalorder %v5823, 0
      %v6700 = vsub.s32 0, %v5823
      %v6701 = vsel %vm6699, %v6700, %v5823
      %v6702 = vand.u32 %v6701, 65535
      %v6703 = vshrl.u32 %v6701, 16
      %v6705 = vmul.u32 %v6702, 14564
      %v6706 = vmul.u32 %v6702, 58254
      %v6707 = vmul.u32 %v6703, 14564
      %v6708 = vmul.u32 %v6703, 58254
      %v6709 = vshll.u32 %v6706, 16
      %v6710 = vshrl.u32 %v6706, 16
      %v6711 = vshll.u32 %v6707, 16
      %v6712 = vshrl.u32 %v6707, 16
      %vm6713 = vc.u32 %v6705, %v6709
      %v6714 = vsel %vm6713, 1, 0
      %v6715 = vadd.s32 %v6705, %v6709
      %v6716 = vadd.s32 %v6708, %v6714
      %vm6717 = vc.u32 %v6715, %v6711
      %v6718 = vsel %vm6717, 1, 0
      %v6719 = vadd.s32 %v6715, %v6711
      %v6720 = vadd.s32 %v6716, %v6718
      %v6721 = vadd.s32 %v6720, %v6710
      %v6722 = vadd.s32 %v6721, %v6712
      %v6723 = vshrl.u32 %v6722, 4
      %v6724 = vmul.u32 %v6723, 18
      %v6725 = vsub.s32 %v6701, %v6724
      %v6726 = vsub.s32 0, %v6725
      %v6727 = vsel %vm6699, %v6726, %v6725
      %vm6728 = vcmp.lt.s32.totalorder %v5824, 0
      %v6729 = vsub.s32 0, %v5824
      %v6730 = vsel %vm6728, %v6729, %v5824
      %v6731 = vand.u32 %v6730, 65535
      %v6732 = vshrl.u32 %v6730, 16
      %v6734 = vmul.u32 %v6731, 14564
      %v6735 = vmul.u32 %v6731, 58254
      %v6736 = vmul.u32 %v6732, 14564
      %v6737 = vmul.u32 %v6732, 58254
      %v6738 = vshll.u32 %v6735, 16
      %v6739 = vshrl.u32 %v6735, 16
      %v6740 = vshll.u32 %v6736, 16
      %v6741 = vshrl.u32 %v6736, 16
      %vm6742 = vc.u32 %v6734, %v6738
      %v6743 = vsel %vm6742, 1, 0
      %v6744 = vadd.s32 %v6734, %v6738
      %v6745 = vadd.s32 %v6737, %v6743
      %vm6746 = vc.u32 %v6744, %v6740
      %v6747 = vsel %vm6746, 1, 0
      %v6748 = vadd.s32 %v6744, %v6740
      %v6749 = vadd.s32 %v6745, %v6747
      %v6750 = vadd.s32 %v6749, %v6739
      %v6751 = vadd.s32 %v6750, %v6741
      %v6752 = vshrl.u32 %v6751, 4
      %v6753 = vmul.u32 %v6752, 18
      %v6754 = vsub.s32 %v6730, %v6753
      %v6755 = vsub.s32 0, %v6754
      %v6756 = vsel %vm6728, %v6755, %v6754
      %vm6757 = vcmp.lt.s32.totalorder %v5825, 0
      %v6758 = vsub.s32 0, %v5825
      %v6759 = vsel %vm6757, %v6758, %v5825
      %v6760 = vand.u32 %v6759, 65535
      %v6761 = vshrl.u32 %v6759, 16
      %v6763 = vmul.u32 %v6760, 14564
      %v6764 = vmul.u32 %v6760, 58254
      %v6765 = vmul.u32 %v6761, 14564
      %v6766 = vmul.u32 %v6761, 58254
      %v6767 = vshll.u32 %v6764, 16
      %v6768 = vshrl.u32 %v6764, 16
      %v6769 = vshll.u32 %v6765, 16
      %v6770 = vshrl.u32 %v6765, 16
      %vm6771 = vc.u32 %v6763, %v6767
      %v6772 = vsel %vm6771, 1, 0
      %v6773 = vadd.s32 %v6763, %v6767
      %v6774 = vadd.s32 %v6766, %v6772
      %vm6775 = vc.u32 %v6773, %v6769
      %v6776 = vsel %vm6775, 1, 0
      %v6777 = vadd.s32 %v6773, %v6769
      %v6778 = vadd.s32 %v6774, %v6776
      %v6779 = vadd.s32 %v6778, %v6768
      %v6780 = vadd.s32 %v6779, %v6770
      %v6781 = vshrl.u32 %v6780, 4
      %v6782 = vmul.u32 %v6781, 18
      %v6783 = vsub.s32 %v6759, %v6782
      %v6784 = vsub.s32 0, %v6783
      %v6785 = vsel %vm6757, %v6784, %v6783
      %vm6786 = vcmp.lt.s32.totalorder %v5826, 0
      %v6787 = vsub.s32 0, %v5826
      %v6788 = vsel %vm6786, %v6787, %v5826
      %v6789 = vand.u32 %v6788, 65535
      %v6790 = vshrl.u32 %v6788, 16
      %v6792 = vmul.u32 %v6789, 14564
      %v6793 = vmul.u32 %v6789, 58254
      %v6794 = vmul.u32 %v6790, 14564
      %v6795 = vmul.u32 %v6790, 58254
      %v6796 = vshll.u32 %v6793, 16
      %v6797 = vshrl.u32 %v6793, 16
      %v6798 = vshll.u32 %v6794, 16
      %v6799 = vshrl.u32 %v6794, 16
      %vm6800 = vc.u32 %v6792, %v6796
      %v6801 = vsel %vm6800, 1, 0
      %v6802 = vadd.s32 %v6792, %v6796
      %v6803 = vadd.s32 %v6795, %v6801
      %vm6804 = vc.u32 %v6802, %v6798
      %v6805 = vsel %vm6804, 1, 0
      %v6806 = vadd.s32 %v6802, %v6798
      %v6807 = vadd.s32 %v6803, %v6805
      %v6808 = vadd.s32 %v6807, %v6797
      %v6809 = vadd.s32 %v6808, %v6799
      %v6810 = vshrl.u32 %v6809, 4
      %v6811 = vmul.u32 %v6810, 18
      %v6812 = vsub.s32 %v6788, %v6811
      %v6813 = vsub.s32 0, %v6812
      %v6814 = vsel %vm6786, %v6813, %v6812
      %vm6815 = vcmp.lt.s32.totalorder %v5827, 0
      %v6816 = vsub.s32 0, %v5827
      %v6817 = vsel %vm6815, %v6816, %v5827
      %v6818 = vand.u32 %v6817, 65535
      %v6819 = vshrl.u32 %v6817, 16
      %v6821 = vmul.u32 %v6818, 14564
      %v6822 = vmul.u32 %v6818, 58254
      %v6823 = vmul.u32 %v6819, 14564
      %v6824 = vmul.u32 %v6819, 58254
      %v6825 = vshll.u32 %v6822, 16
      %v6826 = vshrl.u32 %v6822, 16
      %v6827 = vshll.u32 %v6823, 16
      %v6828 = vshrl.u32 %v6823, 16
      %vm6829 = vc.u32 %v6821, %v6825
      %v6830 = vsel %vm6829, 1, 0
      %v6831 = vadd.s32 %v6821, %v6825
      %v6832 = vadd.s32 %v6824, %v6830
      %vm6833 = vc.u32 %v6831, %v6827
      %v6834 = vsel %vm6833, 1, 0
      %v6835 = vadd.s32 %v6831, %v6827
      %v6836 = vadd.s32 %v6832, %v6834
      %v6837 = vadd.s32 %v6836, %v6826
      %v6838 = vadd.s32 %v6837, %v6828
      %v6839 = vshrl.u32 %v6838, 4
      %v6840 = vmul.u32 %v6839, 18
      %v6841 = vsub.s32 %v6817, %v6840
      %v6842 = vsub.s32 0, %v6841
      %v6843 = vsel %vm6815, %v6842, %v6841
      %vm6844 = vcmp.lt.s32.totalorder %v5828, 0
      %v6845 = vsub.s32 0, %v5828
      %v6846 = vsel %vm6844, %v6845, %v5828
      %v6847 = vand.u32 %v6846, 65535
      %v6848 = vshrl.u32 %v6846, 16
      %v6850 = vmul.u32 %v6847, 14564
      %v6851 = vmul.u32 %v6847, 58254
      %v6852 = vmul.u32 %v6848, 14564
      %v6853 = vmul.u32 %v6848, 58254
      %v6854 = vshll.u32 %v6851, 16
      %v6855 = vshrl.u32 %v6851, 16
      %v6856 = vshll.u32 %v6852, 16
      %v6857 = vshrl.u32 %v6852, 16
      %vm6858 = vc.u32 %v6850, %v6854
      %v6859 = vsel %vm6858, 1, 0
      %v6860 = vadd.s32 %v6850, %v6854
      %v6861 = vadd.s32 %v6853, %v6859
      %vm6862 = vc.u32 %v6860, %v6856
      %v6863 = vsel %vm6862, 1, 0
      %v6864 = vadd.s32 %v6860, %v6856
      %v6865 = vadd.s32 %v6861, %v6863
      %v6866 = vadd.s32 %v6865, %v6855
      %v6867 = vadd.s32 %v6866, %v6857
      %v6868 = vshrl.u32 %v6867, 4
      %v6869 = vmul.u32 %v6868, 18
      %v6870 = vsub.s32 %v6846, %v6869
      %v6871 = vsub.s32 0, %v6870
      %v6872 = vsel %vm6844, %v6871, %v6870
      %vm6873 = vcmp.ne.s32.totalorder %v5857, 0
      %vm6874 = vcmp.ne.s32.totalorder %v5886, 0
      %vm6875 = vcmp.ne.s32.totalorder %v5915, 0
      %vm6876 = vcmp.ne.s32.totalorder %v5944, 0
      %vm6877 = vcmp.ne.s32.totalorder %v5973, 0
      %vm6878 = vcmp.ne.s32.totalorder %v6002, 0
      %vm6879 = vcmp.ne.s32.totalorder %v6031, 0
      %vm6880 = vcmp.ne.s32.totalorder %v6060, 0
      %vm6881 = vcmp.ne.s32.totalorder %v6089, 0
      %vm6882 = vcmp.ne.s32.totalorder %v6118, 0
      %vm6883 = vcmp.ne.s32.totalorder %v6147, 0
      %vm6884 = vcmp.ne.s32.totalorder %v6176, 0
      %vm6885 = vcmp.ne.s32.totalorder %v6205, 0
      %vm6886 = vcmp.ne.s32.totalorder %v6234, 0
      %vm6887 = vcmp.ne.s32.totalorder %v6263, 0
      %vm6888 = vcmp.ne.s32.totalorder %v6292, 0
      %vm6889 = vcmp.ne.s32.totalorder %v6321, 0
      %vm6890 = vcmp.ne.s32.totalorder %v6350, 0
      %vm6891 = vcmp.ne.s32.totalorder %v6379, 0
      %vm6892 = vcmp.ne.s32.totalorder %v6408, 0
      %vm6893 = vcmp.ne.s32.totalorder %v6437, 0
      %vm6894 = vcmp.ne.s32.totalorder %v6466, 0
      %vm6895 = vcmp.ne.s32.totalorder %v6495, 0
      %vm6896 = vcmp.ne.s32.totalorder %v6524, 0
      %vm6897 = vcmp.ne.s32.totalorder %v6553, 0
      %vm6898 = vcmp.ne.s32.totalorder %v6582, 0
      %vm6899 = vcmp.ne.s32.totalorder %v6611, 0
      %vm6900 = vcmp.ne.s32.totalorder %v6640, 0
      %vm6901 = vcmp.ne.s32.totalorder %v6669, 0
      %vm6902 = vcmp.ne.s32.totalorder %v6698, 0
      %vm6903 = vcmp.ne.s32.totalorder %v6727, 0
      %vm6904 = vcmp.ne.s32.totalorder %v6756, 0
      %vm6905 = vcmp.ne.s32.totalorder %v6785, 0
      %vm6906 = vcmp.ne.s32.totalorder %v6814, 0
      %vm6907 = vcmp.ne.s32.totalorder %v6843, 0
      %vm6908 = vcmp.ne.s32.totalorder %v6872, 0
      %vm6909 = vcmp.lt.s32.totalorder %v5857, 0
      %vm6910 = vcmp.lt.s32.totalorder %v5886, 0
      %vm6911 = vcmp.lt.s32.totalorder %v5915, 0
      %vm6912 = vcmp.lt.s32.totalorder %v5944, 0
      %vm6913 = vcmp.lt.s32.totalorder %v5973, 0
      %vm6914 = vcmp.lt.s32.totalorder %v6002, 0
      %vm6915 = vcmp.lt.s32.totalorder %v6031, 0
      %vm6916 = vcmp.lt.s32.totalorder %v6060, 0
      %vm6917 = vcmp.lt.s32.totalorder %v6089, 0
      %vm6918 = vcmp.lt.s32.totalorder %v6118, 0
      %vm6919 = vcmp.lt.s32.totalorder %v6147, 0
      %vm6920 = vcmp.lt.s32.totalorder %v6176, 0
      %vm6921 = vcmp.lt.s32.totalorder %v6205, 0
      %vm6922 = vcmp.lt.s32.totalorder %v6234, 0
      %vm6923 = vcmp.lt.s32.totalorder %v6263, 0
      %vm6924 = vcmp.lt.s32.totalorder %v6292, 0
      %vm6925 = vcmp.lt.s32.totalorder %v6321, 0
      %vm6926 = vcmp.lt.s32.totalorder %v6350, 0
      %vm6927 = vcmp.lt.s32.totalorder %v6379, 0
      %vm6928 = vcmp.lt.s32.totalorder %v6408, 0
      %vm6929 = vcmp.lt.s32.totalorder %v6437, 0
      %vm6930 = vcmp.lt.s32.totalorder %v6466, 0
      %vm6931 = vcmp.lt.s32.totalorder %v6495, 0
      %vm6932 = vcmp.lt.s32.totalorder %v6524, 0
      %vm6933 = vcmp.lt.s32.totalorder %v6553, 0
      %vm6934 = vcmp.lt.s32.totalorder %v6582, 0
      %vm6935 = vcmp.lt.s32.totalorder %v6611, 0
      %vm6936 = vcmp.lt.s32.totalorder %v6640, 0
      %vm6937 = vcmp.lt.s32.totalorder %v6669, 0
      %vm6938 = vcmp.lt.s32.totalorder %v6698, 0
      %vm6939 = vcmp.lt.s32.totalorder %v6727, 0
      %vm6940 = vcmp.lt.s32.totalorder %v6756, 0
      %vm6941 = vcmp.lt.s32.totalorder %v6785, 0
      %vm6942 = vcmp.lt.s32.totalorder %v6814, 0
      %vm6943 = vcmp.lt.s32.totalorder %v6843, 0
      %vm6944 = vcmp.lt.s32.totalorder %v6872, 0
      %vm6945 = vmand %vm6909, %vm6873
      %vm6946 = vmand %vm6910, %vm6874
      %vm6947 = vmand %vm6911, %vm6875
      %vm6948 = vmand %vm6912, %vm6876
      %vm6949 = vmand %vm6913, %vm6877
      %vm6950 = vmand %vm6914, %vm6878
      %vm6951 = vmand %vm6915, %vm6879
      %vm6952 = vmand %vm6916, %vm6880
      %vm6953 = vmand %vm6917, %vm6881
      %vm6954 = vmand %vm6918, %vm6882
      %vm6955 = vmand %vm6919, %vm6883
      %vm6956 = vmand %vm6920, %vm6884
      %vm6957 = vmand %vm6921, %vm6885
      %vm6958 = vmand %vm6922, %vm6886
      %vm6959 = vmand %vm6923, %vm6887
      %vm6960 = vmand %vm6924, %vm6888
      %vm6961 = vmand %vm6925, %vm6889
      %vm6962 = vmand %vm6926, %vm6890
      %vm6963 = vmand %vm6927, %vm6891
      %vm6964 = vmand %vm6928, %vm6892
      %vm6965 = vmand %vm6929, %vm6893
      %vm6966 = vmand %vm6930, %vm6894
      %vm6967 = vmand %vm6931, %vm6895
      %vm6968 = vmand %vm6932, %vm6896
      %vm6969 = vmand %vm6933, %vm6897
      %vm6970 = vmand %vm6934, %vm6898
      %vm6971 = vmand %vm6935, %vm6899
      %vm6972 = vmand %vm6936, %vm6900
      %vm6973 = vmand %vm6937, %vm6901
      %vm6974 = vmand %vm6938, %vm6902
      %vm6975 = vmand %vm6939, %vm6903
      %vm6976 = vmand %vm6940, %vm6904
      %vm6977 = vmand %vm6941, %vm6905
      %vm6978 = vmand %vm6942, %vm6906
      %vm6979 = vmand %vm6943, %vm6907
      %vm6980 = vmand %vm6944, %vm6908
      %v6981 = vadd.s32 %v5857, 18
      %v6982 = vadd.s32 %v5886, 18
      %v6983 = vadd.s32 %v5915, 18
      %v6984 = vadd.s32 %v5944, 18
      %v6985 = vadd.s32 %v5973, 18
      %v6986 = vadd.s32 %v6002, 18
      %v6987 = vadd.s32 %v6031, 18
      %v6988 = vadd.s32 %v6060, 18
      %v6989 = vadd.s32 %v6089, 18
      %v6990 = vadd.s32 %v6118, 18
      %v6991 = vadd.s32 %v6147, 18
      %v6992 = vadd.s32 %v6176, 18
      %v6993 = vadd.s32 %v6205, 18
      %v6994 = vadd.s32 %v6234, 18
      %v6995 = vadd.s32 %v6263, 18
      %v6996 = vadd.s32 %v6292, 18
      %v6997 = vadd.s32 %v6321, 18
      %v6998 = vadd.s32 %v6350, 18
      %v6999 = vadd.s32 %v6379, 18
      %v7000 = vadd.s32 %v6408, 18
      %v7001 = vadd.s32 %v6437, 18
      %v7002 = vadd.s32 %v6466, 18
      %v7003 = vadd.s32 %v6495, 18
      %v7004 = vadd.s32 %v6524, 18
      %v7005 = vadd.s32 %v6553, 18
      %v7006 = vadd.s32 %v6582, 18
      %v7007 = vadd.s32 %v6611, 18
      %v7008 = vadd.s32 %v6640, 18
      %v7009 = vadd.s32 %v6669, 18
      %v7010 = vadd.s32 %v6698, 18
      %v7011 = vadd.s32 %v6727, 18
      %v7012 = vadd.s32 %v6756, 18
      %v7013 = vadd.s32 %v6785, 18
      %v7014 = vadd.s32 %v6814, 18
      %v7015 = vadd.s32 %v6843, 18
      %v7016 = vadd.s32 %v6872, 18
      %v7017 = vsel %vm6945, %v6981, %v5857
      %v7018 = vsel %vm6946, %v6982, %v5886
      %v7019 = vsel %vm6947, %v6983, %v5915
      %v7020 = vsel %vm6948, %v6984, %v5944
      %v7021 = vsel %vm6949, %v6985, %v5973
      %v7022 = vsel %vm6950, %v6986, %v6002
      %v7023 = vsel %vm6951, %v6987, %v6031
      %v7024 = vsel %vm6952, %v6988, %v6060
      %v7025 = vsel %vm6953, %v6989, %v6089
      %v7026 = vsel %vm6954, %v6990, %v6118
      %v7027 = vsel %vm6955, %v6991, %v6147
      %v7028 = vsel %vm6956, %v6992, %v6176
      %v7029 = vsel %vm6957, %v6993, %v6205
      %v7030 = vsel %vm6958, %v6994, %v6234
      %v7031 = vsel %vm6959, %v6995, %v6263
      %v7032 = vsel %vm6960, %v6996, %v6292
      %v7033 = vsel %vm6961, %v6997, %v6321
      %v7034 = vsel %vm6962, %v6998, %v6350
      %v7035 = vsel %vm6963, %v6999, %v6379
      %v7036 = vsel %vm6964, %v7000, %v6408
      %v7037 = vsel %vm6965, %v7001, %v6437
      %v7038 = vsel %vm6966, %v7002, %v6466
      %v7039 = vsel %vm6967, %v7003, %v6495
      %v7040 = vsel %vm6968, %v7004, %v6524
      %v7041 = vsel %vm6969, %v7005, %v6553
      %v7042 = vsel %vm6970, %v7006, %v6582
      %v7043 = vsel %vm6971, %v7007, %v6611
      %v7044 = vsel %vm6972, %v7008, %v6640
      %v7045 = vsel %vm6973, %v7009, %v6669
      %v7046 = vsel %vm6974, %v7010, %v6698
      %v7047 = vsel %vm6975, %v7011, %v6727
      %v7048 = vsel %vm6976, %v7012, %v6756
      %v7049 = vsel %vm6977, %v7013, %v6785
      %v7050 = vsel %vm6978, %v7014, %v6814
      %v7051 = vsel %vm6979, %v7015, %v6843
      %v7052 = vsel %vm6980, %v7016, %v6872
      %vm7053 = vcmp.lt.s32.totalorder %v7017, 16
      %vm7054 = vcmp.lt.s32.totalorder %v7018, 16
      %vm7055 = vcmp.lt.s32.totalorder %v7019, 16
      %vm7056 = vcmp.lt.s32.totalorder %v7020, 16
      %vm7057 = vcmp.lt.s32.totalorder %v7021, 16
      %vm7058 = vcmp.lt.s32.totalorder %v7022, 16
      %vm7059 = vcmp.lt.s32.totalorder %v7023, 16
      %vm7060 = vcmp.lt.s32.totalorder %v7024, 16
      %vm7061 = vcmp.lt.s32.totalorder %v7025, 16
      %vm7062 = vcmp.lt.s32.totalorder %v7026, 16
      %vm7063 = vcmp.lt.s32.totalorder %v7027, 16
      %vm7064 = vcmp.lt.s32.totalorder %v7028, 16
      %vm7065 = vcmp.lt.s32.totalorder %v7029, 16
      %vm7066 = vcmp.lt.s32.totalorder %v7030, 16
      %vm7067 = vcmp.lt.s32.totalorder %v7031, 16
      %vm7068 = vcmp.lt.s32.totalorder %v7032, 16
      %vm7069 = vcmp.lt.s32.totalorder %v7033, 16
      %vm7070 = vcmp.lt.s32.totalorder %v7034, 16
      %vm7071 = vcmp.lt.s32.totalorder %v7035, 16
      %vm7072 = vcmp.lt.s32.totalorder %v7036, 16
      %vm7073 = vcmp.lt.s32.totalorder %v7037, 16
      %vm7074 = vcmp.lt.s32.totalorder %v7038, 16
      %vm7075 = vcmp.lt.s32.totalorder %v7039, 16
      %vm7076 = vcmp.lt.s32.totalorder %v7040, 16
      %vm7077 = vcmp.lt.s32.totalorder %v7041, 16
      %vm7078 = vcmp.lt.s32.totalorder %v7042, 16
      %vm7079 = vcmp.lt.s32.totalorder %v7043, 16
      %vm7080 = vcmp.lt.s32.totalorder %v7044, 16
      %vm7081 = vcmp.lt.s32.totalorder %v7045, 16
      %vm7082 = vcmp.lt.s32.totalorder %v7046, 16
      %vm7083 = vcmp.lt.s32.totalorder %v7047, 16
      %vm7084 = vcmp.lt.s32.totalorder %v7048, 16
      %vm7085 = vcmp.lt.s32.totalorder %v7049, 16
      %vm7086 = vcmp.lt.s32.totalorder %v7050, 16
      %vm7087 = vcmp.lt.s32.totalorder %v7051, 16
      %vm7088 = vcmp.lt.s32.totalorder %v7052, 16
      %v7089 = vsel %vm7053, 1, 0
      %v7090 = vsel %vm7054, 1, 0
      %v7091 = vsel %vm7055, 1, 0
      %v7092 = vsel %vm7056, 1, 0
      %v7093 = vsel %vm7057, 1, 0
      %v7094 = vsel %vm7058, 1, 0
      %v7095 = vsel %vm7059, 1, 0
      %v7096 = vsel %vm7060, 1, 0
      %v7097 = vsel %vm7061, 1, 0
      %v7098 = vsel %vm7062, 1, 0
      %v7099 = vsel %vm7063, 1, 0
      %v7100 = vsel %vm7064, 1, 0
      %v7101 = vsel %vm7065, 1, 0
      %v7102 = vsel %vm7066, 1, 0
      %v7103 = vsel %vm7067, 1, 0
      %v7104 = vsel %vm7068, 1, 0
      %v7105 = vsel %vm7069, 1, 0
      %v7106 = vsel %vm7070, 1, 0
      %v7107 = vsel %vm7071, 1, 0
      %v7108 = vsel %vm7072, 1, 0
      %v7109 = vsel %vm7073, 1, 0
      %v7110 = vsel %vm7074, 1, 0
      %v7111 = vsel %vm7075, 1, 0
      %v7112 = vsel %vm7076, 1, 0
      %v7113 = vsel %vm7077, 1, 0
      %v7114 = vsel %vm7078, 1, 0
      %v7115 = vsel %vm7079, 1, 0
      %v7116 = vsel %vm7080, 1, 0
      %v7117 = vsel %vm7081, 1, 0
      %v7118 = vsel %vm7082, 1, 0
      %v7119 = vsel %vm7083, 1, 0
      %v7120 = vsel %vm7084, 1, 0
      %v7121 = vsel %vm7085, 1, 0
      %v7122 = vsel %vm7086, 1, 0
      %v7123 = vsel %vm7087, 1, 0
      %v7124 = vsel %vm7088, 1, 0
      %vm7125 = vcmp.eq.s32.totalorder %v7089, 1
      %vm7126 = vcmp.eq.s32.totalorder %v7090, 1
      %vm7127 = vcmp.eq.s32.totalorder %v7091, 1
      %vm7128 = vcmp.eq.s32.totalorder %v7092, 1
      %vm7129 = vcmp.eq.s32.totalorder %v7093, 1
      %vm7130 = vcmp.eq.s32.totalorder %v7094, 1
      %vm7131 = vcmp.eq.s32.totalorder %v7095, 1
      %vm7132 = vcmp.eq.s32.totalorder %v7096, 1
      %vm7133 = vcmp.eq.s32.totalorder %v7097, 1
      %vm7134 = vcmp.eq.s32.totalorder %v7098, 1
      %vm7135 = vcmp.eq.s32.totalorder %v7099, 1
      %vm7136 = vcmp.eq.s32.totalorder %v7100, 1
      %vm7137 = vcmp.eq.s32.totalorder %v7101, 1
      %vm7138 = vcmp.eq.s32.totalorder %v7102, 1
      %vm7139 = vcmp.eq.s32.totalorder %v7103, 1
      %vm7140 = vcmp.eq.s32.totalorder %v7104, 1
      %vm7141 = vcmp.eq.s32.totalorder %v7105, 1
      %vm7142 = vcmp.eq.s32.totalorder %v7106, 1
      %vm7143 = vcmp.eq.s32.totalorder %v7107, 1
      %vm7144 = vcmp.eq.s32.totalorder %v7108, 1
      %vm7145 = vcmp.eq.s32.totalorder %v7109, 1
      %vm7146 = vcmp.eq.s32.totalorder %v7110, 1
      %vm7147 = vcmp.eq.s32.totalorder %v7111, 1
      %vm7148 = vcmp.eq.s32.totalorder %v7112, 1
      %vm7149 = vcmp.eq.s32.totalorder %v7113, 1
      %vm7150 = vcmp.eq.s32.totalorder %v7114, 1
      %vm7151 = vcmp.eq.s32.totalorder %v7115, 1
      %vm7152 = vcmp.eq.s32.totalorder %v7116, 1
      %vm7153 = vcmp.eq.s32.totalorder %v7117, 1
      %vm7154 = vcmp.eq.s32.totalorder %v7118, 1
      %vm7155 = vcmp.eq.s32.totalorder %v7119, 1
      %vm7156 = vcmp.eq.s32.totalorder %v7120, 1
      %vm7157 = vcmp.eq.s32.totalorder %v7121, 1
      %vm7158 = vcmp.eq.s32.totalorder %v7122, 1
      %vm7159 = vcmp.eq.s32.totalorder %v7123, 1
      %vm7160 = vcmp.eq.s32.totalorder %v7124, 1
      %v7161 = vsel %vm7125, %v5756, 0.0
      %v7162 = vsel %vm7126, %v5757, 0.0
      %v7163 = vsel %vm7127, %v5758, 0.0
      %v7164 = vsel %vm7128, %v5759, 0.0
      %v7165 = vsel %vm7129, %v5760, 0.0
      %v7166 = vsel %vm7130, %v5761, 0.0
      %v7167 = vsel %vm7131, %v5762, 0.0
      %v7168 = vsel %vm7132, %v5763, 0.0
      %v7169 = vsel %vm7133, %v5764, 0.0
      %v7170 = vsel %vm7134, %v5765, 0.0
      %v7171 = vsel %vm7135, %v5766, 0.0
      %v7172 = vsel %vm7136, %v5767, 0.0
      %v7173 = vsel %vm7137, %v5768, 0.0
      %v7174 = vsel %vm7138, %v5769, 0.0
      %v7175 = vsel %vm7139, %v5770, 0.0
      %v7176 = vsel %vm7140, %v5771, 0.0
      %v7177 = vsel %vm7141, %v5772, 0.0
      %v7178 = vsel %vm7142, %v5773, 0.0
      %v7179 = vsel %vm7143, %v5774, 0.0
      %v7180 = vsel %vm7144, %v5775, 0.0
      %v7181 = vsel %vm7145, %v5776, 0.0
      %v7182 = vsel %vm7146, %v5777, 0.0
      %v7183 = vsel %vm7147, %v5778, 0.0
      %v7184 = vsel %vm7148, %v5779, 0.0
      %v7185 = vsel %vm7149, %v5780, 0.0
      %v7186 = vsel %vm7150, %v5781, 0.0
      %v7187 = vsel %vm7151, %v5782, 0.0
      %v7188 = vsel %vm7152, %v5783, 0.0
      %v7189 = vsel %vm7153, %v5784, 0.0
      %v7190 = vsel %vm7154, %v5785, 0.0
      %v7191 = vsel %vm7155, %v5786, 0.0
      %v7192 = vsel %vm7156, %v5787, 0.0
      %v7193 = vsel %vm7157, %v5788, 0.0
      %v7194 = vsel %vm7158, %v5789, 0.0
      %v7195 = vsel %vm7159, %v5790, 0.0
      %v7196 = vsel %vm7160, %v5791, 0.0
      %v7197 = vpack.c.bf16 %v7161, %v7161
      %v7198 = vpack.c.bf16 %v7162, %v7162
      %v7199 = vpack.c.bf16 %v7163, %v7163
      %v7200 = vpack.c.bf16 %v7164, %v7164
      %v7201 = vpack.c.bf16 %v7165, %v7165
      %v7202 = vpack.c.bf16 %v7166, %v7166
      %v7203 = vpack.c.bf16 %v7167, %v7167
      %v7204 = vpack.c.bf16 %v7168, %v7168
      %v7205 = vpack.c.bf16 %v7169, %v7169
      %v7206 = vpack.c.bf16 %v7170, %v7170
      %v7207 = vpack.c.bf16 %v7171, %v7171
      %v7208 = vpack.c.bf16 %v7172, %v7172
      %v7209 = vpack.c.bf16 %v7173, %v7173
      %v7210 = vpack.c.bf16 %v7174, %v7174
      %v7211 = vpack.c.bf16 %v7175, %v7175
      %v7212 = vpack.c.bf16 %v7176, %v7176
      %v7213 = vpack.c.bf16 %v7177, %v7177
      %v7214 = vpack.c.bf16 %v7178, %v7178
      %v7215 = vpack.c.bf16 %v7179, %v7179
      %v7216 = vpack.c.bf16 %v7180, %v7180
      %v7217 = vpack.c.bf16 %v7181, %v7181
      %v7218 = vpack.c.bf16 %v7182, %v7182
      %v7219 = vpack.c.bf16 %v7183, %v7183
      %v7220 = vpack.c.bf16 %v7184, %v7184
      %v7221 = vpack.c.bf16 %v7185, %v7185
      %v7222 = vpack.c.bf16 %v7186, %v7186
      %v7223 = vpack.c.bf16 %v7187, %v7187
      %v7224 = vpack.c.bf16 %v7188, %v7188
      %v7225 = vpack.c.bf16 %v7189, %v7189
      %v7226 = vpack.c.bf16 %v7190, %v7190
      %v7227 = vpack.c.bf16 %v7191, %v7191
      %v7228 = vpack.c.bf16 %v7192, %v7192
      %v7229 = vpack.c.bf16 %v7193, %v7193
      %v7230 = vpack.c.bf16 %v7194, %v7194
      %v7231 = vpack.c.bf16 %v7195, %v7195
      %v7232 = vpack.c.bf16 %v7196, %v7196
      %7233 = vst [vmem:[#allocation3] sm:$0xf] 0
      %7234 = vst [vmem:[#allocation3 + $0x4] sm:$0xf] 0
      %vm7235 = vmand %vm2103, %vm2579
      %v7236 = vld [vmem:[#allocation3 + $0x8] sm:$0x3]
      %v7237 = vsel %vm7235, 0, %v7236
      %7238 = vst [vmem:[#allocation3 + $0x8] sm:$0x3] %v7237
      %v7240 = vshrl.u32 %v7197, 16
      %v7242 = vrot.slane %v7240, 6
      %v7243 = vshll.u32 %v7197, 16
      %v7245 = vrot.slane %v7243, 7
      %v7246 = vor.u32 %v7242, %v7245
      %v7247 = vrot.slane %v7246, 4
      %v7249 = vshrl.u32 %v7198, 16
      %v7251 = vrot.slane %v7249, 6
      %v7252 = vshll.u32 %v7198, 16
      %v7254 = vrot.slane %v7252, 7
      %v7255 = vor.u32 %v7251, %v7254
      %v7256 = vsel %vm2581, %v7247, %v7255
      %v7257 = vrot.slane %v7255, 4
      %v7259 = vshrl.u32 %v7199, 16
      %v7261 = vrot.slane %v7259, 6
      %v7262 = vshll.u32 %v7199, 16
      %v7264 = vrot.slane %v7262, 7
      %v7265 = vor.u32 %v7261, %v7264
      %v7266 = vsel %vm2581, %v7257, %v7265
      %v7267 = vrot.slane %v7265, 4
      %v7269 = vshrl.u32 %v7200, 16
      %v7271 = vrot.slane %v7269, 6
      %v7272 = vshll.u32 %v7200, 16
      %v7274 = vrot.slane %v7272, 7
      %v7275 = vor.u32 %v7271, %v7274
      %v7276 = vsel %vm2581, %v7267, %v7275
      %v7277 = vrot.slane %v7275, 4
      %v7279 = vshrl.u32 %v7201, 16
      %v7281 = vrot.slane %v7279, 6
      %v7282 = vshll.u32 %v7201, 16
      %v7284 = vrot.slane %v7282, 7
      %v7285 = vor.u32 %v7281, %v7284
      %v7286 = vsel %vm2581, %v7277, %v7285
      %v7287 = vrot.slane %v7285, 4
      %v7289 = vshrl.u32 %v7202, 16
      %v7291 = vrot.slane %v7289, 6
      %v7292 = vshll.u32 %v7202, 16
      %v7294 = vrot.slane %v7292, 7
      %v7295 = vor.u32 %v7291, %v7294
      %v7296 = vsel %vm2581, %v7287, %v7295
      %v7297 = vrot.slane %v7295, 4
      %v7299 = vshrl.u32 %v7203, 16
      %v7301 = vrot.slane %v7299, 6
      %v7302 = vshll.u32 %v7203, 16
      %v7304 = vrot.slane %v7302, 7
      %v7305 = vor.u32 %v7301, %v7304
      %v7306 = vsel %vm2581, %v7297, %v7305
      %v7307 = vrot.slane %v7305, 4
      %v7309 = vshrl.u32 %v7204, 16
      %v7311 = vrot.slane %v7309, 6
      %v7312 = vshll.u32 %v7204, 16
      %v7314 = vrot.slane %v7312, 7
      %v7315 = vor.u32 %v7311, %v7314
      %v7316 = vsel %vm2581, %v7307, %v7315
      %v7317 = vrot.slane %v7315, 4
      %v7319 = vshrl.u32 %v7205, 16
      %v7321 = vrot.slane %v7319, 6
      %v7322 = vshll.u32 %v7205, 16
      %v7324 = vrot.slane %v7322, 7
      %v7325 = vor.u32 %v7321, %v7324
      %v7326 = vsel %vm2581, %v7317, %v7325
      %v7327 = vrot.slane %v7325, 4
      %v7329 = vshrl.u32 %v7206, 16
      %v7331 = vrot.slane %v7329, 6
      %v7332 = vshll.u32 %v7206, 16
      %v7334 = vrot.slane %v7332, 7
      %v7335 = vor.u32 %v7331, %v7334
      %v7336 = vsel %vm2581, %v7327, %v7335
      %v7337 = vrot.slane %v7335, 4
      %v7339 = vshrl.u32 %v7207, 16
      %v7341 = vrot.slane %v7339, 6
      %v7342 = vshll.u32 %v7207, 16
      %v7344 = vrot.slane %v7342, 7
      %v7345 = vor.u32 %v7341, %v7344
      %v7346 = vsel %vm2581, %v7337, %v7345
      %v7347 = vrot.slane %v7345, 4
      %v7349 = vshrl.u32 %v7208, 16
      %v7351 = vrot.slane %v7349, 6
      %v7352 = vshll.u32 %v7208, 16
      %v7354 = vrot.slane %v7352, 7
      %v7355 = vor.u32 %v7351, %v7354
      %v7356 = vsel %vm2581, %v7347, %v7355
      %v7357 = vrot.slane %v7355, 4
      %v7359 = vshrl.u32 %v7209, 16
      %v7361 = vrot.slane %v7359, 6
      %v7362 = vshll.u32 %v7209, 16
      %v7364 = vrot.slane %v7362, 7
      %v7365 = vor.u32 %v7361, %v7364
      %v7366 = vsel %vm2581, %v7357, %v7365
      %v7367 = vrot.slane %v7365, 4
      %v7369 = vshrl.u32 %v7210, 16
      %v7371 = vrot.slane %v7369, 6
      %v7372 = vshll.u32 %v7210, 16
      %v7374 = vrot.slane %v7372, 7
      %v7375 = vor.u32 %v7371, %v7374
      %v7376 = vsel %vm2581, %v7367, %v7375
      %v7377 = vrot.slane %v7375, 4
      %v7379 = vshrl.u32 %v7211, 16
      %v7381 = vrot.slane %v7379, 6
      %v7382 = vshll.u32 %v7211, 16
      %v7384 = vrot.slane %v7382, 7
      %v7385 = vor.u32 %v7381, %v7384
      %v7386 = vsel %vm2581, %v7377, %v7385
      %v7387 = vrot.slane %v7385, 4
      %v7389 = vshrl.u32 %v7212, 16
      %v7391 = vrot.slane %v7389, 6
      %v7392 = vshll.u32 %v7212, 16
      %v7394 = vrot.slane %v7392, 7
      %v7395 = vor.u32 %v7391, %v7394
      %v7396 = vsel %vm2581, %v7387, %v7395
      %v7397 = vrot.slane %v7395, 4
      %v7399 = vshrl.u32 %v7213, 16
      %v7401 = vrot.slane %v7399, 6
      %v7402 = vshll.u32 %v7213, 16
      %v7404 = vrot.slane %v7402, 7
      %v7405 = vor.u32 %v7401, %v7404
      %v7406 = vsel %vm2581, %v7397, %v7405
      %v7407 = vrot.slane %v7405, 4
      %v7409 = vshrl.u32 %v7214, 16
      %v7411 = vrot.slane %v7409, 6
      %v7412 = vshll.u32 %v7214, 16
      %v7414 = vrot.slane %v7412, 7
      %v7415 = vor.u32 %v7411, %v7414
      %v7416 = vsel %vm2581, %v7407, %v7415
      %v7417 = vrot.slane %v7415, 4
      %v7419 = vshrl.u32 %v7215, 16
      %v7421 = vrot.slane %v7419, 6
      %v7422 = vshll.u32 %v7215, 16
      %v7424 = vrot.slane %v7422, 7
      %v7425 = vor.u32 %v7421, %v7424
      %v7426 = vsel %vm2581, %v7417, %v7425
      %v7427 = vrot.slane %v7425, 4
      %v7429 = vshrl.u32 %v7216, 16
      %v7431 = vrot.slane %v7429, 6
      %v7432 = vshll.u32 %v7216, 16
      %v7434 = vrot.slane %v7432, 7
      %v7435 = vor.u32 %v7431, %v7434
      %v7436 = vsel %vm2581, %v7427, %v7435
      %v7437 = vrot.slane %v7435, 4
      %v7439 = vshrl.u32 %v7217, 16
      %v7441 = vrot.slane %v7439, 6
      %v7442 = vshll.u32 %v7217, 16
      %v7444 = vrot.slane %v7442, 7
      %v7445 = vor.u32 %v7441, %v7444
      %v7446 = vsel %vm2581, %v7437, %v7445
      %v7447 = vrot.slane %v7445, 4
      %v7449 = vshrl.u32 %v7218, 16
      %v7451 = vrot.slane %v7449, 6
      %v7452 = vshll.u32 %v7218, 16
      %v7454 = vrot.slane %v7452, 7
      %v7455 = vor.u32 %v7451, %v7454
      %v7456 = vsel %vm2581, %v7447, %v7455
      %v7457 = vrot.slane %v7455, 4
      %v7459 = vshrl.u32 %v7219, 16
      %v7461 = vrot.slane %v7459, 6
      %v7462 = vshll.u32 %v7219, 16
      %v7464 = vrot.slane %v7462, 7
      %v7465 = vor.u32 %v7461, %v7464
      %v7466 = vsel %vm2581, %v7457, %v7465
      %v7467 = vrot.slane %v7465, 4
      %v7469 = vshrl.u32 %v7220, 16
      %v7471 = vrot.slane %v7469, 6
      %v7472 = vshll.u32 %v7220, 16
      %v7474 = vrot.slane %v7472, 7
      %v7475 = vor.u32 %v7471, %v7474
      %v7476 = vsel %vm2581, %v7467, %v7475
      %v7477 = vrot.slane %v7475, 4
      %v7479 = vshrl.u32 %v7221, 16
      %v7481 = vrot.slane %v7479, 6
      %v7482 = vshll.u32 %v7221, 16
      %v7484 = vrot.slane %v7482, 7
      %v7485 = vor.u32 %v7481, %v7484
      %v7486 = vsel %vm2581, %v7477, %v7485
      %v7487 = vrot.slane %v7485, 4
      %v7489 = vshrl.u32 %v7222, 16
      %v7491 = vrot.slane %v7489, 6
      %v7492 = vshll.u32 %v7222, 16
      %v7494 = vrot.slane %v7492, 7
      %v7495 = vor.u32 %v7491, %v7494
      %v7496 = vsel %vm2581, %v7487, %v7495
      %v7497 = vrot.slane %v7495, 4
      %v7499 = vshrl.u32 %v7223, 16
      %v7501 = vrot.slane %v7499, 6
      %v7502 = vshll.u32 %v7223, 16
      %v7504 = vrot.slane %v7502, 7
      %v7505 = vor.u32 %v7501, %v7504
      %v7506 = vsel %vm2581, %v7497, %v7505
      %v7507 = vrot.slane %v7505, 4
      %v7509 = vshrl.u32 %v7224, 16
      %v7511 = vrot.slane %v7509, 6
      %v7512 = vshll.u32 %v7224, 16
      %v7514 = vrot.slane %v7512, 7
      %v7515 = vor.u32 %v7511, %v7514
      %v7516 = vsel %vm2581, %v7507, %v7515
      %v7517 = vrot.slane %v7515, 4
      %v7519 = vshrl.u32 %v7225, 16
      %v7521 = vrot.slane %v7519, 6
      %v7522 = vshll.u32 %v7225, 16
      %v7524 = vrot.slane %v7522, 7
      %v7525 = vor.u32 %v7521, %v7524
      %v7526 = vsel %vm2581, %v7517, %v7525
      %v7527 = vrot.slane %v7525, 4
      %v7529 = vshrl.u32 %v7226, 16
      %v7531 = vrot.slane %v7529, 6
      %v7532 = vshll.u32 %v7226, 16
      %v7534 = vrot.slane %v7532, 7
      %v7535 = vor.u32 %v7531, %v7534
      %v7536 = vsel %vm2581, %v7527, %v7535
      %v7537 = vrot.slane %v7535, 4
      %v7539 = vshrl.u32 %v7227, 16
      %v7541 = vrot.slane %v7539, 6
      %v7542 = vshll.u32 %v7227, 16
      %v7544 = vrot.slane %v7542, 7
      %v7545 = vor.u32 %v7541, %v7544
      %v7546 = vsel %vm2581, %v7537, %v7545
      %v7547 = vrot.slane %v7545, 4
      %v7549 = vshrl.u32 %v7228, 16
      %v7551 = vrot.slane %v7549, 6
      %v7552 = vshll.u32 %v7228, 16
      %v7554 = vrot.slane %v7552, 7
      %v7555 = vor.u32 %v7551, %v7554
      %v7556 = vsel %vm2581, %v7547, %v7555
      %v7557 = vrot.slane %v7555, 4
      %v7559 = vshrl.u32 %v7229, 16
      %v7561 = vrot.slane %v7559, 6
      %v7562 = vshll.u32 %v7229, 16
      %v7564 = vrot.slane %v7562, 7
      %v7565 = vor.u32 %v7561, %v7564
      %v7566 = vsel %vm2581, %v7557, %v7565
      %v7567 = vrot.slane %v7565, 4
      %v7569 = vshrl.u32 %v7230, 16
      %v7571 = vrot.slane %v7569, 6
      %v7572 = vshll.u32 %v7230, 16
      %v7574 = vrot.slane %v7572, 7
      %v7575 = vor.u32 %v7571, %v7574
      %v7576 = vsel %vm2581, %v7567, %v7575
      %v7577 = vrot.slane %v7575, 4
      %v7579 = vshrl.u32 %v7231, 16
      %v7581 = vrot.slane %v7579, 6
      %v7582 = vshll.u32 %v7231, 16
      %v7584 = vrot.slane %v7582, 7
      %v7585 = vor.u32 %v7581, %v7584
      %v7586 = vsel %vm2581, %v7577, %v7585
      %v7587 = vrot.slane %v7585, 4
      %v7589 = vshrl.u32 %v7232, 16
      %v7591 = vrot.slane %v7589, 6
      %v7592 = vshll.u32 %v7232, 16
      %v7594 = vrot.slane %v7592, 7
      %v7595 = vor.u32 %v7591, %v7594
      %v7596 = vsel %vm2581, %v7587, %v7595
      %v7597 = vrot.slane %v7595, 4
      %vm7635 = vcmask 1043457
      %vm7636 = vsmask.f32 7942
      %vm7637 = vmand %vm7635, %vm7636
      %v7638 = vld [vmem:[#allocation3 + $0x8] sm:$0xe]
      %v7639 = vsel %vm7637, %v7246, %v7638
      %7640 = vst [vmem:[#allocation3 + $0x8] sm:$0xe] %v7639
      %7641 = vst [vmem:[#allocation3 + $0xc] sm:$0xf] %v7256
      %7642 = vst [vmem:[#allocation3 + $0x10] sm:$0xf] %v7266
      %7643 = vst [vmem:[#allocation3 + $0x14] sm:$0xf] %v7276
      %7644 = vst [vmem:[#allocation3 + $0x18] sm:$0xf] %v7286
      %7645 = vst [vmem:[#allocation3 + $0x1c] sm:$0xf] %v7296
      %7646 = vst [vmem:[#allocation3 + $0x20] sm:$0xf] %v7306
      %7647 = vst [vmem:[#allocation3 + $0x24] sm:$0xf] %v7316
      %7648 = vst [vmem:[#allocation3 + $0x28] sm:$0xf] %v7326
      %7649 = vst [vmem:[#allocation3 + $0x2c] sm:$0xf] %v7336
      %7650 = vst [vmem:[#allocation3 + $0x30] sm:$0xf] %v7346
      %7651 = vst [vmem:[#allocation3 + $0x34] sm:$0xf] %v7356
      %7652 = vst [vmem:[#allocation3 + $0x38] sm:$0xf] %v7366
      %7653 = vst [vmem:[#allocation3 + $0x3c] sm:$0xf] %v7376
      %7654 = vst [vmem:[#allocation3 + $0x40] sm:$0xf] %v7386
      %7655 = vst [vmem:[#allocation3 + $0x44] sm:$0xf] %v7396
      %7656 = vst [vmem:[#allocation3 + $0x48] sm:$0xf] %v7406
      %7657 = vst [vmem:[#allocation3 + $0x4c] sm:$0xf] %v7416
      %7658 = vst [vmem:[#allocation3 + $0x50] sm:$0xf] %v7426
      %7659 = vst [vmem:[#allocation3 + $0x54] sm:$0xf] %v7436
      %7660 = vst [vmem:[#allocation3 + $0x58] sm:$0xf] %v7446
      %7661 = vst [vmem:[#allocation3 + $0x5c] sm:$0xf] %v7456
      %7662 = vst [vmem:[#allocation3 + $0x60] sm:$0xf] %v7466
      %7663 = vst [vmem:[#allocation3 + $0x64] sm:$0xf] %v7476
      %7664 = vst [vmem:[#allocation3 + $0x68] sm:$0xf] %v7486
      %7665 = vst [vmem:[#allocation3 + $0x6c] sm:$0xf] %v7496
      %7666 = vst [vmem:[#allocation3 + $0x70] sm:$0xf] %v7506
      %7667 = vst [vmem:[#allocation3 + $0x74] sm:$0xf] %v7516
      %7668 = vst [vmem:[#allocation3 + $0x78] sm:$0xf] %v7526
      %7669 = vst [vmem:[#allocation3 + $0x7c] sm:$0xf] %v7536
      %7670 = vst [vmem:[#allocation3 + $0x80] sm:$0xf] %v7546
      %7671 = vst [vmem:[#allocation3 + $0x84] sm:$0xf] %v7556
      %7672 = vst [vmem:[#allocation3 + $0x88] sm:$0xf] %v7566
      %7673 = vst [vmem:[#allocation3 + $0x8c] sm:$0xf] %v7576
      %7674 = vst [vmem:[#allocation3 + $0x90] sm:$0xf] %v7586
      %7675 = vst [vmem:[#allocation3 + $0x94] sm:$0xf] %v7596
      %v7676 = vld [vmem:[#allocation3 + $0x98] sm:$0x3]
      %v7677 = vsel %vm7235, %v7597, %v7676
      %7678 = vst [vmem:[#allocation3 + $0x98] sm:$0x3] %v7677
      %v7679 = vld [vmem:[#allocation3 + $0x98] sm:$0xe]
      %v7680 = vsel %vm7637, 0, %v7679
      %7681 = vst [vmem:[#allocation3 + $0x98] sm:$0xe] %v7680
      %7682 = vst [vmem:[#allocation3 + $0x9c] sm:$0xf] 0
      %7683 = vst [vmem:[#allocation3 + $0xa0] sm:$0xf] 0
      %v7684 = vld [vmem:[#allocation3] sm:$0xf]
      %v7685 = vld [vmem:[#allocation3 + $0x4] sm:$0xf]
      %v7686 = vld [vmem:[#allocation3 + $0x8] sm:$0xf]
      %v7687 = vld [vmem:[#allocation3 + $0xc] sm:$0xf]
      %v7688 = vld [vmem:[#allocation3 + $0x10] sm:$0xf]
      %v7689 = vld [vmem:[#allocation3 + $0x14] sm:$0xf]
      %v7690 = vld [vmem:[#allocation3 + $0x18] sm:$0xf]
      %v7691 = vld [vmem:[#allocation3 + $0x1c] sm:$0xf]
      %v7692 = vld [vmem:[#allocation3 + $0x20] sm:$0xf]
      %v7693 = vld [vmem:[#allocation3 + $0x24] sm:$0xf]
      %v7694 = vld [vmem:[#allocation3 + $0x28] sm:$0xf]
      %v7695 = vld [vmem:[#allocation3 + $0x2c] sm:$0xf]
      %v7696 = vld [vmem:[#allocation3 + $0x30] sm:$0xf]
      %v7697 = vld [vmem:[#allocation3 + $0x34] sm:$0xf]
      %v7698 = vld [vmem:[#allocation3 + $0x38] sm:$0xf]
      %v7699 = vld [vmem:[#allocation3 + $0x3c] sm:$0xf]
      %v7700 = vld [vmem:[#allocation3 + $0x40] sm:$0xf]
      %v7701 = vld [vmem:[#allocation3 + $0x44] sm:$0xf]
      %v7702 = vld [vmem:[#allocation3 + $0x48] sm:$0xf]
      %v7703 = vld [vmem:[#allocation3 + $0x4c] sm:$0xf]
      %v7704 = vld [vmem:[#allocation3 + $0x50] sm:$0xf]
      %v7705 = vld [vmem:[#allocation3 + $0x54] sm:$0xf]
      %v7706 = vld [vmem:[#allocation3 + $0x58] sm:$0xf]
      %v7707 = vld [vmem:[#allocation3 + $0x5c] sm:$0xf]
      %v7708 = vld [vmem:[#allocation3 + $0x60] sm:$0xf]
      %v7709 = vld [vmem:[#allocation3 + $0x64] sm:$0xf]
      %v7710 = vld [vmem:[#allocation3 + $0x68] sm:$0xf]
      %v7711 = vld [vmem:[#allocation3 + $0x6c] sm:$0xf]
      %v7712 = vld [vmem:[#allocation3 + $0x70] sm:$0xf]
      %v7713 = vld [vmem:[#allocation3 + $0x74] sm:$0xf]
      %v7714 = vld [vmem:[#allocation3 + $0x78] sm:$0xf]
      %v7715 = vld [vmem:[#allocation3 + $0x7c] sm:$0xf]
      %v7716 = vld [vmem:[#allocation3 + $0x80] sm:$0xf]
      %v7717 = vld [vmem:[#allocation3 + $0x84] sm:$0xf]
      %v7718 = vld [vmem:[#allocation3 + $0x88] sm:$0xf]
      %v7719 = vld [vmem:[#allocation3 + $0x8c] sm:$0xf]
      %7720 = vst [vmem:[#allocation5] sm:$0xf] %v7684
      %7721 = vst [vmem:[#allocation5 + $0x24] sm:$0xf] %v7685
      %7722 = vst [vmem:[#allocation5 + $0x48] sm:$0xf] %v7686
      %7723 = vst [vmem:[#allocation5 + $0x6c] sm:$0xf] %v7687
      %7724 = vst [vmem:[#allocation5 + $0x90] sm:$0xf] %v7688
      %7725 = vst [vmem:[#allocation5 + $0xb4] sm:$0xf] %v7689
      %7726 = vst [vmem:[#allocation5 + $0xd8] sm:$0xf] %v7690
      %7727 = vst [vmem:[#allocation5 + $0xfc] sm:$0xf] %v7691
      %7728 = vst [vmem:[#allocation5 + $0x120] sm:$0xf] %v7692
      %7729 = vst [vmem:[#allocation5 + $0x144] sm:$0xf] %v7693
      %7730 = vst [vmem:[#allocation5 + $0x168] sm:$0xf] %v7694
      %7731 = vst [vmem:[#allocation5 + $0x18c] sm:$0xf] %v7695
      %7732 = vst [vmem:[#allocation5 + $0x1b0] sm:$0xf] %v7696
      %7733 = vst [vmem:[#allocation5 + $0x1d4] sm:$0xf] %v7697
      %7734 = vst [vmem:[#allocation5 + $0x1f8] sm:$0xf] %v7698
      %7735 = vst [vmem:[#allocation5 + $0x21c] sm:$0xf] %v7699
      %7736 = vst [vmem:[#allocation5 + $0x240] sm:$0xf] %v7700
      %7737 = vst [vmem:[#allocation5 + $0x264] sm:$0xf] %v7701
      %7738 = vst [vmem:[#allocation5 + $0x288] sm:$0xf] %v7702
      %7739 = vst [vmem:[#allocation5 + $0x2ac] sm:$0xf] %v7703
      %7740 = vst [vmem:[#allocation5 + $0x2d0] sm:$0xf] %v7704
      %7741 = vst [vmem:[#allocation5 + $0x2f4] sm:$0xf] %v7705
      %7742 = vst [vmem:[#allocation5 + $0x318] sm:$0xf] %v7706
      %7743 = vst [vmem:[#allocation5 + $0x33c] sm:$0xf] %v7707
      %7744 = vst [vmem:[#allocation5 + $0x360] sm:$0xf] %v7708
      %7745 = vst [vmem:[#allocation5 + $0x384] sm:$0xf] %v7709
      %7746 = vst [vmem:[#allocation5 + $0x3a8] sm:$0xf] %v7710
      %7747 = vst [vmem:[#allocation5 + $0x3cc] sm:$0xf] %v7711
      %7748 = vst [vmem:[#allocation5 + $0x3f0] sm:$0xf] %v7712
      %7749 = vst [vmem:[#allocation5 + $0x414] sm:$0xf] %v7713
      %7750 = vst [vmem:[#allocation5 + $0x438] sm:$0xf] %v7714
      %7751 = vst [vmem:[#allocation5 + $0x45c] sm:$0xf] %v7715
      %7752 = vst [vmem:[#allocation5 + $0x480] sm:$0xf] %v7716
      %7753 = vst [vmem:[#allocation5 + $0x4a4] sm:$0xf] %v7717
      %7754 = vst [vmem:[#allocation5 + $0x4c8] sm:$0xf] %v7718
      %7755 = vst [vmem:[#allocation5 + $0x4ec] sm:$0xf] %v7719
      %v7756 = vld [vmem:[#allocation3] sm:$0xf]
      %v7757 = vld [vmem:[#allocation3 + $0x4] sm:$0xf]
      %v7758 = vld [vmem:[#allocation3 + $0x8] sm:$0xf]
      %v7759 = vld [vmem:[#allocation3 + $0xc] sm:$0xf]
      %v7760 = vld [vmem:[#allocation3 + $0x10] sm:$0xf]
      %v7761 = vld [vmem:[#allocation3 + $0x14] sm:$0xf]
      %v7762 = vld [vmem:[#allocation3 + $0x18] sm:$0xf]
      %v7763 = vld [vmem:[#allocation3 + $0x1c] sm:$0xf]
      %v7764 = vld [vmem:[#allocation3 + $0x20] sm:$0xf]
      %v7765 = vld [vmem:[#allocation3 + $0x24] sm:$0xf]
      %v7766 = vld [vmem:[#allocation3 + $0x28] sm:$0xf]
      %v7767 = vld [vmem:[#allocation3 + $0x2c] sm:$0xf]
      %v7768 = vld [vmem:[#allocation3 + $0x30] sm:$0xf]
      %v7769 = vld [vmem:[#allocation3 + $0x34] sm:$0xf]
      %v7770 = vld [vmem:[#allocation3 + $0x38] sm:$0xf]
      %v7771 = vld [vmem:[#allocation3 + $0x3c] sm:$0xf]
      %v7772 = vld [vmem:[#allocation3 + $0x40] sm:$0xf]
      %v7773 = vld [vmem:[#allocation3 + $0x44] sm:$0xf]
      %v7774 = vld [vmem:[#allocation3 + $0x48] sm:$0xf]
      %v7775 = vld [vmem:[#allocation3 + $0x4c] sm:$0xf]
      %v7776 = vld [vmem:[#allocation3 + $0x50] sm:$0xf]
      %v7777 = vld [vmem:[#allocation3 + $0x54] sm:$0xf]
      %v7778 = vld [vmem:[#allocation3 + $0x58] sm:$0xf]
      %v7779 = vld [vmem:[#allocation3 + $0x5c] sm:$0xf]
      %v7780 = vld [vmem:[#allocation3 + $0x60] sm:$0xf]
      %v7781 = vld [vmem:[#allocation3 + $0x64] sm:$0xf]
      %v7782 = vld [vmem:[#allocation3 + $0x68] sm:$0xf]
      %v7783 = vld [vmem:[#allocation3 + $0x6c] sm:$0xf]
      %v7784 = vld [vmem:[#allocation3 + $0x70] sm:$0xf]
      %v7785 = vld [vmem:[#allocation3 + $0x74] sm:$0xf]
      %v7786 = vld [vmem:[#allocation3 + $0x78] sm:$0xf]
      %v7787 = vld [vmem:[#allocation3 + $0x7c] sm:$0xf]
      %v7788 = vld [vmem:[#allocation3 + $0x80] sm:$0xf]
      %v7789 = vld [vmem:[#allocation3 + $0x84] sm:$0xf]
      %v7790 = vld [vmem:[#allocation3 + $0x88] sm:$0xf]
      %v7791 = vld [vmem:[#allocation3 + $0x8c] sm:$0xf]
      %v7792 = vld [vmem:[#allocation3 + $0x90] sm:$0x1]
      %v7794 = vshrl.u32 %v7756, 16
      %v7796 = vrot.slane %v7794, 4
      %v7797 = vshll.u32 %v7756, 16
      %v7799 = vrot.slane %v7797, 5
      %v7800 = vor.u32 %v7796, %v7799
      %v7801 = vrot.slane %v7800, 4
      %v7803 = vshll.u32 %v7757, 16
      %v7805 = vrot.slane %v7803, 5
      %v7806 = vsel %vm599, %v7801, %v7805
      %v7807 = vshrl.u32 %v7757, 16
      %v7809 = vrot.slane %v7807, 4
      %v7810 = vor.u32 %v7809, %v7805
      %v7811 = vrot.slane %v7810, 4
      %v7813 = vshll.u32 %v7758, 16
      %v7815 = vrot.slane %v7813, 5
      %v7816 = vsel %vm599, %v7811, %v7815
      %v7817 = vshrl.u32 %v7758, 16
      %v7819 = vrot.slane %v7817, 4
      %v7820 = vor.u32 %v7819, %v7815
      %v7821 = vrot.slane %v7820, 4
      %v7823 = vshll.u32 %v7759, 16
      %v7825 = vrot.slane %v7823, 5
      %v7826 = vsel %vm599, %v7821, %v7825
      %v7827 = vshrl.u32 %v7759, 16
      %v7829 = vrot.slane %v7827, 4
      %v7830 = vor.u32 %v7829, %v7825
      %v7831 = vrot.slane %v7830, 4
      %v7833 = vshll.u32 %v7760, 16
      %v7835 = vrot.slane %v7833, 5
      %v7836 = vsel %vm599, %v7831, %v7835
      %v7837 = vshrl.u32 %v7760, 16
      %v7839 = vrot.slane %v7837, 4
      %v7840 = vor.u32 %v7839, %v7835
      %v7841 = vrot.slane %v7840, 4
      %v7843 = vshll.u32 %v7761, 16
      %v7845 = vrot.slane %v7843, 5
      %v7846 = vsel %vm599, %v7841, %v7845
      %v7847 = vshrl.u32 %v7761, 16
      %v7849 = vrot.slane %v7847, 4
      %v7850 = vor.u32 %v7849, %v7845
      %v7851 = vrot.slane %v7850, 4
      %v7853 = vshll.u32 %v7762, 16
      %v7855 = vrot.slane %v7853, 5
      %v7856 = vsel %vm599, %v7851, %v7855
      %v7857 = vshrl.u32 %v7762, 16
      %v7859 = vrot.slane %v7857, 4
      %v7860 = vor.u32 %v7859, %v7855
      %v7861 = vrot.slane %v7860, 4
      %v7863 = vshll.u32 %v7763, 16
      %v7865 = vrot.slane %v7863, 5
      %v7866 = vsel %vm599, %v7861, %v7865
      %v7867 = vshrl.u32 %v7763, 16
      %v7869 = vrot.slane %v7867, 4
      %v7870 = vor.u32 %v7869, %v7865
      %v7871 = vrot.slane %v7870, 4
      %v7873 = vshll.u32 %v7764, 16
      %v7875 = vrot.slane %v7873, 5
      %v7876 = vsel %vm599, %v7871, %v7875
      %v7877 = vshrl.u32 %v7764, 16
      %v7879 = vrot.slane %v7877, 4
      %v7880 = vor.u32 %v7879, %v7875
      %v7881 = vrot.slane %v7880, 4
      %v7883 = vshll.u32 %v7765, 16
      %v7885 = vrot.slane %v7883, 5
      %v7886 = vsel %vm599, %v7881, %v7885
      %v7887 = vshrl.u32 %v7765, 16
      %v7889 = vrot.slane %v7887, 4
      %v7890 = vor.u32 %v7889, %v7885
      %v7891 = vrot.slane %v7890, 4
      %v7893 = vshll.u32 %v7766, 16
      %v7895 = vrot.slane %v7893, 5
      %v7896 = vsel %vm599, %v7891, %v7895
      %v7897 = vshrl.u32 %v7766, 16
      %v7899 = vrot.slane %v7897, 4
      %v7900 = vor.u32 %v7899, %v7895
      %v7901 = vrot.slane %v7900, 4
      %v7903 = vshll.u32 %v7767, 16
      %v7905 = vrot.slane %v7903, 5
      %v7906 = vsel %vm599, %v7901, %v7905
      %v7907 = vshrl.u32 %v7767, 16
      %v7909 = vrot.slane %v7907, 4
      %v7910 = vor.u32 %v7909, %v7905
      %v7911 = vrot.slane %v7910, 4
      %v7913 = vshll.u32 %v7768, 16
      %v7915 = vrot.slane %v7913, 5
      %v7916 = vsel %vm599, %v7911, %v7915
      %v7917 = vshrl.u32 %v7768, 16
      %v7919 = vrot.slane %v7917, 4
      %v7920 = vor.u32 %v7919, %v7915
      %v7921 = vrot.slane %v7920, 4
      %v7923 = vshll.u32 %v7769, 16
      %v7925 = vrot.slane %v7923, 5
      %v7926 = vsel %vm599, %v7921, %v7925
      %v7927 = vshrl.u32 %v7769, 16
      %v7929 = vrot.slane %v7927, 4
      %v7930 = vor.u32 %v7929, %v7925
      %v7931 = vrot.slane %v7930, 4
      %v7933 = vshll.u32 %v7770, 16
      %v7935 = vrot.slane %v7933, 5
      %v7936 = vsel %vm599, %v7931, %v7935
      %v7937 = vshrl.u32 %v7770, 16
      %v7939 = vrot.slane %v7937, 4
      %v7940 = vor.u32 %v7939, %v7935
      %v7941 = vrot.slane %v7940, 4
      %v7943 = vshll.u32 %v7771, 16
      %v7945 = vrot.slane %v7943, 5
      %v7946 = vsel %vm599, %v7941, %v7945
      %v7947 = vshrl.u32 %v7771, 16
      %v7949 = vrot.slane %v7947, 4
      %v7950 = vor.u32 %v7949, %v7945
      %v7951 = vrot.slane %v7950, 4
      %v7953 = vshll.u32 %v7772, 16
      %v7955 = vrot.slane %v7953, 5
      %v7956 = vsel %vm599, %v7951, %v7955
      %v7957 = vshrl.u32 %v7772, 16
      %v7959 = vrot.slane %v7957, 4
      %v7960 = vor.u32 %v7959, %v7955
      %v7961 = vrot.slane %v7960, 4
      %v7963 = vshll.u32 %v7773, 16
      %v7965 = vrot.slane %v7963, 5
      %v7966 = vsel %vm599, %v7961, %v7965
      %v7967 = vshrl.u32 %v7773, 16
      %v7969 = vrot.slane %v7967, 4
      %v7970 = vor.u32 %v7969, %v7965
      %v7971 = vrot.slane %v7970, 4
      %v7973 = vshll.u32 %v7774, 16
      %v7975 = vrot.slane %v7973, 5
      %v7976 = vsel %vm599, %v7971, %v7975
      %v7977 = vshrl.u32 %v7774, 16
      %v7979 = vrot.slane %v7977, 4
      %v7980 = vor.u32 %v7979, %v7975
      %v7981 = vrot.slane %v7980, 4
      %v7983 = vshll.u32 %v7775, 16
      %v7985 = vrot.slane %v7983, 5
      %v7986 = vsel %vm599, %v7981, %v7985
      %v7987 = vshrl.u32 %v7775, 16
      %v7989 = vrot.slane %v7987, 4
      %v7990 = vor.u32 %v7989, %v7985
      %v7991 = vrot.slane %v7990, 4
      %v7993 = vshll.u32 %v7776, 16
      %v7995 = vrot.slane %v7993, 5
      %v7996 = vsel %vm599, %v7991, %v7995
      %v7997 = vshrl.u32 %v7776, 16
      %v7999 = vrot.slane %v7997, 4
      %v8000 = vor.u32 %v7999, %v7995
      %v8001 = vrot.slane %v8000, 4
      %v8003 = vshll.u32 %v7777, 16
      %v8005 = vrot.slane %v8003, 5
      %v8006 = vsel %vm599, %v8001, %v8005
      %v8007 = vshrl.u32 %v7777, 16
      %v8009 = vrot.slane %v8007, 4
      %v8010 = vor.u32 %v8009, %v8005
      %v8011 = vrot.slane %v8010, 4
      %v8013 = vshll.u32 %v7778, 16
      %v8015 = vrot.slane %v8013, 5
      %v8016 = vsel %vm599, %v8011, %v8015
      %v8017 = vshrl.u32 %v7778, 16
      %v8019 = vrot.slane %v8017, 4
      %v8020 = vor.u32 %v8019, %v8015
      %v8021 = vrot.slane %v8020, 4
      %v8023 = vshll.u32 %v7779, 16
      %v8025 = vrot.slane %v8023, 5
      %v8026 = vsel %vm599, %v8021, %v8025
      %v8027 = vshrl.u32 %v7779, 16
      %v8029 = vrot.slane %v8027, 4
      %v8030 = vor.u32 %v8029, %v8025
      %v8031 = vrot.slane %v8030, 4
      %v8033 = vshll.u32 %v7780, 16
      %v8035 = vrot.slane %v8033, 5
      %v8036 = vsel %vm599, %v8031, %v8035
      %v8037 = vshrl.u32 %v7780, 16
      %v8039 = vrot.slane %v8037, 4
      %v8040 = vor.u32 %v8039, %v8035
      %v8041 = vrot.slane %v8040, 4
      %v8043 = vshll.u32 %v7781, 16
      %v8045 = vrot.slane %v8043, 5
      %v8046 = vsel %vm599, %v8041, %v8045
      %v8047 = vshrl.u32 %v7781, 16
      %v8049 = vrot.slane %v8047, 4
      %v8050 = vor.u32 %v8049, %v8045
      %v8051 = vrot.slane %v8050, 4
      %v8053 = vshll.u32 %v7782, 16
      %v8055 = vrot.slane %v8053, 5
      %v8056 = vsel %vm599, %v8051, %v8055
      %v8057 = vshrl.u32 %v7782, 16
      %v8059 = vrot.slane %v8057, 4
      %v8060 = vor.u32 %v8059, %v8055
      %v8061 = vrot.slane %v8060, 4
      %v8063 = vshll.u32 %v7783, 16
      %v8065 = vrot.slane %v8063, 5
      %v8066 = vsel %vm599, %v8061, %v8065
      %v8067 = vshrl.u32 %v7783, 16
      %v8069 = vrot.slane %v8067, 4
      %v8070 = vor.u32 %v8069, %v8065
      %v8071 = vrot.slane %v8070, 4
      %v8073 = vshll.u32 %v7784, 16
      %v8075 = vrot.slane %v8073, 5
      %v8076 = vsel %vm599, %v8071, %v8075
      %v8077 = vshrl.u32 %v7784, 16
      %v8079 = vrot.slane %v8077, 4
      %v8080 = vor.u32 %v8079, %v8075
      %v8081 = vrot.slane %v8080, 4
      %v8083 = vshll.u32 %v7785, 16
      %v8085 = vrot.slane %v8083, 5
      %v8086 = vsel %vm599, %v8081, %v8085
      %v8087 = vshrl.u32 %v7785, 16
      %v8089 = vrot.slane %v8087, 4
      %v8090 = vor.u32 %v8089, %v8085
      %v8091 = vrot.slane %v8090, 4
      %v8093 = vshll.u32 %v7786, 16
      %v8095 = vrot.slane %v8093, 5
      %v8096 = vsel %vm599, %v8091, %v8095
      %v8097 = vshrl.u32 %v7786, 16
      %v8099 = vrot.slane %v8097, 4
      %v8100 = vor.u32 %v8099, %v8095
      %v8101 = vrot.slane %v8100, 4
      %v8103 = vshll.u32 %v7787, 16
      %v8105 = vrot.slane %v8103, 5
      %v8106 = vsel %vm599, %v8101, %v8105
      %v8107 = vshrl.u32 %v7787, 16
      %v8109 = vrot.slane %v8107, 4
      %v8110 = vor.u32 %v8109, %v8105
      %v8111 = vrot.slane %v8110, 4
      %v8113 = vshll.u32 %v7788, 16
      %v8115 = vrot.slane %v8113, 5
      %v8116 = vsel %vm599, %v8111, %v8115
      %v8117 = vshrl.u32 %v7788, 16
      %v8119 = vrot.slane %v8117, 4
      %v8120 = vor.u32 %v8119, %v8115
      %v8121 = vrot.slane %v8120, 4
      %v8123 = vshll.u32 %v7789, 16
      %v8125 = vrot.slane %v8123, 5
      %v8126 = vsel %vm599, %v8121, %v8125
      %v8127 = vshrl.u32 %v7789, 16
      %v8129 = vrot.slane %v8127, 4
      %v8130 = vor.u32 %v8129, %v8125
      %v8131 = vrot.slane %v8130, 4
      %v8133 = vshll.u32 %v7790, 16
      %v8135 = vrot.slane %v8133, 5
      %v8136 = vsel %vm599, %v8131, %v8135
      %v8137 = vshrl.u32 %v7790, 16
      %v8139 = vrot.slane %v8137, 4
      %v8140 = vor.u32 %v8139, %v8135
      %v8141 = vrot.slane %v8140, 4
      %v8143 = vshll.u32 %v7791, 16
      %v8145 = vrot.slane %v8143, 5
      %v8146 = vsel %vm599, %v8141, %v8145
      %v8147 = vshrl.u32 %v7791, 16
      %v8149 = vrot.slane %v8147, 4
      %v8150 = vor.u32 %v8149, %v8145
      %v8151 = vrot.slane %v8150, 4
      %v8153 = vshll.u32 %v7792, 16
      %v8155 = vrot.slane %v8153, 5
      %v8156 = vsel %vm599, %v8151, %v8155
      %8193 = vst [vmem:[#allocation5 + $0x4] sm:$0xf] %v7806
      %8194 = vst [vmem:[#allocation5 + $0x28] sm:$0xf] %v7816
      %8195 = vst [vmem:[#allocation5 + $0x4c] sm:$0xf] %v7826
      %8196 = vst [vmem:[#allocation5 + $0x70] sm:$0xf] %v7836
      %8197 = vst [vmem:[#allocation5 + $0x94] sm:$0xf] %v7846
      %8198 = vst [vmem:[#allocation5 + $0xb8] sm:$0xf] %v7856
      %8199 = vst [vmem:[#allocation5 + $0xdc] sm:$0xf] %v7866
      %8200 = vst [vmem:[#allocation5 + $0x100] sm:$0xf] %v7876
      %8201 = vst [vmem:[#allocation5 + $0x124] sm:$0xf] %v7886
      %8202 = vst [vmem:[#allocation5 + $0x148] sm:$0xf] %v7896
      %8203 = vst [vmem:[#allocation5 + $0x16c] sm:$0xf] %v7906
      %8204 = vst [vmem:[#allocation5 + $0x190] sm:$0xf] %v7916
      %8205 = vst [vmem:[#allocation5 + $0x1b4] sm:$0xf] %v7926
      %8206 = vst [vmem:[#allocation5 + $0x1d8] sm:$0xf] %v7936
      %8207 = vst [vmem:[#allocation5 + $0x1fc] sm:$0xf] %v7946
      %8208 = vst [vmem:[#allocation5 + $0x220] sm:$0xf] %v7956
      %8209 = vst [vmem:[#allocation5 + $0x244] sm:$0xf] %v7966
      %8210 = vst [vmem:[#allocation5 + $0x268] sm:$0xf] %v7976
      %8211 = vst [vmem:[#allocation5 + $0x28c] sm:$0xf] %v7986
      %8212 = vst [vmem:[#allocation5 + $0x2b0] sm:$0xf] %v7996
      %8213 = vst [vmem:[#allocation5 + $0x2d4] sm:$0xf] %v8006
      %8214 = vst [vmem:[#allocation5 + $0x2f8] sm:$0xf] %v8016
      %8215 = vst [vmem:[#allocation5 + $0x31c] sm:$0xf] %v8026
      %8216 = vst [vmem:[#allocation5 + $0x340] sm:$0xf] %v8036
      %8217 = vst [vmem:[#allocation5 + $0x364] sm:$0xf] %v8046
      %8218 = vst [vmem:[#allocation5 + $0x388] sm:$0xf] %v8056
      %8219 = vst [vmem:[#allocation5 + $0x3ac] sm:$0xf] %v8066
      %8220 = vst [vmem:[#allocation5 + $0x3d0] sm:$0xf] %v8076
      %8221 = vst [vmem:[#allocation5 + $0x3f4] sm:$0xf] %v8086
      %8222 = vst [vmem:[#allocation5 + $0x418] sm:$0xf] %v8096
      %8223 = vst [vmem:[#allocation5 + $0x43c] sm:$0xf] %v8106
      %8224 = vst [vmem:[#allocation5 + $0x460] sm:$0xf] %v8116
      %8225 = vst [vmem:[#allocation5 + $0x484] sm:$0xf] %v8126
      %8226 = vst [vmem:[#allocation5 + $0x4a8] sm:$0xf] %v8136
      %8227 = vst [vmem:[#allocation5 + $0x4cc] sm:$0xf] %v8146
      %8228 = vst [vmem:[#allocation5 + $0x4f0] sm:$0xf] %v8156
      %v8229 = vld [vmem:[#allocation3] sm:$0xe]
      %v8230 = vld [vmem:[#allocation3 + $0x4] sm:$0xf]
      %v8231 = vld [vmem:[#allocation3 + $0x8] sm:$0xf]
      %v8232 = vld [vmem:[#allocation3 + $0xc] sm:$0xf]
      %v8233 = vld [vmem:[#allocation3 + $0x10] sm:$0xf]
      %v8234 = vld [vmem:[#allocation3 + $0x14] sm:$0xf]
      %v8235 = vld [vmem:[#allocation3 + $0x18] sm:$0xf]
      %v8236 = vld [vmem:[#allocation3 + $0x1c] sm:$0xf]
      %v8237 = vld [vmem:[#allocation3 + $0x20] sm:$0xf]
      %v8238 = vld [vmem:[#allocation3 + $0x24] sm:$0xf]
      %v8239 = vld [vmem:[#allocation3 + $0x28] sm:$0xf]
      %v8240 = vld [vmem:[#allocation3 + $0x2c] sm:$0xf]
      %v8241 = vld [vmem:[#allocation3 + $0x30] sm:$0xf]
      %v8242 = vld [vmem:[#allocation3 + $0x34] sm:$0xf]
      %v8243 = vld [vmem:[#allocation3 + $0x38] sm:$0xf]
      %v8244 = vld [vmem:[#allocation3 + $0x3c] sm:$0xf]
      %v8245 = vld [vmem:[#allocation3 + $0x40] sm:$0xf]
      %v8246 = vld [vmem:[#allocation3 + $0x44] sm:$0xf]
      %v8247 = vld [vmem:[#allocation3 + $0x48] sm:$0xf]
      %v8248 = vld [vmem:[#allocation3 + $0x4c] sm:$0xf]
      %v8249 = vld [vmem:[#allocation3 + $0x50] sm:$0xf]
      %v8250 = vld [vmem:[#allocation3 + $0x54] sm:$0xf]
      %v8251 = vld [vmem:[#allocation3 + $0x58] sm:$0xf]
      %v8252 = vld [vmem:[#allocation3 + $0x5c] sm:$0xf]
      %v8253 = vld [vmem:[#allocation3 + $0x60] sm:$0xf]
      %v8254 = vld [vmem:[#allocation3 + $0x64] sm:$0xf]
      %v8255 = vld [vmem:[#allocation3 + $0x68] sm:$0xf]
      %v8256 = vld [vmem:[#allocation3 + $0x6c] sm:$0xf]
      %v8257 = vld [vmem:[#allocation3 + $0x70] sm:$0xf]
      %v8258 = vld [vmem:[#allocation3 + $0x74] sm:$0xf]
      %v8259 = vld [vmem:[#allocation3 + $0x78] sm:$0xf]
      %v8260 = vld [vmem:[#allocation3 + $0x7c] sm:$0xf]
      %v8261 = vld [vmem:[#allocation3 + $0x80] sm:$0xf]
      %v8262 = vld [vmem:[#allocation3 + $0x84] sm:$0xf]
      %v8263 = vld [vmem:[#allocation3 + $0x88] sm:$0xf]
      %v8264 = vld [vmem:[#allocation3 + $0x8c] sm:$0xf]
      %v8265 = vld [vmem:[#allocation3 + $0x90] sm:$0x1]
      %v8303 = vrot.slane %v8229, 5
      %v8304 = vrot.slane %v8303, 4
      %v8305 = vrot.slane %v8230, 5
      %v8306 = vsel %vm1112, %v8304, %v8305
      %v8307 = vrot.slane %v8305, 4
      %v8308 = vrot.slane %v8231, 5
      %v8309 = vsel %vm1112, %v8307, %v8308
      %v8310 = vrot.slane %v8308, 4
      %v8311 = vrot.slane %v8232, 5
      %v8312 = vsel %vm1112, %v8310, %v8311
      %v8313 = vrot.slane %v8311, 4
      %v8314 = vrot.slane %v8233, 5
      %v8315 = vsel %vm1112, %v8313, %v8314
      %v8316 = vrot.slane %v8314, 4
      %v8317 = vrot.slane %v8234, 5
      %v8318 = vsel %vm1112, %v8316, %v8317
      %v8319 = vrot.slane %v8317, 4
      %v8320 = vrot.slane %v8235, 5
      %v8321 = vsel %vm1112, %v8319, %v8320
      %v8322 = vrot.slane %v8320, 4
      %v8323 = vrot.slane %v8236, 5
      %v8324 = vsel %vm1112, %v8322, %v8323
      %v8325 = vrot.slane %v8323, 4
      %v8326 = vrot.slane %v8237, 5
      %v8327 = vsel %vm1112, %v8325, %v8326
      %v8328 = vrot.slane %v8326, 4
      %v8329 = vrot.slane %v8238, 5
      %v8330 = vsel %vm1112, %v8328, %v8329
      %v8331 = vrot.slane %v8329, 4
      %v8332 = vrot.slane %v8239, 5
      %v8333 = vsel %vm1112, %v8331, %v8332
      %v8334 = vrot.slane %v8332, 4
      %v8335 = vrot.slane %v8240, 5
      %v8336 = vsel %vm1112, %v8334, %v8335
      %v8337 = vrot.slane %v8335, 4
      %v8338 = vrot.slane %v8241, 5
      %v8339 = vsel %vm1112, %v8337, %v8338
      %v8340 = vrot.slane %v8338, 4
      %v8341 = vrot.slane %v8242, 5
      %v8342 = vsel %vm1112, %v8340, %v8341
      %v8343 = vrot.slane %v8341, 4
      %v8344 = vrot.slane %v8243, 5
      %v8345 = vsel %vm1112, %v8343, %v8344
      %v8346 = vrot.slane %v8344, 4
      %v8347 = vrot.slane %v8244, 5
      %v8348 = vsel %vm1112, %v8346, %v8347
      %v8349 = vrot.slane %v8347, 4
      %v8350 = vrot.slane %v8245, 5
      %v8351 = vsel %vm1112, %v8349, %v8350
      %v8352 = vrot.slane %v8350, 4
      %v8353 = vrot.slane %v8246, 5
      %v8354 = vsel %vm1112, %v8352, %v8353
      %v8355 = vrot.slane %v8353, 4
      %v8356 = vrot.slane %v8247, 5
      %v8357 = vsel %vm1112, %v8355, %v8356
      %v8358 = vrot.slane %v8356, 4
      %v8359 = vrot.slane %v8248, 5
      %v8360 = vsel %vm1112, %v8358, %v8359
      %v8361 = vrot.slane %v8359, 4
      %v8362 = vrot.slane %v8249, 5
      %v8363 = vsel %vm1112, %v8361, %v8362
      %v8364 = vrot.slane %v8362, 4
      %v8365 = vrot.slane %v8250, 5
      %v8366 = vsel %vm1112, %v8364, %v8365
      %v8367 = vrot.slane %v8365, 4
      %v8368 = vrot.slane %v8251, 5
      %v8369 = vsel %vm1112, %v8367, %v8368
      %v8370 = vrot.slane %v8368, 4
      %v8371 = vrot.slane %v8252, 5
      %v8372 = vsel %vm1112, %v8370, %v8371
      %v8373 = vrot.slane %v8371, 4
      %v8374 = vrot.slane %v8253, 5
      %v8375 = vsel %vm1112, %v8373, %v8374
      %v8376 = vrot.slane %v8374, 4
      %v8377 = vrot.slane %v8254, 5
      %v8378 = vsel %vm1112, %v8376, %v8377
      %v8379 = vrot.slane %v8377, 4
      %v8380 = vrot.slane %v8255, 5
      %v8381 = vsel %vm1112, %v8379, %v8380
      %v8382 = vrot.slane %v8380, 4
      %v8383 = vrot.slane %v8256, 5
      %v8384 = vsel %vm1112, %v8382, %v8383
      %v8385 = vrot.slane %v8383, 4
      %v8386 = vrot.slane %v8257, 5
      %v8387 = vsel %vm1112, %v8385, %v8386
      %v8388 = vrot.slane %v8386, 4
      %v8389 = vrot.slane %v8258, 5
      %v8390 = vsel %vm1112, %v8388, %v8389
      %v8391 = vrot.slane %v8389, 4
      %v8392 = vrot.slane %v8259, 5
      %v8393 = vsel %vm1112, %v8391, %v8392
      %v8394 = vrot.slane %v8392, 4
      %v8395 = vrot.slane %v8260, 5
      %v8396 = vsel %vm1112, %v8394, %v8395
      %v8397 = vrot.slane %v8395, 4
      %v8398 = vrot.slane %v8261, 5
      %v8399 = vsel %vm1112, %v8397, %v8398
      %v8400 = vrot.slane %v8398, 4
      %v8401 = vrot.slane %v8262, 5
      %v8402 = vsel %vm1112, %v8400, %v8401
      %v8403 = vrot.slane %v8401, 4
      %v8404 = vrot.slane %v8263, 5
      %v8405 = vsel %vm1112, %v8403, %v8404
      %v8406 = vrot.slane %v8404, 4
      %v8407 = vrot.slane %v8264, 5
      %v8408 = vsel %vm1112, %v8406, %v8407
      %v8409 = vrot.slane %v8407, 4
      %v8410 = vrot.slane %v8265, 5
      %v8411 = vsel %vm1112, %v8409, %v8410
      %8448 = vst [vmem:[#allocation5 + $0x8] sm:$0xf] %v8306
      %8449 = vst [vmem:[#allocation5 + $0x2c] sm:$0xf] %v8309
      %8450 = vst [vmem:[#allocation5 + $0x50] sm:$0xf] %v8312
      %8451 = vst [vmem:[#allocation5 + $0x74] sm:$0xf] %v8315
      %8452 = vst [vmem:[#allocation5 + $0x98] sm:$0xf] %v8318
      %8453 = vst [vmem:[#allocation5 + $0xbc] sm:$0xf] %v8321
      %8454 = vst [vmem:[#allocation5 + $0xe0] sm:$0xf] %v8324
      %8455 = vst [vmem:[#allocation5 + $0x104] sm:$0xf] %v8327
      %8456 = vst [vmem:[#allocation5 + $0x128] sm:$0xf] %v8330
      %8457 = vst [vmem:[#allocation5 + $0x14c] sm:$0xf] %v8333
      %8458 = vst [vmem:[#allocation5 + $0x170] sm:$0xf] %v8336
      %8459 = vst [vmem:[#allocation5 + $0x194] sm:$0xf] %v8339
      %8460 = vst [vmem:[#allocation5 + $0x1b8] sm:$0xf] %v8342
      %8461 = vst [vmem:[#allocation5 + $0x1dc] sm:$0xf] %v8345
      %8462 = vst [vmem:[#allocation5 + $0x200] sm:$0xf] %v8348
      %8463 = vst [vmem:[#allocation5 + $0x224] sm:$0xf] %v8351
      %8464 = vst [vmem:[#allocation5 + $0x248] sm:$0xf] %v8354
      %8465 = vst [vmem:[#allocation5 + $0x26c] sm:$0xf] %v8357
      %8466 = vst [vmem:[#allocation5 + $0x290] sm:$0xf] %v8360
      %8467 = vst [vmem:[#allocation5 + $0x2b4] sm:$0xf] %v8363
      %8468 = vst [vmem:[#allocation5 + $0x2d8] sm:$0xf] %v8366
      %8469 = vst [vmem:[#allocation5 + $0x2fc] sm:$0xf] %v8369
      %8470 = vst [vmem:[#allocation5 + $0x320] sm:$0xf] %v8372
      %8471 = vst [vmem:[#allocation5 + $0x344] sm:$0xf] %v8375
      %8472 = vst [vmem:[#allocation5 + $0x368] sm:$0xf] %v8378
      %8473 = vst [vmem:[#allocation5 + $0x38c] sm:$0xf] %v8381
      %8474 = vst [vmem:[#allocation5 + $0x3b0] sm:$0xf] %v8384
      %8475 = vst [vmem:[#allocation5 + $0x3d4] sm:$0xf] %v8387
      %8476 = vst [vmem:[#allocation5 + $0x3f8] sm:$0xf] %v8390
      %8477 = vst [vmem:[#allocation5 + $0x41c] sm:$0xf] %v8393
      %8478 = vst [vmem:[#allocation5 + $0x440] sm:$0xf] %v8396
      %8479 = vst [vmem:[#allocation5 + $0x464] sm:$0xf] %v8399
      %8480 = vst [vmem:[#allocation5 + $0x488] sm:$0xf] %v8402
      %8481 = vst [vmem:[#allocation5 + $0x4ac] sm:$0xf] %v8405
      %8482 = vst [vmem:[#allocation5 + $0x4d0] sm:$0xf] %v8408
      %8483 = vst [vmem:[#allocation5 + $0x4f4] sm:$0xf] %v8411
      %v8484 = vld [vmem:[#allocation3 + $0x8] sm:$0xe]
      %v8485 = vld [vmem:[#allocation3 + $0xc] sm:$0xf]
      %v8486 = vld [vmem:[#allocation3 + $0x10] sm:$0xf]
      %v8487 = vld [vmem:[#allocation3 + $0x14] sm:$0xf]
      %v8488 = vld [vmem:[#allocation3 + $0x18] sm:$0xf]
      %v8489 = vld [vmem:[#allocation3 + $0x1c] sm:$0xf]
      %v8490 = vld [vmem:[#allocation3 + $0x20] sm:$0xf]
      %v8491 = vld [vmem:[#allocation3 + $0x24] sm:$0xf]
      %v8492 = vld [vmem:[#allocation3 + $0x28] sm:$0xf]
      %v8493 = vld [vmem:[#allocation3 + $0x2c] sm:$0xf]
      %v8494 = vld [vmem:[#allocation3 + $0x30] sm:$0xf]
      %v8495 = vld [vmem:[#allocation3 + $0x34] sm:$0xf]
      %v8496 = vld [vmem:[#allocation3 + $0x38] sm:$0xf]
      %v8497 = vld [vmem:[#allocation3 + $0x3c] sm:$0xf]
      %v8498 = vld [vmem:[#allocation3 + $0x40] sm:$0xf]
      %v8499 = vld [vmem:[#allocation3 + $0x44] sm:$0xf]
      %v8500 = vld [vmem:[#allocation3 + $0x48] sm:$0xf]
      %v8501 = vld [vmem:[#allocation3 + $0x4c] sm:$0xf]
      %v8502 = vld [vmem:[#allocation3 + $0x50] sm:$0xf]
      %v8503 = vld [vmem:[#allocation3 + $0x54] sm:$0xf]
      %v8504 = vld [vmem:[#allocation3 + $0x58] sm:$0xf]
      %v8505 = vld [vmem:[#allocation3 + $0x5c] sm:$0xf]
      %v8506 = vld [vmem:[#allocation3 + $0x60] sm:$0xf]
      %v8507 = vld [vmem:[#allocation3 + $0x64] sm:$0xf]
      %v8508 = vld [vmem:[#allocation3 + $0x68] sm:$0xf]
      %v8509 = vld [vmem:[#allocation3 + $0x6c] sm:$0xf]
      %v8510 = vld [vmem:[#allocation3 + $0x70] sm:$0xf]
      %v8511 = vld [vmem:[#allocation3 + $0x74] sm:$0xf]
      %v8512 = vld [vmem:[#allocation3 + $0x78] sm:$0xf]
      %v8513 = vld [vmem:[#allocation3 + $0x7c] sm:$0xf]
      %v8514 = vld [vmem:[#allocation3 + $0x80] sm:$0xf]
      %v8515 = vld [vmem:[#allocation3 + $0x84] sm:$0xf]
      %v8516 = vld [vmem:[#allocation3 + $0x88] sm:$0xf]
      %v8517 = vld [vmem:[#allocation3 + $0x8c] sm:$0xf]
      %v8518 = vld [vmem:[#allocation3 + $0x90] sm:$0xf]
      %v8519 = vld [vmem:[#allocation3 + $0x94] sm:$0xf]
      %v8520 = vld [vmem:[#allocation3 + $0x98] sm:$0x1]
      %v8558 = vrot.slane %v8484, 5
      %v8559 = vrot.slane %v8558, 4
      %v8560 = vrot.slane %v8485, 5
      %v8561 = vsel %vm1112, %v8559, %v8560
      %v8562 = vrot.slane %v8560, 4
      %v8563 = vrot.slane %v8486, 5
      %v8564 = vsel %vm1112, %v8562, %v8563
      %v8565 = vrot.slane %v8563, 4
      %v8566 = vrot.slane %v8487, 5
      %v8567 = vsel %vm1112, %v8565, %v8566
      %v8568 = vrot.slane %v8566, 4
      %v8569 = vrot.slane %v8488, 5
      %v8570 = vsel %vm1112, %v8568, %v8569
      %v8571 = vrot.slane %v8569, 4
      %v8572 = vrot.slane %v8489, 5
      %v8573 = vsel %vm1112, %v8571, %v8572
      %v8574 = vrot.slane %v8572, 4
      %v8575 = vrot.slane %v8490, 5
      %v8576 = vsel %vm1112, %v8574, %v8575
      %v8577 = vrot.slane %v8575, 4
      %v8578 = vrot.slane %v8491, 5
      %v8579 = vsel %vm1112, %v8577, %v8578
      %v8580 = vrot.slane %v8578, 4
      %v8581 = vrot.slane %v8492, 5
      %v8582 = vsel %vm1112, %v8580, %v8581
      %v8583 = vrot.slane %v8581, 4
      %v8584 = vrot.slane %v8493, 5
      %v8585 = vsel %vm1112, %v8583, %v8584
      %v8586 = vrot.slane %v8584, 4
      %v8587 = vrot.slane %v8494, 5
      %v8588 = vsel %vm1112, %v8586, %v8587
      %v8589 = vrot.slane %v8587, 4
      %v8590 = vrot.slane %v8495, 5
      %v8591 = vsel %vm1112, %v8589, %v8590
      %v8592 = vrot.slane %v8590, 4
      %v8593 = vrot.slane %v8496, 5
      %v8594 = vsel %vm1112, %v8592, %v8593
      %v8595 = vrot.slane %v8593, 4
      %v8596 = vrot.slane %v8497, 5
      %v8597 = vsel %vm1112, %v8595, %v8596
      %v8598 = vrot.slane %v8596, 4
      %v8599 = vrot.slane %v8498, 5
      %v8600 = vsel %vm1112, %v8598, %v8599
      %v8601 = vrot.slane %v8599, 4
      %v8602 = vrot.slane %v8499, 5
      %v8603 = vsel %vm1112, %v8601, %v8602
      %v8604 = vrot.slane %v8602, 4
      %v8605 = vrot.slane %v8500, 5
      %v8606 = vsel %vm1112, %v8604, %v8605
      %v8607 = vrot.slane %v8605, 4
      %v8608 = vrot.slane %v8501, 5
      %v8609 = vsel %vm1112, %v8607, %v8608
      %v8610 = vrot.slane %v8608, 4
      %v8611 = vrot.slane %v8502, 5
      %v8612 = vsel %vm1112, %v8610, %v8611
      %v8613 = vrot.slane %v8611, 4
      %v8614 = vrot.slane %v8503, 5
      %v8615 = vsel %vm1112, %v8613, %v8614
      %v8616 = vrot.slane %v8614, 4
      %v8617 = vrot.slane %v8504, 5
      %v8618 = vsel %vm1112, %v8616, %v8617
      %v8619 = vrot.slane %v8617, 4
      %v8620 = vrot.slane %v8505, 5
      %v8621 = vsel %vm1112, %v8619, %v8620
      %v8622 = vrot.slane %v8620, 4
      %v8623 = vrot.slane %v8506, 5
      %v8624 = vsel %vm1112, %v8622, %v8623
      %v8625 = vrot.slane %v8623, 4
      %v8626 = vrot.slane %v8507, 5
      %v8627 = vsel %vm1112, %v8625, %v8626
      %v8628 = vrot.slane %v8626, 4
      %v8629 = vrot.slane %v8508, 5
      %v8630 = vsel %vm1112, %v8628, %v8629
      %v8631 = vrot.slane %v8629, 4
      %v8632 = vrot.slane %v8509, 5
      %v8633 = vsel %vm1112, %v8631, %v8632
      %v8634 = vrot.slane %v8632, 4
      %v8635 = vrot.slane %v8510, 5
      %v8636 = vsel %vm1112, %v8634, %v8635
      %v8637 = vrot.slane %v8635, 4
      %v8638 = vrot.slane %v8511, 5
      %v8639 = vsel %vm1112, %v8637, %v8638
      %v8640 = vrot.slane %v8638, 4
      %v8641 = vrot.slane %v8512, 5
      %v8642 = vsel %vm1112, %v8640, %v8641
      %v8643 = vrot.slane %v8641, 4
      %v8644 = vrot.slane %v8513, 5
      %v8645 = vsel %vm1112, %v8643, %v8644
      %v8646 = vrot.slane %v8644, 4
      %v8647 = vrot.slane %v8514, 5
      %v8648 = vsel %vm1112, %v8646, %v8647
      %v8649 = vrot.slane %v8647, 4
      %v8650 = vrot.slane %v8515, 5
      %v8651 = vsel %vm1112, %v8649, %v8650
      %v8652 = vrot.slane %v8650, 4
      %v8653 = vrot.slane %v8516, 5
      %v8654 = vsel %vm1112, %v8652, %v8653
      %v8655 = vrot.slane %v8653, 4
      %v8656 = vrot.slane %v8517, 5
      %v8657 = vsel %vm1112, %v8655, %v8656
      %v8658 = vrot.slane %v8656, 4
      %v8659 = vrot.slane %v8518, 5
      %v8660 = vsel %vm1112, %v8658, %v8659
      %v8661 = vrot.slane %v8659, 4
      %v8662 = vrot.slane %v8519, 5
      %v8663 = vsel %vm1112, %v8661, %v8662
      %v8664 = vrot.slane %v8662, 4
      %v8665 = vrot.slane %v8520, 5
      %v8666 = vsel %vm1112, %v8664, %v8665
      %8703 = vst [vmem:[#allocation5 + $0xc] sm:$0xf] %v8561
      %8704 = vst [vmem:[#allocation5 + $0x30] sm:$0xf] %v8564
      %8705 = vst [vmem:[#allocation5 + $0x54] sm:$0xf] %v8567
      %8706 = vst [vmem:[#allocation5 + $0x78] sm:$0xf] %v8570
      %8707 = vst [vmem:[#allocation5 + $0x9c] sm:$0xf] %v8573
      %8708 = vst [vmem:[#allocation5 + $0xc0] sm:$0xf] %v8576
      %8709 = vst [vmem:[#allocation5 + $0xe4] sm:$0xf] %v8579
      %8710 = vst [vmem:[#allocation5 + $0x108] sm:$0xf] %v8582
      %8711 = vst [vmem:[#allocation5 + $0x12c] sm:$0xf] %v8585
      %8712 = vst [vmem:[#allocation5 + $0x150] sm:$0xf] %v8588
      %8713 = vst [vmem:[#allocation5 + $0x174] sm:$0xf] %v8591
      %8714 = vst [vmem:[#allocation5 + $0x198] sm:$0xf] %v8594
      %8715 = vst [vmem:[#allocation5 + $0x1bc] sm:$0xf] %v8597
      %8716 = vst [vmem:[#allocation5 + $0x1e0] sm:$0xf] %v8600
      %8717 = vst [vmem:[#allocation5 + $0x204] sm:$0xf] %v8603
      %8718 = vst [vmem:[#allocation5 + $0x228] sm:$0xf] %v8606
      %8719 = vst [vmem:[#allocation5 + $0x24c] sm:$0xf] %v8609
      %8720 = vst [vmem:[#allocation5 + $0x270] sm:$0xf] %v8612
      %8721 = vst [vmem:[#allocation5 + $0x294] sm:$0xf] %v8615
      %8722 = vst [vmem:[#allocation5 + $0x2b8] sm:$0xf] %v8618
      %8723 = vst [vmem:[#allocation5 + $0x2dc] sm:$0xf] %v8621
      %8724 = vst [vmem:[#allocation5 + $0x300] sm:$0xf] %v8624
      %8725 = vst [vmem:[#allocation5 + $0x324] sm:$0xf] %v8627
      %8726 = vst [vmem:[#allocation5 + $0x348] sm:$0xf] %v8630
      %8727 = vst [vmem:[#allocation5 + $0x36c] sm:$0xf] %v8633
      %8728 = vst [vmem:[#allocation5 + $0x390] sm:$0xf] %v8636
      %8729 = vst [vmem:[#allocation5 + $0x3b4] sm:$0xf] %v8639
      %8730 = vst [vmem:[#allocation5 + $0x3d8] sm:$0xf] %v8642
      %8731 = vst [vmem:[#allocation5 + $0x3fc] sm:$0xf] %v8645
      %8732 = vst [vmem:[#allocation5 + $0x420] sm:$0xf] %v8648
      %8733 = vst [vmem:[#allocation5 + $0x444] sm:$0xf] %v8651
      %8734 = vst [vmem:[#allocation5 + $0x468] sm:$0xf] %v8654
      %8735 = vst [vmem:[#allocation5 + $0x48c] sm:$0xf] %v8657
      %8736 = vst [vmem:[#allocation5 + $0x4b0] sm:$0xf] %v8660
      %8737 = vst [vmem:[#allocation5 + $0x4d4] sm:$0xf] %v8663
      %8738 = vst [vmem:[#allocation5 + $0x4f8] sm:$0xf] %v8666
      %v8739 = vld [vmem:[#allocation3 + $0x8] sm:$0xe]
      %v8740 = vld [vmem:[#allocation3 + $0xc] sm:$0xf]
      %v8741 = vld [vmem:[#allocation3 + $0x10] sm:$0xf]
      %v8742 = vld [vmem:[#allocation3 + $0x14] sm:$0xf]
      %v8743 = vld [vmem:[#allocation3 + $0x18] sm:$0xf]
      %v8744 = vld [vmem:[#allocation3 + $0x1c] sm:$0xf]
      %v8745 = vld [vmem:[#allocation3 + $0x20] sm:$0xf]
      %v8746 = vld [vmem:[#allocation3 + $0x24] sm:$0xf]
      %v8747 = vld [vmem:[#allocation3 + $0x28] sm:$0xf]
      %v8748 = vld [vmem:[#allocation3 + $0x2c] sm:$0xf]
      %v8749 = vld [vmem:[#allocation3 + $0x30] sm:$0xf]
      %v8750 = vld [vmem:[#allocation3 + $0x34] sm:$0xf]
      %v8751 = vld [vmem:[#allocation3 + $0x38] sm:$0xf]
      %v8752 = vld [vmem:[#allocation3 + $0x3c] sm:$0xf]
      %v8753 = vld [vmem:[#allocation3 + $0x40] sm:$0xf]
      %v8754 = vld [vmem:[#allocation3 + $0x44] sm:$0xf]
      %v8755 = vld [vmem:[#allocation3 + $0x48] sm:$0xf]
      %v8756 = vld [vmem:[#allocation3 + $0x4c] sm:$0xf]
      %v8757 = vld [vmem:[#allocation3 + $0x50] sm:$0xf]
      %v8758 = vld [vmem:[#allocation3 + $0x54] sm:$0xf]
      %v8759 = vld [vmem:[#allocation3 + $0x58] sm:$0xf]
      %v8760 = vld [vmem:[#allocation3 + $0x5c] sm:$0xf]
      %v8761 = vld [vmem:[#allocation3 + $0x60] sm:$0xf]
      %v8762 = vld [vmem:[#allocation3 + $0x64] sm:$0xf]
      %v8763 = vld [vmem:[#allocation3 + $0x68] sm:$0xf]
      %v8764 = vld [vmem:[#allocation3 + $0x6c] sm:$0xf]
      %v8765 = vld [vmem:[#allocation3 + $0x70] sm:$0xf]
      %v8766 = vld [vmem:[#allocation3 + $0x74] sm:$0xf]
      %v8767 = vld [vmem:[#allocation3 + $0x78] sm:$0xf]
      %v8768 = vld [vmem:[#allocation3 + $0x7c] sm:$0xf]
      %v8769 = vld [vmem:[#allocation3 + $0x80] sm:$0xf]
      %v8770 = vld [vmem:[#allocation3 + $0x84] sm:$0xf]
      %v8771 = vld [vmem:[#allocation3 + $0x88] sm:$0xf]
      %v8772 = vld [vmem:[#allocation3 + $0x8c] sm:$0xf]
      %v8773 = vld [vmem:[#allocation3 + $0x90] sm:$0xf]
      %v8774 = vld [vmem:[#allocation3 + $0x94] sm:$0xf]
      %v8775 = vld [vmem:[#allocation3 + $0x98] sm:$0x3]
      %v8777 = vshrl.u32 %v8739, 16
      %v8779 = vrot.slane %v8777, 5
      %v8780 = vshll.u32 %v8739, 16
      %v8782 = vrot.slane %v8780, 6
      %v8783 = vor.u32 %v8779, %v8782
      %v8784 = vrot.slane %v8783, 4
      %v8786 = vshrl.u32 %v8740, 16
      %v8788 = vrot.slane %v8786, 5
      %v8789 = vshll.u32 %v8740, 16
      %v8791 = vrot.slane %v8789, 6
      %v8792 = vor.u32 %v8788, %v8791
      %v8793 = vsel %vm1588, %v8784, %v8792
      %v8794 = vrot.slane %v8792, 4
      %v8796 = vshrl.u32 %v8741, 16
      %v8798 = vrot.slane %v8796, 5
      %v8799 = vshll.u32 %v8741, 16
      %v8801 = vrot.slane %v8799, 6
      %v8802 = vor.u32 %v8798, %v8801
      %v8803 = vsel %vm1588, %v8794, %v8802
      %v8804 = vrot.slane %v8802, 4
      %v8806 = vshrl.u32 %v8742, 16
      %v8808 = vrot.slane %v8806, 5
      %v8809 = vshll.u32 %v8742, 16
      %v8811 = vrot.slane %v8809, 6
      %v8812 = vor.u32 %v8808, %v8811
      %v8813 = vsel %vm1588, %v8804, %v8812
      %v8814 = vrot.slane %v8812, 4
      %v8816 = vshrl.u32 %v8743, 16
      %v8818 = vrot.slane %v8816, 5
      %v8819 = vshll.u32 %v8743, 16
      %v8821 = vrot.slane %v8819, 6
      %v8822 = vor.u32 %v8818, %v8821
      %v8823 = vsel %vm1588, %v8814, %v8822
      %v8824 = vrot.slane %v8822, 4
      %v8826 = vshrl.u32 %v8744, 16
      %v8828 = vrot.slane %v8826, 5
      %v8829 = vshll.u32 %v8744, 16
      %v8831 = vrot.slane %v8829, 6
      %v8832 = vor.u32 %v8828, %v8831
      %v8833 = vsel %vm1588, %v8824, %v8832
      %v8834 = vrot.slane %v8832, 4
      %v8836 = vshrl.u32 %v8745, 16
      %v8838 = vrot.slane %v8836, 5
      %v8839 = vshll.u32 %v8745, 16
      %v8841 = vrot.slane %v8839, 6
      %v8842 = vor.u32 %v8838, %v8841
      %v8843 = vsel %vm1588, %v8834, %v8842
      %v8844 = vrot.slane %v8842, 4
      %v8846 = vshrl.u32 %v8746, 16
      %v8848 = vrot.slane %v8846, 5
      %v8849 = vshll.u32 %v8746, 16
      %v8851 = vrot.slane %v8849, 6
      %v8852 = vor.u32 %v8848, %v8851
      %v8853 = vsel %vm1588, %v8844, %v8852
      %v8854 = vrot.slane %v8852, 4
      %v8856 = vshrl.u32 %v8747, 16
      %v8858 = vrot.slane %v8856, 5
      %v8859 = vshll.u32 %v8747, 16
      %v8861 = vrot.slane %v8859, 6
      %v8862 = vor.u32 %v8858, %v8861
      %v8863 = vsel %vm1588, %v8854, %v8862
      %v8864 = vrot.slane %v8862, 4
      %v8866 = vshrl.u32 %v8748, 16
      %v8868 = vrot.slane %v8866, 5
      %v8869 = vshll.u32 %v8748, 16
      %v8871 = vrot.slane %v8869, 6
      %v8872 = vor.u32 %v8868, %v8871
      %v8873 = vsel %vm1588, %v8864, %v8872
      %v8874 = vrot.slane %v8872, 4
      %v8876 = vshrl.u32 %v8749, 16
      %v8878 = vrot.slane %v8876, 5
      %v8879 = vshll.u32 %v8749, 16
      %v8881 = vrot.slane %v8879, 6
      %v8882 = vor.u32 %v8878, %v8881
      %v8883 = vsel %vm1588, %v8874, %v8882
      %v8884 = vrot.slane %v8882, 4
      %v8886 = vshrl.u32 %v8750, 16
      %v8888 = vrot.slane %v8886, 5
      %v8889 = vshll.u32 %v8750, 16
      %v8891 = vrot.slane %v8889, 6
      %v8892 = vor.u32 %v8888, %v8891
      %v8893 = vsel %vm1588, %v8884, %v8892
      %v8894 = vrot.slane %v8892, 4
      %v8896 = vshrl.u32 %v8751, 16
      %v8898 = vrot.slane %v8896, 5
      %v8899 = vshll.u32 %v8751, 16
      %v8901 = vrot.slane %v8899, 6
      %v8902 = vor.u32 %v8898, %v8901
      %v8903 = vsel %vm1588, %v8894, %v8902
      %v8904 = vrot.slane %v8902, 4
      %v8906 = vshrl.u32 %v8752, 16
      %v8908 = vrot.slane %v8906, 5
      %v8909 = vshll.u32 %v8752, 16
      %v8911 = vrot.slane %v8909, 6
      %v8912 = vor.u32 %v8908, %v8911
      %v8913 = vsel %vm1588, %v8904, %v8912
      %v8914 = vrot.slane %v8912, 4
      %v8916 = vshrl.u32 %v8753, 16
      %v8918 = vrot.slane %v8916, 5
      %v8919 = vshll.u32 %v8753, 16
      %v8921 = vrot.slane %v8919, 6
      %v8922 = vor.u32 %v8918, %v8921
      %v8923 = vsel %vm1588, %v8914, %v8922
      %v8924 = vrot.slane %v8922, 4
      %v8926 = vshrl.u32 %v8754, 16
      %v8928 = vrot.slane %v8926, 5
      %v8929 = vshll.u32 %v8754, 16
      %v8931 = vrot.slane %v8929, 6
      %v8932 = vor.u32 %v8928, %v8931
      %v8933 = vsel %vm1588, %v8924, %v8932
      %v8934 = vrot.slane %v8932, 4
      %v8936 = vshrl.u32 %v8755, 16
      %v8938 = vrot.slane %v8936, 5
      %v8939 = vshll.u32 %v8755, 16
      %v8941 = vrot.slane %v8939, 6
      %v8942 = vor.u32 %v8938, %v8941
      %v8943 = vsel %vm1588, %v8934, %v8942
      %v8944 = vrot.slane %v8942, 4
      %v8946 = vshrl.u32 %v8756, 16
      %v8948 = vrot.slane %v8946, 5
      %v8949 = vshll.u32 %v8756, 16
      %v8951 = vrot.slane %v8949, 6
      %v8952 = vor.u32 %v8948, %v8951
      %v8953 = vsel %vm1588, %v8944, %v8952
      %v8954 = vrot.slane %v8952, 4
      %v8956 = vshrl.u32 %v8757, 16
      %v8958 = vrot.slane %v8956, 5
      %v8959 = vshll.u32 %v8757, 16
      %v8961 = vrot.slane %v8959, 6
      %v8962 = vor.u32 %v8958, %v8961
      %v8963 = vsel %vm1588, %v8954, %v8962
      %v8964 = vrot.slane %v8962, 4
      %v8966 = vshrl.u32 %v8758, 16
      %v8968 = vrot.slane %v8966, 5
      %v8969 = vshll.u32 %v8758, 16
      %v8971 = vrot.slane %v8969, 6
      %v8972 = vor.u32 %v8968, %v8971
      %v8973 = vsel %vm1588, %v8964, %v8972
      %v8974 = vrot.slane %v8972, 4
      %v8976 = vshrl.u32 %v8759, 16
      %v8978 = vrot.slane %v8976, 5
      %v8979 = vshll.u32 %v8759, 16
      %v8981 = vrot.slane %v8979, 6
      %v8982 = vor.u32 %v8978, %v8981
      %v8983 = vsel %vm1588, %v8974, %v8982
      %v8984 = vrot.slane %v8982, 4
      %v8986 = vshrl.u32 %v8760, 16
      %v8988 = vrot.slane %v8986, 5
      %v8989 = vshll.u32 %v8760, 16
      %v8991 = vrot.slane %v8989, 6
      %v8992 = vor.u32 %v8988, %v8991
      %v8993 = vsel %vm1588, %v8984, %v8992
      %v8994 = vrot.slane %v8992, 4
      %v8996 = vshrl.u32 %v8761, 16
      %v8998 = vrot.slane %v8996, 5
      %v8999 = vshll.u32 %v8761, 16
      %v9001 = vrot.slane %v8999, 6
      %v9002 = vor.u32 %v8998, %v9001
      %v9003 = vsel %vm1588, %v8994, %v9002
      %v9004 = vrot.slane %v9002, 4
      %v9006 = vshrl.u32 %v8762, 16
      %v9008 = vrot.slane %v9006, 5
      %v9009 = vshll.u32 %v8762, 16
      %v9011 = vrot.slane %v9009, 6
      %v9012 = vor.u32 %v9008, %v9011
      %v9013 = vsel %vm1588, %v9004, %v9012
      %v9014 = vrot.slane %v9012, 4
      %v9016 = vshrl.u32 %v8763, 16
      %v9018 = vrot.slane %v9016, 5
      %v9019 = vshll.u32 %v8763, 16
      %v9021 = vrot.slane %v9019, 6
      %v9022 = vor.u32 %v9018, %v9021
      %v9023 = vsel %vm1588, %v9014, %v9022
      %v9024 = vrot.slane %v9022, 4
      %v9026 = vshrl.u32 %v8764, 16
      %v9028 = vrot.slane %v9026, 5
      %v9029 = vshll.u32 %v8764, 16
      %v9031 = vrot.slane %v9029, 6
      %v9032 = vor.u32 %v9028, %v9031
      %v9033 = vsel %vm1588, %v9024, %v9032
      %v9034 = vrot.slane %v9032, 4
      %v9036 = vshrl.u32 %v8765, 16
      %v9038 = vrot.slane %v9036, 5
      %v9039 = vshll.u32 %v8765, 16
      %v9041 = vrot.slane %v9039, 6
      %v9042 = vor.u32 %v9038, %v9041
      %v9043 = vsel %vm1588, %v9034, %v9042
      %v9044 = vrot.slane %v9042, 4
      %v9046 = vshrl.u32 %v8766, 16
      %v9048 = vrot.slane %v9046, 5
      %v9049 = vshll.u32 %v8766, 16
      %v9051 = vrot.slane %v9049, 6
      %v9052 = vor.u32 %v9048, %v9051
      %v9053 = vsel %vm1588, %v9044, %v9052
      %v9054 = vrot.slane %v9052, 4
      %v9056 = vshrl.u32 %v8767, 16
      %v9058 = vrot.slane %v9056, 5
      %v9059 = vshll.u32 %v8767, 16
      %v9061 = vrot.slane %v9059, 6
      %v9062 = vor.u32 %v9058, %v9061
      %v9063 = vsel %vm1588, %v9054, %v9062
      %v9064 = vrot.slane %v9062, 4
      %v9066 = vshrl.u32 %v8768, 16
      %v9068 = vrot.slane %v9066, 5
      %v9069 = vshll.u32 %v8768, 16
      %v9071 = vrot.slane %v9069, 6
      %v9072 = vor.u32 %v9068, %v9071
      %v9073 = vsel %vm1588, %v9064, %v9072
      %v9074 = vrot.slane %v9072, 4
      %v9076 = vshrl.u32 %v8769, 16
      %v9078 = vrot.slane %v9076, 5
      %v9079 = vshll.u32 %v8769, 16
      %v9081 = vrot.slane %v9079, 6
      %v9082 = vor.u32 %v9078, %v9081
      %v9083 = vsel %vm1588, %v9074, %v9082
      %v9084 = vrot.slane %v9082, 4
      %v9086 = vshrl.u32 %v8770, 16
      %v9088 = vrot.slane %v9086, 5
      %v9089 = vshll.u32 %v8770, 16
      %v9091 = vrot.slane %v9089, 6
      %v9092 = vor.u32 %v9088, %v9091
      %v9093 = vsel %vm1588, %v9084, %v9092
      %v9094 = vrot.slane %v9092, 4
      %v9096 = vshrl.u32 %v8771, 16
      %v9098 = vrot.slane %v9096, 5
      %v9099 = vshll.u32 %v8771, 16
      %v9101 = vrot.slane %v9099, 6
      %v9102 = vor.u32 %v9098, %v9101
      %v9103 = vsel %vm1588, %v9094, %v9102
      %v9104 = vrot.slane %v9102, 4
      %v9106 = vshrl.u32 %v8772, 16
      %v9108 = vrot.slane %v9106, 5
      %v9109 = vshll.u32 %v8772, 16
      %v9111 = vrot.slane %v9109, 6
      %v9112 = vor.u32 %v9108, %v9111
      %v9113 = vsel %vm1588, %v9104, %v9112
      %v9114 = vrot.slane %v9112, 4
      %v9116 = vshrl.u32 %v8773, 16
      %v9118 = vrot.slane %v9116, 5
      %v9119 = vshll.u32 %v8773, 16
      %v9121 = vrot.slane %v9119, 6
      %v9122 = vor.u32 %v9118, %v9121
      %v9123 = vsel %vm1588, %v9114, %v9122
      %v9124 = vrot.slane %v9122, 4
      %v9126 = vshrl.u32 %v8774, 16
      %v9128 = vrot.slane %v9126, 5
      %v9129 = vshll.u32 %v8774, 16
      %v9131 = vrot.slane %v9129, 6
      %v9132 = vor.u32 %v9128, %v9131
      %v9133 = vsel %vm1588, %v9124, %v9132
      %v9134 = vrot.slane %v9132, 4
      %v9136 = vshrl.u32 %v8775, 16
      %v9138 = vrot.slane %v9136, 5
      %v9139 = vshll.u32 %v8775, 16
      %v9141 = vrot.slane %v9139, 6
      %v9142 = vor.u32 %v9138, %v9141
      %v9143 = vsel %vm1588, %v9134, %v9142
      %9180 = vst [vmem:[#allocation5 + $0x10] sm:$0xf] %v8793
      %9181 = vst [vmem:[#allocation5 + $0x34] sm:$0xf] %v8803
      %9182 = vst [vmem:[#allocation5 + $0x58] sm:$0xf] %v8813
      %9183 = vst [vmem:[#allocation5 + $0x7c] sm:$0xf] %v8823
      %9184 = vst [vmem:[#allocation5 + $0xa0] sm:$0xf] %v8833
      %9185 = vst [vmem:[#allocation5 + $0xc4] sm:$0xf] %v8843
      %9186 = vst [vmem:[#allocation5 + $0xe8] sm:$0xf] %v8853
      %9187 = vst [vmem:[#allocation5 + $0x10c] sm:$0xf] %v8863
      %9188 = vst [vmem:[#allocation5 + $0x130] sm:$0xf] %v8873
      %9189 = vst [vmem:[#allocation5 + $0x154] sm:$0xf] %v8883
      %9190 = vst [vmem:[#allocation5 + $0x178] sm:$0xf] %v8893
      %9191 = vst [vmem:[#allocation5 + $0x19c] sm:$0xf] %v8903
      %9192 = vst [vmem:[#allocation5 + $0x1c0] sm:$0xf] %v8913
      %9193 = vst [vmem:[#allocation5 + $0x1e4] sm:$0xf] %v8923
      %9194 = vst [vmem:[#allocation5 + $0x208] sm:$0xf] %v8933
      %9195 = vst [vmem:[#allocation5 + $0x22c] sm:$0xf] %v8943
      %9196 = vst [vmem:[#allocation5 + $0x250] sm:$0xf] %v8953
      %9197 = vst [vmem:[#allocation5 + $0x274] sm:$0xf] %v8963
      %9198 = vst [vmem:[#allocation5 + $0x298] sm:$0xf] %v8973
      %9199 = vst [vmem:[#allocation5 + $0x2bc] sm:$0xf] %v8983
      %9200 = vst [vmem:[#allocation5 + $0x2e0] sm:$0xf] %v8993
      %9201 = vst [vmem:[#allocation5 + $0x304] sm:$0xf] %v9003
      %9202 = vst [vmem:[#allocation5 + $0x328] sm:$0xf] %v9013
      %9203 = vst [vmem:[#allocation5 + $0x34c] sm:$0xf] %v9023
      %9204 = vst [vmem:[#allocation5 + $0x370] sm:$0xf] %v9033
      %9205 = vst [vmem:[#allocation5 + $0x394] sm:$0xf] %v9043
      %9206 = vst [vmem:[#allocation5 + $0x3b8] sm:$0xf] %v9053
      %9207 = vst [vmem:[#allocation5 + $0x3dc] sm:$0xf] %v9063
      %9208 = vst [vmem:[#allocation5 + $0x400] sm:$0xf] %v9073
      %9209 = vst [vmem:[#allocation5 + $0x424] sm:$0xf] %v9083
      %9210 = vst [vmem:[#allocation5 + $0x448] sm:$0xf] %v9093
      %9211 = vst [vmem:[#allocation5 + $0x46c] sm:$0xf] %v9103
      %9212 = vst [vmem:[#allocation5 + $0x490] sm:$0xf] %v9113
      %9213 = vst [vmem:[#allocation5 + $0x4b4] sm:$0xf] %v9123
      %9214 = vst [vmem:[#allocation5 + $0x4d8] sm:$0xf] %v9133
      %9215 = vst [vmem:[#allocation5 + $0x4fc] sm:$0xf] %v9143
      %v9216 = vld [vmem:[#allocation3 + $0x8] sm:$0xc]
      %v9217 = vld [vmem:[#allocation3 + $0xc] sm:$0xf]
      %v9218 = vld [vmem:[#allocation3 + $0x10] sm:$0xf]
      %v9219 = vld [vmem:[#allocation3 + $0x14] sm:$0xf]
      %v9220 = vld [vmem:[#allocation3 + $0x18] sm:$0xf]
      %v9221 = vld [vmem:[#allocation3 + $0x1c] sm:$0xf]
      %v9222 = vld [vmem:[#allocation3 + $0x20] sm:$0xf]
      %v9223 = vld [vmem:[#allocation3 + $0x24] sm:$0xf]
      %v9224 = vld [vmem:[#allocation3 + $0x28] sm:$0xf]
      %v9225 = vld [vmem:[#allocation3 + $0x2c] sm:$0xf]
      %v9226 = vld [vmem:[#allocation3 + $0x30] sm:$0xf]
      %v9227 = vld [vmem:[#allocation3 + $0x34] sm:$0xf]
      %v9228 = vld [vmem:[#allocation3 + $0x38] sm:$0xf]
      %v9229 = vld [vmem:[#allocation3 + $0x3c] sm:$0xf]
      %v9230 = vld [vmem:[#allocation3 + $0x40] sm:$0xf]
      %v9231 = vld [vmem:[#allocation3 + $0x44] sm:$0xf]
      %v9232 = vld [vmem:[#allocation3 + $0x48] sm:$0xf]
      %v9233 = vld [vmem:[#allocation3 + $0x4c] sm:$0xf]
      %v9234 = vld [vmem:[#allocation3 + $0x50] sm:$0xf]
      %v9235 = vld [vmem:[#allocation3 + $0x54] sm:$0xf]
      %v9236 = vld [vmem:[#allocation3 + $0x58] sm:$0xf]
      %v9237 = vld [vmem:[#allocation3 + $0x5c] sm:$0xf]
      %v9238 = vld [vmem:[#allocation3 + $0x60] sm:$0xf]
      %v9239 = vld [vmem:[#allocation3 + $0x64] sm:$0xf]
      %v9240 = vld [vmem:[#allocation3 + $0x68] sm:$0xf]
      %v9241 = vld [vmem:[#allocation3 + $0x6c] sm:$0xf]
      %v9242 = vld [vmem:[#allocation3 + $0x70] sm:$0xf]
      %v9243 = vld [vmem:[#allocation3 + $0x74] sm:$0xf]
      %v9244 = vld [vmem:[#allocation3 + $0x78] sm:$0xf]
      %v9245 = vld [vmem:[#allocation3 + $0x7c] sm:$0xf]
      %v9246 = vld [vmem:[#allocation3 + $0x80] sm:$0xf]
      %v9247 = vld [vmem:[#allocation3 + $0x84] sm:$0xf]
      %v9248 = vld [vmem:[#allocation3 + $0x88] sm:$0xf]
      %v9249 = vld [vmem:[#allocation3 + $0x8c] sm:$0xf]
      %v9250 = vld [vmem:[#allocation3 + $0x90] sm:$0xf]
      %v9251 = vld [vmem:[#allocation3 + $0x94] sm:$0xf]
      %v9252 = vld [vmem:[#allocation3 + $0x98] sm:$0x3]
      %v9290 = vrot.slane %v9216, 6
      %v9291 = vrot.slane %v9290, 4
      %v9292 = vrot.slane %v9217, 6
      %v9293 = vsel %vm2105, %v9291, %v9292
      %v9294 = vrot.slane %v9292, 4
      %v9295 = vrot.slane %v9218, 6
      %v9296 = vsel %vm2105, %v9294, %v9295
      %v9297 = vrot.slane %v9295, 4
      %v9298 = vrot.slane %v9219, 6
      %v9299 = vsel %vm2105, %v9297, %v9298
      %v9300 = vrot.slane %v9298, 4
      %v9301 = vrot.slane %v9220, 6
      %v9302 = vsel %vm2105, %v9300, %v9301
      %v9303 = vrot.slane %v9301, 4
      %v9304 = vrot.slane %v9221, 6
      %v9305 = vsel %vm2105, %v9303, %v9304
      %v9306 = vrot.slane %v9304, 4
      %v9307 = vrot.slane %v9222, 6
      %v9308 = vsel %vm2105, %v9306, %v9307
      %v9309 = vrot.slane %v9307, 4
      %v9310 = vrot.slane %v9223, 6
      %v9311 = vsel %vm2105, %v9309, %v9310
      %v9312 = vrot.slane %v9310, 4
      %v9313 = vrot.slane %v9224, 6
      %v9314 = vsel %vm2105, %v9312, %v9313
      %v9315 = vrot.slane %v9313, 4
      %v9316 = vrot.slane %v9225, 6
      %v9317 = vsel %vm2105, %v9315, %v9316
      %v9318 = vrot.slane %v9316, 4
      %v9319 = vrot.slane %v9226, 6
      %v9320 = vsel %vm2105, %v9318, %v9319
      %v9321 = vrot.slane %v9319, 4
      %v9322 = vrot.slane %v9227, 6
      %v9323 = vsel %vm2105, %v9321, %v9322
      %v9324 = vrot.slane %v9322, 4
      %v9325 = vrot.slane %v9228, 6
      %v9326 = vsel %vm2105, %v9324, %v9325
      %v9327 = vrot.slane %v9325, 4
      %v9328 = vrot.slane %v9229, 6
      %v9329 = vsel %vm2105, %v9327, %v9328
      %v9330 = vrot.slane %v9328, 4
      %v9331 = vrot.slane %v9230, 6
      %v9332 = vsel %vm2105, %v9330, %v9331
      %v9333 = vrot.slane %v9331, 4
      %v9334 = vrot.slane %v9231, 6
      %v9335 = vsel %vm2105, %v9333, %v9334
      %v9336 = vrot.slane %v9334, 4
      %v9337 = vrot.slane %v9232, 6
      %v9338 = vsel %vm2105, %v9336, %v9337
      %v9339 = vrot.slane %v9337, 4
      %v9340 = vrot.slane %v9233, 6
      %v9341 = vsel %vm2105, %v9339, %v9340
      %v9342 = vrot.slane %v9340, 4
      %v9343 = vrot.slane %v9234, 6
      %v9344 = vsel %vm2105, %v9342, %v9343
      %v9345 = vrot.slane %v9343, 4
      %v9346 = vrot.slane %v9235, 6
      %v9347 = vsel %vm2105, %v9345, %v9346
      %v9348 = vrot.slane %v9346, 4
      %v9349 = vrot.slane %v9236, 6
      %v9350 = vsel %vm2105, %v9348, %v9349
      %v9351 = vrot.slane %v9349, 4
      %v9352 = vrot.slane %v9237, 6
      %v9353 = vsel %vm2105, %v9351, %v9352
      %v9354 = vrot.slane %v9352, 4
      %v9355 = vrot.slane %v9238, 6
      %v9356 = vsel %vm2105, %v9354, %v9355
      %v9357 = vrot.slane %v9355, 4
      %v9358 = vrot.slane %v9239, 6
      %v9359 = vsel %vm2105, %v9357, %v9358
      %v9360 = vrot.slane %v9358, 4
      %v9361 = vrot.slane %v9240, 6
      %v9362 = vsel %vm2105, %v9360, %v9361
      %v9363 = vrot.slane %v9361, 4
      %v9364 = vrot.slane %v9241, 6
      %v9365 = vsel %vm2105, %v9363, %v9364
      %v9366 = vrot.slane %v9364, 4
      %v9367 = vrot.slane %v9242, 6
      %v9368 = vsel %vm2105, %v9366, %v9367
      %v9369 = vrot.slane %v9367, 4
      %v9370 = vrot.slane %v9243, 6
      %v9371 = vsel %vm2105, %v9369, %v9370
      %v9372 = vrot.slane %v9370, 4
      %v9373 = vrot.slane %v9244, 6
      %v9374 = vsel %vm2105, %v9372, %v9373
      %v9375 = vrot.slane %v9373, 4
      %v9376 = vrot.slane %v9245, 6
      %v9377 = vsel %vm2105, %v9375, %v9376
      %v9378 = vrot.slane %v9376, 4
      %v9379 = vrot.slane %v9246, 6
      %v9380 = vsel %vm2105, %v9378, %v9379
      %v9381 = vrot.slane %v9379, 4
      %v9382 = vrot.slane %v9247, 6
      %v9383 = vsel %vm2105, %v9381, %v9382
      %v9384 = vrot.slane %v9382, 4
      %v9385 = vrot.slane %v9248, 6
      %v9386 = vsel %vm2105, %v9384, %v9385
      %v9387 = vrot.slane %v9385, 4
      %v9388 = vrot.slane %v9249, 6
      %v9389 = vsel %vm2105, %v9387, %v9388
      %v9390 = vrot.slane %v9388, 4
      %v9391 = vrot.slane %v9250, 6
      %v9392 = vsel %vm2105, %v9390, %v9391
      %v9393 = vrot.slane %v9391, 4
      %v9394 = vrot.slane %v9251, 6
      %v9395 = vsel %vm2105, %v9393, %v9394
      %v9396 = vrot.slane %v9394, 4
      %v9397 = vrot.slane %v9252, 6
      %v9398 = vsel %vm2105, %v9396, %v9397
      %9435 = vst [vmem:[#allocation5 + $0x14] sm:$0xf] %v9293
      %9436 = vst [vmem:[#allocation5 + $0x38] sm:$0xf] %v9296
      %9437 = vst [vmem:[#allocation5 + $0x5c] sm:$0xf] %v9299
      %9438 = vst [vmem:[#allocation5 + $0x80] sm:$0xf] %v9302
      %9439 = vst [vmem:[#allocation5 + $0xa4] sm:$0xf] %v9305
      %9440 = vst [vmem:[#allocation5 + $0xc8] sm:$0xf] %v9308
      %9441 = vst [vmem:[#allocation5 + $0xec] sm:$0xf] %v9311
      %9442 = vst [vmem:[#allocation5 + $0x110] sm:$0xf] %v9314
      %9443 = vst [vmem:[#allocation5 + $0x134] sm:$0xf] %v9317
      %9444 = vst [vmem:[#allocation5 + $0x158] sm:$0xf] %v9320
      %9445 = vst [vmem:[#allocation5 + $0x17c] sm:$0xf] %v9323
      %9446 = vst [vmem:[#allocation5 + $0x1a0] sm:$0xf] %v9326
      %9447 = vst [vmem:[#allocation5 + $0x1c4] sm:$0xf] %v9329
      %9448 = vst [vmem:[#allocation5 + $0x1e8] sm:$0xf] %v9332
      %9449 = vst [vmem:[#allocation5 + $0x20c] sm:$0xf] %v9335
      %9450 = vst [vmem:[#allocation5 + $0x230] sm:$0xf] %v9338
      %9451 = vst [vmem:[#allocation5 + $0x254] sm:$0xf] %v9341
      %9452 = vst [vmem:[#allocation5 + $0x278] sm:$0xf] %v9344
      %9453 = vst [vmem:[#allocation5 + $0x29c] sm:$0xf] %v9347
      %9454 = vst [vmem:[#allocation5 + $0x2c0] sm:$0xf] %v9350
      %9455 = vst [vmem:[#allocation5 + $0x2e4] sm:$0xf] %v9353
      %9456 = vst [vmem:[#allocation5 + $0x308] sm:$0xf] %v9356
      %9457 = vst [vmem:[#allocation5 + $0x32c] sm:$0xf] %v9359
      %9458 = vst [vmem:[#allocation5 + $0x350] sm:$0xf] %v9362
      %9459 = vst [vmem:[#allocation5 + $0x374] sm:$0xf] %v9365
      %9460 = vst [vmem:[#allocation5 + $0x398] sm:$0xf] %v9368
      %9461 = vst [vmem:[#allocation5 + $0x3bc] sm:$0xf] %v9371
      %9462 = vst [vmem:[#allocation5 + $0x3e0] sm:$0xf] %v9374
      %9463 = vst [vmem:[#allocation5 + $0x404] sm:$0xf] %v9377
      %9464 = vst [vmem:[#allocation5 + $0x428] sm:$0xf] %v9380
      %9465 = vst [vmem:[#allocation5 + $0x44c] sm:$0xf] %v9383
      %9466 = vst [vmem:[#allocation5 + $0x470] sm:$0xf] %v9386
      %9467 = vst [vmem:[#allocation5 + $0x494] sm:$0xf] %v9389
      %9468 = vst [vmem:[#allocation5 + $0x4b8] sm:$0xf] %v9392
      %9469 = vst [vmem:[#allocation5 + $0x4dc] sm:$0xf] %v9395
      %9470 = vst [vmem:[#allocation5 + $0x500] sm:$0xf] %v9398
      %v9471 = vld [vmem:[#allocation3 + $0x10] sm:$0xc]
      %v9472 = vld [vmem:[#allocation3 + $0x14] sm:$0xf]
      %v9473 = vld [vmem:[#allocation3 + $0x18] sm:$0xf]
      %v9474 = vld [vmem:[#allocation3 + $0x1c] sm:$0xf]
      %v9475 = vld [vmem:[#allocation3 + $0x20] sm:$0xf]
      %v9476 = vld [vmem:[#allocation3 + $0x24] sm:$0xf]
      %v9477 = vld [vmem:[#allocation3 + $0x28] sm:$0xf]
      %v9478 = vld [vmem:[#allocation3 + $0x2c] sm:$0xf]
      %v9479 = vld [vmem:[#allocation3 + $0x30] sm:$0xf]
      %v9480 = vld [vmem:[#allocation3 + $0x34] sm:$0xf]
      %v9481 = vld [vmem:[#allocation3 + $0x38] sm:$0xf]
      %v9482 = vld [vmem:[#allocation3 + $0x3c] sm:$0xf]
      %v9483 = vld [vmem:[#allocation3 + $0x40] sm:$0xf]
      %v9484 = vld [vmem:[#allocation3 + $0x44] sm:$0xf]
      %v9485 = vld [vmem:[#allocation3 + $0x48] sm:$0xf]
      %v9486 = vld [vmem:[#allocation3 + $0x4c] sm:$0xf]
      %v9487 = vld [vmem:[#allocation3 + $0x50] sm:$0xf]
      %v9488 = vld [vmem:[#allocation3 + $0x54] sm:$0xf]
      %v9489 = vld [vmem:[#allocation3 + $0x58] sm:$0xf]
      %v9490 = vld [vmem:[#allocation3 + $0x5c] sm:$0xf]
      %v9491 = vld [vmem:[#allocation3 + $0x60] sm:$0xf]
      %v9492 = vld [vmem:[#allocation3 + $0x64] sm:$0xf]
      %v9493 = vld [vmem:[#allocation3 + $0x68] sm:$0xf]
      %v9494 = vld [vmem:[#allocation3 + $0x6c] sm:$0xf]
      %v9495 = vld [vmem:[#allocation3 + $0x70] sm:$0xf]
      %v9496 = vld [vmem:[#allocation3 + $0x74] sm:$0xf]
      %v9497 = vld [vmem:[#allocation3 + $0x78] sm:$0xf]
      %v9498 = vld [vmem:[#allocation3 + $0x7c] sm:$0xf]
      %v9499 = vld [vmem:[#allocation3 + $0x80] sm:$0xf]
      %v9500 = vld [vmem:[#allocation3 + $0x84] sm:$0xf]
      %v9501 = vld [vmem:[#allocation3 + $0x88] sm:$0xf]
      %v9502 = vld [vmem:[#allocation3 + $0x8c] sm:$0xf]
      %v9503 = vld [vmem:[#allocation3 + $0x90] sm:$0xf]
      %v9504 = vld [vmem:[#allocation3 + $0x94] sm:$0xf]
      %v9505 = vld [vmem:[#allocation3 + $0x98] sm:$0xf]
      %v9506 = vld [vmem:[#allocation3 + $0x9c] sm:$0xf]
      %v9507 = vld [vmem:[#allocation3 + $0xa0] sm:$0x3]
      %v9545 = vrot.slane %v9471, 6
      %v9546 = vrot.slane %v9545, 4
      %v9547 = vrot.slane %v9472, 6
      %v9548 = vsel %vm2105, %v9546, %v9547
      %v9549 = vrot.slane %v9547, 4
      %v9550 = vrot.slane %v9473, 6
      %v9551 = vsel %vm2105, %v9549, %v9550
      %v9552 = vrot.slane %v9550, 4
      %v9553 = vrot.slane %v9474, 6
      %v9554 = vsel %vm2105, %v9552, %v9553
      %v9555 = vrot.slane %v9553, 4
      %v9556 = vrot.slane %v9475, 6
      %v9557 = vsel %vm2105, %v9555, %v9556
      %v9558 = vrot.slane %v9556, 4
      %v9559 = vrot.slane %v9476, 6
      %v9560 = vsel %vm2105, %v9558, %v9559
      %v9561 = vrot.slane %v9559, 4
      %v9562 = vrot.slane %v9477, 6
      %v9563 = vsel %vm2105, %v9561, %v9562
      %v9564 = vrot.slane %v9562, 4
      %v9565 = vrot.slane %v9478, 6
      %v9566 = vsel %vm2105, %v9564, %v9565
      %v9567 = vrot.slane %v9565, 4
      %v9568 = vrot.slane %v9479, 6
      %v9569 = vsel %vm2105, %v9567, %v9568
      %v9570 = vrot.slane %v9568, 4
      %v9571 = vrot.slane %v9480, 6
      %v9572 = vsel %vm2105, %v9570, %v9571
      %v9573 = vrot.slane %v9571, 4
      %v9574 = vrot.slane %v9481, 6
      %v9575 = vsel %vm2105, %v9573, %v9574
      %v9576 = vrot.slane %v9574, 4
      %v9577 = vrot.slane %v9482, 6
      %v9578 = vsel %vm2105, %v9576, %v9577
      %v9579 = vrot.slane %v9577, 4
      %v9580 = vrot.slane %v9483, 6
      %v9581 = vsel %vm2105, %v9579, %v9580
      %v9582 = vrot.slane %v9580, 4
      %v9583 = vrot.slane %v9484, 6
      %v9584 = vsel %vm2105, %v9582, %v9583
      %v9585 = vrot.slane %v9583, 4
      %v9586 = vrot.slane %v9485, 6
      %v9587 = vsel %vm2105, %v9585, %v9586
      %v9588 = vrot.slane %v9586, 4
      %v9589 = vrot.slane %v9486, 6
      %v9590 = vsel %vm2105, %v9588, %v9589
      %v9591 = vrot.slane %v9589, 4
      %v9592 = vrot.slane %v9487, 6
      %v9593 = vsel %vm2105, %v9591, %v9592
      %v9594 = vrot.slane %v9592, 4
      %v9595 = vrot.slane %v9488, 6
      %v9596 = vsel %vm2105, %v9594, %v9595
      %v9597 = vrot.slane %v9595, 4
      %v9598 = vrot.slane %v9489, 6
      %v9599 = vsel %vm2105, %v9597, %v9598
      %v9600 = vrot.slane %v9598, 4
      %v9601 = vrot.slane %v9490, 6
      %v9602 = vsel %vm2105, %v9600, %v9601
      %v9603 = vrot.slane %v9601, 4
      %v9604 = vrot.slane %v9491, 6
      %v9605 = vsel %vm2105, %v9603, %v9604
      %v9606 = vrot.slane %v9604, 4
      %v9607 = vrot.slane %v9492, 6
      %v9608 = vsel %vm2105, %v9606, %v9607
      %v9609 = vrot.slane %v9607, 4
      %v9610 = vrot.slane %v9493, 6
      %v9611 = vsel %vm2105, %v9609, %v9610
      %v9612 = vrot.slane %v9610, 4
      %v9613 = vrot.slane %v9494, 6
      %v9614 = vsel %vm2105, %v9612, %v9613
      %v9615 = vrot.slane %v9613, 4
      %v9616 = vrot.slane %v9495, 6
      %v9617 = vsel %vm2105, %v9615, %v9616
      %v9618 = vrot.slane %v9616, 4
      %v9619 = vrot.slane %v9496, 6
      %v9620 = vsel %vm2105, %v9618, %v9619
      %v9621 = vrot.slane %v9619, 4
      %v9622 = vrot.slane %v9497, 6
      %v9623 = vsel %vm2105, %v9621, %v9622
      %v9624 = vrot.slane %v9622, 4
      %v9625 = vrot.slane %v9498, 6
      %v9626 = vsel %vm2105, %v9624, %v9625
      %v9627 = vrot.slane %v9625, 4
      %v9628 = vrot.slane %v9499, 6
      %v9629 = vsel %vm2105, %v9627, %v9628
      %v9630 = vrot.slane %v9628, 4
      %v9631 = vrot.slane %v9500, 6
      %v9632 = vsel %vm2105, %v9630, %v9631
      %v9633 = vrot.slane %v9631, 4
      %v9634 = vrot.slane %v9501, 6
      %v9635 = vsel %vm2105, %v9633, %v9634
      %v9636 = vrot.slane %v9634, 4
      %v9637 = vrot.slane %v9502, 6
      %v9638 = vsel %vm2105, %v9636, %v9637
      %v9639 = vrot.slane %v9637, 4
      %v9640 = vrot.slane %v9503, 6
      %v9641 = vsel %vm2105, %v9639, %v9640
      %v9642 = vrot.slane %v9640, 4
      %v9643 = vrot.slane %v9504, 6
      %v9644 = vsel %vm2105, %v9642, %v9643
      %v9645 = vrot.slane %v9643, 4
      %v9646 = vrot.slane %v9505, 6
      %v9647 = vsel %vm2105, %v9645, %v9646
      %v9648 = vrot.slane %v9646, 4
      %v9649 = vrot.slane %v9506, 6
      %v9650 = vsel %vm2105, %v9648, %v9649
      %v9651 = vrot.slane %v9649, 4
      %v9652 = vrot.slane %v9507, 6
      %v9653 = vsel %vm2105, %v9651, %v9652
      %9690 = vst [vmem:[#allocation5 + $0x18] sm:$0xf] %v9548
      %9691 = vst [vmem:[#allocation5 + $0x3c] sm:$0xf] %v9551
      %9692 = vst [vmem:[#allocation5 + $0x60] sm:$0xf] %v9554
      %9693 = vst [vmem:[#allocation5 + $0x84] sm:$0xf] %v9557
      %9694 = vst [vmem:[#allocation5 + $0xa8] sm:$0xf] %v9560
      %9695 = vst [vmem:[#allocation5 + $0xcc] sm:$0xf] %v9563
      %9696 = vst [vmem:[#allocation5 + $0xf0] sm:$0xf] %v9566
      %9697 = vst [vmem:[#allocation5 + $0x114] sm:$0xf] %v9569
      %9698 = vst [vmem:[#allocation5 + $0x138] sm:$0xf] %v9572
      %9699 = vst [vmem:[#allocation5 + $0x15c] sm:$0xf] %v9575
      %9700 = vst [vmem:[#allocation5 + $0x180] sm:$0xf] %v9578
      %9701 = vst [vmem:[#allocation5 + $0x1a4] sm:$0xf] %v9581
      %9702 = vst [vmem:[#allocation5 + $0x1c8] sm:$0xf] %v9584
      %9703 = vst [vmem:[#allocation5 + $0x1ec] sm:$0xf] %v9587
      %9704 = vst [vmem:[#allocation5 + $0x210] sm:$0xf] %v9590
      %9705 = vst [vmem:[#allocation5 + $0x234] sm:$0xf] %v9593
      %9706 = vst [vmem:[#allocation5 + $0x258] sm:$0xf] %v9596
      %9707 = vst [vmem:[#allocation5 + $0x27c] sm:$0xf] %v9599
      %9708 = vst [vmem:[#allocation5 + $0x2a0] sm:$0xf] %v9602
      %9709 = vst [vmem:[#allocation5 + $0x2c4] sm:$0xf] %v9605
      %9710 = vst [vmem:[#allocation5 + $0x2e8] sm:$0xf] %v9608
      %9711 = vst [vmem:[#allocation5 + $0x30c] sm:$0xf] %v9611
      %9712 = vst [vmem:[#allocation5 + $0x330] sm:$0xf] %v9614
      %9713 = vst [vmem:[#allocation5 + $0x354] sm:$0xf] %v9617
      %9714 = vst [vmem:[#allocation5 + $0x378] sm:$0xf] %v9620
      %9715 = vst [vmem:[#allocation5 + $0x39c] sm:$0xf] %v9623
      %9716 = vst [vmem:[#allocation5 + $0x3c0] sm:$0xf] %v9626
      %9717 = vst [vmem:[#allocation5 + $0x3e4] sm:$0xf] %v9629
      %9718 = vst [vmem:[#allocation5 + $0x408] sm:$0xf] %v9632
      %9719 = vst [vmem:[#allocation5 + $0x42c] sm:$0xf] %v9635
      %9720 = vst [vmem:[#allocation5 + $0x450] sm:$0xf] %v9638
      %9721 = vst [vmem:[#allocation5 + $0x474] sm:$0xf] %v9641
      %9722 = vst [vmem:[#allocation5 + $0x498] sm:$0xf] %v9644
      %9723 = vst [vmem:[#allocation5 + $0x4bc] sm:$0xf] %v9647
      %9724 = vst [vmem:[#allocation5 + $0x4e0] sm:$0xf] %v9650
      %9725 = vst [vmem:[#allocation5 + $0x504] sm:$0xf] %v9653
      %v9726 = vld [vmem:[#allocation3 + $0x10] sm:$0xc]
      %v9727 = vld [vmem:[#allocation3 + $0x14] sm:$0xf]
      %v9728 = vld [vmem:[#allocation3 + $0x18] sm:$0xf]
      %v9729 = vld [vmem:[#allocation3 + $0x1c] sm:$0xf]
      %v9730 = vld [vmem:[#allocation3 + $0x20] sm:$0xf]
      %v9731 = vld [vmem:[#allocation3 + $0x24] sm:$0xf]
      %v9732 = vld [vmem:[#allocation3 + $0x28] sm:$0xf]
      %v9733 = vld [vmem:[#allocation3 + $0x2c] sm:$0xf]
      %v9734 = vld [vmem:[#allocation3 + $0x30] sm:$0xf]
      %v9735 = vld [vmem:[#allocation3 + $0x34] sm:$0xf]
      %v9736 = vld [vmem:[#allocation3 + $0x38] sm:$0xf]
      %v9737 = vld [vmem:[#allocation3 + $0x3c] sm:$0xf]
      %v9738 = vld [vmem:[#allocation3 + $0x40] sm:$0xf]
      %v9739 = vld [vmem:[#allocation3 + $0x44] sm:$0xf]
      %v9740 = vld [vmem:[#allocation3 + $0x48] sm:$0xf]
      %v9741 = vld [vmem:[#allocation3 + $0x4c] sm:$0xf]
      %v9742 = vld [vmem:[#allocation3 + $0x50] sm:$0xf]
      %v9743 = vld [vmem:[#allocation3 + $0x54] sm:$0xf]
      %v9744 = vld [vmem:[#allocation3 + $0x58] sm:$0xf]
      %v9745 = vld [vmem:[#allocation3 + $0x5c] sm:$0xf]
      %v9746 = vld [vmem:[#allocation3 + $0x60] sm:$0xf]
      %v9747 = vld [vmem:[#allocation3 + $0x64] sm:$0xf]
      %v9748 = vld [vmem:[#allocation3 + $0x68] sm:$0xf]
      %v9749 = vld [vmem:[#allocation3 + $0x6c] sm:$0xf]
      %v9750 = vld [vmem:[#allocation3 + $0x70] sm:$0xf]
      %v9751 = vld [vmem:[#allocation3 + $0x74] sm:$0xf]
      %v9752 = vld [vmem:[#allocation3 + $0x78] sm:$0xf]
      %v9753 = vld [vmem:[#allocation3 + $0x7c] sm:$0xf]
      %v9754 = vld [vmem:[#allocation3 + $0x80] sm:$0xf]
      %v9755 = vld [vmem:[#allocation3 + $0x84] sm:$0xf]
      %v9756 = vld [vmem:[#allocation3 + $0x88] sm:$0xf]
      %v9757 = vld [vmem:[#allocation3 + $0x8c] sm:$0xf]
      %v9758 = vld [vmem:[#allocation3 + $0x90] sm:$0xf]
      %v9759 = vld [vmem:[#allocation3 + $0x94] sm:$0xf]
      %v9760 = vld [vmem:[#allocation3 + $0x98] sm:$0xf]
      %v9761 = vld [vmem:[#allocation3 + $0x9c] sm:$0xf]
      %v9762 = vld [vmem:[#allocation3 + $0xa0] sm:$0x7]
      %v9764 = vshrl.u32 %v9726, 16
      %v9766 = vrot.slane %v9764, 6
      %v9767 = vshll.u32 %v9726, 16
      %v9769 = vrot.slane %v9767, 7
      %v9770 = vor.u32 %v9766, %v9769
      %v9771 = vrot.slane %v9770, 4
      %v9773 = vshrl.u32 %v9727, 16
      %v9775 = vrot.slane %v9773, 6
      %v9776 = vshll.u32 %v9727, 16
      %v9778 = vrot.slane %v9776, 7
      %v9779 = vor.u32 %v9775, %v9778
      %v9780 = vsel %vm2581, %v9771, %v9779
      %v9781 = vrot.slane %v9779, 4
      %v9783 = vshrl.u32 %v9728, 16
      %v9785 = vrot.slane %v9783, 6
      %v9786 = vshll.u32 %v9728, 16
      %v9788 = vrot.slane %v9786, 7
      %v9789 = vor.u32 %v9785, %v9788
      %v9790 = vsel %vm2581, %v9781, %v9789
      %v9791 = vrot.slane %v9789, 4
      %v9793 = vshrl.u32 %v9729, 16
      %v9795 = vrot.slane %v9793, 6
      %v9796 = vshll.u32 %v9729, 16
      %v9798 = vrot.slane %v9796, 7
      %v9799 = vor.u32 %v9795, %v9798
      %v9800 = vsel %vm2581, %v9791, %v9799
      %v9801 = vrot.slane %v9799, 4
      %v9803 = vshrl.u32 %v9730, 16
      %v9805 = vrot.slane %v9803, 6
      %v9806 = vshll.u32 %v9730, 16
      %v9808 = vrot.slane %v9806, 7
      %v9809 = vor.u32 %v9805, %v9808
      %v9810 = vsel %vm2581, %v9801, %v9809
      %v9811 = vrot.slane %v9809, 4
      %v9813 = vshrl.u32 %v9731, 16
      %v9815 = vrot.slane %v9813, 6
      %v9816 = vshll.u32 %v9731, 16
      %v9818 = vrot.slane %v9816, 7
      %v9819 = vor.u32 %v9815, %v9818
      %v9820 = vsel %vm2581, %v9811, %v9819
      %v9821 = vrot.slane %v9819, 4
      %v9823 = vshrl.u32 %v9732, 16
      %v9825 = vrot.slane %v9823, 6
      %v9826 = vshll.u32 %v9732, 16
      %v9828 = vrot.slane %v9826, 7
      %v9829 = vor.u32 %v9825, %v9828
      %v9830 = vsel %vm2581, %v9821, %v9829
      %v9831 = vrot.slane %v9829, 4
      %v9833 = vshrl.u32 %v9733, 16
      %v9835 = vrot.slane %v9833, 6
      %v9836 = vshll.u32 %v9733, 16
      %v9838 = vrot.slane %v9836, 7
      %v9839 = vor.u32 %v9835, %v9838
      %v9840 = vsel %vm2581, %v9831, %v9839
      %v9841 = vrot.slane %v9839, 4
      %v9843 = vshrl.u32 %v9734, 16
      %v9845 = vrot.slane %v9843, 6
      %v9846 = vshll.u32 %v9734, 16
      %v9848 = vrot.slane %v9846, 7
      %v9849 = vor.u32 %v9845, %v9848
      %v9850 = vsel %vm2581, %v9841, %v9849
      %v9851 = vrot.slane %v9849, 4
      %v9853 = vshrl.u32 %v9735, 16
      %v9855 = vrot.slane %v9853, 6
      %v9856 = vshll.u32 %v9735, 16
      %v9858 = vrot.slane %v9856, 7
      %v9859 = vor.u32 %v9855, %v9858
      %v9860 = vsel %vm2581, %v9851, %v9859
      %v9861 = vrot.slane %v9859, 4
      %v9863 = vshrl.u32 %v9736, 16
      %v9865 = vrot.slane %v9863, 6
      %v9866 = vshll.u32 %v9736, 16
      %v9868 = vrot.slane %v9866, 7
      %v9869 = vor.u32 %v9865, %v9868
      %v9870 = vsel %vm2581, %v9861, %v9869
      %v9871 = vrot.slane %v9869, 4
      %v9873 = vshrl.u32 %v9737, 16
      %v9875 = vrot.slane %v9873, 6
      %v9876 = vshll.u32 %v9737, 16
      %v9878 = vrot.slane %v9876, 7
      %v9879 = vor.u32 %v9875, %v9878
      %v9880 = vsel %vm2581, %v9871, %v9879
      %v9881 = vrot.slane %v9879, 4
      %v9883 = vshrl.u32 %v9738, 16
      %v9885 = vrot.slane %v9883, 6
      %v9886 = vshll.u32 %v9738, 16
      %v9888 = vrot.slane %v9886, 7
      %v9889 = vor.u32 %v9885, %v9888
      %v9890 = vsel %vm2581, %v9881, %v9889
      %v9891 = vrot.slane %v9889, 4
      %v9893 = vshrl.u32 %v9739, 16
      %v9895 = vrot.slane %v9893, 6
      %v9896 = vshll.u32 %v9739, 16
      %v9898 = vrot.slane %v9896, 7
      %v9899 = vor.u32 %v9895, %v9898
      %v9900 = vsel %vm2581, %v9891, %v9899
      %v9901 = vrot.slane %v9899, 4
      %v9903 = vshrl.u32 %v9740, 16
      %v9905 = vrot.slane %v9903, 6
      %v9906 = vshll.u32 %v9740, 16
      %v9908 = vrot.slane %v9906, 7
      %v9909 = vor.u32 %v9905, %v9908
      %v9910 = vsel %vm2581, %v9901, %v9909
      %v9911 = vrot.slane %v9909, 4
      %v9913 = vshrl.u32 %v9741, 16
      %v9915 = vrot.slane %v9913, 6
      %v9916 = vshll.u32 %v9741, 16
      %v9918 = vrot.slane %v9916, 7
      %v9919 = vor.u32 %v9915, %v9918
      %v9920 = vsel %vm2581, %v9911, %v9919
      %v9921 = vrot.slane %v9919, 4
      %v9923 = vshrl.u32 %v9742, 16
      %v9925 = vrot.slane %v9923, 6
      %v9926 = vshll.u32 %v9742, 16
      %v9928 = vrot.slane %v9926, 7
      %v9929 = vor.u32 %v9925, %v9928
      %v9930 = vsel %vm2581, %v9921, %v9929
      %v9931 = vrot.slane %v9929, 4
      %v9933 = vshrl.u32 %v9743, 16
      %v9935 = vrot.slane %v9933, 6
      %v9936 = vshll.u32 %v9743, 16
      %v9938 = vrot.slane %v9936, 7
      %v9939 = vor.u32 %v9935, %v9938
      %v9940 = vsel %vm2581, %v9931, %v9939
      %v9941 = vrot.slane %v9939, 4
      %v9943 = vshrl.u32 %v9744, 16
      %v9945 = vrot.slane %v9943, 6
      %v9946 = vshll.u32 %v9744, 16
      %v9948 = vrot.slane %v9946, 7
      %v9949 = vor.u32 %v9945, %v9948
      %v9950 = vsel %vm2581, %v9941, %v9949
      %v9951 = vrot.slane %v9949, 4
      %v9953 = vshrl.u32 %v9745, 16
      %v9955 = vrot.slane %v9953, 6
      %v9956 = vshll.u32 %v9745, 16
      %v9958 = vrot.slane %v9956, 7
      %v9959 = vor.u32 %v9955, %v9958
      %v9960 = vsel %vm2581, %v9951, %v9959
      %v9961 = vrot.slane %v9959, 4
      %v9963 = vshrl.u32 %v9746, 16
      %v9965 = vrot.slane %v9963, 6
      %v9966 = vshll.u32 %v9746, 16
      %v9968 = vrot.slane %v9966, 7
      %v9969 = vor.u32 %v9965, %v9968
      %v9970 = vsel %vm2581, %v9961, %v9969
      %v9971 = vrot.slane %v9969, 4
      %v9973 = vshrl.u32 %v9747, 16
      %v9975 = vrot.slane %v9973, 6
      %v9976 = vshll.u32 %v9747, 16
      %v9978 = vrot.slane %v9976, 7
      %v9979 = vor.u32 %v9975, %v9978
      %v9980 = vsel %vm2581, %v9971, %v9979
      %v9981 = vrot.slane %v9979, 4
      %v9983 = vshrl.u32 %v9748, 16
      %v9985 = vrot.slane %v9983, 6
      %v9986 = vshll.u32 %v9748, 16
      %v9988 = vrot.slane %v9986, 7
      %v9989 = vor.u32 %v9985, %v9988
      %v9990 = vsel %vm2581, %v9981, %v9989
      %v9991 = vrot.slane %v9989, 4
      %v9993 = vshrl.u32 %v9749, 16
      %v9995 = vrot.slane %v9993, 6
      %v9996 = vshll.u32 %v9749, 16
      %v9998 = vrot.slane %v9996, 7
      %v9999 = vor.u32 %v9995, %v9998
      %v10000 = vsel %vm2581, %v9991, %v9999
      %v10001 = vrot.slane %v9999, 4
      %v10003 = vshrl.u32 %v9750, 16
      %v10005 = vrot.slane %v10003, 6
      %v10006 = vshll.u32 %v9750, 16
      %v10008 = vrot.slane %v10006, 7
      %v10009 = vor.u32 %v10005, %v10008
      %v10010 = vsel %vm2581, %v10001, %v10009
      %v10011 = vrot.slane %v10009, 4
      %v10013 = vshrl.u32 %v9751, 16
      %v10015 = vrot.slane %v10013, 6
      %v10016 = vshll.u32 %v9751, 16
      %v10018 = vrot.slane %v10016, 7
      %v10019 = vor.u32 %v10015, %v10018
      %v10020 = vsel %vm2581, %v10011, %v10019
      %v10021 = vrot.slane %v10019, 4
      %v10023 = vshrl.u32 %v9752, 16
      %v10025 = vrot.slane %v10023, 6
      %v10026 = vshll.u32 %v9752, 16
      %v10028 = vrot.slane %v10026, 7
      %v10029 = vor.u32 %v10025, %v10028
      %v10030 = vsel %vm2581, %v10021, %v10029
      %v10031 = vrot.slane %v10029, 4
      %v10033 = vshrl.u32 %v9753, 16
      %v10035 = vrot.slane %v10033, 6
      %v10036 = vshll.u32 %v9753, 16
      %v10038 = vrot.slane %v10036, 7
      %v10039 = vor.u32 %v10035, %v10038
      %v10040 = vsel %vm2581, %v10031, %v10039
      %v10041 = vrot.slane %v10039, 4
      %v10043 = vshrl.u32 %v9754, 16
      %v10045 = vrot.slane %v10043, 6
      %v10046 = vshll.u32 %v9754, 16
      %v10048 = vrot.slane %v10046, 7
      %v10049 = vor.u32 %v10045, %v10048
      %v10050 = vsel %vm2581, %v10041, %v10049
      %v10051 = vrot.slane %v10049, 4
      %v10053 = vshrl.u32 %v9755, 16
      %v10055 = vrot.slane %v10053, 6
      %v10056 = vshll.u32 %v9755, 16
      %v10058 = vrot.slane %v10056, 7
      %v10059 = vor.u32 %v10055, %v10058
      %v10060 = vsel %vm2581, %v10051, %v10059
      %v10061 = vrot.slane %v10059, 4
      %v10063 = vshrl.u32 %v9756, 16
      %v10065 = vrot.slane %v10063, 6
      %v10066 = vshll.u32 %v9756, 16
      %v10068 = vrot.slane %v10066, 7
      %v10069 = vor.u32 %v10065, %v10068
      %v10070 = vsel %vm2581, %v10061, %v10069
      %v10071 = vrot.slane %v10069, 4
      %v10073 = vshrl.u32 %v9757, 16
      %v10075 = vrot.slane %v10073, 6
      %v10076 = vshll.u32 %v9757, 16
      %v10078 = vrot.slane %v10076, 7
      %v10079 = vor.u32 %v10075, %v10078
      %v10080 = vsel %vm2581, %v10071, %v10079
      %v10081 = vrot.slane %v10079, 4
      %v10083 = vshrl.u32 %v9758, 16
      %v10085 = vrot.slane %v10083, 6
      %v10086 = vshll.u32 %v9758, 16
      %v10088 = vrot.slane %v10086, 7
      %v10089 = vor.u32 %v10085, %v10088
      %v10090 = vsel %vm2581, %v10081, %v10089
      %v10091 = vrot.slane %v10089, 4
      %v10093 = vshrl.u32 %v9759, 16
      %v10095 = vrot.slane %v10093, 6
      %v10096 = vshll.u32 %v9759, 16
      %v10098 = vrot.slane %v10096, 7
      %v10099 = vor.u32 %v10095, %v10098
      %v10100 = vsel %vm2581, %v10091, %v10099
      %v10101 = vrot.slane %v10099, 4
      %v10103 = vshrl.u32 %v9760, 16
      %v10105 = vrot.slane %v10103, 6
      %v10106 = vshll.u32 %v9760, 16
      %v10108 = vrot.slane %v10106, 7
      %v10109 = vor.u32 %v10105, %v10108
      %v10110 = vsel %vm2581, %v10101, %v10109
      %v10111 = vrot.slane %v10109, 4
      %v10113 = vshrl.u32 %v9761, 16
      %v10115 = vrot.slane %v10113, 6
      %v10116 = vshll.u32 %v9761, 16
      %v10118 = vrot.slane %v10116, 7
      %v10119 = vor.u32 %v10115, %v10118
      %v10120 = vsel %vm2581, %v10111, %v10119
      %v10121 = vrot.slane %v10119, 4
      %v10123 = vshrl.u32 %v9762, 16
      %v10125 = vrot.slane %v10123, 6
      %v10126 = vshll.u32 %v9762, 16
      %v10128 = vrot.slane %v10126, 7
      %v10129 = vor.u32 %v10125, %v10128
      %v10130 = vsel %vm2581, %v10121, %v10129
      %10167 = vst [vmem:[#allocation5 + $0x1c] sm:$0xf] %v9780
      %10168 = vst [vmem:[#allocation5 + $0x40] sm:$0xf] %v9790
      %10169 = vst [vmem:[#allocation5 + $0x64] sm:$0xf] %v9800
      %10170 = vst [vmem:[#allocation5 + $0x88] sm:$0xf] %v9810
      %10171 = vst [vmem:[#allocation5 + $0xac] sm:$0xf] %v9820
      %10172 = vst [vmem:[#allocation5 + $0xd0] sm:$0xf] %v9830
      %10173 = vst [vmem:[#allocation5 + $0xf4] sm:$0xf] %v9840
      %10174 = vst [vmem:[#allocation5 + $0x118] sm:$0xf] %v9850
      %10175 = vst [vmem:[#allocation5 + $0x13c] sm:$0xf] %v9860
      %10176 = vst [vmem:[#allocation5 + $0x160] sm:$0xf] %v9870
      %10177 = vst [vmem:[#allocation5 + $0x184] sm:$0xf] %v9880
      %10178 = vst [vmem:[#allocation5 + $0x1a8] sm:$0xf] %v9890
      %10179 = vst [vmem:[#allocation5 + $0x1cc] sm:$0xf] %v9900
      %10180 = vst [vmem:[#allocation5 + $0x1f0] sm:$0xf] %v9910
      %10181 = vst [vmem:[#allocation5 + $0x214] sm:$0xf] %v9920
      %10182 = vst [vmem:[#allocation5 + $0x238] sm:$0xf] %v9930
      %10183 = vst [vmem:[#allocation5 + $0x25c] sm:$0xf] %v9940
      %10184 = vst [vmem:[#allocation5 + $0x280] sm:$0xf] %v9950
      %10185 = vst [vmem:[#allocation5 + $0x2a4] sm:$0xf] %v9960
      %10186 = vst [vmem:[#allocation5 + $0x2c8] sm:$0xf] %v9970
      %10187 = vst [vmem:[#allocation5 + $0x2ec] sm:$0xf] %v9980
      %10188 = vst [vmem:[#allocation5 + $0x310] sm:$0xf] %v9990
      %10189 = vst [vmem:[#allocation5 + $0x334] sm:$0xf] %v10000
      %10190 = vst [vmem:[#allocation5 + $0x358] sm:$0xf] %v10010
      %10191 = vst [vmem:[#allocation5 + $0x37c] sm:$0xf] %v10020
      %10192 = vst [vmem:[#allocation5 + $0x3a0] sm:$0xf] %v10030
      %10193 = vst [vmem:[#allocation5 + $0x3c4] sm:$0xf] %v10040
      %10194 = vst [vmem:[#allocation5 + $0x3e8] sm:$0xf] %v10050
      %10195 = vst [vmem:[#allocation5 + $0x40c] sm:$0xf] %v10060
      %10196 = vst [vmem:[#allocation5 + $0x430] sm:$0xf] %v10070
      %10197 = vst [vmem:[#allocation5 + $0x454] sm:$0xf] %v10080
      %10198 = vst [vmem:[#allocation5 + $0x478] sm:$0xf] %v10090
      %10199 = vst [vmem:[#allocation5 + $0x49c] sm:$0xf] %v10100
      %10200 = vst [vmem:[#allocation5 + $0x4c0] sm:$0xf] %v10110
      %10201 = vst [vmem:[#allocation5 + $0x4e4] sm:$0xf] %v10120
      %10202 = vst [vmem:[#allocation5 + $0x508] sm:$0xf] %v10130
      %v10203 = vld [vmem:[#allocation3 + $0x10] sm:$0x8]
      %v10204 = vld [vmem:[#allocation3 + $0x14] sm:$0xf]
      %v10205 = vld [vmem:[#allocation3 + $0x18] sm:$0xf]
      %v10206 = vld [vmem:[#allocation3 + $0x1c] sm:$0xf]
      %v10207 = vld [vmem:[#allocation3 + $0x20] sm:$0xf]
      %v10208 = vld [vmem:[#allocation3 + $0x24] sm:$0xf]
      %v10209 = vld [vmem:[#allocation3 + $0x28] sm:$0xf]
      %v10210 = vld [vmem:[#allocation3 + $0x2c] sm:$0xf]
      %v10211 = vld [vmem:[#allocation3 + $0x30] sm:$0xf]
      %v10212 = vld [vmem:[#allocation3 + $0x34] sm:$0xf]
      %v10213 = vld [vmem:[#allocation3 + $0x38] sm:$0xf]
      %v10214 = vld [vmem:[#allocation3 + $0x3c] sm:$0xf]
      %v10215 = vld [vmem:[#allocation3 + $0x40] sm:$0xf]
      %v10216 = vld [vmem:[#allocation3 + $0x44] sm:$0xf]
      %v10217 = vld [vmem:[#allocation3 + $0x48] sm:$0xf]
      %v10218 = vld [vmem:[#allocation3 + $0x4c] sm:$0xf]
      %v10219 = vld [vmem:[#allocation3 + $0x50] sm:$0xf]
      %v10220 = vld [vmem:[#allocation3 + $0x54] sm:$0xf]
      %v10221 = vld [vmem:[#allocation3 + $0x58] sm:$0xf]
      %v10222 = vld [vmem:[#allocation3 + $0x5c] sm:$0xf]
      %v10223 = vld [vmem:[#allocation3 + $0x60] sm:$0xf]
      %v10224 = vld [vmem:[#allocation3 + $0x64] sm:$0xf]
      %v10225 = vld [vmem:[#allocation3 + $0x68] sm:$0xf]
      %v10226 = vld [vmem:[#allocation3 + $0x6c] sm:$0xf]
      %v10227 = vld [vmem:[#allocation3 + $0x70] sm:$0xf]
      %v10228 = vld [vmem:[#allocation3 + $0x74] sm:$0xf]
      %v10229 = vld [vmem:[#allocation3 + $0x78] sm:$0xf]
      %v10230 = vld [vmem:[#allocation3 + $0x7c] sm:$0xf]
      %v10231 = vld [vmem:[#allocation3 + $0x80] sm:$0xf]
      %v10232 = vld [vmem:[#allocation3 + $0x84] sm:$0xf]
      %v10233 = vld [vmem:[#allocation3 + $0x88] sm:$0xf]
      %v10234 = vld [vmem:[#allocation3 + $0x8c] sm:$0xf]
      %v10235 = vld [vmem:[#allocation3 + $0x90] sm:$0xf]
      %v10236 = vld [vmem:[#allocation3 + $0x94] sm:$0xf]
      %v10237 = vld [vmem:[#allocation3 + $0x98] sm:$0xf]
      %v10238 = vld [vmem:[#allocation3 + $0x9c] sm:$0xf]
      %v10239 = vld [vmem:[#allocation3 + $0xa0] sm:$0x7]
      %v10277 = vrot.slane %v10203, 7
      %v10278 = vrot.slane %v10277, 4
      %v10279 = vrot.slane %v10204, 7
      %v10280 = vsel %vm303, %v10278, %v10279
      %v10281 = vrot.slane %v10279, 4
      %v10282 = vrot.slane %v10205, 7
      %v10283 = vsel %vm303, %v10281, %v10282
      %v10284 = vrot.slane %v10282, 4
      %v10285 = vrot.slane %v10206, 7
      %v10286 = vsel %vm303, %v10284, %v10285
      %v10287 = vrot.slane %v10285, 4
      %v10288 = vrot.slane %v10207, 7
      %v10289 = vsel %vm303, %v10287, %v10288
      %v10290 = vrot.slane %v10288, 4
      %v10291 = vrot.slane %v10208, 7
      %v10292 = vsel %vm303, %v10290, %v10291
      %v10293 = vrot.slane %v10291, 4
      %v10294 = vrot.slane %v10209, 7
      %v10295 = vsel %vm303, %v10293, %v10294
      %v10296 = vrot.slane %v10294, 4
      %v10297 = vrot.slane %v10210, 7
      %v10298 = vsel %vm303, %v10296, %v10297
      %v10299 = vrot.slane %v10297, 4
      %v10300 = vrot.slane %v10211, 7
      %v10301 = vsel %vm303, %v10299, %v10300
      %v10302 = vrot.slane %v10300, 4
      %v10303 = vrot.slane %v10212, 7
      %v10304 = vsel %vm303, %v10302, %v10303
      %v10305 = vrot.slane %v10303, 4
      %v10306 = vrot.slane %v10213, 7
      %v10307 = vsel %vm303, %v10305, %v10306
      %v10308 = vrot.slane %v10306, 4
      %v10309 = vrot.slane %v10214, 7
      %v10310 = vsel %vm303, %v10308, %v10309
      %v10311 = vrot.slane %v10309, 4
      %v10312 = vrot.slane %v10215, 7
      %v10313 = vsel %vm303, %v10311, %v10312
      %v10314 = vrot.slane %v10312, 4
      %v10315 = vrot.slane %v10216, 7
      %v10316 = vsel %vm303, %v10314, %v10315
      %v10317 = vrot.slane %v10315, 4
      %v10318 = vrot.slane %v10217, 7
      %v10319 = vsel %vm303, %v10317, %v10318
      %v10320 = vrot.slane %v10318, 4
      %v10321 = vrot.slane %v10218, 7
      %v10322 = vsel %vm303, %v10320, %v10321
      %v10323 = vrot.slane %v10321, 4
      %v10324 = vrot.slane %v10219, 7
      %v10325 = vsel %vm303, %v10323, %v10324
      %v10326 = vrot.slane %v10324, 4
      %v10327 = vrot.slane %v10220, 7
      %v10328 = vsel %vm303, %v10326, %v10327
      %v10329 = vrot.slane %v10327, 4
      %v10330 = vrot.slane %v10221, 7
      %v10331 = vsel %vm303, %v10329, %v10330
      %v10332 = vrot.slane %v10330, 4
      %v10333 = vrot.slane %v10222, 7
      %v10334 = vsel %vm303, %v10332, %v10333
      %v10335 = vrot.slane %v10333, 4
      %v10336 = vrot.slane %v10223, 7
      %v10337 = vsel %vm303, %v10335, %v10336
      %v10338 = vrot.slane %v10336, 4
      %v10339 = vrot.slane %v10224, 7
      %v10340 = vsel %vm303, %v10338, %v10339
      %v10341 = vrot.slane %v10339, 4
      %v10342 = vrot.slane %v10225, 7
      %v10343 = vsel %vm303, %v10341, %v10342
      %v10344 = vrot.slane %v10342, 4
      %v10345 = vrot.slane %v10226, 7
      %v10346 = vsel %vm303, %v10344, %v10345
      %v10347 = vrot.slane %v10345, 4
      %v10348 = vrot.slane %v10227, 7
      %v10349 = vsel %vm303, %v10347, %v10348
      %v10350 = vrot.slane %v10348, 4
      %v10351 = vrot.slane %v10228, 7
      %v10352 = vsel %vm303, %v10350, %v10351
      %v10353 = vrot.slane %v10351, 4
      %v10354 = vrot.slane %v10229, 7
      %v10355 = vsel %vm303, %v10353, %v10354
      %v10356 = vrot.slane %v10354, 4
      %v10357 = vrot.slane %v10230, 7
      %v10358 = vsel %vm303, %v10356, %v10357
      %v10359 = vrot.slane %v10357, 4
      %v10360 = vrot.slane %v10231, 7
      %v10361 = vsel %vm303, %v10359, %v10360
      %v10362 = vrot.slane %v10360, 4
      %v10363 = vrot.slane %v10232, 7
      %v10364 = vsel %vm303, %v10362, %v10363
      %v10365 = vrot.slane %v10363, 4
      %v10366 = vrot.slane %v10233, 7
      %v10367 = vsel %vm303, %v10365, %v10366
      %v10368 = vrot.slane %v10366, 4
      %v10369 = vrot.slane %v10234, 7
      %v10370 = vsel %vm303, %v10368, %v10369
      %v10371 = vrot.slane %v10369, 4
      %v10372 = vrot.slane %v10235, 7
      %v10373 = vsel %vm303, %v10371, %v10372
      %v10374 = vrot.slane %v10372, 4
      %v10375 = vrot.slane %v10236, 7
      %v10376 = vsel %vm303, %v10374, %v10375
      %v10377 = vrot.slane %v10375, 4
      %v10378 = vrot.slane %v10237, 7
      %v10379 = vsel %vm303, %v10377, %v10378
      %v10380 = vrot.slane %v10378, 4
      %v10381 = vrot.slane %v10238, 7
      %v10382 = vsel %vm303, %v10380, %v10381
      %v10383 = vrot.slane %v10381, 4
      %v10384 = vrot.slane %v10239, 7
      %v10385 = vsel %vm303, %v10383, %v10384
      %10422 = vst [vmem:[#allocation5 + $0x20] sm:$0xf] %v10280
      %10423 = vst [vmem:[#allocation5 + $0x44] sm:$0xf] %v10283
      %10424 = vst [vmem:[#allocation5 + $0x68] sm:$0xf] %v10286
      %10425 = vst [vmem:[#allocation5 + $0x8c] sm:$0xf] %v10289
      %10426 = vst [vmem:[#allocation5 + $0xb0] sm:$0xf] %v10292
      %10427 = vst [vmem:[#allocation5 + $0xd4] sm:$0xf] %v10295
      %10428 = vst [vmem:[#allocation5 + $0xf8] sm:$0xf] %v10298
      %10429 = vst [vmem:[#allocation5 + $0x11c] sm:$0xf] %v10301
      %10430 = vst [vmem:[#allocation5 + $0x140] sm:$0xf] %v10304
      %10431 = vst [vmem:[#allocation5 + $0x164] sm:$0xf] %v10307
      %10432 = vst [vmem:[#allocation5 + $0x188] sm:$0xf] %v10310
      %10433 = vst [vmem:[#allocation5 + $0x1ac] sm:$0xf] %v10313
      %10434 = vst [vmem:[#allocation5 + $0x1d0] sm:$0xf] %v10316
      %10435 = vst [vmem:[#allocation5 + $0x1f4] sm:$0xf] %v10319
      %10436 = vst [vmem:[#allocation5 + $0x218] sm:$0xf] %v10322
      %10437 = vst [vmem:[#allocation5 + $0x23c] sm:$0xf] %v10325
      %10438 = vst [vmem:[#allocation5 + $0x260] sm:$0xf] %v10328
      %10439 = vst [vmem:[#allocation5 + $0x284] sm:$0xf] %v10331
      %10440 = vst [vmem:[#allocation5 + $0x2a8] sm:$0xf] %v10334
      %10441 = vst [vmem:[#allocation5 + $0x2cc] sm:$0xf] %v10337
      %10442 = vst [vmem:[#allocation5 + $0x2f0] sm:$0xf] %v10340
      %10443 = vst [vmem:[#allocation5 + $0x314] sm:$0xf] %v10343
      %10444 = vst [vmem:[#allocation5 + $0x338] sm:$0xf] %v10346
      %10445 = vst [vmem:[#allocation5 + $0x35c] sm:$0xf] %v10349
      %10446 = vst [vmem:[#allocation5 + $0x380] sm:$0xf] %v10352
      %10447 = vst [vmem:[#allocation5 + $0x3a4] sm:$0xf] %v10355
      %10448 = vst [vmem:[#allocation5 + $0x3c8] sm:$0xf] %v10358
      %10449 = vst [vmem:[#allocation5 + $0x3ec] sm:$0xf] %v10361
      %10450 = vst [vmem:[#allocation5 + $0x410] sm:$0xf] %v10364
      %10451 = vst [vmem:[#allocation5 + $0x434] sm:$0xf] %v10367
      %10452 = vst [vmem:[#allocation5 + $0x458] sm:$0xf] %v10370
      %10453 = vst [vmem:[#allocation5 + $0x47c] sm:$0xf] %v10373
      %10454 = vst [vmem:[#allocation5 + $0x4a0] sm:$0xf] %v10376
      %10455 = vst [vmem:[#allocation5 + $0x4c4] sm:$0xf] %v10379
      %10456 = vst [vmem:[#allocation5 + $0x4e8] sm:$0xf] %v10382
      %10457 = vst [vmem:[#allocation5 + $0x50c] sm:$0xf] %v10385
      %v10458 = vld [vmem:[#allocation5] sm:$0xff]
      %v10459 = vld [vmem:[#allocation5 + $0x8] sm:$0xff]
      %v10460 = vld [vmem:[#allocation5 + $0x10] sm:$0xff]
      %v10461 = vld [vmem:[#allocation5 + $0x18] sm:$0xff]
      %v10462 = vld [vmem:[#allocation5 + $0x20] sm:$0xf]
      %v10463 = vld [vmem:[#allocation5 + $0x24] sm:$0xff]
      %v10464 = vld [vmem:[#allocation5 + $0x2c] sm:$0xff]
      %v10465 = vld [vmem:[#allocation5 + $0x34] sm:$0xff]
      %v10466 = vld [vmem:[#allocation5 + $0x3c] sm:$0xff]
      %v10467 = vld [vmem:[#allocation5 + $0x44] sm:$0xf]
      %v10468 = vld [vmem:[#allocation5 + $0x48] sm:$0xff]
      %v10469 = vld [vmem:[#allocation5 + $0x50] sm:$0xff]
      %v10470 = vld [vmem:[#allocation5 + $0x58] sm:$0xff]
      %v10471 = vld [vmem:[#allocation5 + $0x60] sm:$0xff]
      %v10472 = vld [vmem:[#allocation5 + $0x68] sm:$0xf]
      %v10473 = vld [vmem:[#allocation5 + $0x6c] sm:$0xff]
      %v10474 = vld [vmem:[#allocation5 + $0x74] sm:$0xff]
      %v10475 = vld [vmem:[#allocation5 + $0x7c] sm:$0xff]
      %v10476 = vld [vmem:[#allocation5 + $0x84] sm:$0xff]
      %v10477 = vld [vmem:[#allocation5 + $0x8c] sm:$0xf]
      %v10478 = vld [vmem:[#allocation5 + $0x90] sm:$0xff]
      %v10479 = vld [vmem:[#allocation5 + $0x98] sm:$0xff]
      %v10480 = vld [vmem:[#allocation5 + $0xa0] sm:$0xff]
      %v10481 = vld [vmem:[#allocation5 + $0xa8] sm:$0xff]
      %v10482 = vld [vmem:[#allocation5 + $0xb0] sm:$0xf]
      %v10483 = vld [vmem:[#allocation5 + $0xb4] sm:$0xff]
      %v10484 = vld [vmem:[#allocation5 + $0xbc] sm:$0xff]
      %v10485 = vld [vmem:[#allocation5 + $0xc4] sm:$0xff]
      %v10486 = vld [vmem:[#allocation5 + $0xcc] sm:$0xff]
      %v10487 = vld [vmem:[#allocation5 + $0xd4] sm:$0xf]
      %v10488 = vld [vmem:[#allocation5 + $0xd8] sm:$0xff]
      %v10489 = vld [vmem:[#allocation5 + $0xe0] sm:$0xff]
      %v10490 = vld [vmem:[#allocation5 + $0xe8] sm:$0xff]
      %v10491 = vld [vmem:[#allocation5 + $0xf0] sm:$0xff]
      %v10492 = vld [vmem:[#allocation5 + $0xf8] sm:$0xf]
      %v10493 = vld [vmem:[#allocation5 + $0xfc] sm:$0xff]
      %v10494 = vld [vmem:[#allocation5 + $0x104] sm:$0xff]
      %v10495 = vld [vmem:[#allocation5 + $0x10c] sm:$0xff]
      %v10496 = vld [vmem:[#allocation5 + $0x114] sm:$0xff]
      %v10497 = vld [vmem:[#allocation5 + $0x11c] sm:$0xf]
      %v10498 = vld [vmem:[#allocation5 + $0x120] sm:$0xff]
      %v10499 = vld [vmem:[#allocation5 + $0x128] sm:$0xff]
      %v10500 = vld [vmem:[#allocation5 + $0x130] sm:$0xff]
      %v10501 = vld [vmem:[#allocation5 + $0x138] sm:$0xff]
      %v10502 = vld [vmem:[#allocation5 + $0x140] sm:$0xf]
      %v10503 = vld [vmem:[#allocation5 + $0x144] sm:$0xff]
      %v10504 = vld [vmem:[#allocation5 + $0x14c] sm:$0xff]
      %v10505 = vld [vmem:[#allocation5 + $0x154] sm:$0xff]
      %v10506 = vld [vmem:[#allocation5 + $0x15c] sm:$0xff]
      %v10507 = vld [vmem:[#allocation5 + $0x164] sm:$0xf]
      %v10508 = vld [vmem:[#allocation5 + $0x168] sm:$0xff]
      %v10509 = vld [vmem:[#allocation5 + $0x170] sm:$0xff]
      %v10510 = vld [vmem:[#allocation5 + $0x178] sm:$0xff]
      %v10511 = vld [vmem:[#allocation5 + $0x180] sm:$0xff]
      %v10512 = vld [vmem:[#allocation5 + $0x188] sm:$0xf]
      %v10513 = vld [vmem:[#allocation5 + $0x18c] sm:$0xff]
      %v10514 = vld [vmem:[#allocation5 + $0x194] sm:$0xff]
      %v10515 = vld [vmem:[#allocation5 + $0x19c] sm:$0xff]
      %v10516 = vld [vmem:[#allocation5 + $0x1a4] sm:$0xff]
      %v10517 = vld [vmem:[#allocation5 + $0x1ac] sm:$0xf]
      %v10518 = vld [vmem:[#allocation5 + $0x1b0] sm:$0xff]
      %v10519 = vld [vmem:[#allocation5 + $0x1b8] sm:$0xff]
      %v10520 = vld [vmem:[#allocation5 + $0x1c0] sm:$0xff]
      %v10521 = vld [vmem:[#allocation5 + $0x1c8] sm:$0xff]
      %v10522 = vld [vmem:[#allocation5 + $0x1d0] sm:$0xf]
      %v10523 = vld [vmem:[#allocation5 + $0x1d4] sm:$0xff]
      %v10524 = vld [vmem:[#allocation5 + $0x1dc] sm:$0xff]
      %v10525 = vld [vmem:[#allocation5 + $0x1e4] sm:$0xff]
      %v10526 = vld [vmem:[#allocation5 + $0x1ec] sm:$0xff]
      %v10527 = vld [vmem:[#allocation5 + $0x1f4] sm:$0xf]
      %v10528 = vld [vmem:[#allocation5 + $0x1f8] sm:$0xff]
      %v10529 = vld [vmem:[#allocation5 + $0x200] sm:$0xff]
      %v10530 = vld [vmem:[#allocation5 + $0x208] sm:$0xff]
      %v10531 = vld [vmem:[#allocation5 + $0x210] sm:$0xff]
      %v10532 = vld [vmem:[#allocation5 + $0x218] sm:$0xf]
      %v10533 = vld [vmem:[#allocation5 + $0x21c] sm:$0xff]
      %v10534 = vld [vmem:[#allocation5 + $0x224] sm:$0xff]
      %v10535 = vld [vmem:[#allocation5 + $0x22c] sm:$0xff]
      %v10536 = vld [vmem:[#allocation5 + $0x234] sm:$0xff]
      %v10537 = vld [vmem:[#allocation5 + $0x23c] sm:$0xf]
      %v10538 = vld [vmem:[#allocation5 + $0x240] sm:$0xff]
      %v10539 = vld [vmem:[#allocation5 + $0x248] sm:$0xff]
      %v10540 = vld [vmem:[#allocation5 + $0x250] sm:$0xff]
      %v10541 = vld [vmem:[#allocation5 + $0x258] sm:$0xff]
      %v10542 = vld [vmem:[#allocation5 + $0x260] sm:$0xf]
      %v10543 = vld [vmem:[#allocation5 + $0x264] sm:$0xff]
      %v10544 = vld [vmem:[#allocation5 + $0x26c] sm:$0xff]
      %v10545 = vld [vmem:[#allocation5 + $0x274] sm:$0xff]
      %v10546 = vld [vmem:[#allocation5 + $0x27c] sm:$0xff]
      %v10547 = vld [vmem:[#allocation5 + $0x284] sm:$0xf]
      %v10548 = vld [vmem:[#allocation5 + $0x288] sm:$0xff]
      %v10549 = vld [vmem:[#allocation5 + $0x290] sm:$0xff]
      %v10550 = vld [vmem:[#allocation5 + $0x298] sm:$0xff]
      %v10551 = vld [vmem:[#allocation5 + $0x2a0] sm:$0xff]
      %v10552 = vld [vmem:[#allocation5 + $0x2a8] sm:$0xf]
      %v10553 = vld [vmem:[#allocation5 + $0x2ac] sm:$0xff]
      %v10554 = vld [vmem:[#allocation5 + $0x2b4] sm:$0xff]
      %v10555 = vld [vmem:[#allocation5 + $0x2bc] sm:$0xff]
      %v10556 = vld [vmem:[#allocation5 + $0x2c4] sm:$0xff]
      %v10557 = vld [vmem:[#allocation5 + $0x2cc] sm:$0xf]
      %v10558 = vld [vmem:[#allocation5 + $0x2d0] sm:$0xff]
      %v10559 = vld [vmem:[#allocation5 + $0x2d8] sm:$0xff]
      %v10560 = vld [vmem:[#allocation5 + $0x2e0] sm:$0xff]
      %v10561 = vld [vmem:[#allocation5 + $0x2e8] sm:$0xff]
      %v10562 = vld [vmem:[#allocation5 + $0x2f0] sm:$0xf]
      %v10563 = vld [vmem:[#allocation5 + $0x2f4] sm:$0xff]
      %v10564 = vld [vmem:[#allocation5 + $0x2fc] sm:$0xff]
      %v10565 = vld [vmem:[#allocation5 + $0x304] sm:$0xff]
      %v10566 = vld [vmem:[#allocation5 + $0x30c] sm:$0xff]
      %v10567 = vld [vmem:[#allocation5 + $0x314] sm:$0xf]
      %v10568 = vld [vmem:[#allocation5 + $0x318] sm:$0xff]
      %v10569 = vld [vmem:[#allocation5 + $0x320] sm:$0xff]
      %v10570 = vld [vmem:[#allocation5 + $0x328] sm:$0xff]
      %v10571 = vld [vmem:[#allocation5 + $0x330] sm:$0xff]
      %v10572 = vld [vmem:[#allocation5 + $0x338] sm:$0xf]
      %v10573 = vld [vmem:[#allocation5 + $0x33c] sm:$0xff]
      %v10574 = vld [vmem:[#allocation5 + $0x344] sm:$0xff]
      %v10575 = vld [vmem:[#allocation5 + $0x34c] sm:$0xff]
      %v10576 = vld [vmem:[#allocation5 + $0x354] sm:$0xff]
      %v10577 = vld [vmem:[#allocation5 + $0x35c] sm:$0xf]
      %v10578 = vld [vmem:[#allocation5 + $0x360] sm:$0xff]
      %v10579 = vld [vmem:[#allocation5 + $0x368] sm:$0xff]
      %v10580 = vld [vmem:[#allocation5 + $0x370] sm:$0xff]
      %v10581 = vld [vmem:[#allocation5 + $0x378] sm:$0xff]
      %v10582 = vld [vmem:[#allocation5 + $0x380] sm:$0xf]
      %v10583 = vld [vmem:[#allocation5 + $0x384] sm:$0xff]
      %v10584 = vld [vmem:[#allocation5 + $0x38c] sm:$0xff]
      %v10585 = vld [vmem:[#allocation5 + $0x394] sm:$0xff]
      %v10586 = vld [vmem:[#allocation5 + $0x39c] sm:$0xff]
      %v10587 = vld [vmem:[#allocation5 + $0x3a4] sm:$0xf]
      %v10588 = vld [vmem:[#allocation5 + $0x3a8] sm:$0xff]
      %v10589 = vld [vmem:[#allocation5 + $0x3b0] sm:$0xff]
      %v10590 = vld [vmem:[#allocation5 + $0x3b8] sm:$0xff]
      %v10591 = vld [vmem:[#allocation5 + $0x3c0] sm:$0xff]
      %v10592 = vld [vmem:[#allocation5 + $0x3c8] sm:$0xf]
      %v10593 = vld [vmem:[#allocation5 + $0x3cc] sm:$0xff]
      %v10594 = vld [vmem:[#allocation5 + $0x3d4] sm:$0xff]
      %v10595 = vld [vmem:[#allocation5 + $0x3dc] sm:$0xff]
      %v10596 = vld [vmem:[#allocation5 + $0x3e4] sm:$0xff]
      %v10597 = vld [vmem:[#allocation5 + $0x3ec] sm:$0xf]
      %v10598 = vld [vmem:[#allocation5 + $0x3f0] sm:$0xff]
      %v10599 = vld [vmem:[#allocation5 + $0x3f8] sm:$0xff]
      %v10600 = vld [vmem:[#allocation5 + $0x400] sm:$0xff]
      %v10601 = vld [vmem:[#allocation5 + $0x408] sm:$0xff]
      %v10602 = vld [vmem:[#allocation5 + $0x410] sm:$0xf]
      %v10603 = vld [vmem:[#allocation5 + $0x414] sm:$0xff]
      %v10604 = vld [vmem:[#allocation5 + $0x41c] sm:$0xff]
      %v10605 = vld [vmem:[#allocation5 + $0x424] sm:$0xff]
      %v10606 = vld [vmem:[#allocation5 + $0x42c] sm:$0xff]
      %v10607 = vld [vmem:[#allocation5 + $0x434] sm:$0xf]
      %v10608 = vld [vmem:[#allocation5 + $0x438] sm:$0xff]
      %v10609 = vld [vmem:[#allocation5 + $0x440] sm:$0xff]
      %v10610 = vld [vmem:[#allocation5 + $0x448] sm:$0xff]
      %v10611 = vld [vmem:[#allocation5 + $0x450] sm:$0xff]
      %v10612 = vld [vmem:[#allocation5 + $0x458] sm:$0xf]
      %v10613 = vld [vmem:[#allocation5 + $0x45c] sm:$0xff]
      %v10614 = vld [vmem:[#allocation5 + $0x464] sm:$0xff]
      %v10615 = vld [vmem:[#allocation5 + $0x46c] sm:$0xff]
      %v10616 = vld [vmem:[#allocation5 + $0x474] sm:$0xff]
      %v10617 = vld [vmem:[#allocation5 + $0x47c] sm:$0xf]
      %v10618 = vld [vmem:[#allocation5 + $0x480] sm:$0xff]
      %v10619 = vld [vmem:[#allocation5 + $0x488] sm:$0xff]
      %v10620 = vld [vmem:[#allocation5 + $0x490] sm:$0xff]
      %v10621 = vld [vmem:[#allocation5 + $0x498] sm:$0xff]
      %v10622 = vld [vmem:[#allocation5 + $0x4a0] sm:$0xf]
      %v10623 = vld [vmem:[#allocation5 + $0x4a4] sm:$0xff]
      %v10624 = vld [vmem:[#allocation5 + $0x4ac] sm:$0xff]
      %v10625 = vld [vmem:[#allocation5 + $0x4b4] sm:$0xff]
      %v10626 = vld [vmem:[#allocation5 + $0x4bc] sm:$0xff]
      %v10627 = vld [vmem:[#allocation5 + $0x4c4] sm:$0xf]
      %v10628 = vld [vmem:[#allocation5 + $0x4c8] sm:$0xff]
      %v10629 = vld [vmem:[#allocation5 + $0x4d0] sm:$0xff]
      %v10630 = vld [vmem:[#allocation5 + $0x4d8] sm:$0xff]
      %v10631 = vld [vmem:[#allocation5 + $0x4e0] sm:$0xff]
      %v10632 = vld [vmem:[#allocation5 + $0x4e8] sm:$0xf]
      %v10633 = vld [vmem:[#allocation5 + $0x4ec] sm:$0xff]
      %v10634 = vld [vmem:[#allocation5 + $0x4f4] sm:$0xff]
      %v10635 = vld [vmem:[#allocation5 + $0x4fc] sm:$0xff]
      %v10636 = vld [vmem:[#allocation5 + $0x504] sm:$0xff]
      %v10637 = vld [vmem:[#allocation5 + $0x50c] sm:$0xf]
      %v10638 = vld [vmem:[%s3] sm:$0xf]
      %v10639 = vld [vmem:[%s3 + $0x4] sm:$0xf]
      %v10640 = vld [vmem:[%s3 + $0x8] sm:$0xf]
      %v10641 = vld [vmem:[%s3 + $0xc] sm:$0xf]
      %v10642 = vld [vmem:[%s3 + $0x10] sm:$0xf]
      %v10643 = vld [vmem:[%s3 + $0x14] sm:$0xf]
      %v10644 = vld [vmem:[%s3 + $0x18] sm:$0xf]
      %v10645 = vld [vmem:[%s3 + $0x1c] sm:$0xf]
      %v10646 = vld [vmem:[%s3 + $0x20] sm:$0xf]
      %v10647 = vld [vmem:[%s3 + $0x24] sm:$0xf]
      %v10648 = vld [vmem:[%s3 + $0x28] sm:$0xf]
      %v10649 = vld [vmem:[%s3 + $0x2c] sm:$0xf]
      %v10650 = vld [vmem:[%s3 + $0x30] sm:$0xf]
      %v10651 = vld [vmem:[%s3 + $0x34] sm:$0xf]
      %v10652 = vld [vmem:[%s3 + $0x38] sm:$0xf]
      %v10653 = vld [vmem:[%s3 + $0x3c] sm:$0xf]
      %v10654 = vld [vmem:[%s3 + $0x40] sm:$0xf]
      %v10655 = vld [vmem:[%s3 + $0x44] sm:$0xf]
      %v10656 = vld [vmem:[%s3 + $0x48] sm:$0xf]
      %v10657 = vld [vmem:[%s3 + $0x4c] sm:$0xf]
      %v10658 = vld [vmem:[%s3 + $0x50] sm:$0xf]
      %v10659 = vld [vmem:[%s3 + $0x54] sm:$0xf]
      %v10660 = vld [vmem:[%s3 + $0x58] sm:$0xf]
      %v10661 = vld [vmem:[%s3 + $0x5c] sm:$0xf]
      %v10662 = vld [vmem:[%s3 + $0x60] sm:$0xf]
      %v10663 = vld [vmem:[%s3 + $0x64] sm:$0xf]
      %v10664 = vld [vmem:[%s3 + $0x68] sm:$0xf]
      %v10665 = vld [vmem:[%s3 + $0x6c] sm:$0xf]
      %v10666 = vld [vmem:[%s3 + $0x70] sm:$0xf]
      %v10667 = vld [vmem:[%s3 + $0x74] sm:$0xf]
      %v10668 = vld [vmem:[%s3 + $0x78] sm:$0xf]
      %v10669 = vld [vmem:[%s3 + $0x7c] sm:$0xf]
      %v10670 = vld [vmem:[%s3 + $0x80] sm:$0xf]
      %v10671 = vld [vmem:[%s3 + $0x84] sm:$0xf]
      %v10672 = vld [vmem:[%s3 + $0x88] sm:$0xf]
      %v10673 = vld [vmem:[%s3 + $0x8c] sm:$0xf]
      %v10674 = vld [vmem:[%s3 + $0x90] sm:$0xf]
      %v10675 = vld [vmem:[%s3 + $0x94] sm:$0xf]
      %v10676 = vld [vmem:[%s3 + $0x98] sm:$0xf]
      %v10677 = vld [vmem:[%s3 + $0x9c] sm:$0xf]
      %v10678 = vld [vmem:[%s3 + $0xa0] sm:$0xf]
      %v10679 = vld [vmem:[%s3 + $0xa4] sm:$0xf]
      %v10680 = vld [vmem:[%s3 + $0xa8] sm:$0xf]
      %v10681 = vld [vmem:[%s3 + $0xac] sm:$0xf]
      %v10682 = vld [vmem:[%s3 + $0xb0] sm:$0xf]
      %v10683 = vld [vmem:[%s3 + $0xb4] sm:$0xf]
      %v10684 = vld [vmem:[%s3 + $0xb8] sm:$0xf]
      %v10685 = vld [vmem:[%s3 + $0xbc] sm:$0xf]
      %v10686 = vld [vmem:[%s3 + $0xc0] sm:$0xf]
      %v10687 = vld [vmem:[%s3 + $0xc4] sm:$0xf]
      %v10688 = vld [vmem:[%s3 + $0xc8] sm:$0xf]
      %v10689 = vld [vmem:[%s3 + $0xcc] sm:$0xf]
      %v10690 = vld [vmem:[%s3 + $0xd0] sm:$0xf]
      %v10691 = vld [vmem:[%s3 + $0xd4] sm:$0xf]
      %v10692 = vld [vmem:[%s3 + $0xd8] sm:$0xf]
      %v10693 = vld [vmem:[%s3 + $0xdc] sm:$0xf]
      %v10694 = vld [vmem:[%s3 + $0xe0] sm:$0xf]
      %v10695 = vld [vmem:[%s3 + $0xe4] sm:$0xf]
      %v10696 = vld [vmem:[%s3 + $0xe8] sm:$0xf]
      %v10697 = vld [vmem:[%s3 + $0xec] sm:$0xf]
      %v10698 = vld [vmem:[%s3 + $0xf0] sm:$0xf]
      %v10699 = vld [vmem:[%s3 + $0xf4] sm:$0xf]
      %v10700 = vld [vmem:[%s3 + $0xf8] sm:$0xf]
      %v10701 = vld [vmem:[%s3 + $0xfc] sm:$0xf]
      %v10702 = vld [vmem:[%s3 + $0x100] sm:$0xf]
      %v10703 = vld [vmem:[%s3 + $0x104] sm:$0xf]
      %v10704 = vld [vmem:[%s3 + $0x108] sm:$0xf]
      %v10705 = vld [vmem:[%s3 + $0x10c] sm:$0xf]
      %v10706 = vld [vmem:[%s3 + $0x110] sm:$0xf]
      %v10707 = vld [vmem:[%s3 + $0x114] sm:$0xf]
      %v10708 = vld [vmem:[%s3 + $0x118] sm:$0xf]
      %v10709 = vld [vmem:[%s3 + $0x11c] sm:$0xf]
      %v10710 = vld [vmem:[%s3 + $0x120] sm:$0xf]
      %v10711 = vld [vmem:[%s3 + $0x124] sm:$0xf]
      %v10712 = vld [vmem:[%s3 + $0x128] sm:$0xf]
      %v10713 = vld [vmem:[%s3 + $0x12c] sm:$0xf]
      %v10714 = vld [vmem:[%s3 + $0x130] sm:$0xf]
      %v10715 = vld [vmem:[%s3 + $0x134] sm:$0xf]
      %v10716 = vld [vmem:[%s3 + $0x138] sm:$0xf]
      %v10717 = vld [vmem:[%s3 + $0x13c] sm:$0xf]
      %v10718 = vld [vmem:[%s3 + $0x140] sm:$0xf]
      %v10719 = vld [vmem:[%s3 + $0x144] sm:$0xf]
      %v10720 = vld [vmem:[%s3 + $0x148] sm:$0xf]
      %v10721 = vld [vmem:[%s3 + $0x14c] sm:$0xf]
      %v10722 = vld [vmem:[%s3 + $0x150] sm:$0xf]
      %v10723 = vld [vmem:[%s3 + $0x154] sm:$0xf]
      %v10724 = vld [vmem:[%s3 + $0x158] sm:$0xf]
      %v10725 = vld [vmem:[%s3 + $0x15c] sm:$0xf]
      %v10726 = vld [vmem:[%s3 + $0x160] sm:$0xf]
      %v10727 = vld [vmem:[%s3 + $0x164] sm:$0xf]
      %v10728 = vld [vmem:[%s3 + $0x168] sm:$0xf]
      %v10729 = vld [vmem:[%s3 + $0x16c] sm:$0xf]
      %v10730 = vld [vmem:[%s3 + $0x170] sm:$0xf]
      %v10731 = vld [vmem:[%s3 + $0x174] sm:$0xf]
      %v10732 = vld [vmem:[%s3 + $0x178] sm:$0xf]
      %v10733 = vld [vmem:[%s3 + $0x17c] sm:$0xf]
      %v10734 = vld [vmem:[%s3 + $0x180] sm:$0xf]
      %v10735 = vld [vmem:[%s3 + $0x184] sm:$0xf]
      %v10736 = vld [vmem:[%s3 + $0x188] sm:$0xf]
      %v10737 = vld [vmem:[%s3 + $0x18c] sm:$0xf]
      %v10738 = vld [vmem:[%s3 + $0x190] sm:$0xf]
      %v10739 = vld [vmem:[%s3 + $0x194] sm:$0xf]
      %v10740 = vld [vmem:[%s3 + $0x198] sm:$0xf]
      %v10741 = vld [vmem:[%s3 + $0x19c] sm:$0xf]
      %v10742 = vld [vmem:[%s3 + $0x1a0] sm:$0xf]
      %v10743 = vld [vmem:[%s3 + $0x1a4] sm:$0xf]
      %v10744 = vld [vmem:[%s3 + $0x1a8] sm:$0xf]
      %v10745 = vld [vmem:[%s3 + $0x1ac] sm:$0xf]
      %v10746 = vld [vmem:[%s3 + $0x1b0] sm:$0xf]
      %v10747 = vld [vmem:[%s3 + $0x1b4] sm:$0xf]
      %v10748 = vld [vmem:[%s3 + $0x1b8] sm:$0xf]
      %v10749 = vld [vmem:[%s3 + $0x1bc] sm:$0xf]
      %v10750 = vld [vmem:[%s3 + $0x1c0] sm:$0xf]
      %v10751 = vld [vmem:[%s3 + $0x1c4] sm:$0xf]
      %v10752 = vld [vmem:[%s3 + $0x1c8] sm:$0xf]
      %v10753 = vld [vmem:[%s3 + $0x1cc] sm:$0xf]
      %v10754 = vld [vmem:[%s3 + $0x1d0] sm:$0xf]
      %v10755 = vld [vmem:[%s3 + $0x1d4] sm:$0xf]
      %v10756 = vld [vmem:[%s3 + $0x1d8] sm:$0xf]
      %v10757 = vld [vmem:[%s3 + $0x1dc] sm:$0xf]
      %v10758 = vld [vmem:[%s3 + $0x1e0] sm:$0xf]
      %v10759 = vld [vmem:[%s3 + $0x1e4] sm:$0xf]
      %v10760 = vld [vmem:[%s3 + $0x1e8] sm:$0xf]
      %v10761 = vld [vmem:[%s3 + $0x1ec] sm:$0xf]
      %v10762 = vld [vmem:[%s3 + $0x1f0] sm:$0xf]
      %v10763 = vld [vmem:[%s3 + $0x1f4] sm:$0xf]
      %v10764 = vld [vmem:[%s3 + $0x1f8] sm:$0xf]
      %v10765 = vld [vmem:[%s3 + $0x1fc] sm:$0xf]
      %v10766 = vld [vmem:[%s3 + $0x200] sm:$0xf]
      %v10767 = vld [vmem:[%s3 + $0x204] sm:$0xf]
      %v10768 = vld [vmem:[%s3 + $0x208] sm:$0xf]
      %v10769 = vld [vmem:[%s3 + $0x20c] sm:$0xf]
      %v10770 = vld [vmem:[%s3 + $0x210] sm:$0xf]
      %v10771 = vld [vmem:[%s3 + $0x214] sm:$0xf]
      %v10772 = vld [vmem:[%s3 + $0x218] sm:$0xf]
      %v10773 = vld [vmem:[%s3 + $0x21c] sm:$0xf]
      %v10774 = vld [vmem:[%s3 + $0x220] sm:$0xf]
      %v10775 = vld [vmem:[%s3 + $0x224] sm:$0xf]
      %v10776 = vld [vmem:[%s3 + $0x228] sm:$0xf]
      %v10777 = vld [vmem:[%s3 + $0x22c] sm:$0xf]
      %v10778 = vld [vmem:[%s3 + $0x230] sm:$0xf]
      %v10779 = vld [vmem:[%s3 + $0x234] sm:$0xf]
      %v10780 = vld [vmem:[%s3 + $0x238] sm:$0xf]
      %v10781 = vld [vmem:[%s3 + $0x23c] sm:$0xf]
      %v10782 = vld [vmem:[%s4] sm:$0x1]
      %v10784 = vperm.slane %v10782, 0
      %v10966 = vunpack.c.l.b16 %v10458
      %v10967 = vunpack.c.h.b16 %v10458
      %v10968 = vunpack.c.l.b16 %v10459
      %v10969 = vunpack.c.h.b16 %v10459
      %v10970 = vunpack.c.l.b16 %v10460
      %v10971 = vunpack.c.h.b16 %v10460
      %v10972 = vunpack.c.l.b16 %v10461
      %v10973 = vunpack.c.h.b16 %v10461
      %v10974 = vunpack.c.l.b16 %v10462
      %v10975 = vunpack.c.l.b16 %v10463
      %v10976 = vunpack.c.h.b16 %v10463
      %v10977 = vunpack.c.l.b16 %v10464
      %v10978 = vunpack.c.h.b16 %v10464
      %v10979 = vunpack.c.l.b16 %v10465
      %v10980 = vunpack.c.h.b16 %v10465
      %v10981 = vunpack.c.l.b16 %v10466
      %v10982 = vunpack.c.h.b16 %v10466
      %v10983 = vunpack.c.l.b16 %v10467
      %v10984 = vunpack.c.l.b16 %v10468
      %v10985 = vunpack.c.h.b16 %v10468
      %v10986 = vunpack.c.l.b16 %v10469
      %v10987 = vunpack.c.h.b16 %v10469
      %v10988 = vunpack.c.l.b16 %v10470
      %v10989 = vunpack.c.h.b16 %v10470
      %v10990 = vunpack.c.l.b16 %v10471
      %v10991 = vunpack.c.h.b16 %v10471
      %v10992 = vunpack.c.l.b16 %v10472
      %v10993 = vunpack.c.l.b16 %v10473
      %v10994 = vunpack.c.h.b16 %v10473
      %v10995 = vunpack.c.l.b16 %v10474
      %v10996 = vunpack.c.h.b16 %v10474
      %v10997 = vunpack.c.l.b16 %v10475
      %v10998 = vunpack.c.h.b16 %v10475
      %v10999 = vunpack.c.l.b16 %v10476
      %v11000 = vunpack.c.h.b16 %v10476
      %v11001 = vunpack.c.l.b16 %v10477
      %v11002 = vunpack.c.l.b16 %v10478
      %v11003 = vunpack.c.h.b16 %v10478
      %v11004 = vunpack.c.l.b16 %v10479
      %v11005 = vunpack.c.h.b16 %v10479
      %v11006 = vunpack.c.l.b16 %v10480
      %v11007 = vunpack.c.h.b16 %v10480
      %v11008 = vunpack.c.l.b16 %v10481
      %v11009 = vunpack.c.h.b16 %v10481
      %v11010 = vunpack.c.l.b16 %v10482
      %v11011 = vunpack.c.l.b16 %v10483
      %v11012 = vunpack.c.h.b16 %v10483
      %v11013 = vunpack.c.l.b16 %v10484
      %v11014 = vunpack.c.h.b16 %v10484
      %v11015 = vunpack.c.l.b16 %v10485
      %v11016 = vunpack.c.h.b16 %v10485
      %v11017 = vunpack.c.l.b16 %v10486
      %v11018 = vunpack.c.h.b16 %v10486
      %v11019 = vunpack.c.l.b16 %v10487
      %v11020 = vunpack.c.l.b16 %v10488
      %v11021 = vunpack.c.h.b16 %v10488
      %v11022 = vunpack.c.l.b16 %v10489
      %v11023 = vunpack.c.h.b16 %v10489
      %v11024 = vunpack.c.l.b16 %v10490
      %v11025 = vunpack.c.h.b16 %v10490
      %v11026 = vunpack.c.l.b16 %v10491
      %v11027 = vunpack.c.h.b16 %v10491
      %v11028 = vunpack.c.l.b16 %v10492
      %v11029 = vunpack.c.l.b16 %v10493
      %v11030 = vunpack.c.h.b16 %v10493
      %v11031 = vunpack.c.l.b16 %v10494
      %v11032 = vunpack.c.h.b16 %v10494
      %v11033 = vunpack.c.l.b16 %v10495
      %v11034 = vunpack.c.h.b16 %v10495
      %v11035 = vunpack.c.l.b16 %v10496
      %v11036 = vunpack.c.h.b16 %v10496
      %v11037 = vunpack.c.l.b16 %v10497
      %v11038 = vunpack.c.l.b16 %v10498
      %v11039 = vunpack.c.h.b16 %v10498
      %v11040 = vunpack.c.l.b16 %v10499
      %v11041 = vunpack.c.h.b16 %v10499
      %v11042 = vunpack.c.l.b16 %v10500
      %v11043 = vunpack.c.h.b16 %v10500
      %v11044 = vunpack.c.l.b16 %v10501
      %v11045 = vunpack.c.h.b16 %v10501
      %v11046 = vunpack.c.l.b16 %v10502
      %v11047 = vunpack.c.l.b16 %v10503
      %v11048 = vunpack.c.h.b16 %v10503
      %v11049 = vunpack.c.l.b16 %v10504
      %v11050 = vunpack.c.h.b16 %v10504
      %v11051 = vunpack.c.l.b16 %v10505
      %v11052 = vunpack.c.h.b16 %v10505
      %v11053 = vunpack.c.l.b16 %v10506
      %v11054 = vunpack.c.h.b16 %v10506
      %v11055 = vunpack.c.l.b16 %v10507
      %v11056 = vunpack.c.l.b16 %v10508
      %v11057 = vunpack.c.h.b16 %v10508
      %v11058 = vunpack.c.l.b16 %v10509
      %v11059 = vunpack.c.h.b16 %v10509
      %v11060 = vunpack.c.l.b16 %v10510
      %v11061 = vunpack.c.h.b16 %v10510
      %v11062 = vunpack.c.l.b16 %v10511
      %v11063 = vunpack.c.h.b16 %v10511
      %v11064 = vunpack.c.l.b16 %v10512
      %v11065 = vunpack.c.l.b16 %v10513
      %v11066 = vunpack.c.h.b16 %v10513
      %v11067 = vunpack.c.l.b16 %v10514
      %v11068 = vunpack.c.h.b16 %v10514
      %v11069 = vunpack.c.l.b16 %v10515
      %v11070 = vunpack.c.h.b16 %v10515
      %v11071 = vunpack.c.l.b16 %v10516
      %v11072 = vunpack.c.h.b16 %v10516
      %v11073 = vunpack.c.l.b16 %v10517
      %v11074 = vunpack.c.l.b16 %v10518
      %v11075 = vunpack.c.h.b16 %v10518
      %v11076 = vunpack.c.l.b16 %v10519
      %v11077 = vunpack.c.h.b16 %v10519
      %v11078 = vunpack.c.l.b16 %v10520
      %v11079 = vunpack.c.h.b16 %v10520
      %v11080 = vunpack.c.l.b16 %v10521
      %v11081 = vunpack.c.h.b16 %v10521
      %v11082 = vunpack.c.l.b16 %v10522
      %v11083 = vunpack.c.l.b16 %v10523
      %v11084 = vunpack.c.h.b16 %v10523
      %v11085 = vunpack.c.l.b16 %v10524
      %v11086 = vunpack.c.h.b16 %v10524
      %v11087 = vunpack.c.l.b16 %v10525
      %v11088 = vunpack.c.h.b16 %v10525
      %v11089 = vunpack.c.l.b16 %v10526
      %v11090 = vunpack.c.h.b16 %v10526
      %v11091 = vunpack.c.l.b16 %v10527
      %v11092 = vunpack.c.l.b16 %v10528
      %v11093 = vunpack.c.h.b16 %v10528
      %v11094 = vunpack.c.l.b16 %v10529
      %v11095 = vunpack.c.h.b16 %v10529
      %v11096 = vunpack.c.l.b16 %v10530
      %v11097 = vunpack.c.h.b16 %v10530
      %v11098 = vunpack.c.l.b16 %v10531
      %v11099 = vunpack.c.h.b16 %v10531
      %v11100 = vunpack.c.l.b16 %v10532
      %v11101 = vunpack.c.l.b16 %v10533
      %v11102 = vunpack.c.h.b16 %v10533
      %v11103 = vunpack.c.l.b16 %v10534
      %v11104 = vunpack.c.h.b16 %v10534
      %v11105 = vunpack.c.l.b16 %v10535
      %v11106 = vunpack.c.h.b16 %v10535
      %v11107 = vunpack.c.l.b16 %v10536
      %v11108 = vunpack.c.h.b16 %v10536
      %v11109 = vunpack.c.l.b16 %v10537
      %v11110 = vunpack.c.l.b16 %v10538
      %v11111 = vunpack.c.h.b16 %v10538
      %v11112 = vunpack.c.l.b16 %v10539
      %v11113 = vunpack.c.h.b16 %v10539
      %v11114 = vunpack.c.l.b16 %v10540
      %v11115 = vunpack.c.h.b16 %v10540
      %v11116 = vunpack.c.l.b16 %v10541
      %v11117 = vunpack.c.h.b16 %v10541
      %v11118 = vunpack.c.l.b16 %v10542
      %v11119 = vunpack.c.l.b16 %v10543
      %v11120 = vunpack.c.h.b16 %v10543
      %v11121 = vunpack.c.l.b16 %v10544
      %v11122 = vunpack.c.h.b16 %v10544
      %v11123 = vunpack.c.l.b16 %v10545
      %v11124 = vunpack.c.h.b16 %v10545
      %v11125 = vunpack.c.l.b16 %v10546
      %v11126 = vunpack.c.h.b16 %v10546
      %v11127 = vunpack.c.l.b16 %v10547
      %v11128 = vunpack.c.l.b16 %v10548
      %v11129 = vunpack.c.h.b16 %v10548
      %v11130 = vunpack.c.l.b16 %v10549
      %v11131 = vunpack.c.h.b16 %v10549
      %v11132 = vunpack.c.l.b16 %v10550
      %v11133 = vunpack.c.h.b16 %v10550
      %v11134 = vunpack.c.l.b16 %v10551
      %v11135 = vunpack.c.h.b16 %v10551
      %v11136 = vunpack.c.l.b16 %v10552
      %v11137 = vunpack.c.l.b16 %v10553
      %v11138 = vunpack.c.h.b16 %v10553
      %v11139 = vunpack.c.l.b16 %v10554
      %v11140 = vunpack.c.h.b16 %v10554
      %v11141 = vunpack.c.l.b16 %v10555
      %v11142 = vunpack.c.h.b16 %v10555
      %v11143 = vunpack.c.l.b16 %v10556
      %v11144 = vunpack.c.h.b16 %v10556
      %v11145 = vunpack.c.l.b16 %v10557
      %v11146 = vunpack.c.l.b16 %v10558
      %v11147 = vunpack.c.h.b16 %v10558
      %v11148 = vunpack.c.l.b16 %v10559
      %v11149 = vunpack.c.h.b16 %v10559
      %v11150 = vunpack.c.l.b16 %v10560
      %v11151 = vunpack.c.h.b16 %v10560
      %v11152 = vunpack.c.l.b16 %v10561
      %v11153 = vunpack.c.h.b16 %v10561
      %v11154 = vunpack.c.l.b16 %v10562
      %v11155 = vunpack.c.l.b16 %v10563
      %v11156 = vunpack.c.h.b16 %v10563
      %v11157 = vunpack.c.l.b16 %v10564
      %v11158 = vunpack.c.h.b16 %v10564
      %v11159 = vunpack.c.l.b16 %v10565
      %v11160 = vunpack.c.h.b16 %v10565
      %v11161 = vunpack.c.l.b16 %v10566
      %v11162 = vunpack.c.h.b16 %v10566
      %v11163 = vunpack.c.l.b16 %v10567
      %v11164 = vunpack.c.l.b16 %v10568
      %v11165 = vunpack.c.h.b16 %v10568
      %v11166 = vunpack.c.l.b16 %v10569
      %v11167 = vunpack.c.h.b16 %v10569
      %v11168 = vunpack.c.l.b16 %v10570
      %v11169 = vunpack.c.h.b16 %v10570
      %v11170 = vunpack.c.l.b16 %v10571
      %v11171 = vunpack.c.h.b16 %v10571
      %v11172 = vunpack.c.l.b16 %v10572
      %v11173 = vunpack.c.l.b16 %v10573
      %v11174 = vunpack.c.h.b16 %v10573
      %v11175 = vunpack.c.l.b16 %v10574
      %v11176 = vunpack.c.h.b16 %v10574
      %v11177 = vunpack.c.l.b16 %v10575
      %v11178 = vunpack.c.h.b16 %v10575
      %v11179 = vunpack.c.l.b16 %v10576
      %v11180 = vunpack.c.h.b16 %v10576
      %v11181 = vunpack.c.l.b16 %v10577
      %v11182 = vunpack.c.l.b16 %v10578
      %v11183 = vunpack.c.h.b16 %v10578
      %v11184 = vunpack.c.l.b16 %v10579
      %v11185 = vunpack.c.h.b16 %v10579
      %v11186 = vunpack.c.l.b16 %v10580
      %v11187 = vunpack.c.h.b16 %v10580
      %v11188 = vunpack.c.l.b16 %v10581
      %v11189 = vunpack.c.h.b16 %v10581
      %v11190 = vunpack.c.l.b16 %v10582
      %v11191 = vunpack.c.l.b16 %v10583
      %v11192 = vunpack.c.h.b16 %v10583
      %v11193 = vunpack.c.l.b16 %v10584
      %v11194 = vunpack.c.h.b16 %v10584
      %v11195 = vunpack.c.l.b16 %v10585
      %v11196 = vunpack.c.h.b16 %v10585
      %v11197 = vunpack.c.l.b16 %v10586
      %v11198 = vunpack.c.h.b16 %v10586
      %v11199 = vunpack.c.l.b16 %v10587
      %v11200 = vunpack.c.l.b16 %v10588
      %v11201 = vunpack.c.h.b16 %v10588
      %v11202 = vunpack.c.l.b16 %v10589
      %v11203 = vunpack.c.h.b16 %v10589
      %v11204 = vunpack.c.l.b16 %v10590
      %v11205 = vunpack.c.h.b16 %v10590
      %v11206 = vunpack.c.l.b16 %v10591
      %v11207 = vunpack.c.h.b16 %v10591
      %v11208 = vunpack.c.l.b16 %v10592
      %v11209 = vunpack.c.l.b16 %v10593
      %v11210 = vunpack.c.h.b16 %v10593
      %v11211 = vunpack.c.l.b16 %v10594
      %v11212 = vunpack.c.h.b16 %v10594
      %v11213 = vunpack.c.l.b16 %v10595
      %v11214 = vunpack.c.h.b16 %v10595
      %v11215 = vunpack.c.l.b16 %v10596
      %v11216 = vunpack.c.h.b16 %v10596
      %v11217 = vunpack.c.l.b16 %v10597
      %v11218 = vunpack.c.l.b16 %v10598
      %v11219 = vunpack.c.h.b16 %v10598
      %v11220 = vunpack.c.l.b16 %v10599
      %v11221 = vunpack.c.h.b16 %v10599
      %v11222 = vunpack.c.l.b16 %v10600
      %v11223 = vunpack.c.h.b16 %v10600
      %v11224 = vunpack.c.l.b16 %v10601
      %v11225 = vunpack.c.h.b16 %v10601
      %v11226 = vunpack.c.l.b16 %v10602
      %v11227 = vunpack.c.l.b16 %v10603
      %v11228 = vunpack.c.h.b16 %v10603
      %v11229 = vunpack.c.l.b16 %v10604
      %v11230 = vunpack.c.h.b16 %v10604
      %v11231 = vunpack.c.l.b16 %v10605
      %v11232 = vunpack.c.h.b16 %v10605
      %v11233 = vunpack.c.l.b16 %v10606
      %v11234 = vunpack.c.h.b16 %v10606
      %v11235 = vunpack.c.l.b16 %v10607
      %v11236 = vunpack.c.l.b16 %v10608
      %v11237 = vunpack.c.h.b16 %v10608
      %v11238 = vunpack.c.l.b16 %v10609
      %v11239 = vunpack.c.h.b16 %v10609
      %v11240 = vunpack.c.l.b16 %v10610
      %v11241 = vunpack.c.h.b16 %v10610
      %v11242 = vunpack.c.l.b16 %v10611
      %v11243 = vunpack.c.h.b16 %v10611
      %v11244 = vunpack.c.l.b16 %v10612
      %v11245 = vunpack.c.l.b16 %v10613
      %v11246 = vunpack.c.h.b16 %v10613
      %v11247 = vunpack.c.l.b16 %v10614
      %v11248 = vunpack.c.h.b16 %v10614
      %v11249 = vunpack.c.l.b16 %v10615
      %v11250 = vunpack.c.h.b16 %v10615
      %v11251 = vunpack.c.l.b16 %v10616
      %v11252 = vunpack.c.h.b16 %v10616
      %v11253 = vunpack.c.l.b16 %v10617
      %v11254 = vunpack.c.l.b16 %v10618
      %v11255 = vunpack.c.h.b16 %v10618
      %v11256 = vunpack.c.l.b16 %v10619
      %v11257 = vunpack.c.h.b16 %v10619
      %v11258 = vunpack.c.l.b16 %v10620
      %v11259 = vunpack.c.h.b16 %v10620
      %v11260 = vunpack.c.l.b16 %v10621
      %v11261 = vunpack.c.h.b16 %v10621
      %v11262 = vunpack.c.l.b16 %v10622
      %v11263 = vunpack.c.l.b16 %v10623
      %v11264 = vunpack.c.h.b16 %v10623
      %v11265 = vunpack.c.l.b16 %v10624
      %v11266 = vunpack.c.h.b16 %v10624
      %v11267 = vunpack.c.l.b16 %v10625
      %v11268 = vunpack.c.h.b16 %v10625
      %v11269 = vunpack.c.l.b16 %v10626
      %v11270 = vunpack.c.h.b16 %v10626
      %v11271 = vunpack.c.l.b16 %v10627
      %v11272 = vunpack.c.l.b16 %v10628
      %v11273 = vunpack.c.h.b16 %v10628
      %v11274 = vunpack.c.l.b16 %v10629
      %v11275 = vunpack.c.h.b16 %v10629
      %v11276 = vunpack.c.l.b16 %v10630
      %v11277 = vunpack.c.h.b16 %v10630
      %v11278 = vunpack.c.l.b16 %v10631
      %v11279 = vunpack.c.h.b16 %v10631
      %v11280 = vunpack.c.l.b16 %v10632
      %v11281 = vunpack.c.l.b16 %v10633
      %v11282 = vunpack.c.h.b16 %v10633
      %v11283 = vunpack.c.l.b16 %v10634
      %v11284 = vunpack.c.h.b16 %v10634
      %v11285 = vunpack.c.l.b16 %v10635
      %v11286 = vunpack.c.h.b16 %v10635
      %v11287 = vunpack.c.l.b16 %v10636
      %v11288 = vunpack.c.h.b16 %v10636
      %v11289 = vunpack.c.l.b16 %v10637
      %v11290 = vpack.c.b16 %v10975, %v10966
      %v11291 = vpack.c.b16 %v10976, %v10967
      %v11292 = vpack.c.b16 %v10977, %v10968
      %v11293 = vpack.c.b16 %v10978, %v10969
      %v11294 = vpack.c.b16 %v10979, %v10970
      %v11295 = vpack.c.b16 %v10980, %v10971
      %v11296 = vpack.c.b16 %v10981, %v10972
      %v11297 = vpack.c.b16 %v10982, %v10973
      %v11298 = vpack.c.b16 %v10983, %v10974
      %v11299 = vpack.c.b16 %v10993, %v10984
      %v11300 = vpack.c.b16 %v10994, %v10985
      %v11301 = vpack.c.b16 %v10995, %v10986
      %v11302 = vpack.c.b16 %v10996, %v10987
      %v11303 = vpack.c.b16 %v10997, %v10988
      %v11304 = vpack.c.b16 %v10998, %v10989
      %v11305 = vpack.c.b16 %v10999, %v10990
      %v11306 = vpack.c.b16 %v11000, %v10991
      %v11307 = vpack.c.b16 %v11001, %v10992
      %v11308 = vpack.c.b16 %v11011, %v11002
      %v11309 = vpack.c.b16 %v11012, %v11003
      %v11310 = vpack.c.b16 %v11013, %v11004
      %v11311 = vpack.c.b16 %v11014, %v11005
      %v11312 = vpack.c.b16 %v11015, %v11006
      %v11313 = vpack.c.b16 %v11016, %v11007
      %v11314 = vpack.c.b16 %v11017, %v11008
      %v11315 = vpack.c.b16 %v11018, %v11009
      %v11316 = vpack.c.b16 %v11019, %v11010
      %v11317 = vpack.c.b16 %v11029, %v11020
      %v11318 = vpack.c.b16 %v11030, %v11021
      %v11319 = vpack.c.b16 %v11031, %v11022
      %v11320 = vpack.c.b16 %v11032, %v11023
      %v11321 = vpack.c.b16 %v11033, %v11024
      %v11322 = vpack.c.b16 %v11034, %v11025
      %v11323 = vpack.c.b16 %v11035, %v11026
      %v11324 = vpack.c.b16 %v11036, %v11027
      %v11325 = vpack.c.b16 %v11037, %v11028
      %v11326 = vpack.c.b16 %v11047, %v11038
      %v11327 = vpack.c.b16 %v11048, %v11039
      %v11328 = vpack.c.b16 %v11049, %v11040
      %v11329 = vpack.c.b16 %v11050, %v11041
      %v11330 = vpack.c.b16 %v11051, %v11042
      %v11331 = vpack.c.b16 %v11052, %v11043
      %v11332 = vpack.c.b16 %v11053, %v11044
      %v11333 = vpack.c.b16 %v11054, %v11045
      %v11334 = vpack.c.b16 %v11055, %v11046
      %v11335 = vpack.c.b16 %v11065, %v11056
      %v11336 = vpack.c.b16 %v11066, %v11057
      %v11337 = vpack.c.b16 %v11067, %v11058
      %v11338 = vpack.c.b16 %v11068, %v11059
      %v11339 = vpack.c.b16 %v11069, %v11060
      %v11340 = vpack.c.b16 %v11070, %v11061
      %v11341 = vpack.c.b16 %v11071, %v11062
      %v11342 = vpack.c.b16 %v11072, %v11063
      %v11343 = vpack.c.b16 %v11073, %v11064
      %v11344 = vpack.c.b16 %v11083, %v11074
      %v11345 = vpack.c.b16 %v11084, %v11075
      %v11346 = vpack.c.b16 %v11085, %v11076
      %v11347 = vpack.c.b16 %v11086, %v11077
      %v11348 = vpack.c.b16 %v11087, %v11078
      %v11349 = vpack.c.b16 %v11088, %v11079
      %v11350 = vpack.c.b16 %v11089, %v11080
      %v11351 = vpack.c.b16 %v11090, %v11081
      %v11352 = vpack.c.b16 %v11091, %v11082
      %v11353 = vpack.c.b16 %v11101, %v11092
      %v11354 = vpack.c.b16 %v11102, %v11093
      %v11355 = vpack.c.b16 %v11103, %v11094
      %v11356 = vpack.c.b16 %v11104, %v11095
      %v11357 = vpack.c.b16 %v11105, %v11096
      %v11358 = vpack.c.b16 %v11106, %v11097
      %v11359 = vpack.c.b16 %v11107, %v11098
      %v11360 = vpack.c.b16 %v11108, %v11099
      %v11361 = vpack.c.b16 %v11109, %v11100
      %v11362 = vpack.c.b16 %v11119, %v11110
      %v11363 = vpack.c.b16 %v11120, %v11111
      %v11364 = vpack.c.b16 %v11121, %v11112
      %v11365 = vpack.c.b16 %v11122, %v11113
      %v11366 = vpack.c.b16 %v11123, %v11114
      %v11367 = vpack.c.b16 %v11124, %v11115
      %v11368 = vpack.c.b16 %v11125, %v11116
      %v11369 = vpack.c.b16 %v11126, %v11117
      %v11370 = vpack.c.b16 %v11127, %v11118
      %v11371 = vpack.c.b16 %v11137, %v11128
      %v11372 = vpack.c.b16 %v11138, %v11129
      %v11373 = vpack.c.b16 %v11139, %v11130
      %v11374 = vpack.c.b16 %v11140, %v11131
      %v11375 = vpack.c.b16 %v11141, %v11132
      %v11376 = vpack.c.b16 %v11142, %v11133
      %v11377 = vpack.c.b16 %v11143, %v11134
      %v11378 = vpack.c.b16 %v11144, %v11135
      %v11379 = vpack.c.b16 %v11145, %v11136
      %v11380 = vpack.c.b16 %v11155, %v11146
      %v11381 = vpack.c.b16 %v11156, %v11147
      %v11382 = vpack.c.b16 %v11157, %v11148
      %v11383 = vpack.c.b16 %v11158, %v11149
      %v11384 = vpack.c.b16 %v11159, %v11150
      %v11385 = vpack.c.b16 %v11160, %v11151
      %v11386 = vpack.c.b16 %v11161, %v11152
      %v11387 = vpack.c.b16 %v11162, %v11153
      %v11388 = vpack.c.b16 %v11163, %v11154
      %v11389 = vpack.c.b16 %v11173, %v11164
      %v11390 = vpack.c.b16 %v11174, %v11165
      %v11391 = vpack.c.b16 %v11175, %v11166
      %v11392 = vpack.c.b16 %v11176, %v11167
      %v11393 = vpack.c.b16 %v11177, %v11168
      %v11394 = vpack.c.b16 %v11178, %v11169
      %v11395 = vpack.c.b16 %v11179, %v11170
      %v11396 = vpack.c.b16 %v11180, %v11171
      %v11397 = vpack.c.b16 %v11181, %v11172
      %v11398 = vpack.c.b16 %v11191, %v11182
      %v11399 = vpack.c.b16 %v11192, %v11183
      %v11400 = vpack.c.b16 %v11193, %v11184
      %v11401 = vpack.c.b16 %v11194, %v11185
      %v11402 = vpack.c.b16 %v11195, %v11186
      %v11403 = vpack.c.b16 %v11196, %v11187
      %v11404 = vpack.c.b16 %v11197, %v11188
      %v11405 = vpack.c.b16 %v11198, %v11189
      %v11406 = vpack.c.b16 %v11199, %v11190
      %v11407 = vpack.c.b16 %v11209, %v11200
      %v11408 = vpack.c.b16 %v11210, %v11201
      %v11409 = vpack.c.b16 %v11211, %v11202
      %v11410 = vpack.c.b16 %v11212, %v11203
      %v11411 = vpack.c.b16 %v11213, %v11204
      %v11412 = vpack.c.b16 %v11214, %v11205
      %v11413 = vpack.c.b16 %v11215, %v11206
      %v11414 = vpack.c.b16 %v11216, %v11207
      %v11415 = vpack.c.b16 %v11217, %v11208
      %v11416 = vpack.c.b16 %v11227, %v11218
      %v11417 = vpack.c.b16 %v11228, %v11219
      %v11418 = vpack.c.b16 %v11229, %v11220
      %v11419 = vpack.c.b16 %v11230, %v11221
      %v11420 = vpack.c.b16 %v11231, %v11222
      %v11421 = vpack.c.b16 %v11232, %v11223
      %v11422 = vpack.c.b16 %v11233, %v11224
      %v11423 = vpack.c.b16 %v11234, %v11225
      %v11424 = vpack.c.b16 %v11235, %v11226
      %v11425 = vpack.c.b16 %v11245, %v11236
      %v11426 = vpack.c.b16 %v11246, %v11237
      %v11427 = vpack.c.b16 %v11247, %v11238
      %v11428 = vpack.c.b16 %v11248, %v11239
      %v11429 = vpack.c.b16 %v11249, %v11240
      %v11430 = vpack.c.b16 %v11250, %v11241
      %v11431 = vpack.c.b16 %v11251, %v11242
      %v11432 = vpack.c.b16 %v11252, %v11243
      %v11433 = vpack.c.b16 %v11253, %v11244
      %v11434 = vpack.c.b16 %v11263, %v11254
      %v11435 = vpack.c.b16 %v11264, %v11255
      %v11436 = vpack.c.b16 %v11265, %v11256
      %v11437 = vpack.c.b16 %v11266, %v11257
      %v11438 = vpack.c.b16 %v11267, %v11258
      %v11439 = vpack.c.b16 %v11268, %v11259
      %v11440 = vpack.c.b16 %v11269, %v11260
      %v11441 = vpack.c.b16 %v11270, %v11261
      %v11442 = vpack.c.b16 %v11271, %v11262
      %v11443 = vpack.c.b16 %v11281, %v11272
      %v11444 = vpack.c.b16 %v11282, %v11273
      %v11445 = vpack.c.b16 %v11283, %v11274
      %v11446 = vpack.c.b16 %v11284, %v11275
      %v11447 = vpack.c.b16 %v11285, %v11276
      %v11448 = vpack.c.b16 %v11286, %v11277
      %v11449 = vpack.c.b16 %v11287, %v11278
      %v11450 = vpack.c.b16 %v11288, %v11279
      %v11451 = vpack.c.b16 %v11289, %v11280
      %v11758 = vunpack.c.l.b16 %v10638
      %v11759 = vunpack.c.l.b16 %v10639
      %v11760 = vunpack.c.l.b16 %v10640
      %v11761 = vunpack.c.l.b16 %v10641
      %v11762 = vunpack.c.l.b16 %v10642
      %v11763 = vunpack.c.l.b16 %v10643
      %v11764 = vunpack.c.l.b16 %v10644
      %v11765 = vunpack.c.l.b16 %v10645
      %v11766 = vunpack.c.l.b16 %v10646
      %v11767 = vunpack.c.l.b16 %v10647
      %v11768 = vunpack.c.l.b16 %v10648
      %v11769 = vunpack.c.l.b16 %v10649
      %v11770 = vunpack.c.l.b16 %v10650
      %v11771 = vunpack.c.l.b16 %v10651
      %v11772 = vunpack.c.l.b16 %v10652
      %v11773 = vunpack.c.l.b16 %v10653
      %v11774 = vunpack.c.l.b16 %v10654
      %v11775 = vunpack.c.l.b16 %v10655
      %v11776 = vunpack.c.l.b16 %v10656
      %v11777 = vunpack.c.l.b16 %v10657
      %v11778 = vunpack.c.l.b16 %v10658
      %v11779 = vunpack.c.l.b16 %v10659
      %v11780 = vunpack.c.l.b16 %v10660
      %v11781 = vunpack.c.l.b16 %v10661
      %v11782 = vunpack.c.l.b16 %v10662
      %v11783 = vunpack.c.l.b16 %v10663
      %v11784 = vunpack.c.l.b16 %v10664
      %v11785 = vunpack.c.l.b16 %v10665
      %v11786 = vunpack.c.l.b16 %v10666
      %v11787 = vunpack.c.l.b16 %v10667
      %v11788 = vunpack.c.l.b16 %v10668
      %v11789 = vunpack.c.l.b16 %v10669
      %v11790 = vunpack.c.l.b16 %v10670
      %v11791 = vunpack.c.l.b16 %v10671
      %v11792 = vunpack.c.l.b16 %v10672
      %v11793 = vunpack.c.l.b16 %v10673
      %v11794 = vunpack.c.l.b16 %v10674
      %v11795 = vunpack.c.l.b16 %v10675
      %v11796 = vunpack.c.l.b16 %v10676
      %v11797 = vunpack.c.l.b16 %v10677
      %v11798 = vunpack.c.l.b16 %v10678
      %v11799 = vunpack.c.l.b16 %v10679
      %v11800 = vunpack.c.l.b16 %v10680
      %v11801 = vunpack.c.l.b16 %v10681
      %v11802 = vunpack.c.l.b16 %v10682
      %v11803 = vunpack.c.l.b16 %v10683
      %v11804 = vunpack.c.l.b16 %v10684
      %v11805 = vunpack.c.l.b16 %v10685
      %v11806 = vunpack.c.l.b16 %v10686
      %v11807 = vunpack.c.l.b16 %v10687
      %v11808 = vunpack.c.l.b16 %v10688
      %v11809 = vunpack.c.l.b16 %v10689
      %v11810 = vunpack.c.l.b16 %v10690
      %v11811 = vunpack.c.l.b16 %v10691
      %v11812 = vunpack.c.l.b16 %v10692
      %v11813 = vunpack.c.l.b16 %v10693
      %v11814 = vunpack.c.l.b16 %v10694
      %v11815 = vunpack.c.l.b16 %v10695
      %v11816 = vunpack.c.l.b16 %v10696
      %v11817 = vunpack.c.l.b16 %v10697
      %v11818 = vunpack.c.l.b16 %v10698
      %v11819 = vunpack.c.l.b16 %v10699
      %v11820 = vunpack.c.l.b16 %v10700
      %v11821 = vunpack.c.l.b16 %v10701
      %v11822 = vunpack.c.l.b16 %v10702
      %v11823 = vunpack.c.l.b16 %v10703
      %v11824 = vunpack.c.l.b16 %v10704
      %v11825 = vunpack.c.l.b16 %v10705
      %v11826 = vunpack.c.l.b16 %v10706
      %v11827 = vunpack.c.l.b16 %v10707
      %v11828 = vunpack.c.l.b16 %v10708
      %v11829 = vunpack.c.l.b16 %v10709
      %v11830 = vunpack.c.l.b16 %v10710
      %v11831 = vunpack.c.l.b16 %v10711
      %v11832 = vunpack.c.l.b16 %v10712
      %v11833 = vunpack.c.l.b16 %v10713
      %v11834 = vunpack.c.l.b16 %v10714
      %v11835 = vunpack.c.l.b16 %v10715
      %v11836 = vunpack.c.l.b16 %v10716
      %v11837 = vunpack.c.l.b16 %v10717
      %v11838 = vunpack.c.l.b16 %v10718
      %v11839 = vunpack.c.l.b16 %v10719
      %v11840 = vunpack.c.l.b16 %v10720
      %v11841 = vunpack.c.l.b16 %v10721
      %v11842 = vunpack.c.l.b16 %v10722
      %v11843 = vunpack.c.l.b16 %v10723
      %v11844 = vunpack.c.l.b16 %v10724
      %v11845 = vunpack.c.l.b16 %v10725
      %v11846 = vunpack.c.l.b16 %v10726
      %v11847 = vunpack.c.l.b16 %v10727
      %v11848 = vunpack.c.l.b16 %v10728
      %v11849 = vunpack.c.l.b16 %v10729
      %v11850 = vunpack.c.l.b16 %v10730
      %v11851 = vunpack.c.l.b16 %v10731
      %v11852 = vunpack.c.l.b16 %v10732
      %v11853 = vunpack.c.l.b16 %v10733
      %v11854 = vunpack.c.l.b16 %v10734
      %v11855 = vunpack.c.l.b16 %v10735
      %v11856 = vunpack.c.l.b16 %v10736
      %v11857 = vunpack.c.l.b16 %v10737
      %v11858 = vunpack.c.l.b16 %v10738
      %v11859 = vunpack.c.l.b16 %v10739
      %v11860 = vunpack.c.l.b16 %v10740
      %v11861 = vunpack.c.l.b16 %v10741
      %v11862 = vunpack.c.l.b16 %v10742
      %v11863 = vunpack.c.l.b16 %v10743
      %v11864 = vunpack.c.l.b16 %v10744
      %v11865 = vunpack.c.l.b16 %v10745
      %v11866 = vunpack.c.l.b16 %v10746
      %v11867 = vunpack.c.l.b16 %v10747
      %v11868 = vunpack.c.l.b16 %v10748
      %v11869 = vunpack.c.l.b16 %v10749
      %v11870 = vunpack.c.l.b16 %v10750
      %v11871 = vunpack.c.l.b16 %v10751
      %v11872 = vunpack.c.l.b16 %v10752
      %v11873 = vunpack.c.l.b16 %v10753
      %v11874 = vunpack.c.l.b16 %v10754
      %v11875 = vunpack.c.l.b16 %v10755
      %v11876 = vunpack.c.l.b16 %v10756
      %v11877 = vunpack.c.l.b16 %v10757
      %v11878 = vunpack.c.l.b16 %v10758
      %v11879 = vunpack.c.l.b16 %v10759
      %v11880 = vunpack.c.l.b16 %v10760
      %v11881 = vunpack.c.l.b16 %v10761
      %v11882 = vunpack.c.l.b16 %v10762
      %v11883 = vunpack.c.l.b16 %v10763
      %v11884 = vunpack.c.l.b16 %v10764
      %v11885 = vunpack.c.l.b16 %v10765
      %v11886 = vunpack.c.l.b16 %v10766
      %v11887 = vunpack.c.l.b16 %v10767
      %v11888 = vunpack.c.l.b16 %v10768
      %v11889 = vunpack.c.l.b16 %v10769
      %v11890 = vunpack.c.l.b16 %v10770
      %v11891 = vunpack.c.l.b16 %v10771
      %v11892 = vunpack.c.l.b16 %v10772
      %v11893 = vunpack.c.l.b16 %v10773
      %v11894 = vunpack.c.l.b16 %v10774
      %v11895 = vunpack.c.l.b16 %v10775
      %v11896 = vunpack.c.l.b16 %v10776
      %v11897 = vunpack.c.l.b16 %v10777
      %v11898 = vunpack.c.l.b16 %v10778
      %v11899 = vunpack.c.l.b16 %v10779
      %v11900 = vunpack.c.l.b16 %v10780
      %v11901 = vunpack.c.l.b16 %v10781
      %v11902 = vpack.c.b16 %v11759, %v11758
      %v11903 = vpack.c.b16 %v11761, %v11760
      %v11904 = vpack.c.b16 %v11763, %v11762
      %v11905 = vpack.c.b16 %v11765, %v11764
      %v11906 = vpack.c.b16 %v11767, %v11766
      %v11907 = vpack.c.b16 %v11769, %v11768
      %v11908 = vpack.c.b16 %v11771, %v11770
      %v11909 = vpack.c.b16 %v11773, %v11772
      %v11910 = vpack.c.b16 %v11775, %v11774
      %v11911 = vpack.c.b16 %v11777, %v11776
      %v11912 = vpack.c.b16 %v11779, %v11778
      %v11913 = vpack.c.b16 %v11781, %v11780
      %v11914 = vpack.c.b16 %v11783, %v11782
      %v11915 = vpack.c.b16 %v11785, %v11784
      %v11916 = vpack.c.b16 %v11787, %v11786
      %v11917 = vpack.c.b16 %v11789, %v11788
      %v11918 = vpack.c.b16 %v11791, %v11790
      %v11919 = vpack.c.b16 %v11793, %v11792
      %v11920 = vpack.c.b16 %v11795, %v11794
      %v11921 = vpack.c.b16 %v11797, %v11796
      %v11922 = vpack.c.b16 %v11799, %v11798
      %v11923 = vpack.c.b16 %v11801, %v11800
      %v11924 = vpack.c.b16 %v11803, %v11802
      %v11925 = vpack.c.b16 %v11805, %v11804
      %v11926 = vpack.c.b16 %v11807, %v11806
      %v11927 = vpack.c.b16 %v11809, %v11808
      %v11928 = vpack.c.b16 %v11811, %v11810
      %v11929 = vpack.c.b16 %v11813, %v11812
      %v11930 = vpack.c.b16 %v11815, %v11814
      %v11931 = vpack.c.b16 %v11817, %v11816
      %v11932 = vpack.c.b16 %v11819, %v11818
      %v11933 = vpack.c.b16 %v11821, %v11820
      %v11934 = vpack.c.b16 %v11823, %v11822
      %v11935 = vpack.c.b16 %v11825, %v11824
      %v11936 = vpack.c.b16 %v11827, %v11826
      %v11937 = vpack.c.b16 %v11829, %v11828
      %v11938 = vpack.c.b16 %v11831, %v11830
      %v11939 = vpack.c.b16 %v11833, %v11832
      %v11940 = vpack.c.b16 %v11835, %v11834
      %v11941 = vpack.c.b16 %v11837, %v11836
      %v11942 = vpack.c.b16 %v11839, %v11838
      %v11943 = vpack.c.b16 %v11841, %v11840
      %v11944 = vpack.c.b16 %v11843, %v11842
      %v11945 = vpack.c.b16 %v11845, %v11844
      %v11946 = vpack.c.b16 %v11847, %v11846
      %v11947 = vpack.c.b16 %v11849, %v11848
      %v11948 = vpack.c.b16 %v11851, %v11850
      %v11949 = vpack.c.b16 %v11853, %v11852
      %v11950 = vpack.c.b16 %v11855, %v11854
      %v11951 = vpack.c.b16 %v11857, %v11856
      %v11952 = vpack.c.b16 %v11859, %v11858
      %v11953 = vpack.c.b16 %v11861, %v11860
      %v11954 = vpack.c.b16 %v11863, %v11862
      %v11955 = vpack.c.b16 %v11865, %v11864
      %v11956 = vpack.c.b16 %v11867, %v11866
      %v11957 = vpack.c.b16 %v11869, %v11868
      %v11958 = vpack.c.b16 %v11871, %v11870
      %v11959 = vpack.c.b16 %v11873, %v11872
      %v11960 = vpack.c.b16 %v11875, %v11874
      %v11961 = vpack.c.b16 %v11877, %v11876
      %v11962 = vpack.c.b16 %v11879, %v11878
      %v11963 = vpack.c.b16 %v11881, %v11880
      %v11964 = vpack.c.b16 %v11883, %v11882
      %v11965 = vpack.c.b16 %v11885, %v11884
      %v11966 = vpack.c.b16 %v11887, %v11886
      %v11967 = vpack.c.b16 %v11889, %v11888
      %v11968 = vpack.c.b16 %v11891, %v11890
      %v11969 = vpack.c.b16 %v11893, %v11892
      %v11970 = vpack.c.b16 %v11895, %v11894
      %v11971 = vpack.c.b16 %v11897, %v11896
      %v11972 = vpack.c.b16 %v11899, %v11898
      %v11973 = vpack.c.b16 %v11901, %v11900
      %12046 = vmatpush.bf16.msra.mxu0 %v11909
      %12047 = vmatpush.bf16.msra.mxu0 %v11908
      %12048 = vmatpush.bf16.msra.mxu0 %v11907
      %12049 = vmatpush.bf16.msra.mxu0 %v11906
      %12050 = vmatpush.bf16.msra.mxu0 %v11905
      %12051 = vmatpush.bf16.msra.mxu0 %v11904
      %12052 = vmatpush.bf16.msra.mxu0 %v11903
      %12053 = vmatpush.bf16.msra.mxu0 %v11902
      %12054 = vmatmul.bf16.gmra.mxu0 %v11290
      %v12055 = vpop.f32.mrf.mxu0
      %v12056 = vadd.f32 %v10784, %v12055
      %v12057 = vpop.f32.mrf.mxu0
      %v12058 = vadd.f32 %v10784, %v12057
      %12059 = vmatmul.bf16.gmra.mxu0 %v11299
      %v12060 = vpop.f32.mrf.mxu0
      %v12061 = vadd.f32 %v10784, %v12060
      %v12062 = vpop.f32.mrf.mxu0
      %v12063 = vadd.f32 %v10784, %v12062
      %12064 = vmatmul.bf16.gmra.mxu0 %v11308
      %v12065 = vpop.f32.mrf.mxu0
      %v12066 = vadd.f32 %v10784, %v12065
      %v12067 = vpop.f32.mrf.mxu0
      %v12068 = vadd.f32 %v10784, %v12067
      %12069 = vmatmul.bf16.gmra.mxu0 %v11317
      %v12070 = vpop.f32.mrf.mxu0
      %v12071 = vadd.f32 %v10784, %v12070
      %v12072 = vpop.f32.mrf.mxu0
      %v12073 = vadd.f32 %v10784, %v12072
      %12074 = vmatmul.bf16.gmra.mxu0 %v11326
      %v12075 = vpop.f32.mrf.mxu0
      %v12076 = vadd.f32 %v10784, %v12075
      %v12077 = vpop.f32.mrf.mxu0
      %v12078 = vadd.f32 %v10784, %v12077
      %12079 = vmatmul.bf16.gmra.mxu0 %v11335
      %v12080 = vpop.f32.mrf.mxu0
      %v12081 = vadd.f32 %v10784, %v12080
      %v12082 = vpop.f32.mrf.mxu0
      %v12083 = vadd.f32 %v10784, %v12082
      %12084 = vmatmul.bf16.gmra.mxu0 %v11344
      %v12085 = vpop.f32.mrf.mxu0
      %v12086 = vadd.f32 %v10784, %v12085
      %v12087 = vpop.f32.mrf.mxu0
      %v12088 = vadd.f32 %v10784, %v12087
      %12089 = vmatmul.bf16.gmra.mxu0 %v11353
      %v12090 = vpop.f32.mrf.mxu0
      %v12091 = vadd.f32 %v10784, %v12090
      %v12092 = vpop.f32.mrf.mxu0
      %v12093 = vadd.f32 %v10784, %v12092
      %12094 = vmatmul.bf16.gmra.mxu0 %v11362
      %v12095 = vpop.f32.mrf.mxu0
      %v12096 = vadd.f32 %v10784, %v12095
      %v12097 = vpop.f32.mrf.mxu0
      %v12098 = vadd.f32 %v10784, %v12097
      %12099 = vmatmul.bf16.gmra.mxu0 %v11371
      %v12100 = vpop.f32.mrf.mxu0
      %v12101 = vadd.f32 %v10784, %v12100
      %v12102 = vpop.f32.mrf.mxu0
      %v12103 = vadd.f32 %v10784, %v12102
      %12104 = vmatmul.bf16.gmra.mxu0 %v11380
      %v12105 = vpop.f32.mrf.mxu0
      %v12106 = vadd.f32 %v10784, %v12105
      %v12107 = vpop.f32.mrf.mxu0
      %v12108 = vadd.f32 %v10784, %v12107
      %12109 = vmatmul.bf16.gmra.mxu0 %v11389
      %v12110 = vpop.f32.mrf.mxu0
      %v12111 = vadd.f32 %v10784, %v12110
      %v12112 = vpop.f32.mrf.mxu0
      %v12113 = vadd.f32 %v10784, %v12112
      %12114 = vmatmul.bf16.gmra.mxu0 %v11398
      %v12115 = vpop.f32.mrf.mxu0
      %v12116 = vadd.f32 %v10784, %v12115
      %v12117 = vpop.f32.mrf.mxu0
      %v12118 = vadd.f32 %v10784, %v12117
      %12119 = vmatmul.bf16.gmra.mxu0 %v11407
      %v12120 = vpop.f32.mrf.mxu0
      %v12121 = vadd.f32 %v10784, %v12120
      %v12122 = vpop.f32.mrf.mxu0
      %v12123 = vadd.f32 %v10784, %v12122
      %12124 = vmatmul.bf16.gmra.mxu0 %v11416
      %v12125 = vpop.f32.mrf.mxu0
      %v12126 = vadd.f32 %v10784, %v12125
      %v12127 = vpop.f32.mrf.mxu0
      %v12128 = vadd.f32 %v10784, %v12127
      %12129 = vmatmul.bf16.gmra.mxu0 %v11425
      %v12130 = vpop.f32.mrf.mxu0
      %v12131 = vadd.f32 %v10784, %v12130
      %v12132 = vpop.f32.mrf.mxu0
      %v12133 = vadd.f32 %v10784, %v12132
      %12134 = vmatmul.bf16.gmra.mxu0 %v11434
      %v12135 = vpop.f32.mrf.mxu0
      %v12136 = vadd.f32 %v10784, %v12135
      %v12137 = vpop.f32.mrf.mxu0
      %v12138 = vadd.f32 %v10784, %v12137
      %12139 = vmatmul.bf16.gmra.mxu0 %v11443
      %v12140 = vpop.f32.mrf.mxu0
      %v12141 = vadd.f32 %v10784, %v12140
      %v12142 = vpop.f32.mrf.mxu0
      %v12143 = vadd.f32 %v10784, %v12142
      %12144 = vdwg.mxu0
      %12145 = vmatpush.bf16.msra.mxu0 %v11917
      %12146 = vmatpush.bf16.msra.mxu0 %v11916
      %12147 = vmatpush.bf16.msra.mxu0 %v11915
      %12148 = vmatpush.bf16.msra.mxu0 %v11914
      %12149 = vmatpush.bf16.msra.mxu0 %v11913
      %12150 = vmatpush.bf16.msra.mxu0 %v11912
      %12151 = vmatpush.bf16.msra.mxu0 %v11911
      %12152 = vmatpush.bf16.msra.mxu0 %v11910
      %12153 = vmatmul.bf16.gmra.mxu0 %v11291
      %v12154 = vpop.f32.mrf.mxu0
      %v12155 = vadd.f32 %v12056, %v12154
      %v12156 = vpop.f32.mrf.mxu0
      %v12157 = vadd.f32 %v12058, %v12156
      %12158 = vmatmul.bf16.gmra.mxu0 %v11300
      %v12159 = vpop.f32.mrf.mxu0
      %v12160 = vadd.f32 %v12061, %v12159
      %v12161 = vpop.f32.mrf.mxu0
      %v12162 = vadd.f32 %v12063, %v12161
      %12163 = vmatmul.bf16.gmra.mxu0 %v11309
      %v12164 = vpop.f32.mrf.mxu0
      %v12165 = vadd.f32 %v12066, %v12164
      %v12166 = vpop.f32.mrf.mxu0
      %v12167 = vadd.f32 %v12068, %v12166
      %12168 = vmatmul.bf16.gmra.mxu0 %v11318
      %v12169 = vpop.f32.mrf.mxu0
      %v12170 = vadd.f32 %v12071, %v12169
      %v12171 = vpop.f32.mrf.mxu0
      %v12172 = vadd.f32 %v12073, %v12171
      %12173 = vmatmul.bf16.gmra.mxu0 %v11327
      %v12174 = vpop.f32.mrf.mxu0
      %v12175 = vadd.f32 %v12076, %v12174
      %v12176 = vpop.f32.mrf.mxu0
      %v12177 = vadd.f32 %v12078, %v12176
      %12178 = vmatmul.bf16.gmra.mxu0 %v11336
      %v12179 = vpop.f32.mrf.mxu0
      %v12180 = vadd.f32 %v12081, %v12179
      %v12181 = vpop.f32.mrf.mxu0
      %v12182 = vadd.f32 %v12083, %v12181
      %12183 = vmatmul.bf16.gmra.mxu0 %v11345
      %v12184 = vpop.f32.mrf.mxu0
      %v12185 = vadd.f32 %v12086, %v12184
      %v12186 = vpop.f32.mrf.mxu0
      %v12187 = vadd.f32 %v12088, %v12186
      %12188 = vmatmul.bf16.gmra.mxu0 %v11354
      %v12189 = vpop.f32.mrf.mxu0
      %v12190 = vadd.f32 %v12091, %v12189
      %v12191 = vpop.f32.mrf.mxu0
      %v12192 = vadd.f32 %v12093, %v12191
      %12193 = vmatmul.bf16.gmra.mxu0 %v11363
      %v12194 = vpop.f32.mrf.mxu0
      %v12195 = vadd.f32 %v12096, %v12194
      %v12196 = vpop.f32.mrf.mxu0
      %v12197 = vadd.f32 %v12098, %v12196
      %12198 = vmatmul.bf16.gmra.mxu0 %v11372
      %v12199 = vpop.f32.mrf.mxu0
      %v12200 = vadd.f32 %v12101, %v12199
      %v12201 = vpop.f32.mrf.mxu0
      %v12202 = vadd.f32 %v12103, %v12201
      %12203 = vmatmul.bf16.gmra.mxu0 %v11381
      %v12204 = vpop.f32.mrf.mxu0
      %v12205 = vadd.f32 %v12106, %v12204
      %v12206 = vpop.f32.mrf.mxu0
      %v12207 = vadd.f32 %v12108, %v12206
      %12208 = vmatmul.bf16.gmra.mxu0 %v11390
      %v12209 = vpop.f32.mrf.mxu0
      %v12210 = vadd.f32 %v12111, %v12209
      %v12211 = vpop.f32.mrf.mxu0
      %v12212 = vadd.f32 %v12113, %v12211
      %12213 = vmatmul.bf16.gmra.mxu0 %v11399
      %v12214 = vpop.f32.mrf.mxu0
      %v12215 = vadd.f32 %v12116, %v12214
      %v12216 = vpop.f32.mrf.mxu0
      %v12217 = vadd.f32 %v12118, %v12216
      %12218 = vmatmul.bf16.gmra.mxu0 %v11408
      %v12219 = vpop.f32.mrf.mxu0
      %v12220 = vadd.f32 %v12121, %v12219
      %v12221 = vpop.f32.mrf.mxu0
      %v12222 = vadd.f32 %v12123, %v12221
      %12223 = vmatmul.bf16.gmra.mxu0 %v11417
      %v12224 = vpop.f32.mrf.mxu0
      %v12225 = vadd.f32 %v12126, %v12224
      %v12226 = vpop.f32.mrf.mxu0
      %v12227 = vadd.f32 %v12128, %v12226
      %12228 = vmatmul.bf16.gmra.mxu0 %v11426
      %v12229 = vpop.f32.mrf.mxu0
      %v12230 = vadd.f32 %v12131, %v12229
      %v12231 = vpop.f32.mrf.mxu0
      %v12232 = vadd.f32 %v12133, %v12231
      %12233 = vmatmul.bf16.gmra.mxu0 %v11435
      %v12234 = vpop.f32.mrf.mxu0
      %v12235 = vadd.f32 %v12136, %v12234
      %v12236 = vpop.f32.mrf.mxu0
      %v12237 = vadd.f32 %v12138, %v12236
      %12238 = vmatmul.bf16.gmra.mxu0 %v11444
      %v12239 = vpop.f32.mrf.mxu0
      %v12240 = vadd.f32 %v12141, %v12239
      %v12241 = vpop.f32.mrf.mxu0
      %v12242 = vadd.f32 %v12143, %v12241
      %12243 = vdwg.mxu0
      %12244 = vmatpush.bf16.msra.mxu0 %v11925
      %12245 = vmatpush.bf16.msra.mxu0 %v11924
      %12246 = vmatpush.bf16.msra.mxu0 %v11923
      %12247 = vmatpush.bf16.msra.mxu0 %v11922
      %12248 = vmatpush.bf16.msra.mxu0 %v11921
      %12249 = vmatpush.bf16.msra.mxu0 %v11920
      %12250 = vmatpush.bf16.msra.mxu0 %v11919
      %12251 = vmatpush.bf16.msra.mxu0 %v11918
      %12252 = vmatmul.bf16.gmra.mxu0 %v11292
      %v12253 = vpop.f32.mrf.mxu0
      %v12254 = vadd.f32 %v12155, %v12253
      %v12255 = vpop.f32.mrf.mxu0
      %v12256 = vadd.f32 %v12157, %v12255
      %12257 = vmatmul.bf16.gmra.mxu0 %v11301
      %v12258 = vpop.f32.mrf.mxu0
      %v12259 = vadd.f32 %v12160, %v12258
      %v12260 = vpop.f32.mrf.mxu0
      %v12261 = vadd.f32 %v12162, %v12260
      %12262 = vmatmul.bf16.gmra.mxu0 %v11310
      %v12263 = vpop.f32.mrf.mxu0
      %v12264 = vadd.f32 %v12165, %v12263
      %v12265 = vpop.f32.mrf.mxu0
      %v12266 = vadd.f32 %v12167, %v12265
      %12267 = vmatmul.bf16.gmra.mxu0 %v11319
      %v12268 = vpop.f32.mrf.mxu0
      %v12269 = vadd.f32 %v12170, %v12268
      %v12270 = vpop.f32.mrf.mxu0
      %v12271 = vadd.f32 %v12172, %v12270
      %12272 = vmatmul.bf16.gmra.mxu0 %v11328
      %v12273 = vpop.f32.mrf.mxu0
      %v12274 = vadd.f32 %v12175, %v12273
      %v12275 = vpop.f32.mrf.mxu0
      %v12276 = vadd.f32 %v12177, %v12275
      %12277 = vmatmul.bf16.gmra.mxu0 %v11337
      %v12278 = vpop.f32.mrf.mxu0
      %v12279 = vadd.f32 %v12180, %v12278
      %v12280 = vpop.f32.mrf.mxu0
      %v12281 = vadd.f32 %v12182, %v12280
      %12282 = vmatmul.bf16.gmra.mxu0 %v11346
      %v12283 = vpop.f32.mrf.mxu0
      %v12284 = vadd.f32 %v12185, %v12283
      %v12285 = vpop.f32.mrf.mxu0
      %v12286 = vadd.f32 %v12187, %v12285
      %12287 = vmatmul.bf16.gmra.mxu0 %v11355
      %v12288 = vpop.f32.mrf.mxu0
      %v12289 = vadd.f32 %v12190, %v12288
      %v12290 = vpop.f32.mrf.mxu0
      %v12291 = vadd.f32 %v12192, %v12290
      %12292 = vmatmul.bf16.gmra.mxu0 %v11364
      %v12293 = vpop.f32.mrf.mxu0
      %v12294 = vadd.f32 %v12195, %v12293
      %v12295 = vpop.f32.mrf.mxu0
      %v12296 = vadd.f32 %v12197, %v12295
      %12297 = vmatmul.bf16.gmra.mxu0 %v11373
      %v12298 = vpop.f32.mrf.mxu0
      %v12299 = vadd.f32 %v12200, %v12298
      %v12300 = vpop.f32.mrf.mxu0
      %v12301 = vadd.f32 %v12202, %v12300
      %12302 = vmatmul.bf16.gmra.mxu0 %v11382
      %v12303 = vpop.f32.mrf.mxu0
      %v12304 = vadd.f32 %v12205, %v12303
      %v12305 = vpop.f32.mrf.mxu0
      %v12306 = vadd.f32 %v12207, %v12305
      %12307 = vmatmul.bf16.gmra.mxu0 %v11391
      %v12308 = vpop.f32.mrf.mxu0
      %v12309 = vadd.f32 %v12210, %v12308
      %v12310 = vpop.f32.mrf.mxu0
      %v12311 = vadd.f32 %v12212, %v12310
      %12312 = vmatmul.bf16.gmra.mxu0 %v11400
      %v12313 = vpop.f32.mrf.mxu0
      %v12314 = vadd.f32 %v12215, %v12313
      %v12315 = vpop.f32.mrf.mxu0
      %v12316 = vadd.f32 %v12217, %v12315
      %12317 = vmatmul.bf16.gmra.mxu0 %v11409
      %v12318 = vpop.f32.mrf.mxu0
      %v12319 = vadd.f32 %v12220, %v12318
      %v12320 = vpop.f32.mrf.mxu0
      %v12321 = vadd.f32 %v12222, %v12320
      %12322 = vmatmul.bf16.gmra.mxu0 %v11418
      %v12323 = vpop.f32.mrf.mxu0
      %v12324 = vadd.f32 %v12225, %v12323
      %v12325 = vpop.f32.mrf.mxu0
      %v12326 = vadd.f32 %v12227, %v12325
      %12327 = vmatmul.bf16.gmra.mxu0 %v11427
      %v12328 = vpop.f32.mrf.mxu0
      %v12329 = vadd.f32 %v12230, %v12328
      %v12330 = vpop.f32.mrf.mxu0
      %v12331 = vadd.f32 %v12232, %v12330
      %12332 = vmatmul.bf16.gmra.mxu0 %v11436
      %v12333 = vpop.f32.mrf.mxu0
      %v12334 = vadd.f32 %v12235, %v12333
      %v12335 = vpop.f32.mrf.mxu0
      %v12336 = vadd.f32 %v12237, %v12335
      %12337 = vmatmul.bf16.gmra.mxu0 %v11445
      %v12338 = vpop.f32.mrf.mxu0
      %v12339 = vadd.f32 %v12240, %v12338
      %v12340 = vpop.f32.mrf.mxu0
      %v12341 = vadd.f32 %v12242, %v12340
      %12342 = vdwg.mxu0
      %12343 = vmatpush.bf16.msra.mxu0 %v11933
      %12344 = vmatpush.bf16.msra.mxu0 %v11932
      %12345 = vmatpush.bf16.msra.mxu0 %v11931
      %12346 = vmatpush.bf16.msra.mxu0 %v11930
      %12347 = vmatpush.bf16.msra.mxu0 %v11929
      %12348 = vmatpush.bf16.msra.mxu0 %v11928
      %12349 = vmatpush.bf16.msra.mxu0 %v11927
      %12350 = vmatpush.bf16.msra.mxu0 %v11926
      %12351 = vmatmul.bf16.gmra.mxu0 %v11293
      %v12352 = vpop.f32.mrf.mxu0
      %v12353 = vadd.f32 %v12254, %v12352
      %v12354 = vpop.f32.mrf.mxu0
      %v12355 = vadd.f32 %v12256, %v12354
      %12356 = vmatmul.bf16.gmra.mxu0 %v11302
      %v12357 = vpop.f32.mrf.mxu0
      %v12358 = vadd.f32 %v12259, %v12357
      %v12359 = vpop.f32.mrf.mxu0
      %v12360 = vadd.f32 %v12261, %v12359
      %12361 = vmatmul.bf16.gmra.mxu0 %v11311
      %v12362 = vpop.f32.mrf.mxu0
      %v12363 = vadd.f32 %v12264, %v12362
      %v12364 = vpop.f32.mrf.mxu0
      %v12365 = vadd.f32 %v12266, %v12364
      %12366 = vmatmul.bf16.gmra.mxu0 %v11320
      %v12367 = vpop.f32.mrf.mxu0
      %v12368 = vadd.f32 %v12269, %v12367
      %v12369 = vpop.f32.mrf.mxu0
      %v12370 = vadd.f32 %v12271, %v12369
      %12371 = vmatmul.bf16.gmra.mxu0 %v11329
      %v12372 = vpop.f32.mrf.mxu0
      %v12373 = vadd.f32 %v12274, %v12372
      %v12374 = vpop.f32.mrf.mxu0
      %v12375 = vadd.f32 %v12276, %v12374
      %12376 = vmatmul.bf16.gmra.mxu0 %v11338
      %v12377 = vpop.f32.mrf.mxu0
      %v12378 = vadd.f32 %v12279, %v12377
      %v12379 = vpop.f32.mrf.mxu0
      %v12380 = vadd.f32 %v12281, %v12379
      %12381 = vmatmul.bf16.gmra.mxu0 %v11347
      %v12382 = vpop.f32.mrf.mxu0
      %v12383 = vadd.f32 %v12284, %v12382
      %v12384 = vpop.f32.mrf.mxu0
      %v12385 = vadd.f32 %v12286, %v12384
      %12386 = vmatmul.bf16.gmra.mxu0 %v11356
      %v12387 = vpop.f32.mrf.mxu0
      %v12388 = vadd.f32 %v12289, %v12387
      %v12389 = vpop.f32.mrf.mxu0
      %v12390 = vadd.f32 %v12291, %v12389
      %12391 = vmatmul.bf16.gmra.mxu0 %v11365
      %v12392 = vpop.f32.mrf.mxu0
      %v12393 = vadd.f32 %v12294, %v12392
      %v12394 = vpop.f32.mrf.mxu0
      %v12395 = vadd.f32 %v12296, %v12394
      %12396 = vmatmul.bf16.gmra.mxu0 %v11374
      %v12397 = vpop.f32.mrf.mxu0
      %v12398 = vadd.f32 %v12299, %v12397
      %v12399 = vpop.f32.mrf.mxu0
      %v12400 = vadd.f32 %v12301, %v12399
      %12401 = vmatmul.bf16.gmra.mxu0 %v11383
      %v12402 = vpop.f32.mrf.mxu0
      %v12403 = vadd.f32 %v12304, %v12402
      %v12404 = vpop.f32.mrf.mxu0
      %v12405 = vadd.f32 %v12306, %v12404
      %12406 = vmatmul.bf16.gmra.mxu0 %v11392
      %v12407 = vpop.f32.mrf.mxu0
      %v12408 = vadd.f32 %v12309, %v12407
      %v12409 = vpop.f32.mrf.mxu0
      %v12410 = vadd.f32 %v12311, %v12409
      %12411 = vmatmul.bf16.gmra.mxu0 %v11401
      %v12412 = vpop.f32.mrf.mxu0
      %v12413 = vadd.f32 %v12314, %v12412
      %v12414 = vpop.f32.mrf.mxu0
      %v12415 = vadd.f32 %v12316, %v12414
      %12416 = vmatmul.bf16.gmra.mxu0 %v11410
      %v12417 = vpop.f32.mrf.mxu0
      %v12418 = vadd.f32 %v12319, %v12417
      %v12419 = vpop.f32.mrf.mxu0
      %v12420 = vadd.f32 %v12321, %v12419
      %12421 = vmatmul.bf16.gmra.mxu0 %v11419
      %v12422 = vpop.f32.mrf.mxu0
      %v12423 = vadd.f32 %v12324, %v12422
      %v12424 = vpop.f32.mrf.mxu0
      %v12425 = vadd.f32 %v12326, %v12424
      %12426 = vmatmul.bf16.gmra.mxu0 %v11428
      %v12427 = vpop.f32.mrf.mxu0
      %v12428 = vadd.f32 %v12329, %v12427
      %v12429 = vpop.f32.mrf.mxu0
      %v12430 = vadd.f32 %v12331, %v12429
      %12431 = vmatmul.bf16.gmra.mxu0 %v11437
      %v12432 = vpop.f32.mrf.mxu0
      %v12433 = vadd.f32 %v12334, %v12432
      %v12434 = vpop.f32.mrf.mxu0
      %v12435 = vadd.f32 %v12336, %v12434
      %12436 = vmatmul.bf16.gmra.mxu0 %v11446
      %v12437 = vpop.f32.mrf.mxu0
      %v12438 = vadd.f32 %v12339, %v12437
      %v12439 = vpop.f32.mrf.mxu0
      %v12440 = vadd.f32 %v12341, %v12439
      %12441 = vdwg.mxu0
      %12442 = vmatpush.bf16.msra.mxu0 %v11941
      %12443 = vmatpush.bf16.msra.mxu0 %v11940
      %12444 = vmatpush.bf16.msra.mxu0 %v11939
      %12445 = vmatpush.bf16.msra.mxu0 %v11938
      %12446 = vmatpush.bf16.msra.mxu0 %v11937
      %12447 = vmatpush.bf16.msra.mxu0 %v11936
      %12448 = vmatpush.bf16.msra.mxu0 %v11935
      %12449 = vmatpush.bf16.msra.mxu0 %v11934
      %12450 = vmatmul.bf16.gmra.mxu0 %v11294
      %v12451 = vpop.f32.mrf.mxu0
      %v12452 = vadd.f32 %v12353, %v12451
      %v12453 = vpop.f32.mrf.mxu0
      %v12454 = vadd.f32 %v12355, %v12453
      %12455 = vmatmul.bf16.gmra.mxu0 %v11303
      %v12456 = vpop.f32.mrf.mxu0
      %v12457 = vadd.f32 %v12358, %v12456
      %v12458 = vpop.f32.mrf.mxu0
      %v12459 = vadd.f32 %v12360, %v12458
      %12460 = vmatmul.bf16.gmra.mxu0 %v11312
      %v12461 = vpop.f32.mrf.mxu0
      %v12462 = vadd.f32 %v12363, %v12461
      %v12463 = vpop.f32.mrf.mxu0
      %v12464 = vadd.f32 %v12365, %v12463
      %12465 = vmatmul.bf16.gmra.mxu0 %v11321
      %v12466 = vpop.f32.mrf.mxu0
      %v12467 = vadd.f32 %v12368, %v12466
      %v12468 = vpop.f32.mrf.mxu0
      %v12469 = vadd.f32 %v12370, %v12468
      %12470 = vmatmul.bf16.gmra.mxu0 %v11330
      %v12471 = vpop.f32.mrf.mxu0
      %v12472 = vadd.f32 %v12373, %v12471
      %v12473 = vpop.f32.mrf.mxu0
      %v12474 = vadd.f32 %v12375, %v12473
      %12475 = vmatmul.bf16.gmra.mxu0 %v11339
      %v12476 = vpop.f32.mrf.mxu0
      %v12477 = vadd.f32 %v12378, %v12476
      %v12478 = vpop.f32.mrf.mxu0
      %v12479 = vadd.f32 %v12380, %v12478
      %12480 = vmatmul.bf16.gmra.mxu0 %v11348
      %v12481 = vpop.f32.mrf.mxu0
      %v12482 = vadd.f32 %v12383, %v12481
      %v12483 = vpop.f32.mrf.mxu0
      %v12484 = vadd.f32 %v12385, %v12483
      %12485 = vmatmul.bf16.gmra.mxu0 %v11357
      %v12486 = vpop.f32.mrf.mxu0
      %v12487 = vadd.f32 %v12388, %v12486
      %v12488 = vpop.f32.mrf.mxu0
      %v12489 = vadd.f32 %v12390, %v12488
      %12490 = vmatmul.bf16.gmra.mxu0 %v11366
      %v12491 = vpop.f32.mrf.mxu0
      %v12492 = vadd.f32 %v12393, %v12491
      %v12493 = vpop.f32.mrf.mxu0
      %v12494 = vadd.f32 %v12395, %v12493
      %12495 = vmatmul.bf16.gmra.mxu0 %v11375
      %v12496 = vpop.f32.mrf.mxu0
      %v12497 = vadd.f32 %v12398, %v12496
      %v12498 = vpop.f32.mrf.mxu0
      %v12499 = vadd.f32 %v12400, %v12498
      %12500 = vmatmul.bf16.gmra.mxu0 %v11384
      %v12501 = vpop.f32.mrf.mxu0
      %v12502 = vadd.f32 %v12403, %v12501
      %v12503 = vpop.f32.mrf.mxu0
      %v12504 = vadd.f32 %v12405, %v12503
      %12505 = vmatmul.bf16.gmra.mxu0 %v11393
      %v12506 = vpop.f32.mrf.mxu0
      %v12507 = vadd.f32 %v12408, %v12506
      %v12508 = vpop.f32.mrf.mxu0
      %v12509 = vadd.f32 %v12410, %v12508
      %12510 = vmatmul.bf16.gmra.mxu0 %v11402
      %v12511 = vpop.f32.mrf.mxu0
      %v12512 = vadd.f32 %v12413, %v12511
      %v12513 = vpop.f32.mrf.mxu0
      %v12514 = vadd.f32 %v12415, %v12513
      %12515 = vmatmul.bf16.gmra.mxu0 %v11411
      %v12516 = vpop.f32.mrf.mxu0
      %v12517 = vadd.f32 %v12418, %v12516
      %v12518 = vpop.f32.mrf.mxu0
      %v12519 = vadd.f32 %v12420, %v12518
      %12520 = vmatmul.bf16.gmra.mxu0 %v11420
      %v12521 = vpop.f32.mrf.mxu0
      %v12522 = vadd.f32 %v12423, %v12521
      %v12523 = vpop.f32.mrf.mxu0
      %v12524 = vadd.f32 %v12425, %v12523
      %12525 = vmatmul.bf16.gmra.mxu0 %v11429
      %v12526 = vpop.f32.mrf.mxu0
      %v12527 = vadd.f32 %v12428, %v12526
      %v12528 = vpop.f32.mrf.mxu0
      %v12529 = vadd.f32 %v12430, %v12528
      %12530 = vmatmul.bf16.gmra.mxu0 %v11438
      %v12531 = vpop.f32.mrf.mxu0
      %v12532 = vadd.f32 %v12433, %v12531
      %v12533 = vpop.f32.mrf.mxu0
      %v12534 = vadd.f32 %v12435, %v12533
      %12535 = vmatmul.bf16.gmra.mxu0 %v11447
      %v12536 = vpop.f32.mrf.mxu0
      %v12537 = vadd.f32 %v12438, %v12536
      %v12538 = vpop.f32.mrf.mxu0
      %v12539 = vadd.f32 %v12440, %v12538
      %12540 = vdwg.mxu0
      %12541 = vmatpush.bf16.msra.mxu0 %v11949
      %12542 = vmatpush.bf16.msra.mxu0 %v11948
      %12543 = vmatpush.bf16.msra.mxu0 %v11947
      %12544 = vmatpush.bf16.msra.mxu0 %v11946
      %12545 = vmatpush.bf16.msra.mxu0 %v11945
      %12546 = vmatpush.bf16.msra.mxu0 %v11944
      %12547 = vmatpush.bf16.msra.mxu0 %v11943
      %12548 = vmatpush.bf16.msra.mxu0 %v11942
      %12549 = vmatmul.bf16.gmra.mxu0 %v11295
      %v12550 = vpop.f32.mrf.mxu0
      %v12551 = vadd.f32 %v12452, %v12550
      %v12552 = vpop.f32.mrf.mxu0
      %v12553 = vadd.f32 %v12454, %v12552
      %12554 = vmatmul.bf16.gmra.mxu0 %v11304
      %v12555 = vpop.f32.mrf.mxu0
      %v12556 = vadd.f32 %v12457, %v12555
      %v12557 = vpop.f32.mrf.mxu0
      %v12558 = vadd.f32 %v12459, %v12557
      %12559 = vmatmul.bf16.gmra.mxu0 %v11313
      %v12560 = vpop.f32.mrf.mxu0
      %v12561 = vadd.f32 %v12462, %v12560
      %v12562 = vpop.f32.mrf.mxu0
      %v12563 = vadd.f32 %v12464, %v12562
      %12564 = vmatmul.bf16.gmra.mxu0 %v11322
      %v12565 = vpop.f32.mrf.mxu0
      %v12566 = vadd.f32 %v12467, %v12565
      %v12567 = vpop.f32.mrf.mxu0
      %v12568 = vadd.f32 %v12469, %v12567
      %12569 = vmatmul.bf16.gmra.mxu0 %v11331
      %v12570 = vpop.f32.mrf.mxu0
      %v12571 = vadd.f32 %v12472, %v12570
      %v12572 = vpop.f32.mrf.mxu0
      %v12573 = vadd.f32 %v12474, %v12572
      %12574 = vmatmul.bf16.gmra.mxu0 %v11340
      %v12575 = vpop.f32.mrf.mxu0
      %v12576 = vadd.f32 %v12477, %v12575
      %v12577 = vpop.f32.mrf.mxu0
      %v12578 = vadd.f32 %v12479, %v12577
      %12579 = vmatmul.bf16.gmra.mxu0 %v11349
      %v12580 = vpop.f32.mrf.mxu0
      %v12581 = vadd.f32 %v12482, %v12580
      %v12582 = vpop.f32.mrf.mxu0
      %v12583 = vadd.f32 %v12484, %v12582
      %12584 = vmatmul.bf16.gmra.mxu0 %v11358
      %v12585 = vpop.f32.mrf.mxu0
      %v12586 = vadd.f32 %v12487, %v12585
      %v12587 = vpop.f32.mrf.mxu0
      %v12588 = vadd.f32 %v12489, %v12587
      %12589 = vmatmul.bf16.gmra.mxu0 %v11367
      %v12590 = vpop.f32.mrf.mxu0
      %v12591 = vadd.f32 %v12492, %v12590
      %v12592 = vpop.f32.mrf.mxu0
      %v12593 = vadd.f32 %v12494, %v12592
      %12594 = vmatmul.bf16.gmra.mxu0 %v11376
      %v12595 = vpop.f32.mrf.mxu0
      %v12596 = vadd.f32 %v12497, %v12595
      %v12597 = vpop.f32.mrf.mxu0
      %v12598 = vadd.f32 %v12499, %v12597
      %12599 = vmatmul.bf16.gmra.mxu0 %v11385
      %v12600 = vpop.f32.mrf.mxu0
      %v12601 = vadd.f32 %v12502, %v12600
      %v12602 = vpop.f32.mrf.mxu0
      %v12603 = vadd.f32 %v12504, %v12602
      %12604 = vmatmul.bf16.gmra.mxu0 %v11394
      %v12605 = vpop.f32.mrf.mxu0
      %v12606 = vadd.f32 %v12507, %v12605
      %v12607 = vpop.f32.mrf.mxu0
      %v12608 = vadd.f32 %v12509, %v12607
      %12609 = vmatmul.bf16.gmra.mxu0 %v11403
      %v12610 = vpop.f32.mrf.mxu0
      %v12611 = vadd.f32 %v12512, %v12610
      %v12612 = vpop.f32.mrf.mxu0
      %v12613 = vadd.f32 %v12514, %v12612
      %12614 = vmatmul.bf16.gmra.mxu0 %v11412
      %v12615 = vpop.f32.mrf.mxu0
      %v12616 = vadd.f32 %v12517, %v12615
      %v12617 = vpop.f32.mrf.mxu0
      %v12618 = vadd.f32 %v12519, %v12617
      %12619 = vmatmul.bf16.gmra.mxu0 %v11421
      %v12620 = vpop.f32.mrf.mxu0
      %v12621 = vadd.f32 %v12522, %v12620
      %v12622 = vpop.f32.mrf.mxu0
      %v12623 = vadd.f32 %v12524, %v12622
      %12624 = vmatmul.bf16.gmra.mxu0 %v11430
      %v12625 = vpop.f32.mrf.mxu0
      %v12626 = vadd.f32 %v12527, %v12625
      %v12627 = vpop.f32.mrf.mxu0
      %v12628 = vadd.f32 %v12529, %v12627
      %12629 = vmatmul.bf16.gmra.mxu0 %v11439
      %v12630 = vpop.f32.mrf.mxu0
      %v12631 = vadd.f32 %v12532, %v12630
      %v12632 = vpop.f32.mrf.mxu0
      %v12633 = vadd.f32 %v12534, %v12632
      %12634 = vmatmul.bf16.gmra.mxu0 %v11448
      %v12635 = vpop.f32.mrf.mxu0
      %v12636 = vadd.f32 %v12537, %v12635
      %v12637 = vpop.f32.mrf.mxu0
      %v12638 = vadd.f32 %v12539, %v12637
      %12639 = vdwg.mxu0
      %12640 = vmatpush.bf16.msra.mxu0 %v11957
      %12641 = vmatpush.bf16.msra.mxu0 %v11956
      %12642 = vmatpush.bf16.msra.mxu0 %v11955
      %12643 = vmatpush.bf16.msra.mxu0 %v11954
      %12644 = vmatpush.bf16.msra.mxu0 %v11953
      %12645 = vmatpush.bf16.msra.mxu0 %v11952
      %12646 = vmatpush.bf16.msra.mxu0 %v11951
      %12647 = vmatpush.bf16.msra.mxu0 %v11950
      %12648 = vmatmul.bf16.gmra.mxu0 %v11296
      %v12649 = vpop.f32.mrf.mxu0
      %v12650 = vadd.f32 %v12551, %v12649
      %v12651 = vpop.f32.mrf.mxu0
      %v12652 = vadd.f32 %v12553, %v12651
      %12653 = vmatmul.bf16.gmra.mxu0 %v11305
      %v12654 = vpop.f32.mrf.mxu0
      %v12655 = vadd.f32 %v12556, %v12654
      %v12656 = vpop.f32.mrf.mxu0
      %v12657 = vadd.f32 %v12558, %v12656
      %12658 = vmatmul.bf16.gmra.mxu0 %v11314
      %v12659 = vpop.f32.mrf.mxu0
      %v12660 = vadd.f32 %v12561, %v12659
      %v12661 = vpop.f32.mrf.mxu0
      %v12662 = vadd.f32 %v12563, %v12661
      %12663 = vmatmul.bf16.gmra.mxu0 %v11323
      %v12664 = vpop.f32.mrf.mxu0
      %v12665 = vadd.f32 %v12566, %v12664
      %v12666 = vpop.f32.mrf.mxu0
      %v12667 = vadd.f32 %v12568, %v12666
      %12668 = vmatmul.bf16.gmra.mxu0 %v11332
      %v12669 = vpop.f32.mrf.mxu0
      %v12670 = vadd.f32 %v12571, %v12669
      %v12671 = vpop.f32.mrf.mxu0
      %v12672 = vadd.f32 %v12573, %v12671
      %12673 = vmatmul.bf16.gmra.mxu0 %v11341
      %v12674 = vpop.f32.mrf.mxu0
      %v12675 = vadd.f32 %v12576, %v12674
      %v12676 = vpop.f32.mrf.mxu0
      %v12677 = vadd.f32 %v12578, %v12676
      %12678 = vmatmul.bf16.gmra.mxu0 %v11350
      %v12679 = vpop.f32.mrf.mxu0
      %v12680 = vadd.f32 %v12581, %v12679
      %v12681 = vpop.f32.mrf.mxu0
      %v12682 = vadd.f32 %v12583, %v12681
      %12683 = vmatmul.bf16.gmra.mxu0 %v11359
      %v12684 = vpop.f32.mrf.mxu0
      %v12685 = vadd.f32 %v12586, %v12684
      %v12686 = vpop.f32.mrf.mxu0
      %v12687 = vadd.f32 %v12588, %v12686
      %12688 = vmatmul.bf16.gmra.mxu0 %v11368
      %v12689 = vpop.f32.mrf.mxu0
      %v12690 = vadd.f32 %v12591, %v12689
      %v12691 = vpop.f32.mrf.mxu0
      %v12692 = vadd.f32 %v12593, %v12691
      %12693 = vmatmul.bf16.gmra.mxu0 %v11377
      %v12694 = vpop.f32.mrf.mxu0
      %v12695 = vadd.f32 %v12596, %v12694
      %v12696 = vpop.f32.mrf.mxu0
      %v12697 = vadd.f32 %v12598, %v12696
      %12698 = vmatmul.bf16.gmra.mxu0 %v11386
      %v12699 = vpop.f32.mrf.mxu0
      %v12700 = vadd.f32 %v12601, %v12699
      %v12701 = vpop.f32.mrf.mxu0
      %v12702 = vadd.f32 %v12603, %v12701
      %12703 = vmatmul.bf16.gmra.mxu0 %v11395
      %v12704 = vpop.f32.mrf.mxu0
      %v12705 = vadd.f32 %v12606, %v12704
      %v12706 = vpop.f32.mrf.mxu0
      %v12707 = vadd.f32 %v12608, %v12706
      %12708 = vmatmul.bf16.gmra.mxu0 %v11404
      %v12709 = vpop.f32.mrf.mxu0
      %v12710 = vadd.f32 %v12611, %v12709
      %v12711 = vpop.f32.mrf.mxu0
      %v12712 = vadd.f32 %v12613, %v12711
      %12713 = vmatmul.bf16.gmra.mxu0 %v11413
      %v12714 = vpop.f32.mrf.mxu0
      %v12715 = vadd.f32 %v12616, %v12714
      %v12716 = vpop.f32.mrf.mxu0
      %v12717 = vadd.f32 %v12618, %v12716
      %12718 = vmatmul.bf16.gmra.mxu0 %v11422
      %v12719 = vpop.f32.mrf.mxu0
      %v12720 = vadd.f32 %v12621, %v12719
      %v12721 = vpop.f32.mrf.mxu0
      %v12722 = vadd.f32 %v12623, %v12721
      %12723 = vmatmul.bf16.gmra.mxu0 %v11431
      %v12724 = vpop.f32.mrf.mxu0
      %v12725 = vadd.f32 %v12626, %v12724
      %v12726 = vpop.f32.mrf.mxu0
      %v12727 = vadd.f32 %v12628, %v12726
      %12728 = vmatmul.bf16.gmra.mxu0 %v11440
      %v12729 = vpop.f32.mrf.mxu0
      %v12730 = vadd.f32 %v12631, %v12729
      %v12731 = vpop.f32.mrf.mxu0
      %v12732 = vadd.f32 %v12633, %v12731
      %12733 = vmatmul.bf16.gmra.mxu0 %v11449
      %v12734 = vpop.f32.mrf.mxu0
      %v12735 = vadd.f32 %v12636, %v12734
      %v12736 = vpop.f32.mrf.mxu0
      %v12737 = vadd.f32 %v12638, %v12736
      %12738 = vdwg.mxu0
      %12739 = vmatpush.bf16.msra.mxu0 %v11965
      %12740 = vmatpush.bf16.msra.mxu0 %v11964
      %12741 = vmatpush.bf16.msra.mxu0 %v11963
      %12742 = vmatpush.bf16.msra.mxu0 %v11962
      %12743 = vmatpush.bf16.msra.mxu0 %v11961
      %12744 = vmatpush.bf16.msra.mxu0 %v11960
      %12745 = vmatpush.bf16.msra.mxu0 %v11959
      %12746 = vmatpush.bf16.msra.mxu0 %v11958
      %12747 = vmatmul.bf16.gmra.mxu0 %v11297
      %v12748 = vpop.f32.mrf.mxu0
      %v12749 = vadd.f32 %v12650, %v12748
      %v12750 = vpop.f32.mrf.mxu0
      %v12751 = vadd.f32 %v12652, %v12750
      %12752 = vmatmul.bf16.gmra.mxu0 %v11306
      %v12753 = vpop.f32.mrf.mxu0
      %v12754 = vadd.f32 %v12655, %v12753
      %v12755 = vpop.f32.mrf.mxu0
      %v12756 = vadd.f32 %v12657, %v12755
      %12757 = vmatmul.bf16.gmra.mxu0 %v11315
      %v12758 = vpop.f32.mrf.mxu0
      %v12759 = vadd.f32 %v12660, %v12758
      %v12760 = vpop.f32.mrf.mxu0
      %v12761 = vadd.f32 %v12662, %v12760
      %12762 = vmatmul.bf16.gmra.mxu0 %v11324
      %v12763 = vpop.f32.mrf.mxu0
      %v12764 = vadd.f32 %v12665, %v12763
      %v12765 = vpop.f32.mrf.mxu0
      %v12766 = vadd.f32 %v12667, %v12765
      %12767 = vmatmul.bf16.gmra.mxu0 %v11333
      %v12768 = vpop.f32.mrf.mxu0
      %v12769 = vadd.f32 %v12670, %v12768
      %v12770 = vpop.f32.mrf.mxu0
      %v12771 = vadd.f32 %v12672, %v12770
      %12772 = vmatmul.bf16.gmra.mxu0 %v11342
      %v12773 = vpop.f32.mrf.mxu0
      %v12774 = vadd.f32 %v12675, %v12773
      %v12775 = vpop.f32.mrf.mxu0
      %v12776 = vadd.f32 %v12677, %v12775
      %12777 = vmatmul.bf16.gmra.mxu0 %v11351
      %v12778 = vpop.f32.mrf.mxu0
      %v12779 = vadd.f32 %v12680, %v12778
      %v12780 = vpop.f32.mrf.mxu0
      %v12781 = vadd.f32 %v12682, %v12780
      %12782 = vmatmul.bf16.gmra.mxu0 %v11360
      %v12783 = vpop.f32.mrf.mxu0
      %v12784 = vadd.f32 %v12685, %v12783
      %v12785 = vpop.f32.mrf.mxu0
      %v12786 = vadd.f32 %v12687, %v12785
      %12787 = vmatmul.bf16.gmra.mxu0 %v11369
      %v12788 = vpop.f32.mrf.mxu0
      %v12789 = vadd.f32 %v12690, %v12788
      %v12790 = vpop.f32.mrf.mxu0
      %v12791 = vadd.f32 %v12692, %v12790
      %12792 = vmatmul.bf16.gmra.mxu0 %v11378
      %v12793 = vpop.f32.mrf.mxu0
      %v12794 = vadd.f32 %v12695, %v12793
      %v12795 = vpop.f32.mrf.mxu0
      %v12796 = vadd.f32 %v12697, %v12795
      %12797 = vmatmul.bf16.gmra.mxu0 %v11387
      %v12798 = vpop.f32.mrf.mxu0
      %v12799 = vadd.f32 %v12700, %v12798
      %v12800 = vpop.f32.mrf.mxu0
      %v12801 = vadd.f32 %v12702, %v12800
      %12802 = vmatmul.bf16.gmra.mxu0 %v11396
      %v12803 = vpop.f32.mrf.mxu0
      %v12804 = vadd.f32 %v12705, %v12803
      %v12805 = vpop.f32.mrf.mxu0
      %v12806 = vadd.f32 %v12707, %v12805
      %12807 = vmatmul.bf16.gmra.mxu0 %v11405
      %v12808 = vpop.f32.mrf.mxu0
      %v12809 = vadd.f32 %v12710, %v12808
      %v12810 = vpop.f32.mrf.mxu0
      %v12811 = vadd.f32 %v12712, %v12810
      %12812 = vmatmul.bf16.gmra.mxu0 %v11414
      %v12813 = vpop.f32.mrf.mxu0
      %v12814 = vadd.f32 %v12715, %v12813
      %v12815 = vpop.f32.mrf.mxu0
      %v12816 = vadd.f32 %v12717, %v12815
      %12817 = vmatmul.bf16.gmra.mxu0 %v11423
      %v12818 = vpop.f32.mrf.mxu0
      %v12819 = vadd.f32 %v12720, %v12818
      %v12820 = vpop.f32.mrf.mxu0
      %v12821 = vadd.f32 %v12722, %v12820
      %12822 = vmatmul.bf16.gmra.mxu0 %v11432
      %v12823 = vpop.f32.mrf.mxu0
      %v12824 = vadd.f32 %v12725, %v12823
      %v12825 = vpop.f32.mrf.mxu0
      %v12826 = vadd.f32 %v12727, %v12825
      %12827 = vmatmul.bf16.gmra.mxu0 %v11441
      %v12828 = vpop.f32.mrf.mxu0
      %v12829 = vadd.f32 %v12730, %v12828
      %v12830 = vpop.f32.mrf.mxu0
      %v12831 = vadd.f32 %v12732, %v12830
      %12832 = vmatmul.bf16.gmra.mxu0 %v11450
      %v12833 = vpop.f32.mrf.mxu0
      %v12834 = vadd.f32 %v12735, %v12833
      %v12835 = vpop.f32.mrf.mxu0
      %v12836 = vadd.f32 %v12737, %v12835
      %12837 = vdwg.mxu0
      %12838 = vmatpush.bf16.msra.mxu0 %v11973
      %12839 = vmatpush.bf16.msra.mxu0 %v11972
      %12840 = vmatpush.bf16.msra.mxu0 %v11971
      %12841 = vmatpush.bf16.msra.mxu0 %v11970
      %12842 = vmatpush.bf16.msra.mxu0 %v11969
      %12843 = vmatpush.bf16.msra.mxu0 %v11968
      %12844 = vmatpush.bf16.msra.mxu0 %v11967
      %12845 = vmatpush.bf16.msra.mxu0 %v11966
      %12846 = vmatmul.bf16.gmra.mxu0 %v11298
      %v12847 = vpop.f32.mrf.mxu0
      %v12848 = vadd.f32 %v12749, %v12847
      %v12849 = vpop.f32.mrf.mxu0
      %v12850 = vadd.f32 %v12751, %v12849
      %12851 = vmatmul.bf16.gmra.mxu0 %v11307
      %v12852 = vpop.f32.mrf.mxu0
      %v12853 = vadd.f32 %v12754, %v12852
      %v12854 = vpop.f32.mrf.mxu0
      %v12855 = vadd.f32 %v12756, %v12854
      %12856 = vmatmul.bf16.gmra.mxu0 %v11316
      %v12857 = vpop.f32.mrf.mxu0
      %v12858 = vadd.f32 %v12759, %v12857
      %v12859 = vpop.f32.mrf.mxu0
      %v12860 = vadd.f32 %v12761, %v12859
      %12861 = vmatmul.bf16.gmra.mxu0 %v11325
      %v12862 = vpop.f32.mrf.mxu0
      %v12863 = vadd.f32 %v12764, %v12862
      %v12864 = vpop.f32.mrf.mxu0
      %v12865 = vadd.f32 %v12766, %v12864
      %12866 = vmatmul.bf16.gmra.mxu0 %v11334
      %v12867 = vpop.f32.mrf.mxu0
      %v12868 = vadd.f32 %v12769, %v12867
      %v12869 = vpop.f32.mrf.mxu0
      %v12870 = vadd.f32 %v12771, %v12869
      %12871 = vmatmul.bf16.gmra.mxu0 %v11343
      %v12872 = vpop.f32.mrf.mxu0
      %v12873 = vadd.f32 %v12774, %v12872
      %v12874 = vpop.f32.mrf.mxu0
      %v12875 = vadd.f32 %v12776, %v12874
      %12876 = vmatmul.bf16.gmra.mxu0 %v11352
      %v12877 = vpop.f32.mrf.mxu0
      %v12878 = vadd.f32 %v12779, %v12877
      %v12879 = vpop.f32.mrf.mxu0
      %v12880 = vadd.f32 %v12781, %v12879
      %12881 = vmatmul.bf16.gmra.mxu0 %v11361
      %v12882 = vpop.f32.mrf.mxu0
      %v12883 = vadd.f32 %v12784, %v12882
      %v12884 = vpop.f32.mrf.mxu0
      %v12885 = vadd.f32 %v12786, %v12884
      %12886 = vmatmul.bf16.gmra.mxu0 %v11370
      %v12887 = vpop.f32.mrf.mxu0
      %v12888 = vadd.f32 %v12789, %v12887
      %v12889 = vpop.f32.mrf.mxu0
      %v12890 = vadd.f32 %v12791, %v12889
      %12891 = vmatmul.bf16.gmra.mxu0 %v11379
      %v12892 = vpop.f32.mrf.mxu0
      %v12893 = vadd.f32 %v12794, %v12892
      %v12894 = vpop.f32.mrf.mxu0
      %v12895 = vadd.f32 %v12796, %v12894
      %12896 = vmatmul.bf16.gmra.mxu0 %v11388
      %v12897 = vpop.f32.mrf.mxu0
      %v12898 = vadd.f32 %v12799, %v12897
      %v12899 = vpop.f32.mrf.mxu0
      %v12900 = vadd.f32 %v12801, %v12899
      %12901 = vmatmul.bf16.gmra.mxu0 %v11397
      %v12902 = vpop.f32.mrf.mxu0
      %v12903 = vadd.f32 %v12804, %v12902
      %v12904 = vpop.f32.mrf.mxu0
      %v12905 = vadd.f32 %v12806, %v12904
      %12906 = vmatmul.bf16.gmra.mxu0 %v11406
      %v12907 = vpop.f32.mrf.mxu0
      %v12908 = vadd.f32 %v12809, %v12907
      %v12909 = vpop.f32.mrf.mxu0
      %v12910 = vadd.f32 %v12811, %v12909
      %12911 = vmatmul.bf16.gmra.mxu0 %v11415
      %v12912 = vpop.f32.mrf.mxu0
      %v12913 = vadd.f32 %v12814, %v12912
      %v12914 = vpop.f32.mrf.mxu0
      %v12915 = vadd.f32 %v12816, %v12914
      %12916 = vmatmul.bf16.gmra.mxu0 %v11424
      %v12917 = vpop.f32.mrf.mxu0
      %v12918 = vadd.f32 %v12819, %v12917
      %v12919 = vpop.f32.mrf.mxu0
      %v12920 = vadd.f32 %v12821, %v12919
      %12921 = vmatmul.bf16.gmra.mxu0 %v11433
      %v12922 = vpop.f32.mrf.mxu0
      %v12923 = vadd.f32 %v12824, %v12922
      %v12924 = vpop.f32.mrf.mxu0
      %v12925 = vadd.f32 %v12826, %v12924
      %12926 = vmatmul.bf16.gmra.mxu0 %v11442
      %v12927 = vpop.f32.mrf.mxu0
      %v12928 = vadd.f32 %v12829, %v12927
      %v12929 = vpop.f32.mrf.mxu0
      %v12930 = vadd.f32 %v12831, %v12929
      %12931 = vmatmul.bf16.gmra.mxu0 %v11451
      %v12932 = vpop.f32.mrf.mxu0
      %v12933 = vadd.f32 %v12834, %v12932
      %v12934 = vpop.f32.mrf.mxu0
      %v12935 = vadd.f32 %v12836, %v12934
      %12936 = vdwg.mxu0
      %v12937 = vmax.f32 %v12848, 0.0
      %v12938 = vmax.f32 %v12850, 0.0
      %v12939 = vmax.f32 %v12853, 0.0
      %v12940 = vmax.f32 %v12855, 0.0
      %v12941 = vmax.f32 %v12858, 0.0
      %v12942 = vmax.f32 %v12860, 0.0
      %v12943 = vmax.f32 %v12863, 0.0
      %v12944 = vmax.f32 %v12865, 0.0
      %v12945 = vmax.f32 %v12868, 0.0
      %v12946 = vmax.f32 %v12870, 0.0
      %v12947 = vmax.f32 %v12873, 0.0
      %v12948 = vmax.f32 %v12875, 0.0
      %v12949 = vmax.f32 %v12878, 0.0
      %v12950 = vmax.f32 %v12880, 0.0
      %v12951 = vmax.f32 %v12883, 0.0
      %v12952 = vmax.f32 %v12885, 0.0
      %v12953 = vmax.f32 %v12888, 0.0
      %v12954 = vmax.f32 %v12890, 0.0
      %v12955 = vmax.f32 %v12893, 0.0
      %v12956 = vmax.f32 %v12895, 0.0
      %v12957 = vmax.f32 %v12898, 0.0
      %v12958 = vmax.f32 %v12900, 0.0
      %v12959 = vmax.f32 %v12903, 0.0
      %v12960 = vmax.f32 %v12905, 0.0
      %v12961 = vmax.f32 %v12908, 0.0
      %v12962 = vmax.f32 %v12910, 0.0
      %v12963 = vmax.f32 %v12913, 0.0
      %v12964 = vmax.f32 %v12915, 0.0
      %v12965 = vmax.f32 %v12918, 0.0
      %v12966 = vmax.f32 %v12920, 0.0
      %v12967 = vmax.f32 %v12923, 0.0
      %v12968 = vmax.f32 %v12925, 0.0
      %v12969 = vmax.f32 %v12928, 0.0
      %v12970 = vmax.f32 %v12930, 0.0
      %v12971 = vmax.f32 %v12933, 0.0
      %v12972 = vmax.f32 %v12935, 0.0
      %12973 = vst [vmem:[%s224] sm:$0xff] %v12937
      %12974 = vst [vmem:[%s224 + $0x8] sm:$0xff] %v12938
      %12975 = vst [vmem:[%s224 + $0x10] sm:$0xff] %v12939
      %12976 = vst [vmem:[%s224 + $0x18] sm:$0xff] %v12940
      %12977 = vst [vmem:[%s224 + $0x20] sm:$0xff] %v12941
      %12978 = vst [vmem:[%s224 + $0x28] sm:$0xff] %v12942
      %12979 = vst [vmem:[%s224 + $0x30] sm:$0xff] %v12943
      %12980 = vst [vmem:[%s224 + $0x38] sm:$0xff] %v12944
      %12981 = vst [vmem:[%s224 + $0x40] sm:$0xff] %v12945
      %12982 = vst [vmem:[%s224 + $0x48] sm:$0xff] %v12946
      %12983 = vst [vmem:[%s224 + $0x50] sm:$0xff] %v12947
      %12984 = vst [vmem:[%s224 + $0x58] sm:$0xff] %v12948
      %12985 = vst [vmem:[%s224 + $0x60] sm:$0xff] %v12949
      %12986 = vst [vmem:[%s224 + $0x68] sm:$0xff] %v12950
      %12987 = vst [vmem:[%s224 + $0x70] sm:$0xff] %v12951
      %12988 = vst [vmem:[%s224 + $0x78] sm:$0xff] %v12952
      %12989 = vst [vmem:[%s224 + $0x80] sm:$0xff] %v12953
      %12990 = vst [vmem:[%s224 + $0x88] sm:$0xff] %v12954
      %12991 = vst [vmem:[%s224 + $0x90] sm:$0xff] %v12955
      %12992 = vst [vmem:[%s224 + $0x98] sm:$0xff] %v12956
      %12993 = vst [vmem:[%s224 + $0xa0] sm:$0xff] %v12957
      %12994 = vst [vmem:[%s224 + $0xa8] sm:$0xff] %v12958
      %12995 = vst [vmem:[%s224 + $0xb0] sm:$0xff] %v12959
      %12996 = vst [vmem:[%s224 + $0xb8] sm:$0xff] %v12960
      %12997 = vst [vmem:[%s224 + $0xc0] sm:$0xff] %v12961
      %12998 = vst [vmem:[%s224 + $0xc8] sm:$0xff] %v12962
      %12999 = vst [vmem:[%s224 + $0xd0] sm:$0xff] %v12963
      %13000 = vst [vmem:[%s224 + $0xd8] sm:$0xff] %v12964
      %13001 = vst [vmem:[%s224 + $0xe0] sm:$0xff] %v12965
      %13002 = vst [vmem:[%s224 + $0xe8] sm:$0xff] %v12966
      %13003 = vst [vmem:[%s224 + $0xf0] sm:$0xff] %v12967
      %13004 = vst [vmem:[%s224 + $0xf8] sm:$0xff] %v12968
      %13005 = vst [vmem:[%s224 + $0x100] sm:$0xff] %v12969
      %13006 = vst [vmem:[%s224 + $0x108] sm:$0xff] %v12970
      %13007 = vst [vmem:[%s224 + $0x110] sm:$0xff] %v12971
      %13008 = vst [vmem:[%s224 + $0x118] sm:$0xff] %v12972
      %p13009 = scmp.lt.s32.totalorder %s16, 1
      %s13010 = scalar_select %p13009, %s16, 1
      %s13011 = smul.addr %s13010, 36
      %s13012 = smul.addr %s13011, 8
      %s13013 = scalar_lea.vmem %s5, %s13012
      // Predicated region
      $region41: #{double_conv_pallas.1} parent=39 // pred_check
        %p13014 = pneg %p144
      $region42: #{double_conv_pallas.1} parent=39 // pred_check_branch
        %13016 = sbr.rel (%p13014) target = $region44
      $region43: #{double_conv_pallas.1} parent=39 // pred_region
        _
      $region44: #{double_conv_pallas.1} parent=39 // pred_fallthru
        _
    $region40: #{double_conv_pallas.1} parent=5 // pred_fallthru
      _
    %p13017 = scmp.le.s32.totalorder 2, %s11
    // Predicated region
    $region45: #{double_conv_pallas.1} parent=5 // pred_check
      %p13018 = pneg %p13017
    $region46: #{double_conv_pallas.1} parent=5 // pred_check_branch
      %13020 = sbr.rel (%p13018) target = $region48
    $region47: #{double_conv_pallas.1} parent=5 // pred_region
      %s13021 = ssub.s32 %s11, 2
      // Predicated region
      $region49: #{double_conv_pallas.1} parent=47 // pred_check
        %p13022 = pneg %p150
      $region50: #{double_conv_pallas.1} parent=47 // pred_check_branch
        %13024 = sbr.rel (%p13022) target = $region52
      $region51: #{double_conv_pallas.1} parent=47 // pred_region
        %p13025 = scmp.lt.s32.totalorder %s17, 1
        %s13026 = scalar_select %p13025, %s17, 1
        %s13027 = smul.addr %s13026, 36
        %s13028 = smul.addr %s13027, 8
        %s13029 = scalar_lea.vmem %s5, %s13028
      $region52: #{double_conv_pallas.1} parent=47 // pred_fallthru
        _
    $region48: #{double_conv_pallas.1} parent=5 // pred_fallthru
      _
  $region6: #{double_conv_pallas.1} parent=0 // loop_footer
    %s15 = sadd.s32 1, %s11
  $region7: #{double_conv_pallas.1} parent=0 // loop_footer_branch
    %10 = sbr.rel target = $region3
  $region8: #{double_conv_pallas.1} parent=0 // loop_exit
    _

</llo_original>
